<compile_context>
chip_gen: v5e
topology: v5e:2x2
jax: 0.10.0
libtpu: 0.0.40
codegen_flags: <defaults>
</compile_context>

<pallas_src>
import functools

import jax
import jax.numpy as jnp
from jax.experimental import pallas as pl
from jax.experimental.pallas import tpu as pltpu


# ----------------------------- fused Pallas kernel -----------------------------

def _fused_dqn_kernel(p_ref, w1_ref, b1_ref, w2_ref, b2_ref,
                      wl_ref, bl_ref, wh_ref, bh_ref,
                      out_ref, y1_s, y2_s, hin_s,
                      *, n_spatial, batch, c2):
    """Whole Dueling_DQN forward; grid axis = lin1 output-column chunks.

    p_ref : (nsp*B, 256)  bf16  conv1 patches, rows (h2, w2, b), cols (g, di, dj, c)
    w1_ref: (256, 256)    bf16  block-diagonal conv1 weight (one block per conv2 tap)
    b1_ref: (1, 256)      f32   conv1 bias tiled over the 16 conv2 taps
    w2_ref: (256, 32)     bf16  conv2 weight stacked over taps
    b2_ref: (1, 32)       f32
    wl_ref: (2592, 128)   bf16  current column chunk of lin1 weight (pipelined DMA)
    bl_ref: (1, 128)      f32   matching lin1 bias chunk
    wh_ref: (128, 128)    bf16  matching row chunk of [value | advantage | 0] head
    bh_ref: (1, 128)      f32   head bias (col 0 = value, 1..6 = advantages)
    out_ref:(B, 128)      f32   accumulated across grid steps (revisited block)
    y1_s  : (nsp*B, 256)  bf16  scratch: conv1 activations
    y2_s  : (nsp*B, 32)   f32   scratch: conv2 activations, rows (spatial, batch)
    hin_s : (B, 2592)     f32   scratch: NCHW-flattened lin1 input
    """
    i = pl.program_id(0)

    @pl.when(i == 0)
    def _conv_stage():
        # conv1 over all 16 conv2 receptive-field taps in one K=256 matmul.
        y1 = jnp.dot(p_ref[...], w1_ref[...],
                     preferred_element_type=jnp.float32)
        y1_s[...] = jnp.maximum(y1 + b1_ref[...], 0.0).astype(jnp.bfloat16)

        # conv2 as a second K=256 matmul (stacked weight).
        y2 = jnp.dot(y1_s[...], w2_ref[...],
                     preferred_element_type=jnp.float32)
        y2_s[...] = jnp.maximum(y2 + b2_ref[...], 0.0)

        # NCHW flatten for lin1: (spatial, batch) rows x 32 chans ->
        # (batch, spatial*32) lanes.  81 small static copies (sublane->lane
        # fold, ~20 KB) -- fully hidden under the lin1-weight chunk DMAs.
        for s in range(n_spatial):
            hin_s[:, s * c2:(s + 1) * c2] = y2_s[s * batch:(s + 1) * batch, :]

        # Initialise the head accumulator with the fused head bias.
        out_ref[...] = jnp.broadcast_to(bh_ref[...], out_ref.shape)

    # Every grid step: one 128-column chunk of lin1 (+ReLU) and its head partial.
    h_c = jnp.dot(hin_s[...].astype(jnp.bfloat16), wl_ref[...],
                  preferred_element_type=jnp.float32)          # (B, 128)
    h_c = jnp.maximum(h_c + bl_ref[...], 0.0)
    out_ref[...] += jnp.dot(h_c.astype(jnp.bfloat16), wh_ref[...],
                            preferred_element_type=jnp.float32)


# ------------------------------ wrapper (plain JAX) -----------------------------

def _build_patches(x, kh1, kw1, s1, kh2, kw2, s2, oh2, ow2):
    """conv1 im2col grouped by conv2 receptive-field position.

    Returns (oh2*ow2*B, kh2*kw2*kh1*kw1*C): rows ordered (h2, w2, b) and columns
    ordered (i, j, di, dj, c).  Operates on the tiny raw input only.
    """
    B, C, _, _ = x.shape
    pieces = []
    for i in range(kh2):
        for j in range(kw2):
            for di in range(kh1):
                for dj in range(kw1):
                    h0 = s1 * i + di
                    w0 = s1 * j + dj
                    pieces.append(
                        x[:, :,
                          h0:h0 + s1 * s2 * (oh2 - 1) + 1:s1 * s2,
                          w0:w0 + s1 * s2 * (ow2 - 1) + 1:s1 * s2])
    p = jnp.stack(pieces, axis=0)
    p = p.reshape(kh2, kw2, kh1, kw1, B, C, oh2, ow2)
    p = p.transpose(6, 7, 4, 0, 1, 2, 3, 5)        # (h2, w2, b, i, j, di, dj, c)
    return p.reshape(oh2 * ow2 * B, kh2 * kw2 * kh1 * kw1 * C)


def dueling_dqn_forward(params, x, stride1=1, n_chunks=4):
    """Returns (value (B,1), advantages (B,6)) like the nn.Module."""
    w1, b1, w2, b2, wl, bl, wv, bv, wa, ba = params
    B, C, H, W = x.shape
    ko1, _, kh1, kw1 = w1.shape
    ko2, _, kh2, kw2 = w2.shape
    s2 = 2
    oh1 = (H - kh1) // stride1 + 1
    ow1 = (W - kw1) // stride1 + 1
    oh2 = (oh1 - kh2) // s2 + 1
    ow2 = (ow1 - kw2) // s2 + 1
    nsp = oh2 * ow2                      # 81
    m_rows = nsp * B                     # 162
    num_g = kh2 * kw2                    # 16
    k1 = kh1 * kw1 * C                   # 16
    kbd = num_g * k1                     # 256
    hid = wl.shape[0]                    # 512
    flat = wl.shape[1]                   # 2592 = 32*9*9
    na = wa.shape[0]                     # 6
    nh = 128                             # lane-dense padded head width
    nck = hid // n_chunks                # 128-wide lin1 chunks

    # Tiny prep (patches + weight permutations); fuses into the surrounding jit.
    p = _build_patches(x, kh1, kw1, stride1, kh2, kw2, s2, oh2, ow2)
    w1p = jnp.transpose(w1, (2, 3, 1, 0)).reshape(k1, ko1)          # (16,16)
    w1bd = jnp.kron(jnp.eye(num_g, dtype=w1p.dtype), w1p)           # (256,256)
    b1t = jnp.tile(b1, num_g).reshape(1, kbd)                       # (1,256)
    w2stk = jnp.transpose(w2, (2, 3, 1, 0)).reshape(kbd, ko2)       # (256,32)
    # lin1 weight with rows re-ordered to (spatial, channel) to match hin_s.
    wlf = wl.reshape(hid, ko2, nsp).transpose(2, 1, 0).reshape(flat, hid)
    wh = jnp.zeros((hid, nh), jnp.float32)
    wh = wh.at[:, 0].set(wv[0]).at[:, 1:1 + na].set(wa.T)           # (512,128)
    bh = jnp.zeros((nh,), jnp.float32).at[0].set(bv[0]).at[1:1 + na].set(ba)

    bf = jnp.bfloat16
    kern = functools.partial(_fused_dqn_kernel,
                             n_spatial=nsp, batch=B, c2=ko2)

    out = pl.pallas_call(
        kern,
        out_shape=jax.ShapeDtypeStruct((B, nh), jnp.float32),
        grid=(n_chunks,),
        in_specs=[
            pl.BlockSpec((m_rows, kbd), lambda i: (0, 0)),   # patches
            pl.BlockSpec((kbd, kbd),    lambda i: (0, 0)),   # conv1 block-diag
            pl.BlockSpec((1, kbd),      lambda i: (0, 0)),   # conv1 bias (tiled)
            pl.BlockSpec((kbd, ko2),    lambda i: (0, 0)),   # conv2 stacked
            pl.BlockSpec((1, ko2),      lambda i: (0, 0)),   # conv2 bias
            pl.BlockSpec((flat, nck),   lambda i: (0, i)),   # lin1 weight chunk (pipelined)
            pl.BlockSpec((1, nck),      lambda i: (0, i)),   # lin1 bias chunk
            pl.BlockSpec((nck, nh),     lambda i: (i, 0)),   # head weight chunk
            pl.BlockSpec((1, nh),       lambda i: (0, 0)),   # head bias
        ],
        out_specs=pl.BlockSpec((B, nh), lambda i: (0, 0)),
        scratch_shapes=[pltpu.VMEM((m_rows, kbd), bf),        # y1
                        pltpu.VMEM((m_rows, ko2), jnp.float32),  # y2
                        pltpu.VMEM((B, flat), jnp.float32)],     # flattened lin1 input
        compiler_params=pltpu.CompilerParams(
            dimension_semantics=("arbitrary",),
            vmem_limit_bytes=32 * 1024 * 1024),
        cost_estimate=pl.CostEstimate(flops=30_000_000,
                                      bytes_accessed=3_200_000,
                                      transcendentals=0),
    )(p.astype(bf), w1bd.astype(bf), b1t,
      w2stk.astype(bf), b2.reshape(1, ko2),
      wlf.astype(bf), bl.reshape(1, hid),
      wh.astype(bf), bh.reshape(1, nh))

    return out[:, :1], out[:, 1:1 + na]


def reference_forward(params, x, stride1):
    """Pure-JAX reference of the PyTorch forward (f32, highest precision)."""
    w1, b1, w2, b2, wl, bl, wv, bv, wa, ba = params
    dn = ('NCHW', 'OIHW', 'NCHW')
    hi = jax.lax.Precision.HIGHEST
    y = jax.lax.conv_general_dilated(x, w1, (stride1, stride1), 'VALID',
                                     dimension_numbers=dn, precision=hi)
    y = jnp.maximum(y + b1[None, :, None, None], 0.0)
    y = jax.lax.conv_general_dilated(y, w2, (2, 2), 'VALID',
                                     dimension_numbers=dn, precision=hi)
    y = jnp.maximum(y + b2[None, :, None, None], 0.0)
    y = y.reshape(y.shape[0], -1)
    h = jnp.maximum(jnp.dot(y, wl.T, precision=hi) + bl, 0.0)
    return (jnp.dot(h, wv.T, precision=hi) + bv,
            jnp.dot(h, wa.T, precision=hi) + ba)


# ---------------------------------- main -----------------------------------

if __name__ == "__main__":
    # Hyper-params of Dueling_DQN(kernels=16, kernel_dim=2, stride=1)
    KERNELS, KDIM, STRIDE = 16, 2, 1
    B, CIN, H, W = 2, 4, 21, 21          # conv1 -> 20x20, conv2 -> 9x9 (32*9*9 for lin1)
    N_ACTIONS, HIDDEN = 6, 512
    FLAT = 32 * 9 * 9

    key = jax.random.PRNGKey(0)
    ks = jax.random.split(key, 11)

    def uinit(k, shape, fan_in):
        bound = 1.0 / jnp.sqrt(jnp.float32(fan_in))
        return jax.random.uniform(k, shape, jnp.float32, -bound, bound)

    params = (
        uinit(ks[0], (KERNELS, CIN, KDIM, KDIM), CIN * KDIM * KDIM),   # conv1.weight
        uinit(ks[1], (KERNELS,), CIN * KDIM * KDIM),                   # conv1.bias
        uinit(ks[2], (32, KERNELS, 4, 4), KERNELS * 16),               # conv2.weight
        uinit(ks[3], (32,), KERNELS * 16),                             # conv2.bias
        uinit(ks[4], (HIDDEN, FLAT), FLAT),                            # lin1.weight
        uinit(ks[5], (HIDDEN,), FLAT),                                 # lin1.bias
        uinit(ks[6], (1, HIDDEN), HIDDEN),                             # value_stream.weight
        uinit(ks[7], (1,), HIDDEN),                                    # value_stream.bias
        uinit(ks[8], (N_ACTIONS, HIDDEN), HIDDEN),                     # advantage_stream.weight
        uinit(ks[9], (N_ACTIONS,), HIDDEN),                            # advantage_stream.bias
    )

    x = jax.random.uniform(ks[10], (B, CIN, H, W), jnp.float32, -1.0, 1.0)

    fwd = jax.jit(functools.partial(dueling_dqn_forward, stride1=STRIDE))
    value, advantages = fwd(params, x)
    value = jax.block_until_ready(value)
    advantages = jax.block_until_ready(advantages)

    assert value.shape == (B, 1) and advantages.shape == (B, N_ACTIONS)
    assert value.dtype == jnp.float32 and advantages.dtype == jnp.float32

    # bf16 weights / f32 accumulation -> compare against the f32 reference at 2e-2.
    v_ref, a_ref = reference_forward(params, x, STRIDE)
    assert jnp.allclose(value, v_ref, atol=2e-2, rtol=2e-2)
    assert jnp.allclose(advantages, a_ref, atol=2e-2, rtol=2e-2)

    print("KERNEL_OK")
</pallas_src>

<mosaic_0001>
module attributes {stable_mosaic.version = 11 : i64} {
  func.func @_fused_dqn_kernel(%arg0: i32, %arg1: memref<162x256xbf16, #tpu.memory_space<vmem>>, %arg2: memref<256x256xbf16, #tpu.memory_space<vmem>>, %arg3: memref<1x256xf32, #tpu.memory_space<vmem>>, %arg4: memref<256x32xbf16, #tpu.memory_space<vmem>>, %arg5: memref<1x32xf32, #tpu.memory_space<vmem>>, %arg6: memref<2592x128xbf16, #tpu.memory_space<vmem>>, %arg7: memref<1x128xf32, #tpu.memory_space<vmem>>, %arg8: memref<128x128xbf16, #tpu.memory_space<vmem>>, %arg9: memref<1x128xf32, #tpu.memory_space<vmem>>, %arg10: memref<2x128xf32, #tpu.memory_space<vmem>>, %arg11: memref<162x256xbf16, #tpu.memory_space<vmem>>, %arg12: memref<162x32xf32, #tpu.memory_space<vmem>>, %arg13: memref<2x2592xf32, #tpu.memory_space<vmem>>) attributes {dimension_semantics = [#tpu.dimension_semantics<arbitrary>], iteration_bounds = array<i64: 4>, scalar_prefetch = 0 : i64, scratch_operands = 3 : i64, tpu.core_type = #tpu.core_type<tc>, window_params = [{pipeline_mode = #tpu.pipeline_mode<synchronous>, transform_indices = @transform_0, window_bounds = array<i64: 162, 256>}, {pipeline_mode = #tpu.pipeline_mode<synchronous>, transform_indices = @transform_1, window_bounds = array<i64: 256, 256>}, {pipeline_mode = #tpu.pipeline_mode<synchronous>, transform_indices = @transform_2, window_bounds = array<i64: 1, 256>}, {pipeline_mode = #tpu.pipeline_mode<synchronous>, transform_indices = @transform_3, window_bounds = array<i64: 256, 32>}, {pipeline_mode = #tpu.pipeline_mode<synchronous>, transform_indices = @transform_4, window_bounds = array<i64: 1, 32>}, {transform_indices = @transform_5, window_bounds = array<i64: 2592, 128>}, {transform_indices = @transform_6, window_bounds = array<i64: 1, 128>}, {transform_indices = @transform_7, window_bounds = array<i64: 128, 128>}, {pipeline_mode = #tpu.pipeline_mode<synchronous>, transform_indices = @transform_8, window_bounds = array<i64: 1, 128>}, {pipeline_mode = #tpu.pipeline_mode<synchronous>, transform_indices = @transform_9, window_bounds = array<i64: 2, 128>}]} {
    %c0_i32 = arith.constant 0 : i32
    %0 = arith.cmpi eq, %arg0, %c0_i32 : i32
    %1 = arith.extui %0 : i1 to i32
    %c0_i32_0 = arith.constant 0 : i32
    %2 = arith.cmpi ne, %1, %c0_i32_0 : i32
    scf.if %2 {
      %c0_14 = arith.constant 0 : index
      %c0_15 = arith.constant 0 : index
      %18 = vector.load %arg1[%c0_14, %c0_15] : memref<162x256xbf16, #tpu.memory_space<vmem>>, vector<162x256xbf16>
      %c0_16 = arith.constant 0 : index
      %c0_17 = arith.constant 0 : index
      %19 = vector.load %arg2[%c0_16, %c0_17] : memref<256x256xbf16, #tpu.memory_space<vmem>>, vector<256x256xbf16>
      %cst_18 = arith.constant dense<0.000000e+00> : vector<162x256xf32>
      %20 = tpu.matmul %18, %19, %cst_18 {dimension_numbers = #tpu.dot_dimension_numbers<[1], [0], [0], [1], [0, 0, 1, 1], [], []>} : vector<162x256xbf16>, vector<256x256xbf16>, vector<162x256xf32> -> vector<162x256xf32>
      %c0_19 = arith.constant 0 : index
      %c0_20 = arith.constant 0 : index
      %21 = vector.load %arg3[%c0_19, %c0_20] : memref<1x256xf32, #tpu.memory_space<vmem>>, vector<1x256xf32>
      %22 = vector.broadcast %21 : vector<1x256xf32> to vector<162x256xf32>
      %23 = arith.addf %20, %22 : vector<162x256xf32>
      %cst_21 = arith.constant 0.000000e+00 : f32
      %24 = vector.broadcast %cst_21 : f32 to vector<162x256xf32>
      %25 = arith.maximumf %23, %24 : vector<162x256xf32>
      %26 = arith.truncf %25 : vector<162x256xf32> to vector<162x256xbf16>
      %c0_22 = arith.constant 0 : index
      %c0_23 = arith.constant 0 : index
      %27 = vector.load %arg11[%c0_22, %c0_23] : memref<162x256xbf16, #tpu.memory_space<vmem>>, vector<162x256xbf16>
      tpu.vector_store %arg11[%c0_22, %c0_23], %26 {strides = array<i32>} : memref<162x256xbf16, #tpu.memory_space<vmem>>, vector<162x256xbf16>,
      %c0_24 = arith.constant 0 : index
      %c0_25 = arith.constant 0 : index
      %28 = vector.load %arg11[%c0_24, %c0_25] : memref<162x256xbf16, #tpu.memory_space<vmem>>, vector<162x256xbf16>
      %c0_26 = arith.constant 0 : index
      %c0_27 = arith.constant 0 : index
      %29 = vector.load %arg4[%c0_26, %c0_27] : memref<256x32xbf16, #tpu.memory_space<vmem>>, vector<256x32xbf16>
      %cst_28 = arith.constant dense<0.000000e+00> : vector<162x32xf32>
      %30 = tpu.matmul %28, %29, %cst_28 {dimension_numbers = #tpu.dot_dimension_numbers<[1], [0], [0], [1], [0, 0, 1, 1], [], []>} : vector<162x256xbf16>, vector<256x32xbf16>, vector<162x32xf32> -> vector<162x32xf32>
      %c0_29 = arith.constant 0 : index
      %c0_30 = arith.constant 0 : index
      %31 = vector.load %arg5[%c0_29, %c0_30] : memref<1x32xf32, #tpu.memory_space<vmem>>, vector<1x32xf32>
      %32 = vector.broadcast %31 : vector<1x32xf32> to vector<162x32xf32>
      %33 = arith.addf %30, %32 : vector<162x32xf32>
      %cst_31 = arith.constant 0.000000e+00 : f32
      %34 = vector.broadcast %cst_31 : f32 to vector<162x32xf32>
      %35 = arith.maximumf %33, %34 : vector<162x32xf32>
      %c0_32 = arith.constant 0 : index
      %c0_33 = arith.constant 0 : index
      %36 = vector.load %arg12[%c0_32, %c0_33] : memref<162x32xf32, #tpu.memory_space<vmem>>, vector<162x32xf32>
      tpu.vector_store %arg12[%c0_32, %c0_33], %35 {strides = array<i32>} : memref<162x32xf32, #tpu.memory_space<vmem>>, vector<162x32xf32>,
      %c0_34 = arith.constant 0 : index
      %c0_35 = arith.constant 0 : index
      %37 = vector.load %arg12[%c0_34, %c0_35] : memref<162x32xf32, #tpu.memory_space<vmem>>, vector<2x32xf32>
      %c0_36 = arith.constant 0 : index
      %c0_37 = arith.constant 0 : index
      %38 = vector.load %arg13[%c0_36, %c0_37] : memref<2x2592xf32, #tpu.memory_space<vmem>>, vector<2x32xf32>
      tpu.vector_store %arg13[%c0_36, %c0_37], %37 {strides = array<i32>} : memref<2x2592xf32, #tpu.memory_space<vmem>>, vector<2x32xf32>,
      %c2 = arith.constant 2 : index
      %c0_38 = arith.constant 0 : index
      %39 = vector.load %arg12[%c2, %c0_38] : memref<162x32xf32, #tpu.memory_space<vmem>>, vector<2x32xf32>
      %c0_39 = arith.constant 0 : index
      %c32 = arith.constant 32 : index
      %40 = vector.load %arg13[%c0_39, %c32] : memref<2x2592xf32, #tpu.memory_space<vmem>>, vector<2x32xf32>
      tpu.vector_store %arg13[%c0_39, %c32], %39 {strides = array<i32>} : memref<2x2592xf32, #tpu.memory_space<vmem>>, vector<2x32xf32>,
      %c4 = arith.constant 4 : index
      %c0_40 = arith.constant 0 : index
      %41 = vector.load %arg12[%c4, %c0_40] : memref<162x32xf32, #tpu.memory_space<vmem>>, vector<2x32xf32>
      %c0_41 = arith.constant 0 : index
      %c64 = arith.constant 64 : index
      %42 = vector.load %arg13[%c0_41, %c64] : memref<2x2592xf32, #tpu.memory_space<vmem>>, vector<2x32xf32>
      tpu.vector_store %arg13[%c0_41, %c64], %41 {strides = array<i32>} : memref<2x2592xf32, #tpu.memory_space<vmem>>, vector<2x32xf32>,
      %c6 = arith.constant 6 : index
      %c0_42 = arith.constant 0 : index
      %43 = vector.load %arg12[%c6, %c0_42] : memref<162x32xf32, #tpu.memory_space<vmem>>, vector<2x32xf32>
      %c0_43 = arith.constant 0 : index
      %c96 = arith.constant 96 : index
      %44 = vector.load %arg13[%c0_43, %c96] : memref<2x2592xf32, #tpu.memory_space<vmem>>, vector<2x32xf32>
      tpu.vector_store %arg13[%c0_43, %c96], %43 {strides = array<i32>} : memref<2x2592xf32, #tpu.memory_space<vmem>>, vector<2x32xf32>,
      %c8 = arith.constant 8 : index
      %c0_44 = arith.constant 0 : index
      %45 = vector.load %arg12[%c8, %c0_44] : memref<162x32xf32, #tpu.memory_space<vmem>>, vector<2x32xf32>
      %c0_45 = arith.constant 0 : index
      %c128 = arith.constant 128 : index
      %46 = vector.load %arg13[%c0_45, %c128] : memref<2x2592xf32, #tpu.memory_space<vmem>>, vector<2x32xf32>
      tpu.vector_store %arg13[%c0_45, %c128], %45 {strides = array<i32>} : memref<2x2592xf32, #tpu.memory_space<vmem>>, vector<2x32xf32>,
      %c10 = arith.constant 10 : index
      %c0_46 = arith.constant 0 : index
      %47 = vector.load %arg12[%c10, %c0_46] : memref<162x32xf32, #tpu.memory_space<vmem>>, vector<2x32xf32>
      %c0_47 = arith.constant 0 : index
      %c160 = arith.constant 160 : index
      %48 = vector.load %arg13[%c0_47, %c160] : memref<2x2592xf32, #tpu.memory_space<vmem>>, vector<2x32xf32>
      tpu.vector_store %arg13[%c0_47, %c160], %47 {strides = array<i32>} : memref<2x2592xf32, #tpu.memory_space<vmem>>, vector<2x32xf32>,
      %c12 = arith.constant 12 : index
      %c0_48 = arith.constant 0 : index
      %49 = vector.load %arg12[%c12, %c0_48] : memref<162x32xf32, #tpu.memory_space<vmem>>, vector<2x32xf32>
      %c0_49 = arith.constant 0 : index
      %c192 = arith.constant 192 : index
      %50 = vector.load %arg13[%c0_49, %c192] : memref<2x2592xf32, #tpu.memory_space<vmem>>, vector<2x32xf32>
      tpu.vector_store %arg13[%c0_49, %c192], %49 {strides = array<i32>} : memref<2x2592xf32, #tpu.memory_space<vmem>>, vector<2x32xf32>,
      %c14 = arith.constant 14 : index
      %c0_50 = arith.constant 0 : index
      %51 = vector.load %arg12[%c14, %c0_50] : memref<162x32xf32, #tpu.memory_space<vmem>>, vector<2x32xf32>
      %c0_51 = arith.constant 0 : index
      %c224 = arith.constant 224 : index
      %52 = vector.load %arg13[%c0_51, %c224] : memref<2x2592xf32, #tpu.memory_space<vmem>>, vector<2x32xf32>
      tpu.vector_store %arg13[%c0_51, %c224], %51 {strides = array<i32>} : memref<2x2592xf32, #tpu.memory_space<vmem>>, vector<2x32xf32>,
      %c16 = arith.constant 16 : index
      %c0_52 = arith.constant 0 : index
      %53 = vector.load %arg12[%c16, %c0_52] : memref<162x32xf32, #tpu.memory_space<vmem>>, vector<2x32xf32>
      %c0_53 = arith.constant 0 : index
      %c256 = arith.constant 256 : index
      %54 = vector.load %arg13[%c0_53, %c256] : memref<2x2592xf32, #tpu.memory_space<vmem>>, vector<2x32xf32>
      tpu.vector_store %arg13[%c0_53, %c256], %53 {strides = array<i32>} : memref<2x2592xf32, #tpu.memory_space<vmem>>, vector<2x32xf32>,
      %c18 = arith.constant 18 : index
      %c0_54 = arith.constant 0 : index
      %55 = vector.load %arg12[%c18, %c0_54] : memref<162x32xf32, #tpu.memory_space<vmem>>, vector<2x32xf32>
      %c0_55 = arith.constant 0 : index
      %c288 = arith.constant 288 : index
      %56 = vector.load %arg13[%c0_55, %c288] : memref<2x2592xf32, #tpu.memory_space<vmem>>, vector<2x32xf32>
      tpu.vector_store %arg13[%c0_55, %c288], %55 {strides = array<i32>} : memref<2x2592xf32, #tpu.memory_space<vmem>>, vector<2x32xf32>,
      %c20 = arith.constant 20 : index
      %c0_56 = arith.constant 0 : index
      %57 = vector.load %arg12[%c20, %c0_56] : memref<162x32xf32, #tpu.memory_space<vmem>>, vector<2x32xf32>
      %c0_57 = arith.constant 0 : index
      %c320 = arith.constant 320 : index
      %58 = vector.load %arg13[%c0_57, %c320] : memref<2x2592xf32, #tpu.memory_space<vmem>>, vector<2x32xf32>
      tpu.vector_store %arg13[%c0_57, %c320], %57 {strides = array<i32>} : memref<2x2592xf32, #tpu.memory_space<vmem>>, vector<2x32xf32>,
      %c22 = arith.constant 22 : index
      %c0_58 = arith.constant 0 : index
      %59 = vector.load %arg12[%c22, %c0_58] : memref<162x32xf32, #tpu.memory_space<vmem>>, vector<2x32xf32>
      %c0_59 = arith.constant 0 : index
      %c352 = arith.constant 352 : index
      %60 = vector.load %arg13[%c0_59, %c352] : memref<2x2592xf32, #tpu.memory_space<vmem>>, vector<2x32xf32>
      tpu.vector_store %arg13[%c0_59, %c352], %59 {strides = array<i32>} : memref<2x2592xf32, #tpu.memory_space<vmem>>, vector<2x32xf32>,
      %c24 = arith.constant 24 : index
      %c0_60 = arith.constant 0 : index
      %61 = vector.load %arg12[%c24, %c0_60] : memref<162x32xf32, #tpu.memory_space<vmem>>, vector<2x32xf32>
      %c0_61 = arith.constant 0 : index
      %c384 = arith.constant 384 : index
      %62 = vector.load %arg13[%c0_61, %c384] : memref<2x2592xf32, #tpu.memory_space<vmem>>, vector<2x32xf32>
      tpu.vector_store %arg13[%c0_61, %c384], %61 {strides = array<i32>} : memref<2x2592xf32, #tpu.memory_space<vmem>>, vector<2x32xf32>,
      %c26 = arith.constant 26 : index
      %c0_62 = arith.constant 0 : index
      %63 = vector.load %arg12[%c26, %c0_62] : memref<162x32xf32, #tpu.memory_space<vmem>>, vector<2x32xf32>
      %c0_63 = arith.constant 0 : index
      %c416 = arith.constant 416 : index
      %64 = vector.load %arg13[%c0_63, %c416] : memref<2x2592xf32, #tpu.memory_space<vmem>>, vector<2x32xf32>
      tpu.vector_store %arg13[%c0_63, %c416], %63 {strides = array<i32>} : memref<2x2592xf32, #tpu.memory_space<vmem>>, vector<2x32xf32>,
      %c28 = arith.constant 28 : index
      %c0_64 = arith.constant 0 : index
      %65 = vector.load %arg12[%c28, %c0_64] : memref<162x32xf32, #tpu.memory_space<vmem>>, vector<2x32xf32>
      %c0_65 = arith.constant 0 : index
      %c448 = arith.constant 448 : index
      %66 = vector.load %arg13[%c0_65, %c448] : memref<2x2592xf32, #tpu.memory_space<vmem>>, vector<2x32xf32>
      tpu.vector_store %arg13[%c0_65, %c448], %65 {strides = array<i32>} : memref<2x2592xf32, #tpu.memory_space<vmem>>, vector<2x32xf32>,
      %c30 = arith.constant 30 : index
      %c0_66 = arith.constant 0 : index
      %67 = vector.load %arg12[%c30, %c0_66] : memref<162x32xf32, #tpu.memory_space<vmem>>, vector<2x32xf32>
      %c0_67 = arith.constant 0 : index
      %c480 = arith.constant 480 : index
      %68 = vector.load %arg13[%c0_67, %c480] : memref<2x2592xf32, #tpu.memory_space<vmem>>, vector<2x32xf32>
      tpu.vector_store %arg13[%c0_67, %c480], %67 {strides = array<i32>} : memref<2x2592xf32, #tpu.memory_space<vmem>>, vector<2x32xf32>,
      %c32_68 = arith.constant 32 : index
      %c0_69 = arith.constant 0 : index
      %69 = vector.load %arg12[%c32_68, %c0_69] : memref<162x32xf32, #tpu.memory_space<vmem>>, vector<2x32xf32>
      %c0_70 = arith.constant 0 : index
      %c512 = arith.constant 512 : index
      %70 = vector.load %arg13[%c0_70, %c512] : memref<2x2592xf32, #tpu.memory_space<vmem>>, vector<2x32xf32>
      tpu.vector_store %arg13[%c0_70, %c512], %69 {strides = array<i32>} : memref<2x2592xf32, #tpu.memory_space<vmem>>, vector<2x32xf32>,
      %c34 = arith.constant 34 : index
      %c0_71 = arith.constant 0 : index
      %71 = vector.load %arg12[%c34, %c0_71] : memref<162x32xf32, #tpu.memory_space<vmem>>, vector<2x32xf32>
      %c0_72 = arith.constant 0 : index
      %c544 = arith.constant 544 : index
      %72 = vector.load %arg13[%c0_72, %c544] : memref<2x2592xf32, #tpu.memory_space<vmem>>, vector<2x32xf32>
      tpu.vector_store %arg13[%c0_72, %c544], %71 {strides = array<i32>} : memref<2x2592xf32, #tpu.memory_space<vmem>>, vector<2x32xf32>,
      %c36 = arith.constant 36 : index
      %c0_73 = arith.constant 0 : index
      %73 = vector.load %arg12[%c36, %c0_73] : memref<162x32xf32, #tpu.memory_space<vmem>>, vector<2x32xf32>
      %c0_74 = arith.constant 0 : index
      %c576 = arith.constant 576 : index
      %74 = vector.load %arg13[%c0_74, %c576] : memref<2x2592xf32, #tpu.memory_space<vmem>>, vector<2x32xf32>
      tpu.vector_store %arg13[%c0_74, %c576], %73 {strides = array<i32>} : memref<2x2592xf32, #tpu.memory_space<vmem>>, vector<2x32xf32>,
      %c38 = arith.constant 38 : index
      %c0_75 = arith.constant 0 : index
      %75 = vector.load %arg12[%c38, %c0_75] : memref<162x32xf32, #tpu.memory_space<vmem>>, vector<2x32xf32>
      %c0_76 = arith.constant 0 : index
      %c608 = arith.constant 608 : index
      %76 = vector.load %arg13[%c0_76, %c608] : memref<2x2592xf32, #tpu.memory_space<vmem>>, vector<2x32xf32>
      tpu.vector_store %arg13[%c0_76, %c608], %75 {strides = array<i32>} : memref<2x2592xf32, #tpu.memory_space<vmem>>, vector<2x32xf32>,
      %c40 = arith.constant 40 : index
      %c0_77 = arith.constant 0 : index
      %77 = vector.load %arg12[%c40, %c0_77] : memref<162x32xf32, #tpu.memory_space<vmem>>, vector<2x32xf32>
      %c0_78 = arith.constant 0 : index
      %c640 = arith.constant 640 : index
      %78 = vector.load %arg13[%c0_78, %c640] : memref<2x2592xf32, #tpu.memory_space<vmem>>, vector<2x32xf32>
      tpu.vector_store %arg13[%c0_78, %c640], %77 {strides = array<i32>} : memref<2x2592xf32, #tpu.memory_space<vmem>>, vector<2x32xf32>,
      %c42 = arith.constant 42 : index
      %c0_79 = arith.constant 0 : index
      %79 = vector.load %arg12[%c42, %c0_79] : memref<162x32xf32, #tpu.memory_space<vmem>>, vector<2x32xf32>
      %c0_80 = arith.constant 0 : index
      %c672 = arith.constant 672 : index
      %80 = vector.load %arg13[%c0_80, %c672] : memref<2x2592xf32, #tpu.memory_space<vmem>>, vector<2x32xf32>
      tpu.vector_store %arg13[%c0_80, %c672], %79 {strides = array<i32>} : memref<2x2592xf32, #tpu.memory_space<vmem>>, vector<2x32xf32>,
      %c44 = arith.constant 44 : index
      %c0_81 = arith.constant 0 : index
      %81 = vector.load %arg12[%c44, %c0_81] : memref<162x32xf32, #tpu.memory_space<vmem>>, vector<2x32xf32>
      %c0_82 = arith.constant 0 : index
      %c704 = arith.constant 704 : index
      %82 = vector.load %arg13[%c0_82, %c704] : memref<2x2592xf32, #tpu.memory_space<vmem>>, vector<2x32xf32>
      tpu.vector_store %arg13[%c0_82, %c704], %81 {strides = array<i32>} : memref<2x2592xf32, #tpu.memory_space<vmem>>, vector<2x32xf32>,
      %c46 = arith.constant 46 : index
      %c0_83 = arith.constant 0 : index
      %83 = vector.load %arg12[%c46, %c0_83] : memref<162x32xf32, #tpu.memory_space<vmem>>, vector<2x32xf32>
      %c0_84 = arith.constant 0 : index
      %c736 = arith.constant 736 : index
      %84 = vector.load %arg13[%c0_84, %c736] : memref<2x2592xf32, #tpu.memory_space<vmem>>, vector<2x32xf32>
      tpu.vector_store %arg13[%c0_84, %c736], %83 {strides = array<i32>} : memref<2x2592xf32, #tpu.memory_space<vmem>>, vector<2x32xf32>,
      %c48 = arith.constant 48 : index
      %c0_85 = arith.constant 0 : index
      %85 = vector.load %arg12[%c48, %c0_85] : memref<162x32xf32, #tpu.memory_space<vmem>>, vector<2x32xf32>
      %c0_86 = arith.constant 0 : index
      %c768 = arith.constant 768 : index
      %86 = vector.load %arg13[%c0_86, %c768] : memref<2x2592xf32, #tpu.memory_space<vmem>>, vector<2x32xf32>
      tpu.vector_store %arg13[%c0_86, %c768], %85 {strides = array<i32>} : memref<2x2592xf32, #tpu.memory_space<vmem>>, vector<2x32xf32>,
      %c50 = arith.constant 50 : index
      %c0_87 = arith.constant 0 : index
      %87 = vector.load %arg12[%c50, %c0_87] : memref<162x32xf32, #tpu.memory_space<vmem>>, vector<2x32xf32>
      %c0_88 = arith.constant 0 : index
      %c800 = arith.constant 800 : index
      %88 = vector.load %arg13[%c0_88, %c800] : memref<2x2592xf32, #tpu.memory_space<vmem>>, vector<2x32xf32>
      tpu.vector_store %arg13[%c0_88, %c800], %87 {strides = array<i32>} : memref<2x2592xf32, #tpu.memory_space<vmem>>, vector<2x32xf32>,
      %c52 = arith.constant 52 : index
      %c0_89 = arith.constant 0 : index
      %89 = vector.load %arg12[%c52, %c0_89] : memref<162x32xf32, #tpu.memory_space<vmem>>, vector<2x32xf32>
      %c0_90 = arith.constant 0 : index
      %c832 = arith.constant 832 : index
      %90 = vector.load %arg13[%c0_90, %c832] : memref<2x2592xf32, #tpu.memory_space<vmem>>, vector<2x32xf32>
      tpu.vector_store %arg13[%c0_90, %c832], %89 {strides = array<i32>} : memref<2x2592xf32, #tpu.memory_space<vmem>>, vector<2x32xf32>,
      %c54 = arith.constant 54 : index
      %c0_91 = arith.constant 0 : index
      %91 = vector.load %arg12[%c54, %c0_91] : memref<162x32xf32, #tpu.memory_space<vmem>>, vector<2x32xf32>
      %c0_92 = arith.constant 0 : index
      %c864 = arith.constant 864 : index
      %92 = vector.load %arg13[%c0_92, %c864] : memref<2x2592xf32, #tpu.memory_space<vmem>>, vector<2x32xf32>
      tpu.vector_store %arg13[%c0_92, %c864], %91 {strides = array<i32>} : memref<2x2592xf32, #tpu.memory_space<vmem>>, vector<2x32xf32>,
      %c56 = arith.constant 56 : index
      %c0_93 = arith.constant 0 : index
      %93 = vector.load %arg12[%c56, %c0_93] : memref<162x32xf32, #tpu.memory_space<vmem>>, vector<2x32xf32>
      %c0_94 = arith.constant 0 : index
      %c896 = arith.constant 896 : index
      %94 = vector.load %arg13[%c0_94, %c896] : memref<2x2592xf32, #tpu.memory_space<vmem>>, vector<2x32xf32>
      tpu.vector_store %arg13[%c0_94, %c896], %93 {strides = array<i32>} : memref<2x2592xf32, #tpu.memory_space<vmem>>, vector<2x32xf32>,
      %c58 = arith.constant 58 : index
      %c0_95 = arith.constant 0 : index
      %95 = vector.load %arg12[%c58, %c0_95] : memref<162x32xf32, #tpu.memory_space<vmem>>, vector<2x32xf32>
      %c0_96 = arith.constant 0 : index
      %c928 = arith.constant 928 : index
      %96 = vector.load %arg13[%c0_96, %c928] : memref<2x2592xf32, #tpu.memory_space<vmem>>, vector<2x32xf32>
      tpu.vector_store %arg13[%c0_96, %c928], %95 {strides = array<i32>} : memref<2x2592xf32, #tpu.memory_space<vmem>>, vector<2x32xf32>,
      %c60 = arith.constant 60 : index
      %c0_97 = arith.constant 0 : index
      %97 = vector.load %arg12[%c60, %c0_97] : memref<162x32xf32, #tpu.memory_space<vmem>>, vector<2x32xf32>
      %c0_98 = arith.constant 0 : index
      %c960 = arith.constant 960 : index
      %98 = vector.load %arg13[%c0_98, %c960] : memref<2x2592xf32, #tpu.memory_space<vmem>>, vector<2x32xf32>
      tpu.vector_store %arg13[%c0_98, %c960], %97 {strides = array<i32>} : memref<2x2592xf32, #tpu.memory_space<vmem>>, vector<2x32xf32>,
      %c62 = arith.constant 62 : index
      %c0_99 = arith.constant 0 : index
      %99 = vector.load %arg12[%c62, %c0_99] : memref<162x32xf32, #tpu.memory_space<vmem>>, vector<2x32xf32>
      %c0_100 = arith.constant 0 : index
      %c992 = arith.constant 992 : index
      %100 = vector.load %arg13[%c0_100, %c992] : memref<2x2592xf32, #tpu.memory_space<vmem>>, vector<2x32xf32>
      tpu.vector_store %arg13[%c0_100, %c992], %99 {strides = array<i32>} : memref<2x2592xf32, #tpu.memory_space<vmem>>, vector<2x32xf32>,
      %c64_101 = arith.constant 64 : index
      %c0_102 = arith.constant 0 : index
      %101 = vector.load %arg12[%c64_101, %c0_102] : memref<162x32xf32, #tpu.memory_space<vmem>>, vector<2x32xf32>
      %c0_103 = arith.constant 0 : index
      %c1024 = arith.constant 1024 : index
      %102 = vector.load %arg13[%c0_103, %c1024] : memref<2x2592xf32, #tpu.memory_space<vmem>>, vector<2x32xf32>
      tpu.vector_store %arg13[%c0_103, %c1024], %101 {strides = array<i32>} : memref<2x2592xf32, #tpu.memory_space<vmem>>, vector<2x32xf32>,
      %c66 = arith.constant 66 : index
      %c0_104 = arith.constant 0 : index
      %103 = vector.load %arg12[%c66, %c0_104] : memref<162x32xf32, #tpu.memory_space<vmem>>, vector<2x32xf32>
      %c0_105 = arith.constant 0 : index
      %c1056 = arith.constant 1056 : index
      %104 = vector.load %arg13[%c0_105, %c1056] : memref<2x2592xf32, #tpu.memory_space<vmem>>, vector<2x32xf32>
      tpu.vector_store %arg13[%c0_105, %c1056], %103 {strides = array<i32>} : memref<2x2592xf32, #tpu.memory_space<vmem>>, vector<2x32xf32>,
      %c68 = arith.constant 68 : index
      %c0_106 = arith.constant 0 : index
      %105 = vector.load %arg12[%c68, %c0_106] : memref<162x32xf32, #tpu.memory_space<vmem>>, vector<2x32xf32>
      %c0_107 = arith.constant 0 : index
      %c1088 = arith.constant 1088 : index
      %106 = vector.load %arg13[%c0_107, %c1088] : memref<2x2592xf32, #tpu.memory_space<vmem>>, vector<2x32xf32>
      tpu.vector_store %arg13[%c0_107, %c1088], %105 {strides = array<i32>} : memref<2x2592xf32, #tpu.memory_space<vmem>>, vector<2x32xf32>,
      %c70 = arith.constant 70 : index
      %c0_108 = arith.constant 0 : index
      %107 = vector.load %arg12[%c70, %c0_108] : memref<162x32xf32, #tpu.memory_space<vmem>>, vector<2x32xf32>
      %c0_109 = arith.constant 0 : index
      %c1120 = arith.constant 1120 : index
      %108 = vector.load %arg13[%c0_109, %c1120] : memref<2x2592xf32, #tpu.memory_space<vmem>>, vector<2x32xf32>
      tpu.vector_store %arg13[%c0_109, %c1120], %107 {strides = array<i32>} : memref<2x2592xf32, #tpu.memory_space<vmem>>, vector<2x32xf32>,
      %c72 = arith.constant 72 : index
      %c0_110 = arith.constant 0 : index
      %109 = vector.load %arg12[%c72, %c0_110] : memref<162x32xf32, #tpu.memory_space<vmem>>, vector<2x32xf32>
      %c0_111 = arith.constant 0 : index
      %c1152 = arith.constant 1152 : index
      %110 = vector.load %arg13[%c0_111, %c1152] : memref<2x2592xf32, #tpu.memory_space<vmem>>, vector<2x32xf32>
      tpu.vector_store %arg13[%c0_111, %c1152], %109 {strides = array<i32>} : memref<2x2592xf32, #tpu.memory_space<vmem>>, vector<2x32xf32>,
      %c74 = arith.constant 74 : index
      %c0_112 = arith.constant 0 : index
      %111 = vector.load %arg12[%c74, %c0_112] : memref<162x32xf32, #tpu.memory_space<vmem>>, vector<2x32xf32>
      %c0_113 = arith.constant 0 : index
      %c1184 = arith.constant 1184 : index
      %112 = vector.load %arg13[%c0_113, %c1184] : memref<2x2592xf32, #tpu.memory_space<vmem>>, vector<2x32xf32>
      tpu.vector_store %arg13[%c0_113, %c1184], %111 {strides = array<i32>} : memref<2x2592xf32, #tpu.memory_space<vmem>>, vector<2x32xf32>,
      %c76 = arith.constant 76 : index
      %c0_114 = arith.constant 0 : index
      %113 = vector.load %arg12[%c76, %c0_114] : memref<162x32xf32, #tpu.memory_space<vmem>>, vector<2x32xf32>
      %c0_115 = arith.constant 0 : index
      %c1216 = arith.constant 1216 : index
      %114 = vector.load %arg13[%c0_115, %c1216] : memref<2x2592xf32, #tpu.memory_space<vmem>>, vector<2x32xf32>
      tpu.vector_store %arg13[%c0_115, %c1216], %113 {strides = array<i32>} : memref<2x2592xf32, #tpu.memory_space<vmem>>, vector<2x32xf32>,
      %c78 = arith.constant 78 : index
      %c0_116 = arith.constant 0 : index
      %115 = vector.load %arg12[%c78, %c0_116] : memref<162x32xf32, #tpu.memory_space<vmem>>, vector<2x32xf32>
      %c0_117 = arith.constant 0 : index
      %c1248 = arith.constant 1248 : index
      %116 = vector.load %arg13[%c0_117, %c1248] : memref<2x2592xf32, #tpu.memory_space<vmem>>, vector<2x32xf32>
      tpu.vector_store %arg13[%c0_117, %c1248], %115 {strides = array<i32>} : memref<2x2592xf32, #tpu.memory_space<vmem>>, vector<2x32xf32>,
      %c80 = arith.constant 80 : index
      %c0_118 = arith.constant 0 : index
      %117 = vector.load %arg12[%c80, %c0_118] : memref<162x32xf32, #tpu.memory_space<vmem>>, vector<2x32xf32>
      %c0_119 = arith.constant 0 : index
      %c1280 = arith.constant 1280 : index
      %118 = vector.load %arg13[%c0_119, %c1280] : memref<2x2592xf32, #tpu.memory_space<vmem>>, vector<2x32xf32>
      tpu.vector_store %arg13[%c0_119, %c1280], %117 {strides = array<i32>} : memref<2x2592xf32, #tpu.memory_space<vmem>>, vector<2x32xf32>,
      %c82 = arith.constant 82 : index
      %c0_120 = arith.constant 0 : index
      %119 = vector.load %arg12[%c82, %c0_120] : memref<162x32xf32, #tpu.memory_space<vmem>>, vector<2x32xf32>
      %c0_121 = arith.constant 0 : index
      %c1312 = arith.constant 1312 : index
      %120 = vector.load %arg13[%c0_121, %c1312] : memref<2x2592xf32, #tpu.memory_space<vmem>>, vector<2x32xf32>
      tpu.vector_store %arg13[%c0_121, %c1312], %119 {strides = array<i32>} : memref<2x2592xf32, #tpu.memory_space<vmem>>, vector<2x32xf32>,
      %c84 = arith.constant 84 : index
      %c0_122 = arith.constant 0 : index
      %121 = vector.load %arg12[%c84, %c0_122] : memref<162x32xf32, #tpu.memory_space<vmem>>, vector<2x32xf32>
      %c0_123 = arith.constant 0 : index
      %c1344 = arith.constant 1344 : index
      %122 = vector.load %arg13[%c0_123, %c1344] : memref<2x2592xf32, #tpu.memory_space<vmem>>, vector<2x32xf32>
      tpu.vector_store %arg13[%c0_123, %c1344], %121 {strides = array<i32>} : memref<2x2592xf32, #tpu.memory_space<vmem>>, vector<2x32xf32>,
      %c86 = arith.constant 86 : index
      %c0_124 = arith.constant 0 : index
      %123 = vector.load %arg12[%c86, %c0_124] : memref<162x32xf32, #tpu.memory_space<vmem>>, vector<2x32xf32>
      %c0_125 = arith.constant 0 : index
      %c1376 = arith.constant 1376 : index
      %124 = vector.load %arg13[%c0_125, %c1376] : memref<2x2592xf32, #tpu.memory_space<vmem>>, vector<2x32xf32>
      tpu.vector_store %arg13[%c0_125, %c1376], %123 {strides = array<i32>} : memref<2x2592xf32, #tpu.memory_space<vmem>>, vector<2x32xf32>,
      %c88 = arith.constant 88 : index
      %c0_126 = arith.constant 0 : index
      %125 = vector.load %arg12[%c88, %c0_126] : memref<162x32xf32, #tpu.memory_space<vmem>>, vector<2x32xf32>
      %c0_127 = arith.constant 0 : index
      %c1408 = arith.constant 1408 : index
      %126 = vector.load %arg13[%c0_127, %c1408] : memref<2x2592xf32, #tpu.memory_space<vmem>>, vector<2x32xf32>
      tpu.vector_store %arg13[%c0_127, %c1408], %125 {strides = array<i32>} : memref<2x2592xf32, #tpu.memory_space<vmem>>, vector<2x32xf32>,
      %c90 = arith.constant 90 : index
      %c0_128 = arith.constant 0 : index
      %127 = vector.load %arg12[%c90, %c0_128] : memref<162x32xf32, #tpu.memory_space<vmem>>, vector<2x32xf32>
      %c0_129 = arith.constant 0 : index
      %c1440 = arith.constant 1440 : index
      %128 = vector.load %arg13[%c0_129, %c1440] : memref<2x2592xf32, #tpu.memory_space<vmem>>, vector<2x32xf32>
      tpu.vector_store %arg13[%c0_129, %c1440], %127 {strides = array<i32>} : memref<2x2592xf32, #tpu.memory_space<vmem>>, vector<2x32xf32>,
      %c92 = arith.constant 92 : index
      %c0_130 = arith.constant 0 : index
      %129 = vector.load %arg12[%c92, %c0_130] : memref<162x32xf32, #tpu.memory_space<vmem>>, vector<2x32xf32>
      %c0_131 = arith.constant 0 : index
      %c1472 = arith.constant 1472 : index
      %130 = vector.load %arg13[%c0_131, %c1472] : memref<2x2592xf32, #tpu.memory_space<vmem>>, vector<2x32xf32>
      tpu.vector_store %arg13[%c0_131, %c1472], %129 {strides = array<i32>} : memref<2x2592xf32, #tpu.memory_space<vmem>>, vector<2x32xf32>,
      %c94 = arith.constant 94 : index
      %c0_132 = arith.constant 0 : index
      %131 = vector.load %arg12[%c94, %c0_132] : memref<162x32xf32, #tpu.memory_space<vmem>>, vector<2x32xf32>
      %c0_133 = arith.constant 0 : index
      %c1504 = arith.constant 1504 : index
      %132 = vector.load %arg13[%c0_133, %c1504] : memref<2x2592xf32, #tpu.memory_space<vmem>>, vector<2x32xf32>
      tpu.vector_store %arg13[%c0_133, %c1504], %131 {strides = array<i32>} : memref<2x2592xf32, #tpu.memory_space<vmem>>, vector<2x32xf32>,
      %c96_134 = arith.constant 96 : index
      %c0_135 = arith.constant 0 : index
      %133 = vector.load %arg12[%c96_134, %c0_135] : memref<162x32xf32, #tpu.memory_space<vmem>>, vector<2x32xf32>
      %c0_136 = arith.constant 0 : index
      %c1536 = arith.constant 1536 : index
      %134 = vector.load %arg13[%c0_136, %c1536] : memref<2x2592xf32, #tpu.memory_space<vmem>>, vector<2x32xf32>
      tpu.vector_store %arg13[%c0_136, %c1536], %133 {strides = array<i32>} : memref<2x2592xf32, #tpu.memory_space<vmem>>, vector<2x32xf32>,
      %c98 = arith.constant 98 : index
      %c0_137 = arith.constant 0 : index
      %135 = vector.load %arg12[%c98, %c0_137] : memref<162x32xf32, #tpu.memory_space<vmem>>, vector<2x32xf32>
      %c0_138 = arith.constant 0 : index
      %c1568 = arith.constant 1568 : index
      %136 = vector.load %arg13[%c0_138, %c1568] : memref<2x2592xf32, #tpu.memory_space<vmem>>, vector<2x32xf32>
      tpu.vector_store %arg13[%c0_138, %c1568], %135 {strides = array<i32>} : memref<2x2592xf32, #tpu.memory_space<vmem>>, vector<2x32xf32>,
      %c100 = arith.constant 100 : index
      %c0_139 = arith.constant 0 : index
      %137 = vector.load %arg12[%c100, %c0_139] : memref<162x32xf32, #tpu.memory_space<vmem>>, vector<2x32xf32>
      %c0_140 = arith.constant 0 : index
      %c1600 = arith.constant 1600 : index
      %138 = vector.load %arg13[%c0_140, %c1600] : memref<2x2592xf32, #tpu.memory_space<vmem>>, vector<2x32xf32>
      tpu.vector_store %arg13[%c0_140, %c1600], %137 {strides = array<i32>} : memref<2x2592xf32, #tpu.memory_space<vmem>>, vector<2x32xf32>,
      %c102 = arith.constant 102 : index
      %c0_141 = arith.constant 0 : index
      %139 = vector.load %arg12[%c102, %c0_141] : memref<162x32xf32, #tpu.memory_space<vmem>>, vector<2x32xf32>
      %c0_142 = arith.constant 0 : index
      %c1632 = arith.constant 1632 : index
      %140 = vector.load %arg13[%c0_142, %c1632] : memref<2x2592xf32, #tpu.memory_space<vmem>>, vector<2x32xf32>
      tpu.vector_store %arg13[%c0_142, %c1632], %139 {strides = array<i32>} : memref<2x2592xf32, #tpu.memory_space<vmem>>, vector<2x32xf32>,
      %c104 = arith.constant 104 : index
      %c0_143 = arith.constant 0 : index
      %141 = vector.load %arg12[%c104, %c0_143] : memref<162x32xf32, #tpu.memory_space<vmem>>, vector<2x32xf32>
      %c0_144 = arith.constant 0 : index
      %c1664 = arith.constant 1664 : index
      %142 = vector.load %arg13[%c0_144, %c1664] : memref<2x2592xf32, #tpu.memory_space<vmem>>, vector<2x32xf32>
      tpu.vector_store %arg13[%c0_144, %c1664], %141 {strides = array<i32>} : memref<2x2592xf32, #tpu.memory_space<vmem>>, vector<2x32xf32>,
      %c106 = arith.constant 106 : index
      %c0_145 = arith.constant 0 : index
      %143 = vector.load %arg12[%c106, %c0_145] : memref<162x32xf32, #tpu.memory_space<vmem>>, vector<2x32xf32>
      %c0_146 = arith.constant 0 : index
      %c1696 = arith.constant 1696 : index
      %144 = vector.load %arg13[%c0_146, %c1696] : memref<2x2592xf32, #tpu.memory_space<vmem>>, vector<2x32xf32>
      tpu.vector_store %arg13[%c0_146, %c1696], %143 {strides = array<i32>} : memref<2x2592xf32, #tpu.memory_space<vmem>>, vector<2x32xf32>,
      %c108 = arith.constant 108 : index
      %c0_147 = arith.constant 0 : index
      %145 = vector.load %arg12[%c108, %c0_147] : memref<162x32xf32, #tpu.memory_space<vmem>>, vector<2x32xf32>
      %c0_148 = arith.constant 0 : index
      %c1728 = arith.constant 1728 : index
      %146 = vector.load %arg13[%c0_148, %c1728] : memref<2x2592xf32, #tpu.memory_space<vmem>>, vector<2x32xf32>
      tpu.vector_store %arg13[%c0_148, %c1728], %145 {strides = array<i32>} : memref<2x2592xf32, #tpu.memory_space<vmem>>, vector<2x32xf32>,
      %c110 = arith.constant 110 : index
      %c0_149 = arith.constant 0 : index
      %147 = vector.load %arg12[%c110, %c0_149] : memref<162x32xf32, #tpu.memory_space<vmem>>, vector<2x32xf32>
      %c0_150 = arith.constant 0 : index
      %c1760 = arith.constant 1760 : index
      %148 = vector.load %arg13[%c0_150, %c1760] : memref<2x2592xf32, #tpu.memory_space<vmem>>, vector<2x32xf32>
      tpu.vector_store %arg13[%c0_150, %c1760], %147 {strides = array<i32>} : memref<2x2592xf32, #tpu.memory_space<vmem>>, vector<2x32xf32>,
      %c112 = arith.constant 112 : index
      %c0_151 = arith.constant 0 : index
      %149 = vector.load %arg12[%c112, %c0_151] : memref<162x32xf32, #tpu.memory_space<vmem>>, vector<2x32xf32>
      %c0_152 = arith.constant 0 : index
      %c1792 = arith.constant 1792 : index
      %150 = vector.load %arg13[%c0_152, %c1792] : memref<2x2592xf32, #tpu.memory_space<vmem>>, vector<2x32xf32>
      tpu.vector_store %arg13[%c0_152, %c1792], %149 {strides = array<i32>} : memref<2x2592xf32, #tpu.memory_space<vmem>>, vector<2x32xf32>,
      %c114 = arith.constant 114 : index
      %c0_153 = arith.constant 0 : index
      %151 = vector.load %arg12[%c114, %c0_153] : memref<162x32xf32, #tpu.memory_space<vmem>>, vector<2x32xf32>
      %c0_154 = arith.constant 0 : index
      %c1824 = arith.constant 1824 : index
      %152 = vector.load %arg13[%c0_154, %c1824] : memref<2x2592xf32, #tpu.memory_space<vmem>>, vector<2x32xf32>
      tpu.vector_store %arg13[%c0_154, %c1824], %151 {strides = array<i32>} : memref<2x2592xf32, #tpu.memory_space<vmem>>, vector<2x32xf32>,
      %c116 = arith.constant 116 : index
      %c0_155 = arith.constant 0 : index
      %153 = vector.load %arg12[%c116, %c0_155] : memref<162x32xf32, #tpu.memory_space<vmem>>, vector<2x32xf32>
      %c0_156 = arith.constant 0 : index
      %c1856 = arith.constant 1856 : index
      %154 = vector.load %arg13[%c0_156, %c1856] : memref<2x2592xf32, #tpu.memory_space<vmem>>, vector<2x32xf32>
      tpu.vector_store %arg13[%c0_156, %c1856], %153 {strides = array<i32>} : memref<2x2592xf32, #tpu.memory_space<vmem>>, vector<2x32xf32>,
      %c118 = arith.constant 118 : index
      %c0_157 = arith.constant 0 : index
      %155 = vector.load %arg12[%c118, %c0_157] : memref<162x32xf32, #tpu.memory_space<vmem>>, vector<2x32xf32>
      %c0_158 = arith.constant 0 : index
      %c1888 = arith.constant 1888 : index
      %156 = vector.load %arg13[%c0_158, %c1888] : memref<2x2592xf32, #tpu.memory_space<vmem>>, vector<2x32xf32>
      tpu.vector_store %arg13[%c0_158, %c1888], %155 {strides = array<i32>} : memref<2x2592xf32, #tpu.memory_space<vmem>>, vector<2x32xf32>,
      %c120 = arith.constant 120 : index
      %c0_159 = arith.constant 0 : index
      %157 = vector.load %arg12[%c120, %c0_159] : memref<162x32xf32, #tpu.memory_space<vmem>>, vector<2x32xf32>
      %c0_160 = arith.constant 0 : index
      %c1920 = arith.constant 1920 : index
      %158 = vector.load %arg13[%c0_160, %c1920] : memref<2x2592xf32, #tpu.memory_space<vmem>>, vector<2x32xf32>
      tpu.vector_store %arg13[%c0_160, %c1920], %157 {strides = array<i32>} : memref<2x2592xf32, #tpu.memory_space<vmem>>, vector<2x32xf32>,
      %c122 = arith.constant 122 : index
      %c0_161 = arith.constant 0 : index
      %159 = vector.load %arg12[%c122, %c0_161] : memref<162x32xf32, #tpu.memory_space<vmem>>, vector<2x32xf32>
      %c0_162 = arith.constant 0 : index
      %c1952 = arith.constant 1952 : index
      %160 = vector.load %arg13[%c0_162, %c1952] : memref<2x2592xf32, #tpu.memory_space<vmem>>, vector<2x32xf32>
      tpu.vector_store %arg13[%c0_162, %c1952], %159 {strides = array<i32>} : memref<2x2592xf32, #tpu.memory_space<vmem>>, vector<2x32xf32>,
      %c124 = arith.constant 124 : index
      %c0_163 = arith.constant 0 : index
      %161 = vector.load %arg12[%c124, %c0_163] : memref<162x32xf32, #tpu.memory_space<vmem>>, vector<2x32xf32>
      %c0_164 = arith.constant 0 : index
      %c1984 = arith.constant 1984 : index
      %162 = vector.load %arg13[%c0_164, %c1984] : memref<2x2592xf32, #tpu.memory_space<vmem>>, vector<2x32xf32>
      tpu.vector_store %arg13[%c0_164, %c1984], %161 {strides = array<i32>} : memref<2x2592xf32, #tpu.memory_space<vmem>>, vector<2x32xf32>,
      %c126 = arith.constant 126 : index
      %c0_165 = arith.constant 0 : index
      %163 = vector.load %arg12[%c126, %c0_165] : memref<162x32xf32, #tpu.memory_space<vmem>>, vector<2x32xf32>
      %c0_166 = arith.constant 0 : index
      %c2016 = arith.constant 2016 : index
      %164 = vector.load %arg13[%c0_166, %c2016] : memref<2x2592xf32, #tpu.memory_space<vmem>>, vector<2x32xf32>
      tpu.vector_store %arg13[%c0_166, %c2016], %163 {strides = array<i32>} : memref<2x2592xf32, #tpu.memory_space<vmem>>, vector<2x32xf32>,
      %c128_167 = arith.constant 128 : index
      %c0_168 = arith.constant 0 : index
      %165 = vector.load %arg12[%c128_167, %c0_168] : memref<162x32xf32, #tpu.memory_space<vmem>>, vector<2x32xf32>
      %c0_169 = arith.constant 0 : index
      %c2048 = arith.constant 2048 : index
      %166 = vector.load %arg13[%c0_169, %c2048] : memref<2x2592xf32, #tpu.memory_space<vmem>>, vector<2x32xf32>
      tpu.vector_store %arg13[%c0_169, %c2048], %165 {strides = array<i32>} : memref<2x2592xf32, #tpu.memory_space<vmem>>, vector<2x32xf32>,
      %c130 = arith.constant 130 : index
      %c0_170 = arith.constant 0 : index
      %167 = vector.load %arg12[%c130, %c0_170] : memref<162x32xf32, #tpu.memory_space<vmem>>, vector<2x32xf32>
      %c0_171 = arith.constant 0 : index
      %c2080 = arith.constant 2080 : index
      %168 = vector.load %arg13[%c0_171, %c2080] : memref<2x2592xf32, #tpu.memory_space<vmem>>, vector<2x32xf32>
      tpu.vector_store %arg13[%c0_171, %c2080], %167 {strides = array<i32>} : memref<2x2592xf32, #tpu.memory_space<vmem>>, vector<2x32xf32>,
      %c132 = arith.constant 132 : index
      %c0_172 = arith.constant 0 : index
      %169 = vector.load %arg12[%c132, %c0_172] : memref<162x32xf32, #tpu.memory_space<vmem>>, vector<2x32xf32>
      %c0_173 = arith.constant 0 : index
      %c2112 = arith.constant 2112 : index
      %170 = vector.load %arg13[%c0_173, %c2112] : memref<2x2592xf32, #tpu.memory_space<vmem>>, vector<2x32xf32>
      tpu.vector_store %arg13[%c0_173, %c2112], %169 {strides = array<i32>} : memref<2x2592xf32, #tpu.memory_space<vmem>>, vector<2x32xf32>,
      %c134 = arith.constant 134 : index
      %c0_174 = arith.constant 0 : index
      %171 = vector.load %arg12[%c134, %c0_174] : memref<162x32xf32, #tpu.memory_space<vmem>>, vector<2x32xf32>
      %c0_175 = arith.constant 0 : index
      %c2144 = arith.constant 2144 : index
      %172 = vector.load %arg13[%c0_175, %c2144] : memref<2x2592xf32, #tpu.memory_space<vmem>>, vector<2x32xf32>
      tpu.vector_store %arg13[%c0_175, %c2144], %171 {strides = array<i32>} : memref<2x2592xf32, #tpu.memory_space<vmem>>, vector<2x32xf32>,
      %c136 = arith.constant 136 : index
      %c0_176 = arith.constant 0 : index
      %173 = vector.load %arg12[%c136, %c0_176] : memref<162x32xf32, #tpu.memory_space<vmem>>, vector<2x32xf32>
      %c0_177 = arith.constant 0 : index
      %c2176 = arith.constant 2176 : index
      %174 = vector.load %arg13[%c0_177, %c2176] : memref<2x2592xf32, #tpu.memory_space<vmem>>, vector<2x32xf32>
      tpu.vector_store %arg13[%c0_177, %c2176], %173 {strides = array<i32>} : memref<2x2592xf32, #tpu.memory_space<vmem>>, vector<2x32xf32>,
      %c138 = arith.constant 138 : index
      %c0_178 = arith.constant 0 : index
      %175 = vector.load %arg12[%c138, %c0_178] : memref<162x32xf32, #tpu.memory_space<vmem>>, vector<2x32xf32>
      %c0_179 = arith.constant 0 : index
      %c2208 = arith.constant 2208 : index
      %176 = vector.load %arg13[%c0_179, %c2208] : memref<2x2592xf32, #tpu.memory_space<vmem>>, vector<2x32xf32>
      tpu.vector_store %arg13[%c0_179, %c2208], %175 {strides = array<i32>} : memref<2x2592xf32, #tpu.memory_space<vmem>>, vector<2x32xf32>,
      %c140 = arith.constant 140 : index
      %c0_180 = arith.constant 0 : index
      %177 = vector.load %arg12[%c140, %c0_180] : memref<162x32xf32, #tpu.memory_space<vmem>>, vector<2x32xf32>
      %c0_181 = arith.constant 0 : index
      %c2240 = arith.constant 2240 : index
      %178 = vector.load %arg13[%c0_181, %c2240] : memref<2x2592xf32, #tpu.memory_space<vmem>>, vector<2x32xf32>
      tpu.vector_store %arg13[%c0_181, %c2240], %177 {strides = array<i32>} : memref<2x2592xf32, #tpu.memory_space<vmem>>, vector<2x32xf32>,
      %c142 = arith.constant 142 : index
      %c0_182 = arith.constant 0 : index
      %179 = vector.load %arg12[%c142, %c0_182] : memref<162x32xf32, #tpu.memory_space<vmem>>, vector<2x32xf32>
      %c0_183 = arith.constant 0 : index
      %c2272 = arith.constant 2272 : index
      %180 = vector.load %arg13[%c0_183, %c2272] : memref<2x2592xf32, #tpu.memory_space<vmem>>, vector<2x32xf32>
      tpu.vector_store %arg13[%c0_183, %c2272], %179 {strides = array<i32>} : memref<2x2592xf32, #tpu.memory_space<vmem>>, vector<2x32xf32>,
      %c144 = arith.constant 144 : index
      %c0_184 = arith.constant 0 : index
      %181 = vector.load %arg12[%c144, %c0_184] : memref<162x32xf32, #tpu.memory_space<vmem>>, vector<2x32xf32>
      %c0_185 = arith.constant 0 : index
      %c2304 = arith.constant 2304 : index
      %182 = vector.load %arg13[%c0_185, %c2304] : memref<2x2592xf32, #tpu.memory_space<vmem>>, vector<2x32xf32>
      tpu.vector_store %arg13[%c0_185, %c2304], %181 {strides = array<i32>} : memref<2x2592xf32, #tpu.memory_space<vmem>>, vector<2x32xf32>,
      %c146 = arith.constant 146 : index
      %c0_186 = arith.constant 0 : index
      %183 = vector.load %arg12[%c146, %c0_186] : memref<162x32xf32, #tpu.memory_space<vmem>>, vector<2x32xf32>
      %c0_187 = arith.constant 0 : index
      %c2336 = arith.constant 2336 : index
      %184 = vector.load %arg13[%c0_187, %c2336] : memref<2x2592xf32, #tpu.memory_space<vmem>>, vector<2x32xf32>
      tpu.vector_store %arg13[%c0_187, %c2336], %183 {strides = array<i32>} : memref<2x2592xf32, #tpu.memory_space<vmem>>, vector<2x32xf32>,
      %c148 = arith.constant 148 : index
      %c0_188 = arith.constant 0 : index
      %185 = vector.load %arg12[%c148, %c0_188] : memref<162x32xf32, #tpu.memory_space<vmem>>, vector<2x32xf32>
      %c0_189 = arith.constant 0 : index
      %c2368 = arith.constant 2368 : index
      %186 = vector.load %arg13[%c0_189, %c2368] : memref<2x2592xf32, #tpu.memory_space<vmem>>, vector<2x32xf32>
      tpu.vector_store %arg13[%c0_189, %c2368], %185 {strides = array<i32>} : memref<2x2592xf32, #tpu.memory_space<vmem>>, vector<2x32xf32>,
      %c150 = arith.constant 150 : index
      %c0_190 = arith.constant 0 : index
      %187 = vector.load %arg12[%c150, %c0_190] : memref<162x32xf32, #tpu.memory_space<vmem>>, vector<2x32xf32>
      %c0_191 = arith.constant 0 : index
      %c2400 = arith.constant 2400 : index
      %188 = vector.load %arg13[%c0_191, %c2400] : memref<2x2592xf32, #tpu.memory_space<vmem>>, vector<2x32xf32>
      tpu.vector_store %arg13[%c0_191, %c2400], %187 {strides = array<i32>} : memref<2x2592xf32, #tpu.memory_space<vmem>>, vector<2x32xf32>,
      %c152 = arith.constant 152 : index
      %c0_192 = arith.constant 0 : index
      %189 = vector.load %arg12[%c152, %c0_192] : memref<162x32xf32, #tpu.memory_space<vmem>>, vector<2x32xf32>
      %c0_193 = arith.constant 0 : index
      %c2432 = arith.constant 2432 : index
      %190 = vector.load %arg13[%c0_193, %c2432] : memref<2x2592xf32, #tpu.memory_space<vmem>>, vector<2x32xf32>
      tpu.vector_store %arg13[%c0_193, %c2432], %189 {strides = array<i32>} : memref<2x2592xf32, #tpu.memory_space<vmem>>, vector<2x32xf32>,
      %c154 = arith.constant 154 : index
      %c0_194 = arith.constant 0 : index
      %191 = vector.load %arg12[%c154, %c0_194] : memref<162x32xf32, #tpu.memory_space<vmem>>, vector<2x32xf32>
      %c0_195 = arith.constant 0 : index
      %c2464 = arith.constant 2464 : index
      %192 = vector.load %arg13[%c0_195, %c2464] : memref<2x2592xf32, #tpu.memory_space<vmem>>, vector<2x32xf32>
      tpu.vector_store %arg13[%c0_195, %c2464], %191 {strides = array<i32>} : memref<2x2592xf32, #tpu.memory_space<vmem>>, vector<2x32xf32>,
      %c156 = arith.constant 156 : index
      %c0_196 = arith.constant 0 : index
      %193 = vector.load %arg12[%c156, %c0_196] : memref<162x32xf32, #tpu.memory_space<vmem>>, vector<2x32xf32>
      %c0_197 = arith.constant 0 : index
      %c2496 = arith.constant 2496 : index
      %194 = vector.load %arg13[%c0_197, %c2496] : memref<2x2592xf32, #tpu.memory_space<vmem>>, vector<2x32xf32>
      tpu.vector_store %arg13[%c0_197, %c2496], %193 {strides = array<i32>} : memref<2x2592xf32, #tpu.memory_space<vmem>>, vector<2x32xf32>,
      %c158 = arith.constant 158 : index
      %c0_198 = arith.constant 0 : index
      %195 = vector.load %arg12[%c158, %c0_198] : memref<162x32xf32, #tpu.memory_space<vmem>>, vector<2x32xf32>
      %c0_199 = arith.constant 0 : index
      %c2528 = arith.constant 2528 : index
      %196 = vector.load %arg13[%c0_199, %c2528] : memref<2x2592xf32, #tpu.memory_space<vmem>>, vector<2x32xf32>
      tpu.vector_store %arg13[%c0_199, %c2528], %195 {strides = array<i32>} : memref<2x2592xf32, #tpu.memory_space<vmem>>, vector<2x32xf32>,
      %c160_200 = arith.constant 160 : index
      %c0_201 = arith.constant 0 : index
      %197 = vector.load %arg12[%c160_200, %c0_201] : memref<162x32xf32, #tpu.memory_space<vmem>>, vector<2x32xf32>
      %c0_202 = arith.constant 0 : index
      %c2560 = arith.constant 2560 : index
      %198 = vector.load %arg13[%c0_202, %c2560] : memref<2x2592xf32, #tpu.memory_space<vmem>>, vector<2x32xf32>
      tpu.vector_store %arg13[%c0_202, %c2560], %197 {strides = array<i32>} : memref<2x2592xf32, #tpu.memory_space<vmem>>, vector<2x32xf32>,
      %c0_203 = arith.constant 0 : index
      %c0_204 = arith.constant 0 : index
      %199 = vector.load %arg9[%c0_203, %c0_204] : memref<1x128xf32, #tpu.memory_space<vmem>>, vector<1x128xf32>
      %200 = vector.shape_cast %199 : vector<1x128xf32> to vector<1x128xf32>
      %201 = vector.broadcast %200 : vector<1x128xf32> to vector<2x128xf32>
      %c0_205 = arith.constant 0 : index
      %c0_206 = arith.constant 0 : index
      %202 = vector.load %arg10[%c0_205, %c0_206] : memref<2x128xf32, #tpu.memory_space<vmem>>, vector<2x128xf32>
      tpu.vector_store %arg10[%c0_205, %c0_206], %201 {strides = array<i32>} : memref<2x128xf32, #tpu.memory_space<vmem>>, vector<2x128xf32>,
    } else {
    }
    %c0 = arith.constant 0 : index
    %c0_1 = arith.constant 0 : index
    %3 = vector.load %arg13[%c0, %c0_1] : memref<2x2592xf32, #tpu.memory_space<vmem>>, vector<2x2592xf32>
    %4 = arith.truncf %3 : vector<2x2592xf32> to vector<2x2592xbf16>
    %c0_2 = arith.constant 0 : index
    %c0_3 = arith.constant 0 : index
    %5 = vector.load %arg6[%c0_2, %c0_3] : memref<2592x128xbf16, #tpu.memory_space<vmem>>, vector<2592x128xbf16>
    %cst = arith.constant dense<0.000000e+00> : vector<2x128xf32>
    %6 = tpu.matmul %4, %5, %cst {dimension_numbers = #tpu.dot_dimension_numbers<[1], [0], [0], [1], [0, 0, 1, 1], [], []>} : vector<2x2592xbf16>, vector<2592x128xbf16>, vector<2x128xf32> -> vector<2x128xf32>
    %c0_4 = arith.constant 0 : index
    %c0_5 = arith.constant 0 : index
    %7 = vector.load %arg7[%c0_4, %c0_5] : memref<1x128xf32, #tpu.memory_space<vmem>>, vector<1x128xf32>
    %8 = vector.broadcast %7 : vector<1x128xf32> to vector<2x128xf32>
    %9 = arith.addf %6, %8 : vector<2x128xf32>
    %cst_6 = arith.constant 0.000000e+00 : f32
    %10 = vector.broadcast %cst_6 : f32 to vector<2x128xf32>
    %11 = arith.maximumf %9, %10 : vector<2x128xf32>
    %c0_7 = arith.constant 0 : index
    %c0_8 = arith.constant 0 : index
    %12 = vector.load %arg10[%c0_7, %c0_8] : memref<2x128xf32, #tpu.memory_space<vmem>>, vector<2x128xf32>
    %13 = arith.truncf %11 : vector<2x128xf32> to vector<2x128xbf16>
    %c0_9 = arith.constant 0 : index
    %c0_10 = arith.constant 0 : index
    %14 = vector.load %arg8[%c0_9, %c0_10] : memref<128x128xbf16, #tpu.memory_space<vmem>>, vector<128x128xbf16>
    %cst_11 = arith.constant dense<0.000000e+00> : vector<2x128xf32>
    %15 = tpu.matmul %13, %14, %cst_11 {dimension_numbers = #tpu.dot_dimension_numbers<[1], [0], [0], [1], [0, 0, 1, 1], [], []>} : vector<2x128xbf16>, vector<128x128xbf16>, vector<2x128xf32> -> vector<2x128xf32>
    %16 = arith.addf %12, %15 : vector<2x128xf32>
    %c0_12 = arith.constant 0 : index
    %c0_13 = arith.constant 0 : index
    %17 = vector.load %arg10[%c0_12, %c0_13] : memref<2x128xf32, #tpu.memory_space<vmem>>, vector<2x128xf32>
    tpu.vector_store %arg10[%c0_12, %c0_13], %16 {strides = array<i32>} : memref<2x128xf32, #tpu.memory_space<vmem>>, vector<2x128xf32>,
    return
  }
  func.func @transform_0(%arg0: i32) -> (i32, i32) {
    %c0_i32 = arith.constant 0 : i32
    %c0_i32_0 = arith.constant 0 : i32
    %c0_i32_1 = arith.constant 0 : i32
    return %c0_i32, %c0_i32_0 : i32, i32
  }
  func.func @transform_1(%arg0: i32) -> (i32, i32) {
    %c0_i32 = arith.constant 0 : i32
    %c0_i32_0 = arith.constant 0 : i32
    %c0_i32_1 = arith.constant 0 : i32
    return %c0_i32, %c0_i32_0 : i32, i32
  }
  func.func @transform_2(%arg0: i32) -> (i32, i32) {
    %c0_i32 = arith.constant 0 : i32
    %c0_i32_0 = arith.constant 0 : i32
    %c0_i32_1 = arith.constant 0 : i32
    return %c0_i32, %c0_i32_0 : i32, i32
  }
  func.func @transform_3(%arg0: i32) -> (i32, i32) {
    %c0_i32 = arith.constant 0 : i32
    %c0_i32_0 = arith.constant 0 : i32
    %c0_i32_1 = arith.constant 0 : i32
    return %c0_i32, %c0_i32_0 : i32, i32
  }
  func.func @transform_4(%arg0: i32) -> (i32, i32) {
    %c0_i32 = arith.constant 0 : i32
    %c0_i32_0 = arith.constant 0 : i32
    %c0_i32_1 = arith.constant 0 : i32
    return %c0_i32, %c0_i32_0 : i32, i32
  }
  func.func @transform_5(%arg0: i32) -> (i32, i32) {
    %c0_i32 = arith.constant 0 : i32
    %c0_i32_0 = arith.constant 0 : i32
    return %c0_i32, %arg0 : i32, i32
  }
  func.func @transform_6(%arg0: i32) -> (i32, i32) {
    %c0_i32 = arith.constant 0 : i32
    %c0_i32_0 = arith.constant 0 : i32
    return %c0_i32, %arg0 : i32, i32
  }
  func.func @transform_7(%arg0: i32) -> (i32, i32) {
    %c0_i32 = arith.constant 0 : i32
    %c0_i32_0 = arith.constant 0 : i32
    return %arg0, %c0_i32 : i32, i32
  }
  func.func @transform_8(%arg0: i32) -> (i32, i32) {
    %c0_i32 = arith.constant 0 : i32
    %c0_i32_0 = arith.constant 0 : i32
    %c0_i32_1 = arith.constant 0 : i32
    return %c0_i32, %c0_i32_0 : i32, i32
  }
  func.func @transform_9(%arg0: i32) -> (i32, i32) {
    %c0_i32 = arith.constant 0 : i32
    %c0_i32_0 = arith.constant 0 : i32
    %c0_i32_1 = arith.constant 0 : i32
    return %c0_i32, %c0_i32_0 : i32, i32
  }
}

</mosaic_0001>

<llo_original>
// kernel: tile.8
$region0: #{tile.8}
  #allocation0 [shape = 's32[1]{0}', space=sflag, size = 0x4, scoped, tag = 'scoped memory for tile.8']
  %s0 = inlined_call_operand.vmem [shape: f32[16], index: 0, kind: input, shape index: {}]
  %s1 = inlined_call_operand.vmem [shape: f32[16,16], index: 1, kind: output, shape index: {}]
  // Predicated region
  $region2: #{tile.8} parent=0 // pred_check
    _
  $region3: #{tile.8} parent=0 // pred_check_branch
    %3 = sbr.rel (0) target = $region5
  $region4: #{tile.8} parent=0 // pred_region
    _
  $region5: #{tile.8} parent=0 // pred_fallthru
    _
  %v4 = vld [vmem:[%s0] ss:$0 sm:$0xff]
  %5 = vst [vmem:[%s1] sm:$0xff] %v4
  %s6 = scalar_lea.vmem %s1, 8
  %7 = vst [vmem:[%s6] sm:$0xff] %v4

// kernel: tile.9
$region0: #{tile.9}
  %s0 = inlined_call_operand.vmem [shape: f32[16,16], index: 0, kind: input, shape index: {}]
  %s1 = inlined_call_operand.vmem [shape: f32[1,256], index: 1, kind: output, shape index: {}]
  $region1: #{tile.9} parent=0
    #allocation0 [shape = 'u8[8192]{0}', space=vmem, size = 0x2000, scoped, tag = 'scoped mem for output reshape']
    %s2 = smov 3
    %v3 = vld [vmem:[%s0] ss:$8 sm:%s2]
    %vm4 = vcmask 130048
    %5 = vst.msk [vmem:[#allocation0] ss:$8 sm:$0x3] %vm4, %v3
    %s6 = scalar_lea.vmem %s0, 7
    %s7 = smov 3
    %v8 = vld [vmem:[%s6] ss:$8 sm:%s7]
    %9 = vrot.lane.b32.xlu0 %v8, 112
    %v10 = vpop.permute.xlu0 %9
    %vm11 = vcmask 1048448
    %12 = vst.msk [vmem:[#allocation0] ss:$8 sm:$0x3] %vm11, %v10
    %s13 = scalar_lea.vmem %s0, 6
    %s14 = smov 3
    %v15 = vld [vmem:[%s13] ss:$8 sm:%s14]
    %16 = vrot.lane.b32.xlu0 %v15, 96
    %v17 = vpop.permute.xlu0 %16
    %vm18 = vcmask 917248
    %19 = vst.msk [vmem:[#allocation0] ss:$8 sm:$0x3] %vm18, %v17
    %s20 = scalar_lea.vmem %s0, 5
    %s21 = smov 3
    %v22 = vld [vmem:[%s20] ss:$8 sm:%s21]
    %23 = vrot.lane.b32.xlu0 %v22, 80
    %v24 = vpop.permute.xlu0 %23
    %vm25 = vcmask 786048
    %26 = vst.msk [vmem:[#allocation0] ss:$8 sm:$0x3] %vm25, %v24
    %s27 = scalar_lea.vmem %s0, 4
    %s28 = smov 3
    %v29 = vld [vmem:[%s27] ss:$8 sm:%s28]
    %30 = vrot.lane.b32.xlu0 %v29, 64
    %v31 = vpop.permute.xlu0 %30
    %vm32 = vcmask 654848
    %33 = vst.msk [vmem:[#allocation0] ss:$8 sm:$0x3] %vm32, %v31
    %s34 = scalar_lea.vmem %s0, 3
    %s35 = smov 3
    %v36 = vld [vmem:[%s34] ss:$8 sm:%s35]
    %37 = vrot.lane.b32.xlu0 %v36, 48
    %v38 = vpop.permute.xlu0 %37
    %vm39 = vcmask 523648
    %40 = vst.msk [vmem:[#allocation0] ss:$8 sm:$0x3] %vm39, %v38
    %s41 = scalar_lea.vmem %s0, 2
    %s42 = smov 3
    %v43 = vld [vmem:[%s41] ss:$8 sm:%s42]
    %44 = vrot.lane.b32.xlu0 %v43, 32
    %v45 = vpop.permute.xlu0 %44
    %vm46 = vcmask 392448
    %47 = vst.msk [vmem:[#allocation0] ss:$8 sm:$0x3] %vm46, %v45
    %s48 = scalar_lea.vmem %s0, 1
    %s49 = smov 3
    %v50 = vld [vmem:[%s48] ss:$8 sm:%s49]
    %51 = vrot.lane.b32.xlu0 %v50, 16
    %v52 = vpop.permute.xlu0 %51
    %vm53 = vcmask 261248
    %54 = vst.msk [vmem:[#allocation0] ss:$8 sm:$0x3] %vm53, %v52
    %s56 = ssub.s32 2, 1
    %v57 = vld [vmem:[#allocation0] sm:%s56]
    %s59 = ssub.s32 2, 1
    %60 = vst [vmem:[%s1] sm:%s59] %v57
    %s61 = scalar_lea.vmem [#allocation0], 8
    %v62 = vld [vmem:[%s61] sm:%s56]
    %s64 = ssub.s32 2, 1
    %s65 = scalar_lea.vmem %s1, 1
    %66 = vst [vmem:[%s65] sm:%s64] %v62

// kernel: dueling_dqn_forward.1
$region0: #{dueling_dqn_forward.1}
  #allocation0 [shape = 'u32[]', space=smem, size = 0x4, offset = 0x4, fixed_abs, tag = 'smem constant byte address 0x4 - core index']
  #allocation1 [shape = 'u32[72,128]{1,0:T(1,128)}', space=vmem, size = 0x9000, scoped, tag = 'internal scratch']
  #allocation2 [shape = 'bf16[162,256]{1,0:T(8,128)(2,1)}', space=vmem, size = 0x15000, scoped, tag = 'scratch operand']
  #allocation3 [shape = 'f32[162,32]{1,0:T(8,128)}', space=vmem, size = 0x15000, scoped, tag = 'scratch operand']
  #allocation4 [shape = 'f32[2,2592]{1,0:T(2,128)}', space=vmem, size = 0x5400, scoped, tag = 'scratch operand']
  %s0 = inlined_call_operand.vmem [shape: bf16[162,256], index: 0, kind: input, shape index: {}]
  %s1 = inlined_call_operand.vmem [shape: bf16[256,256], index: 1, kind: input, shape index: {}]
  %s2 = inlined_call_operand.vmem [shape: f32[1,256], index: 2, kind: input, shape index: {}]
  %s3 = inlined_call_operand.vmem [shape: bf16[256,32], index: 3, kind: input, shape index: {}]
  %s4 = inlined_call_operand.vmem [shape: f32[1,32], index: 4, kind: input, shape index: {}]
  %s5 = inlined_call_operand.vmem [shape: bf16[2592,512], index: 5, kind: input, shape index: {}]
  %s6 = inlined_call_operand.vmem [shape: f32[1,512], index: 6, kind: input, shape index: {}]
  %s7 = inlined_call_operand.vmem [shape: bf16[512,128], index: 7, kind: input, shape index: {}]
  %s8 = inlined_call_operand.vmem [shape: f32[1,128], index: 8, kind: input, shape index: {}]
  %s9 = inlined_call_operand.vmem [shape: f32[2,128], index: 9, kind: output, shape index: {}]
  %s10 = sld [smem:[#allocation0]]
  $region125: #{dueling_dqn_forward.1} parent=0
    _
  %s12 = ssub.s32 1, %s10
  %s13 = scalar_select 0, %s12, %s10
  $region1: #{dueling_dqn_forward.1} parent=0
    #allocation5 [shape = 'u8[1327104]{0}', space=vmem, size = 0x144000, scoped, tag = 'input window, operand 5']
    loop: start=0, step=1, limit=6
    $region2: #{dueling_dqn_forward.1} parent=1 // loop_pre_header
      _
    $region3: #{dueling_dqn_forward.1} parent=1 // loop_header
      %s15 = sphi 0, %s19
      %p16 = scmp.ge.s32.totalorder %s15, 6
      %s23 = sphi 0, %s23
      %s25 = sphi 0, %s23
      %s26 = sphi 0, %s25
      %s40 = sphi 0, %s26
      %s44 = sphi 0, %s44
      %s46 = sphi 0, %s44
      %s47 = sphi 0, %s46
      %s61 = sphi 0, %s47
      %s65 = sphi 0, %s65
      %s67 = sphi 0, %s65
      %s68 = sphi 0, %s67
      %s82 = sphi 0, %s68
      %s86 = sphi 0, %s86
      %s88 = sphi 0, %s86
      %s89 = sphi 0, %s88
      %s103 = sphi 0, %s89
      %s107 = sphi 0, %s107
      %s109 = sphi 0, %s107
      %s110 = sphi 0, %s109
      %s124 = sphi 0, %s110
      %s130 = sphi 0, %s132
      %s133 = sphi 0, %s130
      %s134 = sphi 0, %s133
      %s150 = sphi 0, %s134
      %s156 = sphi 0, %s158
      %s159 = sphi 0, %s156
      %s160 = sphi 0, %s159
      %s176 = sphi 0, %s160
      %s182 = sphi 0, %s184
      %s185 = sphi 0, %s182
      %s186 = sphi 0, %s185
      %s202 = sphi 0, %s186
      %s206 = sphi 0, %s206
      %s208 = sphi 0, %s206
      %s209 = sphi 0, %s208
      %s223 = sphi 0, %s209
      %s227 = sphi 0, %s227
      %s229 = sphi 0, %s227
      %s230 = sphi 0, %s229
      %s244 = sphi 0, %s230
    $region4: #{dueling_dqn_forward.1} parent=1 // loop_header_branch
      %18 = sbr.rel (%p16) target = $region8
    $region5: #{dueling_dqn_forward.1} parent=1 // loop_body
      %s20 = ssub.s32 %s15, 1
      %s21 = ssub.s32 %s15, 2
      %s22 = sadd.s32 %s15, 1
      %s24 = sadd.s32 %s23, 1
      %p27 = scmp.eq.s32.totalorder %s15, 3
      %p28 = scmp.ne.s32.totalorder %s23, %s25
      %p29 = scmp.eq.s32.totalorder %s15, 0
      %p30 = por %p28, %p29
      %p31 = scmp.ne.s32.totalorder %s23, %s25
      %p32 = scmp.eq.s32.totalorder %s20, 3
      %p33 = por %p31, %p32
      %p34 = scmp.ne.s32.totalorder %s25, %s26
      %p35 = scmp.eq.s32.totalorder %s20, 0
      %p36 = por %p34, %p35
      %p37 = scmp.ne.s32.totalorder %s25, %s26
      %p38 = scmp.eq.s32.totalorder %s21, 3
      %p39 = por %p37, %p38
      %p41 = scmp.ne.s32.totalorder %s26, %s40
      %p42 = scmp.eq.s32.totalorder %s21, 0
      %p43 = por %p41, %p42
      %s45 = sadd.s32 %s44, 1
      %p48 = scmp.eq.s32.totalorder %s15, 3
      %p49 = scmp.ne.s32.totalorder %s44, %s46
      %p50 = scmp.eq.s32.totalorder %s15, 0
      %p51 = por %p49, %p50
      %p52 = scmp.ne.s32.totalorder %s44, %s46
      %p53 = scmp.eq.s32.totalorder %s20, 3
      %p54 = por %p52, %p53
      %p55 = scmp.ne.s32.totalorder %s46, %s47
      %p56 = scmp.eq.s32.totalorder %s20, 0
      %p57 = por %p55, %p56
      %p58 = scmp.ne.s32.totalorder %s46, %s47
      %p59 = scmp.eq.s32.totalorder %s21, 3
      %p60 = por %p58, %p59
      %p62 = scmp.ne.s32.totalorder %s47, %s61
      %p63 = scmp.eq.s32.totalorder %s21, 0
      %p64 = por %p62, %p63
      %s66 = sadd.s32 %s65, 1
      %p69 = scmp.eq.s32.totalorder %s15, 3
      %p70 = scmp.ne.s32.totalorder %s65, %s67
      %p71 = scmp.eq.s32.totalorder %s15, 0
      %p72 = por %p70, %p71
      %p73 = scmp.ne.s32.totalorder %s65, %s67
      %p74 = scmp.eq.s32.totalorder %s20, 3
      %p75 = por %p73, %p74
      %p76 = scmp.ne.s32.totalorder %s67, %s68
      %p77 = scmp.eq.s32.totalorder %s20, 0
      %p78 = por %p76, %p77
      %p79 = scmp.ne.s32.totalorder %s67, %s68
      %p80 = scmp.eq.s32.totalorder %s21, 3
      %p81 = por %p79, %p80
      %p83 = scmp.ne.s32.totalorder %s68, %s82
      %p84 = scmp.eq.s32.totalorder %s21, 0
      %p85 = por %p83, %p84
      %s87 = sadd.s32 %s86, 1
      %p90 = scmp.eq.s32.totalorder %s15, 3
      %p91 = scmp.ne.s32.totalorder %s86, %s88
      %p92 = scmp.eq.s32.totalorder %s15, 0
      %p93 = por %p91, %p92
      %p94 = scmp.ne.s32.totalorder %s86, %s88
      %p95 = scmp.eq.s32.totalorder %s20, 3
      %p96 = por %p94, %p95
      %p97 = scmp.ne.s32.totalorder %s88, %s89
      %p98 = scmp.eq.s32.totalorder %s20, 0
      %p99 = por %p97, %p98
      %p100 = scmp.ne.s32.totalorder %s88, %s89
      %p101 = scmp.eq.s32.totalorder %s21, 3
      %p102 = por %p100, %p101
      %p104 = scmp.ne.s32.totalorder %s89, %s103
      %p105 = scmp.eq.s32.totalorder %s21, 0
      %p106 = por %p104, %p105
      %s108 = sadd.s32 %s107, 1
      %p111 = scmp.eq.s32.totalorder %s15, 3
      %p112 = scmp.ne.s32.totalorder %s107, %s109
      %p113 = scmp.eq.s32.totalorder %s15, 0
      %p114 = por %p112, %p113
      %p115 = scmp.ne.s32.totalorder %s107, %s109
      %p116 = scmp.eq.s32.totalorder %s20, 3
      %p117 = por %p115, %p116
      %p118 = scmp.ne.s32.totalorder %s109, %s110
      %p119 = scmp.eq.s32.totalorder %s20, 0
      %p120 = por %p118, %p119
      %p121 = scmp.ne.s32.totalorder %s109, %s110
      %p122 = scmp.eq.s32.totalorder %s21, 3
      %p123 = por %p121, %p122
      %p125 = scmp.ne.s32.totalorder %s110, %s124
      %p126 = scmp.eq.s32.totalorder %s21, 0
      %p127 = por %p125, %p126
      %s128 = ssub.s32 %s15, %s22
      %p129 = scmp.eq.s32.totalorder %s128, 0
      %s131 = sadd.s32 %s130, 1
      %s132 = scalar_select %p129, %s130, %s131
      %p135 = pneg %p129
      %p136 = scmp.eq.s32.totalorder %s15, 3
      %p137 = por %p135, %p136
      %p138 = scmp.ne.s32.totalorder %s130, %s133
      %p139 = scmp.eq.s32.totalorder %s15, 0
      %p140 = por %p138, %p139
      %p141 = scmp.ne.s32.totalorder %s130, %s133
      %p142 = scmp.eq.s32.totalorder %s20, 3
      %p143 = por %p141, %p142
      %p144 = scmp.ne.s32.totalorder %s133, %s134
      %p145 = scmp.eq.s32.totalorder %s20, 0
      %p146 = por %p144, %p145
      %p147 = scmp.ne.s32.totalorder %s133, %s134
      %p148 = scmp.eq.s32.totalorder %s21, 3
      %p149 = por %p147, %p148
      %p151 = scmp.ne.s32.totalorder %s134, %s150
      %p152 = scmp.eq.s32.totalorder %s21, 0
      %p153 = por %p151, %p152
      %s154 = ssub.s32 %s15, %s22
      %p155 = scmp.eq.s32.totalorder %s154, 0
      %s157 = sadd.s32 %s156, 1
      %s158 = scalar_select %p155, %s156, %s157
      %p161 = pneg %p155
      %p162 = scmp.eq.s32.totalorder %s15, 3
      %p163 = por %p161, %p162
      %p164 = scmp.ne.s32.totalorder %s156, %s159
      %p165 = scmp.eq.s32.totalorder %s15, 0
      %p166 = por %p164, %p165
      %p167 = scmp.ne.s32.totalorder %s156, %s159
      %p168 = scmp.eq.s32.totalorder %s20, 3
      %p169 = por %p167, %p168
      %p170 = scmp.ne.s32.totalorder %s159, %s160
      %p171 = scmp.eq.s32.totalorder %s20, 0
      %p172 = por %p170, %p171
      %p173 = scmp.ne.s32.totalorder %s159, %s160
      %p174 = scmp.eq.s32.totalorder %s21, 3
      %p175 = por %p173, %p174
      %p177 = scmp.ne.s32.totalorder %s160, %s176
      %p178 = scmp.eq.s32.totalorder %s21, 0
      %p179 = por %p177, %p178
      %s180 = ssub.s32 %s15, %s22
      %p181 = scmp.eq.s32.totalorder %s180, 0
      %s183 = sadd.s32 %s182, 1
      %s184 = scalar_select %p181, %s182, %s183
      %p187 = pneg %p181
      %p188 = scmp.eq.s32.totalorder %s15, 3
      %p189 = por %p187, %p188
      %p190 = scmp.ne.s32.totalorder %s182, %s185
      %p191 = scmp.eq.s32.totalorder %s15, 0
      %p192 = por %p190, %p191
      %p193 = scmp.ne.s32.totalorder %s182, %s185
      %p194 = scmp.eq.s32.totalorder %s20, 3
      %p195 = por %p193, %p194
      %p196 = scmp.ne.s32.totalorder %s185, %s186
      %p197 = scmp.eq.s32.totalorder %s20, 0
      %p198 = por %p196, %p197
      %p199 = scmp.ne.s32.totalorder %s185, %s186
      %p200 = scmp.eq.s32.totalorder %s21, 3
      %p201 = por %p199, %p200
      %p203 = scmp.ne.s32.totalorder %s186, %s202
      %p204 = scmp.eq.s32.totalorder %s21, 0
      %p205 = por %p203, %p204
      %s207 = sadd.s32 %s206, 1
      %p210 = scmp.eq.s32.totalorder %s15, 3
      %p211 = scmp.ne.s32.totalorder %s206, %s208
      %p212 = scmp.eq.s32.totalorder %s15, 0
      %p213 = por %p211, %p212
      %p214 = scmp.ne.s32.totalorder %s206, %s208
      %p215 = scmp.eq.s32.totalorder %s20, 3
      %p216 = por %p214, %p215
      %p217 = scmp.ne.s32.totalorder %s208, %s209
      %p218 = scmp.eq.s32.totalorder %s20, 0
      %p219 = por %p217, %p218
      %p220 = scmp.ne.s32.totalorder %s208, %s209
      %p221 = scmp.eq.s32.totalorder %s21, 3
      %p222 = por %p220, %p221
      %p224 = scmp.ne.s32.totalorder %s209, %s223
      %p225 = scmp.eq.s32.totalorder %s21, 0
      %p226 = por %p224, %p225
      %s228 = sadd.s32 %s227, 1
      %p231 = scmp.eq.s32.totalorder %s15, 3
      %p232 = scmp.ne.s32.totalorder %s227, %s229
      %p233 = scmp.eq.s32.totalorder %s15, 0
      %p234 = por %p232, %p233
      %p235 = scmp.ne.s32.totalorder %s227, %s229
      %p236 = scmp.eq.s32.totalorder %s20, 3
      %p237 = por %p235, %p236
      %p238 = scmp.ne.s32.totalorder %s229, %s230
      %p239 = scmp.eq.s32.totalorder %s20, 0
      %p240 = por %p238, %p239
      %p241 = scmp.ne.s32.totalorder %s229, %s230
      %p242 = scmp.eq.s32.totalorder %s21, 3
      %p243 = por %p241, %p242
      %p245 = scmp.ne.s32.totalorder %s230, %s244
      %p246 = scmp.eq.s32.totalorder %s21, 0
      %p247 = por %p245, %p246
      %p248 = scmp.le.s32.totalorder 1, %s15
      %p249 = scmp.lt.s32.totalorder %s15, 5
      %p250 = pnand %p248, %p249
      %p251 = pneg %p250
      // Predicated region
      $region9: #{dueling_dqn_forward.1} parent=5 // pred_check
        _
      $region10: #{dueling_dqn_forward.1} parent=5 // pred_check_branch
        %253 = sbr.rel (%p250) target = $region12
      $region11: #{dueling_dqn_forward.1} parent=5 // pred_region
        %s254 = ssub.s32 %s15, 1
        // Predicated region
        $region13: #{dueling_dqn_forward.1} parent=11 // pred_check
          %p255 = pneg %p36
        $region14: #{dueling_dqn_forward.1} parent=11 // pred_check_branch
          %257 = sbr.rel (%p255) target = $region16
        $region15: #{dueling_dqn_forward.1} parent=11 // pred_region
          _
        $region16: #{dueling_dqn_forward.1} parent=11 // pred_fallthru
          _
        // Predicated region
        $region17: #{dueling_dqn_forward.1} parent=11 // pred_check
          %p258 = pneg %p57
        $region18: #{dueling_dqn_forward.1} parent=11 // pred_check_branch
          %260 = sbr.rel (%p258) target = $region20
        $region19: #{dueling_dqn_forward.1} parent=11 // pred_region
          _
        $region20: #{dueling_dqn_forward.1} parent=11 // pred_fallthru
          _
        // Predicated region
        $region21: #{dueling_dqn_forward.1} parent=11 // pred_check
          %p261 = pneg %p78
        $region22: #{dueling_dqn_forward.1} parent=11 // pred_check_branch
          %263 = sbr.rel (%p261) target = $region24
        $region23: #{dueling_dqn_forward.1} parent=11 // pred_region
          _
        $region24: #{dueling_dqn_forward.1} parent=11 // pred_fallthru
          _
        // Predicated region
        $region25: #{dueling_dqn_forward.1} parent=11 // pred_check
          %p264 = pneg %p99
        $region26: #{dueling_dqn_forward.1} parent=11 // pred_check_branch
          %266 = sbr.rel (%p264) target = $region28
        $region27: #{dueling_dqn_forward.1} parent=11 // pred_region
          _
        $region28: #{dueling_dqn_forward.1} parent=11 // pred_fallthru
          _
        // Predicated region
        $region29: #{dueling_dqn_forward.1} parent=11 // pred_check
          %p267 = pneg %p120
        $region30: #{dueling_dqn_forward.1} parent=11 // pred_check_branch
          %269 = sbr.rel (%p267) target = $region32
        $region31: #{dueling_dqn_forward.1} parent=11 // pred_region
          _
        $region32: #{dueling_dqn_forward.1} parent=11 // pred_fallthru
          _
        // Predicated region
        $region33: #{dueling_dqn_forward.1} parent=11 // pred_check
          %p270 = pneg %p219
        $region34: #{dueling_dqn_forward.1} parent=11 // pred_check_branch
          %272 = sbr.rel (%p270) target = $region36
        $region35: #{dueling_dqn_forward.1} parent=11 // pred_region
          _
        $region36: #{dueling_dqn_forward.1} parent=11 // pred_fallthru
          _
      $region12: #{dueling_dqn_forward.1} parent=5 // pred_fallthru
        _
      %p273 = scmp.lt.s32.totalorder %s15, 4
      // Predicated region
      $region37: #{dueling_dqn_forward.1} parent=5 // pred_check
        %p274 = pneg %p273
      $region38: #{dueling_dqn_forward.1} parent=5 // pred_check_branch
        %276 = sbr.rel (%p274) target = $region40
      $region39: #{dueling_dqn_forward.1} parent=5 // pred_region
        // Predicated region
        $region41: #{dueling_dqn_forward.1} parent=39 // pred_check
          %p277 = pneg %p140
        $region42: #{dueling_dqn_forward.1} parent=39 // pred_check_branch
          %279 = sbr.rel (%p277) target = $region44
        $region43: #{dueling_dqn_forward.1} parent=39 // pred_region
          %s280 = sand.u32 %s130, 1
          %s281 = sand.u32 %s130, 1
          %s282 = smul.addr %s281, 1296
          %s283 = scalar_lea.vmem [#allocation5], %s282
          %s284 = smul.addr %s15, 4
          %s285 = scalar_lea.vmem %s5, %s284
          // Predicated region
          $region45: #{dueling_dqn_forward.1} parent=43 // pred_check
            _
          $region46: #{dueling_dqn_forward.1} parent=43 // pred_check_branch
            %287 = sbr.rel (0) target = $region48
          $region47: #{dueling_dqn_forward.1} parent=43 // pred_region
            // Predicated region
            $region49: #{dueling_dqn_forward.1} parent=47 // pred_check
              _
            $region50: #{dueling_dqn_forward.1} parent=47 // pred_check_branch
              %289 = sbr.rel target = $region52
            $region51: #{dueling_dqn_forward.1} parent=47 // pred_region
              // Predicated region
              $region64: #{dueling_dqn_forward.1} parent=51 // pred_check
                _
              $region65: #{dueling_dqn_forward.1} parent=51 // pred_check_branch
                %951 = sbr.rel target = $region67
              $region66: #{dueling_dqn_forward.1} parent=51 // pred_region
                loop: start=0, step=1, limit=0
                $region68: #{dueling_dqn_forward.1} parent=66 // loop_pre_header
                  _
                $region69: #{dueling_dqn_forward.1} parent=66 // loop_header
                  %s953 = sphi 0, %s957
                  %p954 = scmp.ge.s32.totalorder %s953, 0
                  %s958 = sphi 0, %s1611
                  %s959 = sphi %s285, %s1614
                  %s960 = sphi %s283, %s1615
                $region70: #{dueling_dqn_forward.1} parent=66 // loop_header_branch
                  %956 = sbr.rel (%p954) target = $region74
                $region71: #{dueling_dqn_forward.1} parent=66 // loop_body
                  %v961 = vld [vmem:[%s959] sm:$0xff]
                  %962 = vst [vmem:[%s960] sm:$0xff] %v961
                  %v963 = vld [vmem:[%s959 + $0x10] sm:$0xff]
                  %964 = vst [vmem:[%s960 + $0x4] sm:$0xff] %v963
                  %v965 = vld [vmem:[%s959 + $0x20] sm:$0xff]
                  %966 = vst [vmem:[%s960 + $0x8] sm:$0xff] %v965
                  %v967 = vld [vmem:[%s959 + $0x30] sm:$0xff]
                  %968 = vst [vmem:[%s960 + $0xc] sm:$0xff] %v967
                  %v969 = vld [vmem:[%s959 + $0x40] sm:$0xff]
                  %970 = vst [vmem:[%s960 + $0x10] sm:$0xff] %v969
                  %v971 = vld [vmem:[%s959 + $0x50] sm:$0xff]
                  %972 = vst [vmem:[%s960 + $0x14] sm:$0xff] %v971
                  %v973 = vld [vmem:[%s959 + $0x60] sm:$0xff]
                  %974 = vst [vmem:[%s960 + $0x18] sm:$0xff] %v973
                  %v975 = vld [vmem:[%s959 + $0x70] sm:$0xff]
                  %976 = vst [vmem:[%s960 + $0x1c] sm:$0xff] %v975
                  %v977 = vld [vmem:[%s959 + $0x80] sm:$0xff]
                  %978 = vst [vmem:[%s960 + $0x20] sm:$0xff] %v977
                  %v979 = vld [vmem:[%s959 + $0x90] sm:$0xff]
                  %980 = vst [vmem:[%s960 + $0x24] sm:$0xff] %v979
                  %v981 = vld [vmem:[%s959 + $0xa0] sm:$0xff]
                  %982 = vst [vmem:[%s960 + $0x28] sm:$0xff] %v981
                  %v983 = vld [vmem:[%s959 + $0xb0] sm:$0xff]
                  %984 = vst [vmem:[%s960 + $0x2c] sm:$0xff] %v983
                  %v985 = vld [vmem:[%s959 + $0xc0] sm:$0xff]
                  %986 = vst [vmem:[%s960 + $0x30] sm:$0xff] %v985
                  %v987 = vld [vmem:[%s959 + $0xd0] sm:$0xff]
                  %988 = vst [vmem:[%s960 + $0x34] sm:$0xff] %v987
                  %v989 = vld [vmem:[%s959 + $0xe0] sm:$0xff]
                  %990 = vst [vmem:[%s960 + $0x38] sm:$0xff] %v989
                  %v991 = vld [vmem:[%s959 + $0xf0] sm:$0xff]
                  %992 = vst [vmem:[%s960 + $0x3c] sm:$0xff] %v991
                  %v993 = vld [vmem:[%s959 + $0x100] sm:$0xff]
                  %994 = vst [vmem:[%s960 + $0x40] sm:$0xff] %v993
                  %v995 = vld [vmem:[%s959 + $0x110] sm:$0xff]
                  %996 = vst [vmem:[%s960 + $0x44] sm:$0xff] %v995
                  %v997 = vld [vmem:[%s959 + $0x120] sm:$0xff]
                  %998 = vst [vmem:[%s960 + $0x48] sm:$0xff] %v997
                  %v999 = vld [vmem:[%s959 + $0x130] sm:$0xff]
                  %1000 = vst [vmem:[%s960 + $0x4c] sm:$0xff] %v999
                  %v1001 = vld [vmem:[%s959 + $0x140] sm:$0xff]
                  %1002 = vst [vmem:[%s960 + $0x50] sm:$0xff] %v1001
                  %v1003 = vld [vmem:[%s959 + $0x150] sm:$0xff]
                  %1004 = vst [vmem:[%s960 + $0x54] sm:$0xff] %v1003
                  %v1005 = vld [vmem:[%s959 + $0x160] sm:$0xff]
                  %1006 = vst [vmem:[%s960 + $0x58] sm:$0xff] %v1005
                  %v1007 = vld [vmem:[%s959 + $0x170] sm:$0xff]
                  %1008 = vst [vmem:[%s960 + $0x5c] sm:$0xff] %v1007
                  %v1009 = vld [vmem:[%s959 + $0x180] sm:$0xff]
                  %1010 = vst [vmem:[%s960 + $0x60] sm:$0xff] %v1009
                  %v1011 = vld [vmem:[%s959 + $0x190] sm:$0xff]
                  %1012 = vst [vmem:[%s960 + $0x64] sm:$0xff] %v1011
                  %v1013 = vld [vmem:[%s959 + $0x1a0] sm:$0xff]
                  %1014 = vst [vmem:[%s960 + $0x68] sm:$0xff] %v1013
                  %v1015 = vld [vmem:[%s959 + $0x1b0] sm:$0xff]
                  %1016 = vst [vmem:[%s960 + $0x6c] sm:$0xff] %v1015
                  %v1017 = vld [vmem:[%s959 + $0x1c0] sm:$0xff]
                  %1018 = vst [vmem:[%s960 + $0x70] sm:$0xff] %v1017
                  %v1019 = vld [vmem:[%s959 + $0x1d0] sm:$0xff]
                  %1020 = vst [vmem:[%s960 + $0x74] sm:$0xff] %v1019
                  %v1021 = vld [vmem:[%s959 + $0x1e0] sm:$0xff]
                  %1022 = vst [vmem:[%s960 + $0x78] sm:$0xff] %v1021
                  %v1023 = vld [vmem:[%s959 + $0x1f0] sm:$0xff]
                  %1024 = vst [vmem:[%s960 + $0x7c] sm:$0xff] %v1023
                  %v1025 = vld [vmem:[%s959 + $0x200] sm:$0xff]
                  %1026 = vst [vmem:[%s960 + $0x80] sm:$0xff] %v1025
                  %v1027 = vld [vmem:[%s959 + $0x210] sm:$0xff]
                  %1028 = vst [vmem:[%s960 + $0x84] sm:$0xff] %v1027
                  %v1029 = vld [vmem:[%s959 + $0x220] sm:$0xff]
                  %1030 = vst [vmem:[%s960 + $0x88] sm:$0xff] %v1029
                  %v1031 = vld [vmem:[%s959 + $0x230] sm:$0xff]
                  %1032 = vst [vmem:[%s960 + $0x8c] sm:$0xff] %v1031
                  %v1033 = vld [vmem:[%s959 + $0x240] sm:$0xff]
                  %1034 = vst [vmem:[%s960 + $0x90] sm:$0xff] %v1033
                  %v1035 = vld [vmem:[%s959 + $0x250] sm:$0xff]
                  %1036 = vst [vmem:[%s960 + $0x94] sm:$0xff] %v1035
                  %v1037 = vld [vmem:[%s959 + $0x260] sm:$0xff]
                  %1038 = vst [vmem:[%s960 + $0x98] sm:$0xff] %v1037
                  %v1039 = vld [vmem:[%s959 + $0x270] sm:$0xff]
                  %1040 = vst [vmem:[%s960 + $0x9c] sm:$0xff] %v1039
                  %v1041 = vld [vmem:[%s959 + $0x280] sm:$0xff]
                  %1042 = vst [vmem:[%s960 + $0xa0] sm:$0xff] %v1041
                  %v1043 = vld [vmem:[%s959 + $0x290] sm:$0xff]
                  %1044 = vst [vmem:[%s960 + $0xa4] sm:$0xff] %v1043
                  %v1045 = vld [vmem:[%s959 + $0x2a0] sm:$0xff]
                  %1046 = vst [vmem:[%s960 + $0xa8] sm:$0xff] %v1045
                  %v1047 = vld [vmem:[%s959 + $0x2b0] sm:$0xff]
                  %1048 = vst [vmem:[%s960 + $0xac] sm:$0xff] %v1047
                  %v1049 = vld [vmem:[%s959 + $0x2c0] sm:$0xff]
                  %1050 = vst [vmem:[%s960 + $0xb0] sm:$0xff] %v1049
                  %v1051 = vld [vmem:[%s959 + $0x2d0] sm:$0xff]
                  %1052 = vst [vmem:[%s960 + $0xb4] sm:$0xff] %v1051
                  %v1053 = vld [vmem:[%s959 + $0x2e0] sm:$0xff]
                  %1054 = vst [vmem:[%s960 + $0xb8] sm:$0xff] %v1053
                  %v1055 = vld [vmem:[%s959 + $0x2f0] sm:$0xff]
                  %1056 = vst [vmem:[%s960 + $0xbc] sm:$0xff] %v1055
                  %v1057 = vld [vmem:[%s959 + $0x300] sm:$0xff]
                  %1058 = vst [vmem:[%s960 + $0xc0] sm:$0xff] %v1057
                  %v1059 = vld [vmem:[%s959 + $0x310] sm:$0xff]
                  %1060 = vst [vmem:[%s960 + $0xc4] sm:$0xff] %v1059
                  %v1061 = vld [vmem:[%s959 + $0x320] sm:$0xff]
                  %1062 = vst [vmem:[%s960 + $0xc8] sm:$0xff] %v1061
                  %v1063 = vld [vmem:[%s959 + $0x330] sm:$0xff]
                  %1064 = vst [vmem:[%s960 + $0xcc] sm:$0xff] %v1063
                  %v1065 = vld [vmem:[%s959 + $0x340] sm:$0xff]
                  %1066 = vst [vmem:[%s960 + $0xd0] sm:$0xff] %v1065
                  %v1067 = vld [vmem:[%s959 + $0x350] sm:$0xff]
                  %1068 = vst [vmem:[%s960 + $0xd4] sm:$0xff] %v1067
                  %v1069 = vld [vmem:[%s959 + $0x360] sm:$0xff]
                  %1070 = vst [vmem:[%s960 + $0xd8] sm:$0xff] %v1069
                  %v1071 = vld [vmem:[%s959 + $0x370] sm:$0xff]
                  %1072 = vst [vmem:[%s960 + $0xdc] sm:$0xff] %v1071
                  %v1073 = vld [vmem:[%s959 + $0x380] sm:$0xff]
                  %1074 = vst [vmem:[%s960 + $0xe0] sm:$0xff] %v1073
                  %v1075 = vld [vmem:[%s959 + $0x390] sm:$0xff]
                  %1076 = vst [vmem:[%s960 + $0xe4] sm:$0xff] %v1075
                  %v1077 = vld [vmem:[%s959 + $0x3a0] sm:$0xff]
                  %1078 = vst [vmem:[%s960 + $0xe8] sm:$0xff] %v1077
                  %v1079 = vld [vmem:[%s959 + $0x3b0] sm:$0xff]
                  %1080 = vst [vmem:[%s960 + $0xec] sm:$0xff] %v1079
                  %v1081 = vld [vmem:[%s959 + $0x3c0] sm:$0xff]
                  %1082 = vst [vmem:[%s960 + $0xf0] sm:$0xff] %v1081
                  %v1083 = vld [vmem:[%s959 + $0x3d0] sm:$0xff]
                  %1084 = vst [vmem:[%s960 + $0xf4] sm:$0xff] %v1083
                  %v1085 = vld [vmem:[%s959 + $0x3e0] sm:$0xff]
                  %1086 = vst [vmem:[%s960 + $0xf8] sm:$0xff] %v1085
                  %v1087 = vld [vmem:[%s959 + $0x3f0] sm:$0xff]
                  %1088 = vst [vmem:[%s960 + $0xfc] sm:$0xff] %v1087
                  %v1089 = vld [vmem:[%s959 + $0x400] sm:$0xff]
                  %1090 = vst [vmem:[%s960 + $0x100] sm:$0xff] %v1089
                  %v1091 = vld [vmem:[%s959 + $0x410] sm:$0xff]
                  %1092 = vst [vmem:[%s960 + $0x104] sm:$0xff] %v1091
                  %v1093 = vld [vmem:[%s959 + $0x420] sm:$0xff]
                  %1094 = vst [vmem:[%s960 + $0x108] sm:$0xff] %v1093
                  %v1095 = vld [vmem:[%s959 + $0x430] sm:$0xff]
                  %1096 = vst [vmem:[%s960 + $0x10c] sm:$0xff] %v1095
                  %v1097 = vld [vmem:[%s959 + $0x440] sm:$0xff]
                  %1098 = vst [vmem:[%s960 + $0x110] sm:$0xff] %v1097
                  %v1099 = vld [vmem:[%s959 + $0x450] sm:$0xff]
                  %1100 = vst [vmem:[%s960 + $0x114] sm:$0xff] %v1099
                  %v1101 = vld [vmem:[%s959 + $0x460] sm:$0xff]
                  %1102 = vst [vmem:[%s960 + $0x118] sm:$0xff] %v1101
                  %v1103 = vld [vmem:[%s959 + $0x470] sm:$0xff]
                  %1104 = vst [vmem:[%s960 + $0x11c] sm:$0xff] %v1103
                  %v1105 = vld [vmem:[%s959 + $0x480] sm:$0xff]
                  %1106 = vst [vmem:[%s960 + $0x120] sm:$0xff] %v1105
                  %v1107 = vld [vmem:[%s959 + $0x490] sm:$0xff]
                  %1108 = vst [vmem:[%s960 + $0x124] sm:$0xff] %v1107
                  %v1109 = vld [vmem:[%s959 + $0x4a0] sm:$0xff]
                  %1110 = vst [vmem:[%s960 + $0x128] sm:$0xff] %v1109
                  %v1111 = vld [vmem:[%s959 + $0x4b0] sm:$0xff]
                  %1112 = vst [vmem:[%s960 + $0x12c] sm:$0xff] %v1111
                  %v1113 = vld [vmem:[%s959 + $0x4c0] sm:$0xff]
                  %1114 = vst [vmem:[%s960 + $0x130] sm:$0xff] %v1113
                  %v1115 = vld [vmem:[%s959 + $0x4d0] sm:$0xff]
                  %1116 = vst [vmem:[%s960 + $0x134] sm:$0xff] %v1115
                  %v1117 = vld [vmem:[%s959 + $0x4e0] sm:$0xff]
                  %1118 = vst [vmem:[%s960 + $0x138] sm:$0xff] %v1117
                  %v1119 = vld [vmem:[%s959 + $0x4f0] sm:$0xff]
                  %1120 = vst [vmem:[%s960 + $0x13c] sm:$0xff] %v1119
                  %v1121 = vld [vmem:[%s959 + $0x500] sm:$0xff]
                  %1122 = vst [vmem:[%s960 + $0x140] sm:$0xff] %v1121
                  %v1123 = vld [vmem:[%s959 + $0x510] sm:$0xff]
                  %1124 = vst [vmem:[%s960 + $0x144] sm:$0xff] %v1123
                  %v1125 = vld [vmem:[%s959 + $0x520] sm:$0xff]
                  %1126 = vst [vmem:[%s960 + $0x148] sm:$0xff] %v1125
                  %v1127 = vld [vmem:[%s959 + $0x530] sm:$0xff]
                  %1128 = vst [vmem:[%s960 + $0x14c] sm:$0xff] %v1127
                  %v1129 = vld [vmem:[%s959 + $0x540] sm:$0xff]
                  %1130 = vst [vmem:[%s960 + $0x150] sm:$0xff] %v1129
                  %v1131 = vld [vmem:[%s959 + $0x550] sm:$0xff]
                  %1132 = vst [vmem:[%s960 + $0x154] sm:$0xff] %v1131
                  %v1133 = vld [vmem:[%s959 + $0x560] sm:$0xff]
                  %1134 = vst [vmem:[%s960 + $0x158] sm:$0xff] %v1133
                  %v1135 = vld [vmem:[%s959 + $0x570] sm:$0xff]
                  %1136 = vst [vmem:[%s960 + $0x15c] sm:$0xff] %v1135
                  %v1137 = vld [vmem:[%s959 + $0x580] sm:$0xff]
                  %1138 = vst [vmem:[%s960 + $0x160] sm:$0xff] %v1137
                  %v1139 = vld [vmem:[%s959 + $0x590] sm:$0xff]
                  %1140 = vst [vmem:[%s960 + $0x164] sm:$0xff] %v1139
                  %v1141 = vld [vmem:[%s959 + $0x5a0] sm:$0xff]
                  %1142 = vst [vmem:[%s960 + $0x168] sm:$0xff] %v1141
                  %v1143 = vld [vmem:[%s959 + $0x5b0] sm:$0xff]
                  %1144 = vst [vmem:[%s960 + $0x16c] sm:$0xff] %v1143
                  %v1145 = vld [vmem:[%s959 + $0x5c0] sm:$0xff]
                  %1146 = vst [vmem:[%s960 + $0x170] sm:$0xff] %v1145
                  %v1147 = vld [vmem:[%s959 + $0x5d0] sm:$0xff]
                  %1148 = vst [vmem:[%s960 + $0x174] sm:$0xff] %v1147
                  %v1149 = vld [vmem:[%s959 + $0x5e0] sm:$0xff]
                  %1150 = vst [vmem:[%s960 + $0x178] sm:$0xff] %v1149
                  %v1151 = vld [vmem:[%s959 + $0x5f0] sm:$0xff]
                  %1152 = vst [vmem:[%s960 + $0x17c] sm:$0xff] %v1151
                  %v1153 = vld [vmem:[%s959 + $0x600] sm:$0xff]
                  %1154 = vst [vmem:[%s960 + $0x180] sm:$0xff] %v1153
                  %v1155 = vld [vmem:[%s959 + $0x610] sm:$0xff]
                  %1156 = vst [vmem:[%s960 + $0x184] sm:$0xff] %v1155
                  %v1157 = vld [vmem:[%s959 + $0x620] sm:$0xff]
                  %1158 = vst [vmem:[%s960 + $0x188] sm:$0xff] %v1157
                  %v1159 = vld [vmem:[%s959 + $0x630] sm:$0xff]
                  %1160 = vst [vmem:[%s960 + $0x18c] sm:$0xff] %v1159
                  %v1161 = vld [vmem:[%s959 + $0x640] sm:$0xff]
                  %1162 = vst [vmem:[%s960 + $0x190] sm:$0xff] %v1161
                  %v1163 = vld [vmem:[%s959 + $0x650] sm:$0xff]
                  %1164 = vst [vmem:[%s960 + $0x194] sm:$0xff] %v1163
                  %v1165 = vld [vmem:[%s959 + $0x660] sm:$0xff]
                  %1166 = vst [vmem:[%s960 + $0x198] sm:$0xff] %v1165
                  %v1167 = vld [vmem:[%s959 + $0x670] sm:$0xff]
                  %1168 = vst [vmem:[%s960 + $0x19c] sm:$0xff] %v1167
                  %v1169 = vld [vmem:[%s959 + $0x680] sm:$0xff]
                  %1170 = vst [vmem:[%s960 + $0x1a0] sm:$0xff] %v1169
                  %v1171 = vld [vmem:[%s959 + $0x690] sm:$0xff]
                  %1172 = vst [vmem:[%s960 + $0x1a4] sm:$0xff] %v1171
                  %v1173 = vld [vmem:[%s959 + $0x6a0] sm:$0xff]
                  %1174 = vst [vmem:[%s960 + $0x1a8] sm:$0xff] %v1173
                  %v1175 = vld [vmem:[%s959 + $0x6b0] sm:$0xff]
                  %1176 = vst [vmem:[%s960 + $0x1ac] sm:$0xff] %v1175
                  %v1177 = vld [vmem:[%s959 + $0x6c0] sm:$0xff]
                  %1178 = vst [vmem:[%s960 + $0x1b0] sm:$0xff] %v1177
                  %v1179 = vld [vmem:[%s959 + $0x6d0] sm:$0xff]
                  %1180 = vst [vmem:[%s960 + $0x1b4] sm:$0xff] %v1179
                  %v1181 = vld [vmem:[%s959 + $0x6e0] sm:$0xff]
                  %1182 = vst [vmem:[%s960 + $0x1b8] sm:$0xff] %v1181
                  %v1183 = vld [vmem:[%s959 + $0x6f0] sm:$0xff]
                  %1184 = vst [vmem:[%s960 + $0x1bc] sm:$0xff] %v1183
                  %v1185 = vld [vmem:[%s959 + $0x700] sm:$0xff]
                  %1186 = vst [vmem:[%s960 + $0x1c0] sm:$0xff] %v1185
                  %v1187 = vld [vmem:[%s959 + $0x710] sm:$0xff]
                  %1188 = vst [vmem:[%s960 + $0x1c4] sm:$0xff] %v1187
                  %v1189 = vld [vmem:[%s959 + $0x720] sm:$0xff]
                  %1190 = vst [vmem:[%s960 + $0x1c8] sm:$0xff] %v1189
                  %v1191 = vld [vmem:[%s959 + $0x730] sm:$0xff]
                  %1192 = vst [vmem:[%s960 + $0x1cc] sm:$0xff] %v1191
                  %v1193 = vld [vmem:[%s959 + $0x740] sm:$0xff]
                  %1194 = vst [vmem:[%s960 + $0x1d0] sm:$0xff] %v1193
                  %v1195 = vld [vmem:[%s959 + $0x750] sm:$0xff]
                  %1196 = vst [vmem:[%s960 + $0x1d4] sm:$0xff] %v1195
                  %v1197 = vld [vmem:[%s959 + $0x760] sm:$0xff]
                  %1198 = vst [vmem:[%s960 + $0x1d8] sm:$0xff] %v1197
                  %v1199 = vld [vmem:[%s959 + $0x770] sm:$0xff]
                  %1200 = vst [vmem:[%s960 + $0x1dc] sm:$0xff] %v1199
                  %v1201 = vld [vmem:[%s959 + $0x780] sm:$0xff]
                  %1202 = vst [vmem:[%s960 + $0x1e0] sm:$0xff] %v1201
                  %v1203 = vld [vmem:[%s959 + $0x790] sm:$0xff]
                  %1204 = vst [vmem:[%s960 + $0x1e4] sm:$0xff] %v1203
                  %v1205 = vld [vmem:[%s959 + $0x7a0] sm:$0xff]
                  %1206 = vst [vmem:[%s960 + $0x1e8] sm:$0xff] %v1205
                  %v1207 = vld [vmem:[%s959 + $0x7b0] sm:$0xff]
                  %1208 = vst [vmem:[%s960 + $0x1ec] sm:$0xff] %v1207
                  %v1209 = vld [vmem:[%s959 + $0x7c0] sm:$0xff]
                  %1210 = vst [vmem:[%s960 + $0x1f0] sm:$0xff] %v1209
                  %v1211 = vld [vmem:[%s959 + $0x7d0] sm:$0xff]
                  %1212 = vst [vmem:[%s960 + $0x1f4] sm:$0xff] %v1211
                  %v1213 = vld [vmem:[%s959 + $0x7e0] sm:$0xff]
                  %1214 = vst [vmem:[%s960 + $0x1f8] sm:$0xff] %v1213
                  %v1215 = vld [vmem:[%s959 + $0x7f0] sm:$0xff]
                  %1216 = vst [vmem:[%s960 + $0x1fc] sm:$0xff] %v1215
                  %v1217 = vld [vmem:[%s959 + $0x800] sm:$0xff]
                  %1218 = vst [vmem:[%s960 + $0x200] sm:$0xff] %v1217
                  %v1219 = vld [vmem:[%s959 + $0x810] sm:$0xff]
                  %1220 = vst [vmem:[%s960 + $0x204] sm:$0xff] %v1219
                  %v1221 = vld [vmem:[%s959 + $0x820] sm:$0xff]
                  %1222 = vst [vmem:[%s960 + $0x208] sm:$0xff] %v1221
                  %v1223 = vld [vmem:[%s959 + $0x830] sm:$0xff]
                  %1224 = vst [vmem:[%s960 + $0x20c] sm:$0xff] %v1223
                  %v1225 = vld [vmem:[%s959 + $0x840] sm:$0xff]
                  %1226 = vst [vmem:[%s960 + $0x210] sm:$0xff] %v1225
                  %v1227 = vld [vmem:[%s959 + $0x850] sm:$0xff]
                  %1228 = vst [vmem:[%s960 + $0x214] sm:$0xff] %v1227
                  %v1229 = vld [vmem:[%s959 + $0x860] sm:$0xff]
                  %1230 = vst [vmem:[%s960 + $0x218] sm:$0xff] %v1229
                  %v1231 = vld [vmem:[%s959 + $0x870] sm:$0xff]
                  %1232 = vst [vmem:[%s960 + $0x21c] sm:$0xff] %v1231
                  %v1233 = vld [vmem:[%s959 + $0x880] sm:$0xff]
                  %1234 = vst [vmem:[%s960 + $0x220] sm:$0xff] %v1233
                  %v1235 = vld [vmem:[%s959 + $0x890] sm:$0xff]
                  %1236 = vst [vmem:[%s960 + $0x224] sm:$0xff] %v1235
                  %v1237 = vld [vmem:[%s959 + $0x8a0] sm:$0xff]
                  %1238 = vst [vmem:[%s960 + $0x228] sm:$0xff] %v1237
                  %v1239 = vld [vmem:[%s959 + $0x8b0] sm:$0xff]
                  %1240 = vst [vmem:[%s960 + $0x22c] sm:$0xff] %v1239
                  %v1241 = vld [vmem:[%s959 + $0x8c0] sm:$0xff]
                  %1242 = vst [vmem:[%s960 + $0x230] sm:$0xff] %v1241
                  %v1243 = vld [vmem:[%s959 + $0x8d0] sm:$0xff]
                  %1244 = vst [vmem:[%s960 + $0x234] sm:$0xff] %v1243
                  %v1245 = vld [vmem:[%s959 + $0x8e0] sm:$0xff]
                  %1246 = vst [vmem:[%s960 + $0x238] sm:$0xff] %v1245
                  %v1247 = vld [vmem:[%s959 + $0x8f0] sm:$0xff]
                  %1248 = vst [vmem:[%s960 + $0x23c] sm:$0xff] %v1247
                  %v1249 = vld [vmem:[%s959 + $0x900] sm:$0xff]
                  %1250 = vst [vmem:[%s960 + $0x240] sm:$0xff] %v1249
                  %v1251 = vld [vmem:[%s959 + $0x910] sm:$0xff]
                  %1252 = vst [vmem:[%s960 + $0x244] sm:$0xff] %v1251
                  %v1253 = vld [vmem:[%s959 + $0x920] sm:$0xff]
                  %1254 = vst [vmem:[%s960 + $0x248] sm:$0xff] %v1253
                  %v1255 = vld [vmem:[%s959 + $0x930] sm:$0xff]
                  %1256 = vst [vmem:[%s960 + $0x24c] sm:$0xff] %v1255
                  %v1257 = vld [vmem:[%s959 + $0x940] sm:$0xff]
                  %1258 = vst [vmem:[%s960 + $0x250] sm:$0xff] %v1257
                  %v1259 = vld [vmem:[%s959 + $0x950] sm:$0xff]
                  %1260 = vst [vmem:[%s960 + $0x254] sm:$0xff] %v1259
                  %v1261 = vld [vmem:[%s959 + $0x960] sm:$0xff]
                  %1262 = vst [vmem:[%s960 + $0x258] sm:$0xff] %v1261
                  %v1263 = vld [vmem:[%s959 + $0x970] sm:$0xff]
                  %1264 = vst [vmem:[%s960 + $0x25c] sm:$0xff] %v1263
                  %v1265 = vld [vmem:[%s959 + $0x980] sm:$0xff]
                  %1266 = vst [vmem:[%s960 + $0x260] sm:$0xff] %v1265
                  %v1267 = vld [vmem:[%s959 + $0x990] sm:$0xff]
                  %1268 = vst [vmem:[%s960 + $0x264] sm:$0xff] %v1267
                  %v1269 = vld [vmem:[%s959 + $0x9a0] sm:$0xff]
                  %1270 = vst [vmem:[%s960 + $0x268] sm:$0xff] %v1269
                  %v1271 = vld [vmem:[%s959 + $0x9b0] sm:$0xff]
                  %1272 = vst [vmem:[%s960 + $0x26c] sm:$0xff] %v1271
                  %v1273 = vld [vmem:[%s959 + $0x9c0] sm:$0xff]
                  %1274 = vst [vmem:[%s960 + $0x270] sm:$0xff] %v1273
                  %v1275 = vld [vmem:[%s959 + $0x9d0] sm:$0xff]
                  %1276 = vst [vmem:[%s960 + $0x274] sm:$0xff] %v1275
                  %v1277 = vld [vmem:[%s959 + $0x9e0] sm:$0xff]
                  %1278 = vst [vmem:[%s960 + $0x278] sm:$0xff] %v1277
                  %v1279 = vld [vmem:[%s959 + $0x9f0] sm:$0xff]
                  %1280 = vst [vmem:[%s960 + $0x27c] sm:$0xff] %v1279
                  %v1281 = vld [vmem:[%s959 + $0xa00] sm:$0xff]
                  %1282 = vst [vmem:[%s960 + $0x280] sm:$0xff] %v1281
                  %v1283 = vld [vmem:[%s959 + $0xa10] sm:$0xff]
                  %1284 = vst [vmem:[%s960 + $0x284] sm:$0xff] %v1283
                  %v1285 = vld [vmem:[%s959 + $0xa20] sm:$0xff]
                  %1286 = vst [vmem:[%s960 + $0x288] sm:$0xff] %v1285
                  %v1287 = vld [vmem:[%s959 + $0xa30] sm:$0xff]
                  %1288 = vst [vmem:[%s960 + $0x28c] sm:$0xff] %v1287
                  %v1289 = vld [vmem:[%s959 + $0xa40] sm:$0xff]
                  %1290 = vst [vmem:[%s960 + $0x290] sm:$0xff] %v1289
                  %v1291 = vld [vmem:[%s959 + $0xa50] sm:$0xff]
                  %1292 = vst [vmem:[%s960 + $0x294] sm:$0xff] %v1291
                  %v1293 = vld [vmem:[%s959 + $0xa60] sm:$0xff]
                  %1294 = vst [vmem:[%s960 + $0x298] sm:$0xff] %v1293
                  %v1295 = vld [vmem:[%s959 + $0xa70] sm:$0xff]
                  %1296 = vst [vmem:[%s960 + $0x29c] sm:$0xff] %v1295
                  %v1297 = vld [vmem:[%s959 + $0xa80] sm:$0xff]
                  %1298 = vst [vmem:[%s960 + $0x2a0] sm:$0xff] %v1297
                  %v1299 = vld [vmem:[%s959 + $0xa90] sm:$0xff]
                  %1300 = vst [vmem:[%s960 + $0x2a4] sm:$0xff] %v1299
                  %v1301 = vld [vmem:[%s959 + $0xaa0] sm:$0xff]
                  %1302 = vst [vmem:[%s960 + $0x2a8] sm:$0xff] %v1301
                  %v1303 = vld [vmem:[%s959 + $0xab0] sm:$0xff]
                  %1304 = vst [vmem:[%s960 + $0x2ac] sm:$0xff] %v1303
                  %v1305 = vld [vmem:[%s959 + $0xac0] sm:$0xff]
                  %1306 = vst [vmem:[%s960 + $0x2b0] sm:$0xff] %v1305
                  %v1307 = vld [vmem:[%s959 + $0xad0] sm:$0xff]
                  %1308 = vst [vmem:[%s960 + $0x2b4] sm:$0xff] %v1307
                  %v1309 = vld [vmem:[%s959 + $0xae0] sm:$0xff]
                  %1310 = vst [vmem:[%s960 + $0x2b8] sm:$0xff] %v1309
                  %v1311 = vld [vmem:[%s959 + $0xaf0] sm:$0xff]
                  %1312 = vst [vmem:[%s960 + $0x2bc] sm:$0xff] %v1311
                  %v1313 = vld [vmem:[%s959 + $0xb00] sm:$0xff]
                  %1314 = vst [vmem:[%s960 + $0x2c0] sm:$0xff] %v1313
                  %v1315 = vld [vmem:[%s959 + $0xb10] sm:$0xff]
                  %1316 = vst [vmem:[%s960 + $0x2c4] sm:$0xff] %v1315
                  %v1317 = vld [vmem:[%s959 + $0xb20] sm:$0xff]
                  %1318 = vst [vmem:[%s960 + $0x2c8] sm:$0xff] %v1317
                  %v1319 = vld [vmem:[%s959 + $0xb30] sm:$0xff]
                  %1320 = vst [vmem:[%s960 + $0x2cc] sm:$0xff] %v1319
                  %v1321 = vld [vmem:[%s959 + $0xb40] sm:$0xff]
                  %1322 = vst [vmem:[%s960 + $0x2d0] sm:$0xff] %v1321
                  %v1323 = vld [vmem:[%s959 + $0xb50] sm:$0xff]
                  %1324 = vst [vmem:[%s960 + $0x2d4] sm:$0xff] %v1323
                  %v1325 = vld [vmem:[%s959 + $0xb60] sm:$0xff]
                  %1326 = vst [vmem:[%s960 + $0x2d8] sm:$0xff] %v1325
                  %v1327 = vld [vmem:[%s959 + $0xb70] sm:$0xff]
                  %1328 = vst [vmem:[%s960 + $0x2dc] sm:$0xff] %v1327
                  %v1329 = vld [vmem:[%s959 + $0xb80] sm:$0xff]
                  %1330 = vst [vmem:[%s960 + $0x2e0] sm:$0xff] %v1329
                  %v1331 = vld [vmem:[%s959 + $0xb90] sm:$0xff]
                  %1332 = vst [vmem:[%s960 + $0x2e4] sm:$0xff] %v1331
                  %v1333 = vld [vmem:[%s959 + $0xba0] sm:$0xff]
                  %1334 = vst [vmem:[%s960 + $0x2e8] sm:$0xff] %v1333
                  %v1335 = vld [vmem:[%s959 + $0xbb0] sm:$0xff]
                  %1336 = vst [vmem:[%s960 + $0x2ec] sm:$0xff] %v1335
                  %v1337 = vld [vmem:[%s959 + $0xbc0] sm:$0xff]
                  %1338 = vst [vmem:[%s960 + $0x2f0] sm:$0xff] %v1337
                  %v1339 = vld [vmem:[%s959 + $0xbd0] sm:$0xff]
                  %1340 = vst [vmem:[%s960 + $0x2f4] sm:$0xff] %v1339
                  %v1341 = vld [vmem:[%s959 + $0xbe0] sm:$0xff]
                  %1342 = vst [vmem:[%s960 + $0x2f8] sm:$0xff] %v1341
                  %v1343 = vld [vmem:[%s959 + $0xbf0] sm:$0xff]
                  %1344 = vst [vmem:[%s960 + $0x2fc] sm:$0xff] %v1343
                  %v1345 = vld [vmem:[%s959 + $0xc00] sm:$0xff]
                  %1346 = vst [vmem:[%s960 + $0x300] sm:$0xff] %v1345
                  %v1347 = vld [vmem:[%s959 + $0xc10] sm:$0xff]
                  %1348 = vst [vmem:[%s960 + $0x304] sm:$0xff] %v1347
                  %v1349 = vld [vmem:[%s959 + $0xc20] sm:$0xff]
                  %1350 = vst [vmem:[%s960 + $0x308] sm:$0xff] %v1349
                  %v1351 = vld [vmem:[%s959 + $0xc30] sm:$0xff]
                  %1352 = vst [vmem:[%s960 + $0x30c] sm:$0xff] %v1351
                  %v1353 = vld [vmem:[%s959 + $0xc40] sm:$0xff]
                  %1354 = vst [vmem:[%s960 + $0x310] sm:$0xff] %v1353
                  %v1355 = vld [vmem:[%s959 + $0xc50] sm:$0xff]
                  %1356 = vst [vmem:[%s960 + $0x314] sm:$0xff] %v1355
                  %v1357 = vld [vmem:[%s959 + $0xc60] sm:$0xff]
                  %1358 = vst [vmem:[%s960 + $0x318] sm:$0xff] %v1357
                  %v1359 = vld [vmem:[%s959 + $0xc70] sm:$0xff]
                  %1360 = vst [vmem:[%s960 + $0x31c] sm:$0xff] %v1359
                  %v1361 = vld [vmem:[%s959 + $0xc80] sm:$0xff]
                  %1362 = vst [vmem:[%s960 + $0x320] sm:$0xff] %v1361
                  %v1363 = vld [vmem:[%s959 + $0xc90] sm:$0xff]
                  %1364 = vst [vmem:[%s960 + $0x324] sm:$0xff] %v1363
                  %v1365 = vld [vmem:[%s959 + $0xca0] sm:$0xff]
                  %1366 = vst [vmem:[%s960 + $0x328] sm:$0xff] %v1365
                  %v1367 = vld [vmem:[%s959 + $0xcb0] sm:$0xff]
                  %1368 = vst [vmem:[%s960 + $0x32c] sm:$0xff] %v1367
                  %v1369 = vld [vmem:[%s959 + $0xcc0] sm:$0xff]
                  %1370 = vst [vmem:[%s960 + $0x330] sm:$0xff] %v1369
                  %v1371 = vld [vmem:[%s959 + $0xcd0] sm:$0xff]
                  %1372 = vst [vmem:[%s960 + $0x334] sm:$0xff] %v1371
                  %v1373 = vld [vmem:[%s959 + $0xce0] sm:$0xff]
                  %1374 = vst [vmem:[%s960 + $0x338] sm:$0xff] %v1373
                  %v1375 = vld [vmem:[%s959 + $0xcf0] sm:$0xff]
                  %1376 = vst [vmem:[%s960 + $0x33c] sm:$0xff] %v1375
                  %v1377 = vld [vmem:[%s959 + $0xd00] sm:$0xff]
                  %1378 = vst [vmem:[%s960 + $0x340] sm:$0xff] %v1377
                  %v1379 = vld [vmem:[%s959 + $0xd10] sm:$0xff]
                  %1380 = vst [vmem:[%s960 + $0x344] sm:$0xff] %v1379
                  %v1381 = vld [vmem:[%s959 + $0xd20] sm:$0xff]
                  %1382 = vst [vmem:[%s960 + $0x348] sm:$0xff] %v1381
                  %v1383 = vld [vmem:[%s959 + $0xd30] sm:$0xff]
                  %1384 = vst [vmem:[%s960 + $0x34c] sm:$0xff] %v1383
                  %v1385 = vld [vmem:[%s959 + $0xd40] sm:$0xff]
                  %1386 = vst [vmem:[%s960 + $0x350] sm:$0xff] %v1385
                  %v1387 = vld [vmem:[%s959 + $0xd50] sm:$0xff]
                  %1388 = vst [vmem:[%s960 + $0x354] sm:$0xff] %v1387
                  %v1389 = vld [vmem:[%s959 + $0xd60] sm:$0xff]
                  %1390 = vst [vmem:[%s960 + $0x358] sm:$0xff] %v1389
                  %v1391 = vld [vmem:[%s959 + $0xd70] sm:$0xff]
                  %1392 = vst [vmem:[%s960 + $0x35c] sm:$0xff] %v1391
                  %v1393 = vld [vmem:[%s959 + $0xd80] sm:$0xff]
                  %1394 = vst [vmem:[%s960 + $0x360] sm:$0xff] %v1393
                  %v1395 = vld [vmem:[%s959 + $0xd90] sm:$0xff]
                  %1396 = vst [vmem:[%s960 + $0x364] sm:$0xff] %v1395
                  %v1397 = vld [vmem:[%s959 + $0xda0] sm:$0xff]
                  %1398 = vst [vmem:[%s960 + $0x368] sm:$0xff] %v1397
                  %v1399 = vld [vmem:[%s959 + $0xdb0] sm:$0xff]
                  %1400 = vst [vmem:[%s960 + $0x36c] sm:$0xff] %v1399
                  %v1401 = vld [vmem:[%s959 + $0xdc0] sm:$0xff]
                  %1402 = vst [vmem:[%s960 + $0x370] sm:$0xff] %v1401
                  %v1403 = vld [vmem:[%s959 + $0xdd0] sm:$0xff]
                  %1404 = vst [vmem:[%s960 + $0x374] sm:$0xff] %v1403
                  %v1405 = vld [vmem:[%s959 + $0xde0] sm:$0xff]
                  %1406 = vst [vmem:[%s960 + $0x378] sm:$0xff] %v1405
                  %v1407 = vld [vmem:[%s959 + $0xdf0] sm:$0xff]
                  %1408 = vst [vmem:[%s960 + $0x37c] sm:$0xff] %v1407
                  %v1409 = vld [vmem:[%s959 + $0xe00] sm:$0xff]
                  %1410 = vst [vmem:[%s960 + $0x380] sm:$0xff] %v1409
                  %v1411 = vld [vmem:[%s959 + $0xe10] sm:$0xff]
                  %1412 = vst [vmem:[%s960 + $0x384] sm:$0xff] %v1411
                  %v1413 = vld [vmem:[%s959 + $0xe20] sm:$0xff]
                  %1414 = vst [vmem:[%s960 + $0x388] sm:$0xff] %v1413
                  %v1415 = vld [vmem:[%s959 + $0xe30] sm:$0xff]
                  %1416 = vst [vmem:[%s960 + $0x38c] sm:$0xff] %v1415
                  %v1417 = vld [vmem:[%s959 + $0xe40] sm:$0xff]
                  %1418 = vst [vmem:[%s960 + $0x390] sm:$0xff] %v1417
                  %v1419 = vld [vmem:[%s959 + $0xe50] sm:$0xff]
                  %1420 = vst [vmem:[%s960 + $0x394] sm:$0xff] %v1419
                  %v1421 = vld [vmem:[%s959 + $0xe60] sm:$0xff]
                  %1422 = vst [vmem:[%s960 + $0x398] sm:$0xff] %v1421
                  %v1423 = vld [vmem:[%s959 + $0xe70] sm:$0xff]
                  %1424 = vst [vmem:[%s960 + $0x39c] sm:$0xff] %v1423
                  %v1425 = vld [vmem:[%s959 + $0xe80] sm:$0xff]
                  %1426 = vst [vmem:[%s960 + $0x3a0] sm:$0xff] %v1425
                  %v1427 = vld [vmem:[%s959 + $0xe90] sm:$0xff]
                  %1428 = vst [vmem:[%s960 + $0x3a4] sm:$0xff] %v1427
                  %v1429 = vld [vmem:[%s959 + $0xea0] sm:$0xff]
                  %1430 = vst [vmem:[%s960 + $0x3a8] sm:$0xff] %v1429
                  %v1431 = vld [vmem:[%s959 + $0xeb0] sm:$0xff]
                  %1432 = vst [vmem:[%s960 + $0x3ac] sm:$0xff] %v1431
                  %v1433 = vld [vmem:[%s959 + $0xec0] sm:$0xff]
                  %1434 = vst [vmem:[%s960 + $0x3b0] sm:$0xff] %v1433
                  %v1435 = vld [vmem:[%s959 + $0xed0] sm:$0xff]
                  %1436 = vst [vmem:[%s960 + $0x3b4] sm:$0xff] %v1435
                  %v1437 = vld [vmem:[%s959 + $0xee0] sm:$0xff]
                  %1438 = vst [vmem:[%s960 + $0x3b8] sm:$0xff] %v1437
                  %v1439 = vld [vmem:[%s959 + $0xef0] sm:$0xff]
                  %1440 = vst [vmem:[%s960 + $0x3bc] sm:$0xff] %v1439
                  %v1441 = vld [vmem:[%s959 + $0xf00] sm:$0xff]
                  %1442 = vst [vmem:[%s960 + $0x3c0] sm:$0xff] %v1441
                  %v1443 = vld [vmem:[%s959 + $0xf10] sm:$0xff]
                  %1444 = vst [vmem:[%s960 + $0x3c4] sm:$0xff] %v1443
                  %v1445 = vld [vmem:[%s959 + $0xf20] sm:$0xff]
                  %1446 = vst [vmem:[%s960 + $0x3c8] sm:$0xff] %v1445
                  %v1447 = vld [vmem:[%s959 + $0xf30] sm:$0xff]
                  %1448 = vst [vmem:[%s960 + $0x3cc] sm:$0xff] %v1447
                  %v1449 = vld [vmem:[%s959 + $0xf40] sm:$0xff]
                  %1450 = vst [vmem:[%s960 + $0x3d0] sm:$0xff] %v1449
                  %v1451 = vld [vmem:[%s959 + $0xf50] sm:$0xff]
                  %1452 = vst [vmem:[%s960 + $0x3d4] sm:$0xff] %v1451
                  %v1453 = vld [vmem:[%s959 + $0xf60] sm:$0xff]
                  %1454 = vst [vmem:[%s960 + $0x3d8] sm:$0xff] %v1453
                  %v1455 = vld [vmem:[%s959 + $0xf70] sm:$0xff]
                  %1456 = vst [vmem:[%s960 + $0x3dc] sm:$0xff] %v1455
                  %v1457 = vld [vmem:[%s959 + $0xf80] sm:$0xff]
                  %1458 = vst [vmem:[%s960 + $0x3e0] sm:$0xff] %v1457
                  %v1459 = vld [vmem:[%s959 + $0xf90] sm:$0xff]
                  %1460 = vst [vmem:[%s960 + $0x3e4] sm:$0xff] %v1459
                  %v1461 = vld [vmem:[%s959 + $0xfa0] sm:$0xff]
                  %1462 = vst [vmem:[%s960 + $0x3e8] sm:$0xff] %v1461
                  %v1463 = vld [vmem:[%s959 + $0xfb0] sm:$0xff]
                  %1464 = vst [vmem:[%s960 + $0x3ec] sm:$0xff] %v1463
                  %v1465 = vld [vmem:[%s959 + $0xfc0] sm:$0xff]
                  %1466 = vst [vmem:[%s960 + $0x3f0] sm:$0xff] %v1465
                  %v1467 = vld [vmem:[%s959 + $0xfd0] sm:$0xff]
                  %1468 = vst [vmem:[%s960 + $0x3f4] sm:$0xff] %v1467
                  %v1469 = vld [vmem:[%s959 + $0xfe0] sm:$0xff]
                  %1470 = vst [vmem:[%s960 + $0x3f8] sm:$0xff] %v1469
                  %v1471 = vld [vmem:[%s959 + $0xff0] sm:$0xff]
                  %1472 = vst [vmem:[%s960 + $0x3fc] sm:$0xff] %v1471
                  %v1473 = vld [vmem:[%s959 + $0x1000] sm:$0xff]
                  %1474 = vst [vmem:[%s960 + $0x400] sm:$0xff] %v1473
                  %v1475 = vld [vmem:[%s959 + $0x1010] sm:$0xff]
                  %1476 = vst [vmem:[%s960 + $0x404] sm:$0xff] %v1475
                  %v1477 = vld [vmem:[%s959 + $0x1020] sm:$0xff]
                  %1478 = vst [vmem:[%s960 + $0x408] sm:$0xff] %v1477
                  %v1479 = vld [vmem:[%s959 + $0x1030] sm:$0xff]
                  %1480 = vst [vmem:[%s960 + $0x40c] sm:$0xff] %v1479
                  %v1481 = vld [vmem:[%s959 + $0x1040] sm:$0xff]
                  %1482 = vst [vmem:[%s960 + $0x410] sm:$0xff] %v1481
                  %v1483 = vld [vmem:[%s959 + $0x1050] sm:$0xff]
                  %1484 = vst [vmem:[%s960 + $0x414] sm:$0xff] %v1483
                  %v1485 = vld [vmem:[%s959 + $0x1060] sm:$0xff]
                  %1486 = vst [vmem:[%s960 + $0x418] sm:$0xff] %v1485
                  %v1487 = vld [vmem:[%s959 + $0x1070] sm:$0xff]
                  %1488 = vst [vmem:[%s960 + $0x41c] sm:$0xff] %v1487
                  %v1489 = vld [vmem:[%s959 + $0x1080] sm:$0xff]
                  %1490 = vst [vmem:[%s960 + $0x420] sm:$0xff] %v1489
                  %v1491 = vld [vmem:[%s959 + $0x1090] sm:$0xff]
                  %1492 = vst [vmem:[%s960 + $0x424] sm:$0xff] %v1491
                  %v1493 = vld [vmem:[%s959 + $0x10a0] sm:$0xff]
                  %1494 = vst [vmem:[%s960 + $0x428] sm:$0xff] %v1493
                  %v1495 = vld [vmem:[%s959 + $0x10b0] sm:$0xff]
                  %1496 = vst [vmem:[%s960 + $0x42c] sm:$0xff] %v1495
                  %v1497 = vld [vmem:[%s959 + $0x10c0] sm:$0xff]
                  %1498 = vst [vmem:[%s960 + $0x430] sm:$0xff] %v1497
                  %v1499 = vld [vmem:[%s959 + $0x10d0] sm:$0xff]
                  %1500 = vst [vmem:[%s960 + $0x434] sm:$0xff] %v1499
                  %v1501 = vld [vmem:[%s959 + $0x10e0] sm:$0xff]
                  %1502 = vst [vmem:[%s960 + $0x438] sm:$0xff] %v1501
                  %v1503 = vld [vmem:[%s959 + $0x10f0] sm:$0xff]
                  %1504 = vst [vmem:[%s960 + $0x43c] sm:$0xff] %v1503
                  %v1505 = vld [vmem:[%s959 + $0x1100] sm:$0xff]
                  %1506 = vst [vmem:[%s960 + $0x440] sm:$0xff] %v1505
                  %v1507 = vld [vmem:[%s959 + $0x1110] sm:$0xff]
                  %1508 = vst [vmem:[%s960 + $0x444] sm:$0xff] %v1507
                  %v1509 = vld [vmem:[%s959 + $0x1120] sm:$0xff]
                  %1510 = vst [vmem:[%s960 + $0x448] sm:$0xff] %v1509
                  %v1511 = vld [vmem:[%s959 + $0x1130] sm:$0xff]
                  %1512 = vst [vmem:[%s960 + $0x44c] sm:$0xff] %v1511
                  %v1513 = vld [vmem:[%s959 + $0x1140] sm:$0xff]
                  %1514 = vst [vmem:[%s960 + $0x450] sm:$0xff] %v1513
                  %v1515 = vld [vmem:[%s959 + $0x1150] sm:$0xff]
                  %1516 = vst [vmem:[%s960 + $0x454] sm:$0xff] %v1515
                  %v1517 = vld [vmem:[%s959 + $0x1160] sm:$0xff]
                  %1518 = vst [vmem:[%s960 + $0x458] sm:$0xff] %v1517
                  %v1519 = vld [vmem:[%s959 + $0x1170] sm:$0xff]
                  %1520 = vst [vmem:[%s960 + $0x45c] sm:$0xff] %v1519
                  %v1521 = vld [vmem:[%s959 + $0x1180] sm:$0xff]
                  %1522 = vst [vmem:[%s960 + $0x460] sm:$0xff] %v1521
                  %v1523 = vld [vmem:[%s959 + $0x1190] sm:$0xff]
                  %1524 = vst [vmem:[%s960 + $0x464] sm:$0xff] %v1523
                  %v1525 = vld [vmem:[%s959 + $0x11a0] sm:$0xff]
                  %1526 = vst [vmem:[%s960 + $0x468] sm:$0xff] %v1525
                  %v1527 = vld [vmem:[%s959 + $0x11b0] sm:$0xff]
                  %1528 = vst [vmem:[%s960 + $0x46c] sm:$0xff] %v1527
                  %v1529 = vld [vmem:[%s959 + $0x11c0] sm:$0xff]
                  %1530 = vst [vmem:[%s960 + $0x470] sm:$0xff] %v1529
                  %v1531 = vld [vmem:[%s959 + $0x11d0] sm:$0xff]
                  %1532 = vst [vmem:[%s960 + $0x474] sm:$0xff] %v1531
                  %v1533 = vld [vmem:[%s959 + $0x11e0] sm:$0xff]
                  %1534 = vst [vmem:[%s960 + $0x478] sm:$0xff] %v1533
                  %v1535 = vld [vmem:[%s959 + $0x11f0] sm:$0xff]
                  %1536 = vst [vmem:[%s960 + $0x47c] sm:$0xff] %v1535
                  %v1537 = vld [vmem:[%s959 + $0x1200] sm:$0xff]
                  %1538 = vst [vmem:[%s960 + $0x480] sm:$0xff] %v1537
                  %v1539 = vld [vmem:[%s959 + $0x1210] sm:$0xff]
                  %1540 = vst [vmem:[%s960 + $0x484] sm:$0xff] %v1539
                  %v1541 = vld [vmem:[%s959 + $0x1220] sm:$0xff]
                  %1542 = vst [vmem:[%s960 + $0x488] sm:$0xff] %v1541
                  %v1543 = vld [vmem:[%s959 + $0x1230] sm:$0xff]
                  %1544 = vst [vmem:[%s960 + $0x48c] sm:$0xff] %v1543
                  %v1545 = vld [vmem:[%s959 + $0x1240] sm:$0xff]
                  %1546 = vst [vmem:[%s960 + $0x490] sm:$0xff] %v1545
                  %v1547 = vld [vmem:[%s959 + $0x1250] sm:$0xff]
                  %1548 = vst [vmem:[%s960 + $0x494] sm:$0xff] %v1547
                  %v1549 = vld [vmem:[%s959 + $0x1260] sm:$0xff]
                  %1550 = vst [vmem:[%s960 + $0x498] sm:$0xff] %v1549
                  %v1551 = vld [vmem:[%s959 + $0x1270] sm:$0xff]
                  %1552 = vst [vmem:[%s960 + $0x49c] sm:$0xff] %v1551
                  %v1553 = vld [vmem:[%s959 + $0x1280] sm:$0xff]
                  %1554 = vst [vmem:[%s960 + $0x4a0] sm:$0xff] %v1553
                  %v1555 = vld [vmem:[%s959 + $0x1290] sm:$0xff]
                  %1556 = vst [vmem:[%s960 + $0x4a4] sm:$0xff] %v1555
                  %v1557 = vld [vmem:[%s959 + $0x12a0] sm:$0xff]
                  %1558 = vst [vmem:[%s960 + $0x4a8] sm:$0xff] %v1557
                  %v1559 = vld [vmem:[%s959 + $0x12b0] sm:$0xff]
                  %1560 = vst [vmem:[%s960 + $0x4ac] sm:$0xff] %v1559
                  %v1561 = vld [vmem:[%s959 + $0x12c0] sm:$0xff]
                  %1562 = vst [vmem:[%s960 + $0x4b0] sm:$0xff] %v1561
                  %v1563 = vld [vmem:[%s959 + $0x12d0] sm:$0xff]
                  %1564 = vst [vmem:[%s960 + $0x4b4] sm:$0xff] %v1563
                  %v1565 = vld [vmem:[%s959 + $0x12e0] sm:$0xff]
                  %1566 = vst [vmem:[%s960 + $0x4b8] sm:$0xff] %v1565
                  %v1567 = vld [vmem:[%s959 + $0x12f0] sm:$0xff]
                  %1568 = vst [vmem:[%s960 + $0x4bc] sm:$0xff] %v1567
                  %v1569 = vld [vmem:[%s959 + $0x1300] sm:$0xff]
                  %1570 = vst [vmem:[%s960 + $0x4c0] sm:$0xff] %v1569
                  %v1571 = vld [vmem:[%s959 + $0x1310] sm:$0xff]
                  %1572 = vst [vmem:[%s960 + $0x4c4] sm:$0xff] %v1571
                  %v1573 = vld [vmem:[%s959 + $0x1320] sm:$0xff]
                  %1574 = vst [vmem:[%s960 + $0x4c8] sm:$0xff] %v1573
                  %v1575 = vld [vmem:[%s959 + $0x1330] sm:$0xff]
                  %1576 = vst [vmem:[%s960 + $0x4cc] sm:$0xff] %v1575
                  %v1577 = vld [vmem:[%s959 + $0x1340] sm:$0xff]
                  %1578 = vst [vmem:[%s960 + $0x4d0] sm:$0xff] %v1577
                  %v1579 = vld [vmem:[%s959 + $0x1350] sm:$0xff]
                  %1580 = vst [vmem:[%s960 + $0x4d4] sm:$0xff] %v1579
                  %v1581 = vld [vmem:[%s959 + $0x1360] sm:$0xff]
                  %1582 = vst [vmem:[%s960 + $0x4d8] sm:$0xff] %v1581
                  %v1583 = vld [vmem:[%s959 + $0x1370] sm:$0xff]
                  %1584 = vst [vmem:[%s960 + $0x4dc] sm:$0xff] %v1583
                  %v1585 = vld [vmem:[%s959 + $0x1380] sm:$0xff]
                  %1586 = vst [vmem:[%s960 + $0x4e0] sm:$0xff] %v1585
                  %v1587 = vld [vmem:[%s959 + $0x1390] sm:$0xff]
                  %1588 = vst [vmem:[%s960 + $0x4e4] sm:$0xff] %v1587
                  %v1589 = vld [vmem:[%s959 + $0x13a0] sm:$0xff]
                  %1590 = vst [vmem:[%s960 + $0x4e8] sm:$0xff] %v1589
                  %v1591 = vld [vmem:[%s959 + $0x13b0] sm:$0xff]
                  %1592 = vst [vmem:[%s960 + $0x4ec] sm:$0xff] %v1591
                  %v1593 = vld [vmem:[%s959 + $0x13c0] sm:$0xff]
                  %1594 = vst [vmem:[%s960 + $0x4f0] sm:$0xff] %v1593
                  %v1595 = vld [vmem:[%s959 + $0x13d0] sm:$0xff]
                  %1596 = vst [vmem:[%s960 + $0x4f4] sm:$0xff] %v1595
                  %v1597 = vld [vmem:[%s959 + $0x13e0] sm:$0xff]
                  %1598 = vst [vmem:[%s960 + $0x4f8] sm:$0xff] %v1597
                  %v1599 = vld [vmem:[%s959 + $0x13f0] sm:$0xff]
                  %1600 = vst [vmem:[%s960 + $0x4fc] sm:$0xff] %v1599
                  %v1601 = vld [vmem:[%s959 + $0x1400] sm:$0xff]
                  %1602 = vst [vmem:[%s960 + $0x500] sm:$0xff] %v1601
                  %v1603 = vld [vmem:[%s959 + $0x1410] sm:$0xff]
                  %1604 = vst [vmem:[%s960 + $0x504] sm:$0xff] %v1603
                  %v1605 = vld [vmem:[%s959 + $0x1420] sm:$0xff]
                  %1606 = vst [vmem:[%s960 + $0x508] sm:$0xff] %v1605
                  %v1607 = vld [vmem:[%s959 + $0x1430] sm:$0xff]
                  %1608 = vst [vmem:[%s960 + $0x50c] sm:$0xff] %v1607
                  %s1609 = sadd.s32 1, %s958
                  %p1610 = scmp.ge.s32.totalorder %s1609, 0
                  %s1611 = scalar_select %p1610, 0, %s1609
                  %s1612 = smul.u32 %s1611, 8
                  %s1613 = smul.u32 %s1611, 8
                  %s1614 = scalar_lea.vmem %s285, %s1612
                  %s1615 = scalar_lea.vmem %s283, %s1613 [#allocation5]
                $region72: #{dueling_dqn_forward.1} parent=66 // loop_footer
                  %s957 = sadd.s32 1, %s953
                $region73: #{dueling_dqn_forward.1} parent=66 // loop_footer_branch
                  %952 = sbr.rel target = $region69
                $region74: #{dueling_dqn_forward.1} parent=66 // loop_exit
                  _
              $region67: #{dueling_dqn_forward.1} parent=51 // pred_fallthru
                _
              // Predicated region
              $region75: #{dueling_dqn_forward.1} parent=51 // pred_check
                _
              $region76: #{dueling_dqn_forward.1} parent=51 // pred_check_branch
                %1617 = sbr.rel (0) target = $region78
              $region77: #{dueling_dqn_forward.1} parent=51 // pred_region
                loop: start=0, step=1, limit=0
                $region79: #{dueling_dqn_forward.1} parent=77 // loop_pre_header
                  _
                $region80: #{dueling_dqn_forward.1} parent=77 // loop_header
                  %s1619 = sphi 0, %s1623
                  %p1620 = scmp.ge.s32.totalorder %s1619, 0
                  %s1624 = sphi 0, %s2277
                  %s1625 = sphi %s285, %s2280
                  %s1626 = sphi %s283, %s2281
                $region81: #{dueling_dqn_forward.1} parent=77 // loop_header_branch
                  %1622 = sbr.rel (%p1620) target = $region85
                $region82: #{dueling_dqn_forward.1} parent=77 // loop_body
                  %v1627 = vld [vmem:[%s1625] sm:$0xff]
                  %1628 = vst [vmem:[%s1626] sm:$0xff] %v1627
                  %v1629 = vld [vmem:[%s1625 + $0x10] sm:$0xff]
                  %1630 = vst [vmem:[%s1626 + $0x4] sm:$0xff] %v1629
                  %v1631 = vld [vmem:[%s1625 + $0x20] sm:$0xff]
                  %1632 = vst [vmem:[%s1626 + $0x8] sm:$0xff] %v1631
                  %v1633 = vld [vmem:[%s1625 + $0x30] sm:$0xff]
                  %1634 = vst [vmem:[%s1626 + $0xc] sm:$0xff] %v1633
                  %v1635 = vld [vmem:[%s1625 + $0x40] sm:$0xff]
                  %1636 = vst [vmem:[%s1626 + $0x10] sm:$0xff] %v1635
                  %v1637 = vld [vmem:[%s1625 + $0x50] sm:$0xff]
                  %1638 = vst [vmem:[%s1626 + $0x14] sm:$0xff] %v1637
                  %v1639 = vld [vmem:[%s1625 + $0x60] sm:$0xff]
                  %1640 = vst [vmem:[%s1626 + $0x18] sm:$0xff] %v1639
                  %v1641 = vld [vmem:[%s1625 + $0x70] sm:$0xff]
                  %1642 = vst [vmem:[%s1626 + $0x1c] sm:$0xff] %v1641
                  %v1643 = vld [vmem:[%s1625 + $0x80] sm:$0xff]
                  %1644 = vst [vmem:[%s1626 + $0x20] sm:$0xff] %v1643
                  %v1645 = vld [vmem:[%s1625 + $0x90] sm:$0xff]
                  %1646 = vst [vmem:[%s1626 + $0x24] sm:$0xff] %v1645
                  %v1647 = vld [vmem:[%s1625 + $0xa0] sm:$0xff]
                  %1648 = vst [vmem:[%s1626 + $0x28] sm:$0xff] %v1647
                  %v1649 = vld [vmem:[%s1625 + $0xb0] sm:$0xff]
                  %1650 = vst [vmem:[%s1626 + $0x2c] sm:$0xff] %v1649
                  %v1651 = vld [vmem:[%s1625 + $0xc0] sm:$0xff]
                  %1652 = vst [vmem:[%s1626 + $0x30] sm:$0xff] %v1651
                  %v1653 = vld [vmem:[%s1625 + $0xd0] sm:$0xff]
                  %1654 = vst [vmem:[%s1626 + $0x34] sm:$0xff] %v1653
                  %v1655 = vld [vmem:[%s1625 + $0xe0] sm:$0xff]
                  %1656 = vst [vmem:[%s1626 + $0x38] sm:$0xff] %v1655
                  %v1657 = vld [vmem:[%s1625 + $0xf0] sm:$0xff]
                  %1658 = vst [vmem:[%s1626 + $0x3c] sm:$0xff] %v1657
                  %v1659 = vld [vmem:[%s1625 + $0x100] sm:$0xff]
                  %1660 = vst [vmem:[%s1626 + $0x40] sm:$0xff] %v1659
                  %v1661 = vld [vmem:[%s1625 + $0x110] sm:$0xff]
                  %1662 = vst [vmem:[%s1626 + $0x44] sm:$0xff] %v1661
                  %v1663 = vld [vmem:[%s1625 + $0x120] sm:$0xff]
                  %1664 = vst [vmem:[%s1626 + $0x48] sm:$0xff] %v1663
                  %v1665 = vld [vmem:[%s1625 + $0x130] sm:$0xff]
                  %1666 = vst [vmem:[%s1626 + $0x4c] sm:$0xff] %v1665
                  %v1667 = vld [vmem:[%s1625 + $0x140] sm:$0xff]
                  %1668 = vst [vmem:[%s1626 + $0x50] sm:$0xff] %v1667
                  %v1669 = vld [vmem:[%s1625 + $0x150] sm:$0xff]
                  %1670 = vst [vmem:[%s1626 + $0x54] sm:$0xff] %v1669
                  %v1671 = vld [vmem:[%s1625 + $0x160] sm:$0xff]
                  %1672 = vst [vmem:[%s1626 + $0x58] sm:$0xff] %v1671
                  %v1673 = vld [vmem:[%s1625 + $0x170] sm:$0xff]
                  %1674 = vst [vmem:[%s1626 + $0x5c] sm:$0xff] %v1673
                  %v1675 = vld [vmem:[%s1625 + $0x180] sm:$0xff]
                  %1676 = vst [vmem:[%s1626 + $0x60] sm:$0xff] %v1675
                  %v1677 = vld [vmem:[%s1625 + $0x190] sm:$0xff]
                  %1678 = vst [vmem:[%s1626 + $0x64] sm:$0xff] %v1677
                  %v1679 = vld [vmem:[%s1625 + $0x1a0] sm:$0xff]
                  %1680 = vst [vmem:[%s1626 + $0x68] sm:$0xff] %v1679
                  %v1681 = vld [vmem:[%s1625 + $0x1b0] sm:$0xff]
                  %1682 = vst [vmem:[%s1626 + $0x6c] sm:$0xff] %v1681
                  %v1683 = vld [vmem:[%s1625 + $0x1c0] sm:$0xff]
                  %1684 = vst [vmem:[%s1626 + $0x70] sm:$0xff] %v1683
                  %v1685 = vld [vmem:[%s1625 + $0x1d0] sm:$0xff]
                  %1686 = vst [vmem:[%s1626 + $0x74] sm:$0xff] %v1685
                  %v1687 = vld [vmem:[%s1625 + $0x1e0] sm:$0xff]
                  %1688 = vst [vmem:[%s1626 + $0x78] sm:$0xff] %v1687
                  %v1689 = vld [vmem:[%s1625 + $0x1f0] sm:$0xff]
                  %1690 = vst [vmem:[%s1626 + $0x7c] sm:$0xff] %v1689
                  %v1691 = vld [vmem:[%s1625 + $0x200] sm:$0xff]
                  %1692 = vst [vmem:[%s1626 + $0x80] sm:$0xff] %v1691
                  %v1693 = vld [vmem:[%s1625 + $0x210] sm:$0xff]
                  %1694 = vst [vmem:[%s1626 + $0x84] sm:$0xff] %v1693
                  %v1695 = vld [vmem:[%s1625 + $0x220] sm:$0xff]
                  %1696 = vst [vmem:[%s1626 + $0x88] sm:$0xff] %v1695
                  %v1697 = vld [vmem:[%s1625 + $0x230] sm:$0xff]
                  %1698 = vst [vmem:[%s1626 + $0x8c] sm:$0xff] %v1697
                  %v1699 = vld [vmem:[%s1625 + $0x240] sm:$0xff]
                  %1700 = vst [vmem:[%s1626 + $0x90] sm:$0xff] %v1699
                  %v1701 = vld [vmem:[%s1625 + $0x250] sm:$0xff]
                  %1702 = vst [vmem:[%s1626 + $0x94] sm:$0xff] %v1701
                  %v1703 = vld [vmem:[%s1625 + $0x260] sm:$0xff]
                  %1704 = vst [vmem:[%s1626 + $0x98] sm:$0xff] %v1703
                  %v1705 = vld [vmem:[%s1625 + $0x270] sm:$0xff]
                  %1706 = vst [vmem:[%s1626 + $0x9c] sm:$0xff] %v1705
                  %v1707 = vld [vmem:[%s1625 + $0x280] sm:$0xff]
                  %1708 = vst [vmem:[%s1626 + $0xa0] sm:$0xff] %v1707
                  %v1709 = vld [vmem:[%s1625 + $0x290] sm:$0xff]
                  %1710 = vst [vmem:[%s1626 + $0xa4] sm:$0xff] %v1709
                  %v1711 = vld [vmem:[%s1625 + $0x2a0] sm:$0xff]
                  %1712 = vst [vmem:[%s1626 + $0xa8] sm:$0xff] %v1711
                  %v1713 = vld [vmem:[%s1625 + $0x2b0] sm:$0xff]
                  %1714 = vst [vmem:[%s1626 + $0xac] sm:$0xff] %v1713
                  %v1715 = vld [vmem:[%s1625 + $0x2c0] sm:$0xff]
                  %1716 = vst [vmem:[%s1626 + $0xb0] sm:$0xff] %v1715
                  %v1717 = vld [vmem:[%s1625 + $0x2d0] sm:$0xff]
                  %1718 = vst [vmem:[%s1626 + $0xb4] sm:$0xff] %v1717
                  %v1719 = vld [vmem:[%s1625 + $0x2e0] sm:$0xff]
                  %1720 = vst [vmem:[%s1626 + $0xb8] sm:$0xff] %v1719
                  %v1721 = vld [vmem:[%s1625 + $0x2f0] sm:$0xff]
                  %1722 = vst [vmem:[%s1626 + $0xbc] sm:$0xff] %v1721
                  %v1723 = vld [vmem:[%s1625 + $0x300] sm:$0xff]
                  %1724 = vst [vmem:[%s1626 + $0xc0] sm:$0xff] %v1723
                  %v1725 = vld [vmem:[%s1625 + $0x310] sm:$0xff]
                  %1726 = vst [vmem:[%s1626 + $0xc4] sm:$0xff] %v1725
                  %v1727 = vld [vmem:[%s1625 + $0x320] sm:$0xff]
                  %1728 = vst [vmem:[%s1626 + $0xc8] sm:$0xff] %v1727
                  %v1729 = vld [vmem:[%s1625 + $0x330] sm:$0xff]
                  %1730 = vst [vmem:[%s1626 + $0xcc] sm:$0xff] %v1729
                  %v1731 = vld [vmem:[%s1625 + $0x340] sm:$0xff]
                  %1732 = vst [vmem:[%s1626 + $0xd0] sm:$0xff] %v1731
                  %v1733 = vld [vmem:[%s1625 + $0x350] sm:$0xff]
                  %1734 = vst [vmem:[%s1626 + $0xd4] sm:$0xff] %v1733
                  %v1735 = vld [vmem:[%s1625 + $0x360] sm:$0xff]
                  %1736 = vst [vmem:[%s1626 + $0xd8] sm:$0xff] %v1735
                  %v1737 = vld [vmem:[%s1625 + $0x370] sm:$0xff]
                  %1738 = vst [vmem:[%s1626 + $0xdc] sm:$0xff] %v1737
                  %v1739 = vld [vmem:[%s1625 + $0x380] sm:$0xff]
                  %1740 = vst [vmem:[%s1626 + $0xe0] sm:$0xff] %v1739
                  %v1741 = vld [vmem:[%s1625 + $0x390] sm:$0xff]
                  %1742 = vst [vmem:[%s1626 + $0xe4] sm:$0xff] %v1741
                  %v1743 = vld [vmem:[%s1625 + $0x3a0] sm:$0xff]
                  %1744 = vst [vmem:[%s1626 + $0xe8] sm:$0xff] %v1743
                  %v1745 = vld [vmem:[%s1625 + $0x3b0] sm:$0xff]
                  %1746 = vst [vmem:[%s1626 + $0xec] sm:$0xff] %v1745
                  %v1747 = vld [vmem:[%s1625 + $0x3c0] sm:$0xff]
                  %1748 = vst [vmem:[%s1626 + $0xf0] sm:$0xff] %v1747
                  %v1749 = vld [vmem:[%s1625 + $0x3d0] sm:$0xff]
                  %1750 = vst [vmem:[%s1626 + $0xf4] sm:$0xff] %v1749
                  %v1751 = vld [vmem:[%s1625 + $0x3e0] sm:$0xff]
                  %1752 = vst [vmem:[%s1626 + $0xf8] sm:$0xff] %v1751
                  %v1753 = vld [vmem:[%s1625 + $0x3f0] sm:$0xff]
                  %1754 = vst [vmem:[%s1626 + $0xfc] sm:$0xff] %v1753
                  %v1755 = vld [vmem:[%s1625 + $0x400] sm:$0xff]
                  %1756 = vst [vmem:[%s1626 + $0x100] sm:$0xff] %v1755
                  %v1757 = vld [vmem:[%s1625 + $0x410] sm:$0xff]
                  %1758 = vst [vmem:[%s1626 + $0x104] sm:$0xff] %v1757
                  %v1759 = vld [vmem:[%s1625 + $0x420] sm:$0xff]
                  %1760 = vst [vmem:[%s1626 + $0x108] sm:$0xff] %v1759
                  %v1761 = vld [vmem:[%s1625 + $0x430] sm:$0xff]
                  %1762 = vst [vmem:[%s1626 + $0x10c] sm:$0xff] %v1761
                  %v1763 = vld [vmem:[%s1625 + $0x440] sm:$0xff]
                  %1764 = vst [vmem:[%s1626 + $0x110] sm:$0xff] %v1763
                  %v1765 = vld [vmem:[%s1625 + $0x450] sm:$0xff]
                  %1766 = vst [vmem:[%s1626 + $0x114] sm:$0xff] %v1765
                  %v1767 = vld [vmem:[%s1625 + $0x460] sm:$0xff]
                  %1768 = vst [vmem:[%s1626 + $0x118] sm:$0xff] %v1767
                  %v1769 = vld [vmem:[%s1625 + $0x470] sm:$0xff]
                  %1770 = vst [vmem:[%s1626 + $0x11c] sm:$0xff] %v1769
                  %v1771 = vld [vmem:[%s1625 + $0x480] sm:$0xff]
                  %1772 = vst [vmem:[%s1626 + $0x120] sm:$0xff] %v1771
                  %v1773 = vld [vmem:[%s1625 + $0x490] sm:$0xff]
                  %1774 = vst [vmem:[%s1626 + $0x124] sm:$0xff] %v1773
                  %v1775 = vld [vmem:[%s1625 + $0x4a0] sm:$0xff]
                  %1776 = vst [vmem:[%s1626 + $0x128] sm:$0xff] %v1775
                  %v1777 = vld [vmem:[%s1625 + $0x4b0] sm:$0xff]
                  %1778 = vst [vmem:[%s1626 + $0x12c] sm:$0xff] %v1777
                  %v1779 = vld [vmem:[%s1625 + $0x4c0] sm:$0xff]
                  %1780 = vst [vmem:[%s1626 + $0x130] sm:$0xff] %v1779
                  %v1781 = vld [vmem:[%s1625 + $0x4d0] sm:$0xff]
                  %1782 = vst [vmem:[%s1626 + $0x134] sm:$0xff] %v1781
                  %v1783 = vld [vmem:[%s1625 + $0x4e0] sm:$0xff]
                  %1784 = vst [vmem:[%s1626 + $0x138] sm:$0xff] %v1783
                  %v1785 = vld [vmem:[%s1625 + $0x4f0] sm:$0xff]
                  %1786 = vst [vmem:[%s1626 + $0x13c] sm:$0xff] %v1785
                  %v1787 = vld [vmem:[%s1625 + $0x500] sm:$0xff]
                  %1788 = vst [vmem:[%s1626 + $0x140] sm:$0xff] %v1787
                  %v1789 = vld [vmem:[%s1625 + $0x510] sm:$0xff]
                  %1790 = vst [vmem:[%s1626 + $0x144] sm:$0xff] %v1789
                  %v1791 = vld [vmem:[%s1625 + $0x520] sm:$0xff]
                  %1792 = vst [vmem:[%s1626 + $0x148] sm:$0xff] %v1791
                  %v1793 = vld [vmem:[%s1625 + $0x530] sm:$0xff]
                  %1794 = vst [vmem:[%s1626 + $0x14c] sm:$0xff] %v1793
                  %v1795 = vld [vmem:[%s1625 + $0x540] sm:$0xff]
                  %1796 = vst [vmem:[%s1626 + $0x150] sm:$0xff] %v1795
                  %v1797 = vld [vmem:[%s1625 + $0x550] sm:$0xff]
                  %1798 = vst [vmem:[%s1626 + $0x154] sm:$0xff] %v1797
                  %v1799 = vld [vmem:[%s1625 + $0x560] sm:$0xff]
                  %1800 = vst [vmem:[%s1626 + $0x158] sm:$0xff] %v1799
                  %v1801 = vld [vmem:[%s1625 + $0x570] sm:$0xff]
                  %1802 = vst [vmem:[%s1626 + $0x15c] sm:$0xff] %v1801
                  %v1803 = vld [vmem:[%s1625 + $0x580] sm:$0xff]
                  %1804 = vst [vmem:[%s1626 + $0x160] sm:$0xff] %v1803
                  %v1805 = vld [vmem:[%s1625 + $0x590] sm:$0xff]
                  %1806 = vst [vmem:[%s1626 + $0x164] sm:$0xff] %v1805
                  %v1807 = vld [vmem:[%s1625 + $0x5a0] sm:$0xff]
                  %1808 = vst [vmem:[%s1626 + $0x168] sm:$0xff] %v1807
                  %v1809 = vld [vmem:[%s1625 + $0x5b0] sm:$0xff]
                  %1810 = vst [vmem:[%s1626 + $0x16c] sm:$0xff] %v1809
                  %v1811 = vld [vmem:[%s1625 + $0x5c0] sm:$0xff]
                  %1812 = vst [vmem:[%s1626 + $0x170] sm:$0xff] %v1811
                  %v1813 = vld [vmem:[%s1625 + $0x5d0] sm:$0xff]
                  %1814 = vst [vmem:[%s1626 + $0x174] sm:$0xff] %v1813
                  %v1815 = vld [vmem:[%s1625 + $0x5e0] sm:$0xff]
                  %1816 = vst [vmem:[%s1626 + $0x178] sm:$0xff] %v1815
                  %v1817 = vld [vmem:[%s1625 + $0x5f0] sm:$0xff]
                  %1818 = vst [vmem:[%s1626 + $0x17c] sm:$0xff] %v1817
                  %v1819 = vld [vmem:[%s1625 + $0x600] sm:$0xff]
                  %1820 = vst [vmem:[%s1626 + $0x180] sm:$0xff] %v1819
                  %v1821 = vld [vmem:[%s1625 + $0x610] sm:$0xff]
                  %1822 = vst [vmem:[%s1626 + $0x184] sm:$0xff] %v1821
                  %v1823 = vld [vmem:[%s1625 + $0x620] sm:$0xff]
                  %1824 = vst [vmem:[%s1626 + $0x188] sm:$0xff] %v1823
                  %v1825 = vld [vmem:[%s1625 + $0x630] sm:$0xff]
                  %1826 = vst [vmem:[%s1626 + $0x18c] sm:$0xff] %v1825
                  %v1827 = vld [vmem:[%s1625 + $0x640] sm:$0xff]
                  %1828 = vst [vmem:[%s1626 + $0x190] sm:$0xff] %v1827
                  %v1829 = vld [vmem:[%s1625 + $0x650] sm:$0xff]
                  %1830 = vst [vmem:[%s1626 + $0x194] sm:$0xff] %v1829
                  %v1831 = vld [vmem:[%s1625 + $0x660] sm:$0xff]
                  %1832 = vst [vmem:[%s1626 + $0x198] sm:$0xff] %v1831
                  %v1833 = vld [vmem:[%s1625 + $0x670] sm:$0xff]
                  %1834 = vst [vmem:[%s1626 + $0x19c] sm:$0xff] %v1833
                  %v1835 = vld [vmem:[%s1625 + $0x680] sm:$0xff]
                  %1836 = vst [vmem:[%s1626 + $0x1a0] sm:$0xff] %v1835
                  %v1837 = vld [vmem:[%s1625 + $0x690] sm:$0xff]
                  %1838 = vst [vmem:[%s1626 + $0x1a4] sm:$0xff] %v1837
                  %v1839 = vld [vmem:[%s1625 + $0x6a0] sm:$0xff]
                  %1840 = vst [vmem:[%s1626 + $0x1a8] sm:$0xff] %v1839
                  %v1841 = vld [vmem:[%s1625 + $0x6b0] sm:$0xff]
                  %1842 = vst [vmem:[%s1626 + $0x1ac] sm:$0xff] %v1841
                  %v1843 = vld [vmem:[%s1625 + $0x6c0] sm:$0xff]
                  %1844 = vst [vmem:[%s1626 + $0x1b0] sm:$0xff] %v1843
                  %v1845 = vld [vmem:[%s1625 + $0x6d0] sm:$0xff]
                  %1846 = vst [vmem:[%s1626 + $0x1b4] sm:$0xff] %v1845
                  %v1847 = vld [vmem:[%s1625 + $0x6e0] sm:$0xff]
                  %1848 = vst [vmem:[%s1626 + $0x1b8] sm:$0xff] %v1847
                  %v1849 = vld [vmem:[%s1625 + $0x6f0] sm:$0xff]
                  %1850 = vst [vmem:[%s1626 + $0x1bc] sm:$0xff] %v1849
                  %v1851 = vld [vmem:[%s1625 + $0x700] sm:$0xff]
                  %1852 = vst [vmem:[%s1626 + $0x1c0] sm:$0xff] %v1851
                  %v1853 = vld [vmem:[%s1625 + $0x710] sm:$0xff]
                  %1854 = vst [vmem:[%s1626 + $0x1c4] sm:$0xff] %v1853
                  %v1855 = vld [vmem:[%s1625 + $0x720] sm:$0xff]
                  %1856 = vst [vmem:[%s1626 + $0x1c8] sm:$0xff] %v1855
                  %v1857 = vld [vmem:[%s1625 + $0x730] sm:$0xff]
                  %1858 = vst [vmem:[%s1626 + $0x1cc] sm:$0xff] %v1857
                  %v1859 = vld [vmem:[%s1625 + $0x740] sm:$0xff]
                  %1860 = vst [vmem:[%s1626 + $0x1d0] sm:$0xff] %v1859
                  %v1861 = vld [vmem:[%s1625 + $0x750] sm:$0xff]
                  %1862 = vst [vmem:[%s1626 + $0x1d4] sm:$0xff] %v1861
                  %v1863 = vld [vmem:[%s1625 + $0x760] sm:$0xff]
                  %1864 = vst [vmem:[%s1626 + $0x1d8] sm:$0xff] %v1863
                  %v1865 = vld [vmem:[%s1625 + $0x770] sm:$0xff]
                  %1866 = vst [vmem:[%s1626 + $0x1dc] sm:$0xff] %v1865
                  %v1867 = vld [vmem:[%s1625 + $0x780] sm:$0xff]
                  %1868 = vst [vmem:[%s1626 + $0x1e0] sm:$0xff] %v1867
                  %v1869 = vld [vmem:[%s1625 + $0x790] sm:$0xff]
                  %1870 = vst [vmem:[%s1626 + $0x1e4] sm:$0xff] %v1869
                  %v1871 = vld [vmem:[%s1625 + $0x7a0] sm:$0xff]
                  %1872 = vst [vmem:[%s1626 + $0x1e8] sm:$0xff] %v1871
                  %v1873 = vld [vmem:[%s1625 + $0x7b0] sm:$0xff]
                  %1874 = vst [vmem:[%s1626 + $0x1ec] sm:$0xff] %v1873
                  %v1875 = vld [vmem:[%s1625 + $0x7c0] sm:$0xff]
                  %1876 = vst [vmem:[%s1626 + $0x1f0] sm:$0xff] %v1875
                  %v1877 = vld [vmem:[%s1625 + $0x7d0] sm:$0xff]
                  %1878 = vst [vmem:[%s1626 + $0x1f4] sm:$0xff] %v1877
                  %v1879 = vld [vmem:[%s1625 + $0x7e0] sm:$0xff]
                  %1880 = vst [vmem:[%s1626 + $0x1f8] sm:$0xff] %v1879
                  %v1881 = vld [vmem:[%s1625 + $0x7f0] sm:$0xff]
                  %1882 = vst [vmem:[%s1626 + $0x1fc] sm:$0xff] %v1881
                  %v1883 = vld [vmem:[%s1625 + $0x800] sm:$0xff]
                  %1884 = vst [vmem:[%s1626 + $0x200] sm:$0xff] %v1883
                  %v1885 = vld [vmem:[%s1625 + $0x810] sm:$0xff]
                  %1886 = vst [vmem:[%s1626 + $0x204] sm:$0xff] %v1885
                  %v1887 = vld [vmem:[%s1625 + $0x820] sm:$0xff]
                  %1888 = vst [vmem:[%s1626 + $0x208] sm:$0xff] %v1887
                  %v1889 = vld [vmem:[%s1625 + $0x830] sm:$0xff]
                  %1890 = vst [vmem:[%s1626 + $0x20c] sm:$0xff] %v1889
                  %v1891 = vld [vmem:[%s1625 + $0x840] sm:$0xff]
                  %1892 = vst [vmem:[%s1626 + $0x210] sm:$0xff] %v1891
                  %v1893 = vld [vmem:[%s1625 + $0x850] sm:$0xff]
                  %1894 = vst [vmem:[%s1626 + $0x214] sm:$0xff] %v1893
                  %v1895 = vld [vmem:[%s1625 + $0x860] sm:$0xff]
                  %1896 = vst [vmem:[%s1626 + $0x218] sm:$0xff] %v1895
                  %v1897 = vld [vmem:[%s1625 + $0x870] sm:$0xff]
                  %1898 = vst [vmem:[%s1626 + $0x21c] sm:$0xff] %v1897
                  %v1899 = vld [vmem:[%s1625 + $0x880] sm:$0xff]
                  %1900 = vst [vmem:[%s1626 + $0x220] sm:$0xff] %v1899
                  %v1901 = vld [vmem:[%s1625 + $0x890] sm:$0xff]
                  %1902 = vst [vmem:[%s1626 + $0x224] sm:$0xff] %v1901
                  %v1903 = vld [vmem:[%s1625 + $0x8a0] sm:$0xff]
                  %1904 = vst [vmem:[%s1626 + $0x228] sm:$0xff] %v1903
                  %v1905 = vld [vmem:[%s1625 + $0x8b0] sm:$0xff]
                  %1906 = vst [vmem:[%s1626 + $0x22c] sm:$0xff] %v1905
                  %v1907 = vld [vmem:[%s1625 + $0x8c0] sm:$0xff]
                  %1908 = vst [vmem:[%s1626 + $0x230] sm:$0xff] %v1907
                  %v1909 = vld [vmem:[%s1625 + $0x8d0] sm:$0xff]
                  %1910 = vst [vmem:[%s1626 + $0x234] sm:$0xff] %v1909
                  %v1911 = vld [vmem:[%s1625 + $0x8e0] sm:$0xff]
                  %1912 = vst [vmem:[%s1626 + $0x238] sm:$0xff] %v1911
                  %v1913 = vld [vmem:[%s1625 + $0x8f0] sm:$0xff]
                  %1914 = vst [vmem:[%s1626 + $0x23c] sm:$0xff] %v1913
                  %v1915 = vld [vmem:[%s1625 + $0x900] sm:$0xff]
                  %1916 = vst [vmem:[%s1626 + $0x240] sm:$0xff] %v1915
                  %v1917 = vld [vmem:[%s1625 + $0x910] sm:$0xff]
                  %1918 = vst [vmem:[%s1626 + $0x244] sm:$0xff] %v1917
                  %v1919 = vld [vmem:[%s1625 + $0x920] sm:$0xff]
                  %1920 = vst [vmem:[%s1626 + $0x248] sm:$0xff] %v1919
                  %v1921 = vld [vmem:[%s1625 + $0x930] sm:$0xff]
                  %1922 = vst [vmem:[%s1626 + $0x24c] sm:$0xff] %v1921
                  %v1923 = vld [vmem:[%s1625 + $0x940] sm:$0xff]
                  %1924 = vst [vmem:[%s1626 + $0x250] sm:$0xff] %v1923
                  %v1925 = vld [vmem:[%s1625 + $0x950] sm:$0xff]
                  %1926 = vst [vmem:[%s1626 + $0x254] sm:$0xff] %v1925
                  %v1927 = vld [vmem:[%s1625 + $0x960] sm:$0xff]
                  %1928 = vst [vmem:[%s1626 + $0x258] sm:$0xff] %v1927
                  %v1929 = vld [vmem:[%s1625 + $0x970] sm:$0xff]
                  %1930 = vst [vmem:[%s1626 + $0x25c] sm:$0xff] %v1929
                  %v1931 = vld [vmem:[%s1625 + $0x980] sm:$0xff]
                  %1932 = vst [vmem:[%s1626 + $0x260] sm:$0xff] %v1931
                  %v1933 = vld [vmem:[%s1625 + $0x990] sm:$0xff]
                  %1934 = vst [vmem:[%s1626 + $0x264] sm:$0xff] %v1933
                  %v1935 = vld [vmem:[%s1625 + $0x9a0] sm:$0xff]
                  %1936 = vst [vmem:[%s1626 + $0x268] sm:$0xff] %v1935
                  %v1937 = vld [vmem:[%s1625 + $0x9b0] sm:$0xff]
                  %1938 = vst [vmem:[%s1626 + $0x26c] sm:$0xff] %v1937
                  %v1939 = vld [vmem:[%s1625 + $0x9c0] sm:$0xff]
                  %1940 = vst [vmem:[%s1626 + $0x270] sm:$0xff] %v1939
                  %v1941 = vld [vmem:[%s1625 + $0x9d0] sm:$0xff]
                  %1942 = vst [vmem:[%s1626 + $0x274] sm:$0xff] %v1941
                  %v1943 = vld [vmem:[%s1625 + $0x9e0] sm:$0xff]
                  %1944 = vst [vmem:[%s1626 + $0x278] sm:$0xff] %v1943
                  %v1945 = vld [vmem:[%s1625 + $0x9f0] sm:$0xff]
                  %1946 = vst [vmem:[%s1626 + $0x27c] sm:$0xff] %v1945
                  %v1947 = vld [vmem:[%s1625 + $0xa00] sm:$0xff]
                  %1948 = vst [vmem:[%s1626 + $0x280] sm:$0xff] %v1947
                  %v1949 = vld [vmem:[%s1625 + $0xa10] sm:$0xff]
                  %1950 = vst [vmem:[%s1626 + $0x284] sm:$0xff] %v1949
                  %v1951 = vld [vmem:[%s1625 + $0xa20] sm:$0xff]
                  %1952 = vst [vmem:[%s1626 + $0x288] sm:$0xff] %v1951
                  %v1953 = vld [vmem:[%s1625 + $0xa30] sm:$0xff]
                  %1954 = vst [vmem:[%s1626 + $0x28c] sm:$0xff] %v1953
                  %v1955 = vld [vmem:[%s1625 + $0xa40] sm:$0xff]
                  %1956 = vst [vmem:[%s1626 + $0x290] sm:$0xff] %v1955
                  %v1957 = vld [vmem:[%s1625 + $0xa50] sm:$0xff]
                  %1958 = vst [vmem:[%s1626 + $0x294] sm:$0xff] %v1957
                  %v1959 = vld [vmem:[%s1625 + $0xa60] sm:$0xff]
                  %1960 = vst [vmem:[%s1626 + $0x298] sm:$0xff] %v1959
                  %v1961 = vld [vmem:[%s1625 + $0xa70] sm:$0xff]
                  %1962 = vst [vmem:[%s1626 + $0x29c] sm:$0xff] %v1961
                  %v1963 = vld [vmem:[%s1625 + $0xa80] sm:$0xff]
                  %1964 = vst [vmem:[%s1626 + $0x2a0] sm:$0xff] %v1963
                  %v1965 = vld [vmem:[%s1625 + $0xa90] sm:$0xff]
                  %1966 = vst [vmem:[%s1626 + $0x2a4] sm:$0xff] %v1965
                  %v1967 = vld [vmem:[%s1625 + $0xaa0] sm:$0xff]
                  %1968 = vst [vmem:[%s1626 + $0x2a8] sm:$0xff] %v1967
                  %v1969 = vld [vmem:[%s1625 + $0xab0] sm:$0xff]
                  %1970 = vst [vmem:[%s1626 + $0x2ac] sm:$0xff] %v1969
                  %v1971 = vld [vmem:[%s1625 + $0xac0] sm:$0xff]
                  %1972 = vst [vmem:[%s1626 + $0x2b0] sm:$0xff] %v1971
                  %v1973 = vld [vmem:[%s1625 + $0xad0] sm:$0xff]
                  %1974 = vst [vmem:[%s1626 + $0x2b4] sm:$0xff] %v1973
                  %v1975 = vld [vmem:[%s1625 + $0xae0] sm:$0xff]
                  %1976 = vst [vmem:[%s1626 + $0x2b8] sm:$0xff] %v1975
                  %v1977 = vld [vmem:[%s1625 + $0xaf0] sm:$0xff]
                  %1978 = vst [vmem:[%s1626 + $0x2bc] sm:$0xff] %v1977
                  %v1979 = vld [vmem:[%s1625 + $0xb00] sm:$0xff]
                  %1980 = vst [vmem:[%s1626 + $0x2c0] sm:$0xff] %v1979
                  %v1981 = vld [vmem:[%s1625 + $0xb10] sm:$0xff]
                  %1982 = vst [vmem:[%s1626 + $0x2c4] sm:$0xff] %v1981
                  %v1983 = vld [vmem:[%s1625 + $0xb20] sm:$0xff]
                  %1984 = vst [vmem:[%s1626 + $0x2c8] sm:$0xff] %v1983
                  %v1985 = vld [vmem:[%s1625 + $0xb30] sm:$0xff]
                  %1986 = vst [vmem:[%s1626 + $0x2cc] sm:$0xff] %v1985
                  %v1987 = vld [vmem:[%s1625 + $0xb40] sm:$0xff]
                  %1988 = vst [vmem:[%s1626 + $0x2d0] sm:$0xff] %v1987
                  %v1989 = vld [vmem:[%s1625 + $0xb50] sm:$0xff]
                  %1990 = vst [vmem:[%s1626 + $0x2d4] sm:$0xff] %v1989
                  %v1991 = vld [vmem:[%s1625 + $0xb60] sm:$0xff]
                  %1992 = vst [vmem:[%s1626 + $0x2d8] sm:$0xff] %v1991
                  %v1993 = vld [vmem:[%s1625 + $0xb70] sm:$0xff]
                  %1994 = vst [vmem:[%s1626 + $0x2dc] sm:$0xff] %v1993
                  %v1995 = vld [vmem:[%s1625 + $0xb80] sm:$0xff]
                  %1996 = vst [vmem:[%s1626 + $0x2e0] sm:$0xff] %v1995
                  %v1997 = vld [vmem:[%s1625 + $0xb90] sm:$0xff]
                  %1998 = vst [vmem:[%s1626 + $0x2e4] sm:$0xff] %v1997
                  %v1999 = vld [vmem:[%s1625 + $0xba0] sm:$0xff]
                  %2000 = vst [vmem:[%s1626 + $0x2e8] sm:$0xff] %v1999
                  %v2001 = vld [vmem:[%s1625 + $0xbb0] sm:$0xff]
                  %2002 = vst [vmem:[%s1626 + $0x2ec] sm:$0xff] %v2001
                  %v2003 = vld [vmem:[%s1625 + $0xbc0] sm:$0xff]
                  %2004 = vst [vmem:[%s1626 + $0x2f0] sm:$0xff] %v2003
                  %v2005 = vld [vmem:[%s1625 + $0xbd0] sm:$0xff]
                  %2006 = vst [vmem:[%s1626 + $0x2f4] sm:$0xff] %v2005
                  %v2007 = vld [vmem:[%s1625 + $0xbe0] sm:$0xff]
                  %2008 = vst [vmem:[%s1626 + $0x2f8] sm:$0xff] %v2007
                  %v2009 = vld [vmem:[%s1625 + $0xbf0] sm:$0xff]
                  %2010 = vst [vmem:[%s1626 + $0x2fc] sm:$0xff] %v2009
                  %v2011 = vld [vmem:[%s1625 + $0xc00] sm:$0xff]
                  %2012 = vst [vmem:[%s1626 + $0x300] sm:$0xff] %v2011
                  %v2013 = vld [vmem:[%s1625 + $0xc10] sm:$0xff]
                  %2014 = vst [vmem:[%s1626 + $0x304] sm:$0xff] %v2013
                  %v2015 = vld [vmem:[%s1625 + $0xc20] sm:$0xff]
                  %2016 = vst [vmem:[%s1626 + $0x308] sm:$0xff] %v2015
                  %v2017 = vld [vmem:[%s1625 + $0xc30] sm:$0xff]
                  %2018 = vst [vmem:[%s1626 + $0x30c] sm:$0xff] %v2017
                  %v2019 = vld [vmem:[%s1625 + $0xc40] sm:$0xff]
                  %2020 = vst [vmem:[%s1626 + $0x310] sm:$0xff] %v2019
                  %v2021 = vld [vmem:[%s1625 + $0xc50] sm:$0xff]
                  %2022 = vst [vmem:[%s1626 + $0x314] sm:$0xff] %v2021
                  %v2023 = vld [vmem:[%s1625 + $0xc60] sm:$0xff]
                  %2024 = vst [vmem:[%s1626 + $0x318] sm:$0xff] %v2023
                  %v2025 = vld [vmem:[%s1625 + $0xc70] sm:$0xff]
                  %2026 = vst [vmem:[%s1626 + $0x31c] sm:$0xff] %v2025
                  %v2027 = vld [vmem:[%s1625 + $0xc80] sm:$0xff]
                  %2028 = vst [vmem:[%s1626 + $0x320] sm:$0xff] %v2027
                  %v2029 = vld [vmem:[%s1625 + $0xc90] sm:$0xff]
                  %2030 = vst [vmem:[%s1626 + $0x324] sm:$0xff] %v2029
                  %v2031 = vld [vmem:[%s1625 + $0xca0] sm:$0xff]
                  %2032 = vst [vmem:[%s1626 + $0x328] sm:$0xff] %v2031
                  %v2033 = vld [vmem:[%s1625 + $0xcb0] sm:$0xff]
                  %2034 = vst [vmem:[%s1626 + $0x32c] sm:$0xff] %v2033
                  %v2035 = vld [vmem:[%s1625 + $0xcc0] sm:$0xff]
                  %2036 = vst [vmem:[%s1626 + $0x330] sm:$0xff] %v2035
                  %v2037 = vld [vmem:[%s1625 + $0xcd0] sm:$0xff]
                  %2038 = vst [vmem:[%s1626 + $0x334] sm:$0xff] %v2037
                  %v2039 = vld [vmem:[%s1625 + $0xce0] sm:$0xff]
                  %2040 = vst [vmem:[%s1626 + $0x338] sm:$0xff] %v2039
                  %v2041 = vld [vmem:[%s1625 + $0xcf0] sm:$0xff]
                  %2042 = vst [vmem:[%s1626 + $0x33c] sm:$0xff] %v2041
                  %v2043 = vld [vmem:[%s1625 + $0xd00] sm:$0xff]
                  %2044 = vst [vmem:[%s1626 + $0x340] sm:$0xff] %v2043
                  %v2045 = vld [vmem:[%s1625 + $0xd10] sm:$0xff]
                  %2046 = vst [vmem:[%s1626 + $0x344] sm:$0xff] %v2045
                  %v2047 = vld [vmem:[%s1625 + $0xd20] sm:$0xff]
                  %2048 = vst [vmem:[%s1626 + $0x348] sm:$0xff] %v2047
                  %v2049 = vld [vmem:[%s1625 + $0xd30] sm:$0xff]
                  %2050 = vst [vmem:[%s1626 + $0x34c] sm:$0xff] %v2049
                  %v2051 = vld [vmem:[%s1625 + $0xd40] sm:$0xff]
                  %2052 = vst [vmem:[%s1626 + $0x350] sm:$0xff] %v2051
                  %v2053 = vld [vmem:[%s1625 + $0xd50] sm:$0xff]
                  %2054 = vst [vmem:[%s1626 + $0x354] sm:$0xff] %v2053
                  %v2055 = vld [vmem:[%s1625 + $0xd60] sm:$0xff]
                  %2056 = vst [vmem:[%s1626 + $0x358] sm:$0xff] %v2055
                  %v2057 = vld [vmem:[%s1625 + $0xd70] sm:$0xff]
                  %2058 = vst [vmem:[%s1626 + $0x35c] sm:$0xff] %v2057
                  %v2059 = vld [vmem:[%s1625 + $0xd80] sm:$0xff]
                  %2060 = vst [vmem:[%s1626 + $0x360] sm:$0xff] %v2059
                  %v2061 = vld [vmem:[%s1625 + $0xd90] sm:$0xff]
                  %2062 = vst [vmem:[%s1626 + $0x364] sm:$0xff] %v2061
                  %v2063 = vld [vmem:[%s1625 + $0xda0] sm:$0xff]
                  %2064 = vst [vmem:[%s1626 + $0x368] sm:$0xff] %v2063
                  %v2065 = vld [vmem:[%s1625 + $0xdb0] sm:$0xff]
                  %2066 = vst [vmem:[%s1626 + $0x36c] sm:$0xff] %v2065
                  %v2067 = vld [vmem:[%s1625 + $0xdc0] sm:$0xff]
                  %2068 = vst [vmem:[%s1626 + $0x370] sm:$0xff] %v2067
                  %v2069 = vld [vmem:[%s1625 + $0xdd0] sm:$0xff]
                  %2070 = vst [vmem:[%s1626 + $0x374] sm:$0xff] %v2069
                  %v2071 = vld [vmem:[%s1625 + $0xde0] sm:$0xff]
                  %2072 = vst [vmem:[%s1626 + $0x378] sm:$0xff] %v2071
                  %v2073 = vld [vmem:[%s1625 + $0xdf0] sm:$0xff]
                  %2074 = vst [vmem:[%s1626 + $0x37c] sm:$0xff] %v2073
                  %v2075 = vld [vmem:[%s1625 + $0xe00] sm:$0xff]
                  %2076 = vst [vmem:[%s1626 + $0x380] sm:$0xff] %v2075
                  %v2077 = vld [vmem:[%s1625 + $0xe10] sm:$0xff]
                  %2078 = vst [vmem:[%s1626 + $0x384] sm:$0xff] %v2077
                  %v2079 = vld [vmem:[%s1625 + $0xe20] sm:$0xff]
                  %2080 = vst [vmem:[%s1626 + $0x388] sm:$0xff] %v2079
                  %v2081 = vld [vmem:[%s1625 + $0xe30] sm:$0xff]
                  %2082 = vst [vmem:[%s1626 + $0x38c] sm:$0xff] %v2081
                  %v2083 = vld [vmem:[%s1625 + $0xe40] sm:$0xff]
                  %2084 = vst [vmem:[%s1626 + $0x390] sm:$0xff] %v2083
                  %v2085 = vld [vmem:[%s1625 + $0xe50] sm:$0xff]
                  %2086 = vst [vmem:[%s1626 + $0x394] sm:$0xff] %v2085
                  %v2087 = vld [vmem:[%s1625 + $0xe60] sm:$0xff]
                  %2088 = vst [vmem:[%s1626 + $0x398] sm:$0xff] %v2087
                  %v2089 = vld [vmem:[%s1625 + $0xe70] sm:$0xff]
                  %2090 = vst [vmem:[%s1626 + $0x39c] sm:$0xff] %v2089
                  %v2091 = vld [vmem:[%s1625 + $0xe80] sm:$0xff]
                  %2092 = vst [vmem:[%s1626 + $0x3a0] sm:$0xff] %v2091
                  %v2093 = vld [vmem:[%s1625 + $0xe90] sm:$0xff]
                  %2094 = vst [vmem:[%s1626 + $0x3a4] sm:$0xff] %v2093
                  %v2095 = vld [vmem:[%s1625 + $0xea0] sm:$0xff]
                  %2096 = vst [vmem:[%s1626 + $0x3a8] sm:$0xff] %v2095
                  %v2097 = vld [vmem:[%s1625 + $0xeb0] sm:$0xff]
                  %2098 = vst [vmem:[%s1626 + $0x3ac] sm:$0xff] %v2097
                  %v2099 = vld [vmem:[%s1625 + $0xec0] sm:$0xff]
                  %2100 = vst [vmem:[%s1626 + $0x3b0] sm:$0xff] %v2099
                  %v2101 = vld [vmem:[%s1625 + $0xed0] sm:$0xff]
                  %2102 = vst [vmem:[%s1626 + $0x3b4] sm:$0xff] %v2101
                  %v2103 = vld [vmem:[%s1625 + $0xee0] sm:$0xff]
                  %2104 = vst [vmem:[%s1626 + $0x3b8] sm:$0xff] %v2103
                  %v2105 = vld [vmem:[%s1625 + $0xef0] sm:$0xff]
                  %2106 = vst [vmem:[%s1626 + $0x3bc] sm:$0xff] %v2105
                  %v2107 = vld [vmem:[%s1625 + $0xf00] sm:$0xff]
                  %2108 = vst [vmem:[%s1626 + $0x3c0] sm:$0xff] %v2107
                  %v2109 = vld [vmem:[%s1625 + $0xf10] sm:$0xff]
                  %2110 = vst [vmem:[%s1626 + $0x3c4] sm:$0xff] %v2109
                  %v2111 = vld [vmem:[%s1625 + $0xf20] sm:$0xff]
                  %2112 = vst [vmem:[%s1626 + $0x3c8] sm:$0xff] %v2111
                  %v2113 = vld [vmem:[%s1625 + $0xf30] sm:$0xff]
                  %2114 = vst [vmem:[%s1626 + $0x3cc] sm:$0xff] %v2113
                  %v2115 = vld [vmem:[%s1625 + $0xf40] sm:$0xff]
                  %2116 = vst [vmem:[%s1626 + $0x3d0] sm:$0xff] %v2115
                  %v2117 = vld [vmem:[%s1625 + $0xf50] sm:$0xff]
                  %2118 = vst [vmem:[%s1626 + $0x3d4] sm:$0xff] %v2117
                  %v2119 = vld [vmem:[%s1625 + $0xf60] sm:$0xff]
                  %2120 = vst [vmem:[%s1626 + $0x3d8] sm:$0xff] %v2119
                  %v2121 = vld [vmem:[%s1625 + $0xf70] sm:$0xff]
                  %2122 = vst [vmem:[%s1626 + $0x3dc] sm:$0xff] %v2121
                  %v2123 = vld [vmem:[%s1625 + $0xf80] sm:$0xff]
                  %2124 = vst [vmem:[%s1626 + $0x3e0] sm:$0xff] %v2123
                  %v2125 = vld [vmem:[%s1625 + $0xf90] sm:$0xff]
                  %2126 = vst [vmem:[%s1626 + $0x3e4] sm:$0xff] %v2125
                  %v2127 = vld [vmem:[%s1625 + $0xfa0] sm:$0xff]
                  %2128 = vst [vmem:[%s1626 + $0x3e8] sm:$0xff] %v2127
                  %v2129 = vld [vmem:[%s1625 + $0xfb0] sm:$0xff]
                  %2130 = vst [vmem:[%s1626 + $0x3ec] sm:$0xff] %v2129
                  %v2131 = vld [vmem:[%s1625 + $0xfc0] sm:$0xff]
                  %2132 = vst [vmem:[%s1626 + $0x3f0] sm:$0xff] %v2131
                  %v2133 = vld [vmem:[%s1625 + $0xfd0] sm:$0xff]
                  %2134 = vst [vmem:[%s1626 + $0x3f4] sm:$0xff] %v2133
                  %v2135 = vld [vmem:[%s1625 + $0xfe0] sm:$0xff]
                  %2136 = vst [vmem:[%s1626 + $0x3f8] sm:$0xff] %v2135
                  %v2137 = vld [vmem:[%s1625 + $0xff0] sm:$0xff]
                  %2138 = vst [vmem:[%s1626 + $0x3fc] sm:$0xff] %v2137
                  %v2139 = vld [vmem:[%s1625 + $0x1000] sm:$0xff]
                  %2140 = vst [vmem:[%s1626 + $0x400] sm:$0xff] %v2139
                  %v2141 = vld [vmem:[%s1625 + $0x1010] sm:$0xff]
                  %2142 = vst [vmem:[%s1626 + $0x404] sm:$0xff] %v2141
                  %v2143 = vld [vmem:[%s1625 + $0x1020] sm:$0xff]
                  %2144 = vst [vmem:[%s1626 + $0x408] sm:$0xff] %v2143
                  %v2145 = vld [vmem:[%s1625 + $0x1030] sm:$0xff]
                  %2146 = vst [vmem:[%s1626 + $0x40c] sm:$0xff] %v2145
                  %v2147 = vld [vmem:[%s1625 + $0x1040] sm:$0xff]
                  %2148 = vst [vmem:[%s1626 + $0x410] sm:$0xff] %v2147
                  %v2149 = vld [vmem:[%s1625 + $0x1050] sm:$0xff]
                  %2150 = vst [vmem:[%s1626 + $0x414] sm:$0xff] %v2149
                  %v2151 = vld [vmem:[%s1625 + $0x1060] sm:$0xff]
                  %2152 = vst [vmem:[%s1626 + $0x418] sm:$0xff] %v2151
                  %v2153 = vld [vmem:[%s1625 + $0x1070] sm:$0xff]
                  %2154 = vst [vmem:[%s1626 + $0x41c] sm:$0xff] %v2153
                  %v2155 = vld [vmem:[%s1625 + $0x1080] sm:$0xff]
                  %2156 = vst [vmem:[%s1626 + $0x420] sm:$0xff] %v2155
                  %v2157 = vld [vmem:[%s1625 + $0x1090] sm:$0xff]
                  %2158 = vst [vmem:[%s1626 + $0x424] sm:$0xff] %v2157
                  %v2159 = vld [vmem:[%s1625 + $0x10a0] sm:$0xff]
                  %2160 = vst [vmem:[%s1626 + $0x428] sm:$0xff] %v2159
                  %v2161 = vld [vmem:[%s1625 + $0x10b0] sm:$0xff]
                  %2162 = vst [vmem:[%s1626 + $0x42c] sm:$0xff] %v2161
                  %v2163 = vld [vmem:[%s1625 + $0x10c0] sm:$0xff]
                  %2164 = vst [vmem:[%s1626 + $0x430] sm:$0xff] %v2163
                  %v2165 = vld [vmem:[%s1625 + $0x10d0] sm:$0xff]
                  %2166 = vst [vmem:[%s1626 + $0x434] sm:$0xff] %v2165
                  %v2167 = vld [vmem:[%s1625 + $0x10e0] sm:$0xff]
                  %2168 = vst [vmem:[%s1626 + $0x438] sm:$0xff] %v2167
                  %v2169 = vld [vmem:[%s1625 + $0x10f0] sm:$0xff]
                  %2170 = vst [vmem:[%s1626 + $0x43c] sm:$0xff] %v2169
                  %v2171 = vld [vmem:[%s1625 + $0x1100] sm:$0xff]
                  %2172 = vst [vmem:[%s1626 + $0x440] sm:$0xff] %v2171
                  %v2173 = vld [vmem:[%s1625 + $0x1110] sm:$0xff]
                  %2174 = vst [vmem:[%s1626 + $0x444] sm:$0xff] %v2173
                  %v2175 = vld [vmem:[%s1625 + $0x1120] sm:$0xff]
                  %2176 = vst [vmem:[%s1626 + $0x448] sm:$0xff] %v2175
                  %v2177 = vld [vmem:[%s1625 + $0x1130] sm:$0xff]
                  %2178 = vst [vmem:[%s1626 + $0x44c] sm:$0xff] %v2177
                  %v2179 = vld [vmem:[%s1625 + $0x1140] sm:$0xff]
                  %2180 = vst [vmem:[%s1626 + $0x450] sm:$0xff] %v2179
                  %v2181 = vld [vmem:[%s1625 + $0x1150] sm:$0xff]
                  %2182 = vst [vmem:[%s1626 + $0x454] sm:$0xff] %v2181
                  %v2183 = vld [vmem:[%s1625 + $0x1160] sm:$0xff]
                  %2184 = vst [vmem:[%s1626 + $0x458] sm:$0xff] %v2183
                  %v2185 = vld [vmem:[%s1625 + $0x1170] sm:$0xff]
                  %2186 = vst [vmem:[%s1626 + $0x45c] sm:$0xff] %v2185
                  %v2187 = vld [vmem:[%s1625 + $0x1180] sm:$0xff]
                  %2188 = vst [vmem:[%s1626 + $0x460] sm:$0xff] %v2187
                  %v2189 = vld [vmem:[%s1625 + $0x1190] sm:$0xff]
                  %2190 = vst [vmem:[%s1626 + $0x464] sm:$0xff] %v2189
                  %v2191 = vld [vmem:[%s1625 + $0x11a0] sm:$0xff]
                  %2192 = vst [vmem:[%s1626 + $0x468] sm:$0xff] %v2191
                  %v2193 = vld [vmem:[%s1625 + $0x11b0] sm:$0xff]
                  %2194 = vst [vmem:[%s1626 + $0x46c] sm:$0xff] %v2193
                  %v2195 = vld [vmem:[%s1625 + $0x11c0] sm:$0xff]
                  %2196 = vst [vmem:[%s1626 + $0x470] sm:$0xff] %v2195
                  %v2197 = vld [vmem:[%s1625 + $0x11d0] sm:$0xff]
                  %2198 = vst [vmem:[%s1626 + $0x474] sm:$0xff] %v2197
                  %v2199 = vld [vmem:[%s1625 + $0x11e0] sm:$0xff]
                  %2200 = vst [vmem:[%s1626 + $0x478] sm:$0xff] %v2199
                  %v2201 = vld [vmem:[%s1625 + $0x11f0] sm:$0xff]
                  %2202 = vst [vmem:[%s1626 + $0x47c] sm:$0xff] %v2201
                  %v2203 = vld [vmem:[%s1625 + $0x1200] sm:$0xff]
                  %2204 = vst [vmem:[%s1626 + $0x480] sm:$0xff] %v2203
                  %v2205 = vld [vmem:[%s1625 + $0x1210] sm:$0xff]
                  %2206 = vst [vmem:[%s1626 + $0x484] sm:$0xff] %v2205
                  %v2207 = vld [vmem:[%s1625 + $0x1220] sm:$0xff]
                  %2208 = vst [vmem:[%s1626 + $0x488] sm:$0xff] %v2207
                  %v2209 = vld [vmem:[%s1625 + $0x1230] sm:$0xff]
                  %2210 = vst [vmem:[%s1626 + $0x48c] sm:$0xff] %v2209
                  %v2211 = vld [vmem:[%s1625 + $0x1240] sm:$0xff]
                  %2212 = vst [vmem:[%s1626 + $0x490] sm:$0xff] %v2211
                  %v2213 = vld [vmem:[%s1625 + $0x1250] sm:$0xff]
                  %2214 = vst [vmem:[%s1626 + $0x494] sm:$0xff] %v2213
                  %v2215 = vld [vmem:[%s1625 + $0x1260] sm:$0xff]
                  %2216 = vst [vmem:[%s1626 + $0x498] sm:$0xff] %v2215
                  %v2217 = vld [vmem:[%s1625 + $0x1270] sm:$0xff]
                  %2218 = vst [vmem:[%s1626 + $0x49c] sm:$0xff] %v2217
                  %v2219 = vld [vmem:[%s1625 + $0x1280] sm:$0xff]
                  %2220 = vst [vmem:[%s1626 + $0x4a0] sm:$0xff] %v2219
                  %v2221 = vld [vmem:[%s1625 + $0x1290] sm:$0xff]
                  %2222 = vst [vmem:[%s1626 + $0x4a4] sm:$0xff] %v2221
                  %v2223 = vld [vmem:[%s1625 + $0x12a0] sm:$0xff]
                  %2224 = vst [vmem:[%s1626 + $0x4a8] sm:$0xff] %v2223
                  %v2225 = vld [vmem:[%s1625 + $0x12b0] sm:$0xff]
                  %2226 = vst [vmem:[%s1626 + $0x4ac] sm:$0xff] %v2225
                  %v2227 = vld [vmem:[%s1625 + $0x12c0] sm:$0xff]
                  %2228 = vst [vmem:[%s1626 + $0x4b0] sm:$0xff] %v2227
                  %v2229 = vld [vmem:[%s1625 + $0x12d0] sm:$0xff]
                  %2230 = vst [vmem:[%s1626 + $0x4b4] sm:$0xff] %v2229
                  %v2231 = vld [vmem:[%s1625 + $0x12e0] sm:$0xff]
                  %2232 = vst [vmem:[%s1626 + $0x4b8] sm:$0xff] %v2231
                  %v2233 = vld [vmem:[%s1625 + $0x12f0] sm:$0xff]
                  %2234 = vst [vmem:[%s1626 + $0x4bc] sm:$0xff] %v2233
                  %v2235 = vld [vmem:[%s1625 + $0x1300] sm:$0xff]
                  %2236 = vst [vmem:[%s1626 + $0x4c0] sm:$0xff] %v2235
                  %v2237 = vld [vmem:[%s1625 + $0x1310] sm:$0xff]
                  %2238 = vst [vmem:[%s1626 + $0x4c4] sm:$0xff] %v2237
                  %v2239 = vld [vmem:[%s1625 + $0x1320] sm:$0xff]
                  %2240 = vst [vmem:[%s1626 + $0x4c8] sm:$0xff] %v2239
                  %v2241 = vld [vmem:[%s1625 + $0x1330] sm:$0xff]
                  %2242 = vst [vmem:[%s1626 + $0x4cc] sm:$0xff] %v2241
                  %v2243 = vld [vmem:[%s1625 + $0x1340] sm:$0xff]
                  %2244 = vst [vmem:[%s1626 + $0x4d0] sm:$0xff] %v2243
                  %v2245 = vld [vmem:[%s1625 + $0x1350] sm:$0xff]
                  %2246 = vst [vmem:[%s1626 + $0x4d4] sm:$0xff] %v2245
                  %v2247 = vld [vmem:[%s1625 + $0x1360] sm:$0xff]
                  %2248 = vst [vmem:[%s1626 + $0x4d8] sm:$0xff] %v2247
                  %v2249 = vld [vmem:[%s1625 + $0x1370] sm:$0xff]
                  %2250 = vst [vmem:[%s1626 + $0x4dc] sm:$0xff] %v2249
                  %v2251 = vld [vmem:[%s1625 + $0x1380] sm:$0xff]
                  %2252 = vst [vmem:[%s1626 + $0x4e0] sm:$0xff] %v2251
                  %v2253 = vld [vmem:[%s1625 + $0x1390] sm:$0xff]
                  %2254 = vst [vmem:[%s1626 + $0x4e4] sm:$0xff] %v2253
                  %v2255 = vld [vmem:[%s1625 + $0x13a0] sm:$0xff]
                  %2256 = vst [vmem:[%s1626 + $0x4e8] sm:$0xff] %v2255
                  %v2257 = vld [vmem:[%s1625 + $0x13b0] sm:$0xff]
                  %2258 = vst [vmem:[%s1626 + $0x4ec] sm:$0xff] %v2257
                  %v2259 = vld [vmem:[%s1625 + $0x13c0] sm:$0xff]
                  %2260 = vst [vmem:[%s1626 + $0x4f0] sm:$0xff] %v2259
                  %v2261 = vld [vmem:[%s1625 + $0x13d0] sm:$0xff]
                  %2262 = vst [vmem:[%s1626 + $0x4f4] sm:$0xff] %v2261
                  %v2263 = vld [vmem:[%s1625 + $0x13e0] sm:$0xff]
                  %2264 = vst [vmem:[%s1626 + $0x4f8] sm:$0xff] %v2263
                  %v2265 = vld [vmem:[%s1625 + $0x13f0] sm:$0xff]
                  %2266 = vst [vmem:[%s1626 + $0x4fc] sm:$0xff] %v2265
                  %v2267 = vld [vmem:[%s1625 + $0x1400] sm:$0xff]
                  %2268 = vst [vmem:[%s1626 + $0x500] sm:$0xff] %v2267
                  %v2269 = vld [vmem:[%s1625 + $0x1410] sm:$0xff]
                  %2270 = vst [vmem:[%s1626 + $0x504] sm:$0xff] %v2269
                  %v2271 = vld [vmem:[%s1625 + $0x1420] sm:$0xff]
                  %2272 = vst [vmem:[%s1626 + $0x508] sm:$0xff] %v2271
                  %v2273 = vld [vmem:[%s1625 + $0x1430] sm:$0xff]
                  %2274 = vst [vmem:[%s1626 + $0x50c] sm:$0xff] %v2273
                  %s2275 = sadd.s32 1, %s1624
                  %p2276 = scmp.ge.s32.totalorder %s2275, 0
                  %s2277 = scalar_select %p2276, 0, %s2275
                  %s2278 = smul.u32 %s2277, 8
                  %s2279 = smul.u32 %s2277, 8
                  %s2280 = scalar_lea.vmem %s285, %s2278
                  %s2281 = scalar_lea.vmem %s283, %s2279 [#allocation5]
                $region83: #{dueling_dqn_forward.1} parent=77 // loop_footer
                  %s1623 = sadd.s32 1, %s1619
                $region84: #{dueling_dqn_forward.1} parent=77 // loop_footer_branch
                  %1618 = sbr.rel target = $region80
                $region85: #{dueling_dqn_forward.1} parent=77 // loop_exit
                  _
                %s2283 = ssub.s32 16, 1
                loop: start=0, step=1, limit=1
                $region86: #{dueling_dqn_forward.1} parent=77 // loop_pre_header
                  _
                $region87: #{dueling_dqn_forward.1} parent=77 // loop_header
                  %s2285 = sphi 0, %s2289
                  %p2286 = scmp.ge.s32.totalorder %s2285, 1
                  %s2290 = sphi %s285, %s285
                  %s2291 = sphi %s283, %s283
                $region88: #{dueling_dqn_forward.1} parent=77 // loop_header_branch
                  %2288 = sbr.rel (%p2286) target = $region92
                $region89: #{dueling_dqn_forward.1} parent=77 // loop_body
                  %v2292 = vld [vmem:[%s2290] sm:%s2283]
                  %2293 = vst [vmem:[%s2291] sm:%s2283] %v2292
                  %v2294 = vld [vmem:[%s2290 + $0x10] sm:%s2283]
                  %2295 = vst [vmem:[%s2291 + $0x4] sm:%s2283] %v2294
                  %v2296 = vld [vmem:[%s2290 + $0x20] sm:%s2283]
                  %2297 = vst [vmem:[%s2291 + $0x8] sm:%s2283] %v2296
                  %v2298 = vld [vmem:[%s2290 + $0x30] sm:%s2283]
                  %2299 = vst [vmem:[%s2291 + $0xc] sm:%s2283] %v2298
                  %v2300 = vld [vmem:[%s2290 + $0x40] sm:%s2283]
                  %2301 = vst [vmem:[%s2291 + $0x10] sm:%s2283] %v2300
                  %v2302 = vld [vmem:[%s2290 + $0x50] sm:%s2283]
                  %2303 = vst [vmem:[%s2291 + $0x14] sm:%s2283] %v2302
                  %v2304 = vld [vmem:[%s2290 + $0x60] sm:%s2283]
                  %2305 = vst [vmem:[%s2291 + $0x18] sm:%s2283] %v2304
                  %v2306 = vld [vmem:[%s2290 + $0x70] sm:%s2283]
                  %2307 = vst [vmem:[%s2291 + $0x1c] sm:%s2283] %v2306
                  %v2308 = vld [vmem:[%s2290 + $0x80] sm:%s2283]
                  %2309 = vst [vmem:[%s2291 + $0x20] sm:%s2283] %v2308
                  %v2310 = vld [vmem:[%s2290 + $0x90] sm:%s2283]
                  %2311 = vst [vmem:[%s2291 + $0x24] sm:%s2283] %v2310
                  %v2312 = vld [vmem:[%s2290 + $0xa0] sm:%s2283]
                  %2313 = vst [vmem:[%s2291 + $0x28] sm:%s2283] %v2312
                  %v2314 = vld [vmem:[%s2290 + $0xb0] sm:%s2283]
                  %2315 = vst [vmem:[%s2291 + $0x2c] sm:%s2283] %v2314
                  %v2316 = vld [vmem:[%s2290 + $0xc0] sm:%s2283]
                  %2317 = vst [vmem:[%s2291 + $0x30] sm:%s2283] %v2316
                  %v2318 = vld [vmem:[%s2290 + $0xd0] sm:%s2283]
                  %2319 = vst [vmem:[%s2291 + $0x34] sm:%s2283] %v2318
                  %v2320 = vld [vmem:[%s2290 + $0xe0] sm:%s2283]
                  %2321 = vst [vmem:[%s2291 + $0x38] sm:%s2283] %v2320
                  %v2322 = vld [vmem:[%s2290 + $0xf0] sm:%s2283]
                  %2323 = vst [vmem:[%s2291 + $0x3c] sm:%s2283] %v2322
                  %v2324 = vld [vmem:[%s2290 + $0x100] sm:%s2283]
                  %2325 = vst [vmem:[%s2291 + $0x40] sm:%s2283] %v2324
                  %v2326 = vld [vmem:[%s2290 + $0x110] sm:%s2283]
                  %2327 = vst [vmem:[%s2291 + $0x44] sm:%s2283] %v2326
                  %v2328 = vld [vmem:[%s2290 + $0x120] sm:%s2283]
                  %2329 = vst [vmem:[%s2291 + $0x48] sm:%s2283] %v2328
                  %v2330 = vld [vmem:[%s2290 + $0x130] sm:%s2283]
                  %2331 = vst [vmem:[%s2291 + $0x4c] sm:%s2283] %v2330
                  %v2332 = vld [vmem:[%s2290 + $0x140] sm:%s2283]
                  %2333 = vst [vmem:[%s2291 + $0x50] sm:%s2283] %v2332
                  %v2334 = vld [vmem:[%s2290 + $0x150] sm:%s2283]
                  %2335 = vst [vmem:[%s2291 + $0x54] sm:%s2283] %v2334
                  %v2336 = vld [vmem:[%s2290 + $0x160] sm:%s2283]
                  %2337 = vst [vmem:[%s2291 + $0x58] sm:%s2283] %v2336
                  %v2338 = vld [vmem:[%s2290 + $0x170] sm:%s2283]
                  %2339 = vst [vmem:[%s2291 + $0x5c] sm:%s2283] %v2338
                  %v2340 = vld [vmem:[%s2290 + $0x180] sm:%s2283]
                  %2341 = vst [vmem:[%s2291 + $0x60] sm:%s2283] %v2340
                  %v2342 = vld [vmem:[%s2290 + $0x190] sm:%s2283]
                  %2343 = vst [vmem:[%s2291 + $0x64] sm:%s2283] %v2342
                  %v2344 = vld [vmem:[%s2290 + $0x1a0] sm:%s2283]
                  %2345 = vst [vmem:[%s2291 + $0x68] sm:%s2283] %v2344
                  %v2346 = vld [vmem:[%s2290 + $0x1b0] sm:%s2283]
                  %2347 = vst [vmem:[%s2291 + $0x6c] sm:%s2283] %v2346
                  %v2348 = vld [vmem:[%s2290 + $0x1c0] sm:%s2283]
                  %2349 = vst [vmem:[%s2291 + $0x70] sm:%s2283] %v2348
                  %v2350 = vld [vmem:[%s2290 + $0x1d0] sm:%s2283]
                  %2351 = vst [vmem:[%s2291 + $0x74] sm:%s2283] %v2350
                  %v2352 = vld [vmem:[%s2290 + $0x1e0] sm:%s2283]
                  %2353 = vst [vmem:[%s2291 + $0x78] sm:%s2283] %v2352
                  %v2354 = vld [vmem:[%s2290 + $0x1f0] sm:%s2283]
                  %2355 = vst [vmem:[%s2291 + $0x7c] sm:%s2283] %v2354
                  %v2356 = vld [vmem:[%s2290 + $0x200] sm:%s2283]
                  %2357 = vst [vmem:[%s2291 + $0x80] sm:%s2283] %v2356
                  %v2358 = vld [vmem:[%s2290 + $0x210] sm:%s2283]
                  %2359 = vst [vmem:[%s2291 + $0x84] sm:%s2283] %v2358
                  %v2360 = vld [vmem:[%s2290 + $0x220] sm:%s2283]
                  %2361 = vst [vmem:[%s2291 + $0x88] sm:%s2283] %v2360
                  %v2362 = vld [vmem:[%s2290 + $0x230] sm:%s2283]
                  %2363 = vst [vmem:[%s2291 + $0x8c] sm:%s2283] %v2362
                  %v2364 = vld [vmem:[%s2290 + $0x240] sm:%s2283]
                  %2365 = vst [vmem:[%s2291 + $0x90] sm:%s2283] %v2364
                  %v2366 = vld [vmem:[%s2290 + $0x250] sm:%s2283]
                  %2367 = vst [vmem:[%s2291 + $0x94] sm:%s2283] %v2366
                  %v2368 = vld [vmem:[%s2290 + $0x260] sm:%s2283]
                  %2369 = vst [vmem:[%s2291 + $0x98] sm:%s2283] %v2368
                  %v2370 = vld [vmem:[%s2290 + $0x270] sm:%s2283]
                  %2371 = vst [vmem:[%s2291 + $0x9c] sm:%s2283] %v2370
                  %v2372 = vld [vmem:[%s2290 + $0x280] sm:%s2283]
                  %2373 = vst [vmem:[%s2291 + $0xa0] sm:%s2283] %v2372
                  %v2374 = vld [vmem:[%s2290 + $0x290] sm:%s2283]
                  %2375 = vst [vmem:[%s2291 + $0xa4] sm:%s2283] %v2374
                  %v2376 = vld [vmem:[%s2290 + $0x2a0] sm:%s2283]
                  %2377 = vst [vmem:[%s2291 + $0xa8] sm:%s2283] %v2376
                  %v2378 = vld [vmem:[%s2290 + $0x2b0] sm:%s2283]
                  %2379 = vst [vmem:[%s2291 + $0xac] sm:%s2283] %v2378
                  %v2380 = vld [vmem:[%s2290 + $0x2c0] sm:%s2283]
                  %2381 = vst [vmem:[%s2291 + $0xb0] sm:%s2283] %v2380
                  %v2382 = vld [vmem:[%s2290 + $0x2d0] sm:%s2283]
                  %2383 = vst [vmem:[%s2291 + $0xb4] sm:%s2283] %v2382
                  %v2384 = vld [vmem:[%s2290 + $0x2e0] sm:%s2283]
                  %2385 = vst [vmem:[%s2291 + $0xb8] sm:%s2283] %v2384
                  %v2386 = vld [vmem:[%s2290 + $0x2f0] sm:%s2283]
                  %2387 = vst [vmem:[%s2291 + $0xbc] sm:%s2283] %v2386
                  %v2388 = vld [vmem:[%s2290 + $0x300] sm:%s2283]
                  %2389 = vst [vmem:[%s2291 + $0xc0] sm:%s2283] %v2388
                  %v2390 = vld [vmem:[%s2290 + $0x310] sm:%s2283]
                  %2391 = vst [vmem:[%s2291 + $0xc4] sm:%s2283] %v2390
                  %v2392 = vld [vmem:[%s2290 + $0x320] sm:%s2283]
                  %2393 = vst [vmem:[%s2291 + $0xc8] sm:%s2283] %v2392
                  %v2394 = vld [vmem:[%s2290 + $0x330] sm:%s2283]
                  %2395 = vst [vmem:[%s2291 + $0xcc] sm:%s2283] %v2394
                  %v2396 = vld [vmem:[%s2290 + $0x340] sm:%s2283]
                  %2397 = vst [vmem:[%s2291 + $0xd0] sm:%s2283] %v2396
                  %v2398 = vld [vmem:[%s2290 + $0x350] sm:%s2283]
                  %2399 = vst [vmem:[%s2291 + $0xd4] sm:%s2283] %v2398
                  %v2400 = vld [vmem:[%s2290 + $0x360] sm:%s2283]
                  %2401 = vst [vmem:[%s2291 + $0xd8] sm:%s2283] %v2400
                  %v2402 = vld [vmem:[%s2290 + $0x370] sm:%s2283]
                  %2403 = vst [vmem:[%s2291 + $0xdc] sm:%s2283] %v2402
                  %v2404 = vld [vmem:[%s2290 + $0x380] sm:%s2283]
                  %2405 = vst [vmem:[%s2291 + $0xe0] sm:%s2283] %v2404
                  %v2406 = vld [vmem:[%s2290 + $0x390] sm:%s2283]
                  %2407 = vst [vmem:[%s2291 + $0xe4] sm:%s2283] %v2406
                  %v2408 = vld [vmem:[%s2290 + $0x3a0] sm:%s2283]
                  %2409 = vst [vmem:[%s2291 + $0xe8] sm:%s2283] %v2408
                  %v2410 = vld [vmem:[%s2290 + $0x3b0] sm:%s2283]
                  %2411 = vst [vmem:[%s2291 + $0xec] sm:%s2283] %v2410
                  %v2412 = vld [vmem:[%s2290 + $0x3c0] sm:%s2283]
                  %2413 = vst [vmem:[%s2291 + $0xf0] sm:%s2283] %v2412
                  %v2414 = vld [vmem:[%s2290 + $0x3d0] sm:%s2283]
                  %2415 = vst [vmem:[%s2291 + $0xf4] sm:%s2283] %v2414
                  %v2416 = vld [vmem:[%s2290 + $0x3e0] sm:%s2283]
                  %2417 = vst [vmem:[%s2291 + $0xf8] sm:%s2283] %v2416
                  %v2418 = vld [vmem:[%s2290 + $0x3f0] sm:%s2283]
                  %2419 = vst [vmem:[%s2291 + $0xfc] sm:%s2283] %v2418
                  %v2420 = vld [vmem:[%s2290 + $0x400] sm:%s2283]
                  %2421 = vst [vmem:[%s2291 + $0x100] sm:%s2283] %v2420
                  %v2422 = vld [vmem:[%s2290 + $0x410] sm:%s2283]
                  %2423 = vst [vmem:[%s2291 + $0x104] sm:%s2283] %v2422
                  %v2424 = vld [vmem:[%s2290 + $0x420] sm:%s2283]
                  %2425 = vst [vmem:[%s2291 + $0x108] sm:%s2283] %v2424
                  %v2426 = vld [vmem:[%s2290 + $0x430] sm:%s2283]
                  %2427 = vst [vmem:[%s2291 + $0x10c] sm:%s2283] %v2426
                  %v2428 = vld [vmem:[%s2290 + $0x440] sm:%s2283]
                  %2429 = vst [vmem:[%s2291 + $0x110] sm:%s2283] %v2428
                  %v2430 = vld [vmem:[%s2290 + $0x450] sm:%s2283]
                  %2431 = vst [vmem:[%s2291 + $0x114] sm:%s2283] %v2430
                  %v2432 = vld [vmem:[%s2290 + $0x460] sm:%s2283]
                  %2433 = vst [vmem:[%s2291 + $0x118] sm:%s2283] %v2432
                  %v2434 = vld [vmem:[%s2290 + $0x470] sm:%s2283]
                  %2435 = vst [vmem:[%s2291 + $0x11c] sm:%s2283] %v2434
                  %v2436 = vld [vmem:[%s2290 + $0x480] sm:%s2283]
                  %2437 = vst [vmem:[%s2291 + $0x120] sm:%s2283] %v2436
                  %v2438 = vld [vmem:[%s2290 + $0x490] sm:%s2283]
                  %2439 = vst [vmem:[%s2291 + $0x124] sm:%s2283] %v2438
                  %v2440 = vld [vmem:[%s2290 + $0x4a0] sm:%s2283]
                  %2441 = vst [vmem:[%s2291 + $0x128] sm:%s2283] %v2440
                  %v2442 = vld [vmem:[%s2290 + $0x4b0] sm:%s2283]
                  %2443 = vst [vmem:[%s2291 + $0x12c] sm:%s2283] %v2442
                  %v2444 = vld [vmem:[%s2290 + $0x4c0] sm:%s2283]
                  %2445 = vst [vmem:[%s2291 + $0x130] sm:%s2283] %v2444
                  %v2446 = vld [vmem:[%s2290 + $0x4d0] sm:%s2283]
                  %2447 = vst [vmem:[%s2291 + $0x134] sm:%s2283] %v2446
                  %v2448 = vld [vmem:[%s2290 + $0x4e0] sm:%s2283]
                  %2449 = vst [vmem:[%s2291 + $0x138] sm:%s2283] %v2448
                  %v2450 = vld [vmem:[%s2290 + $0x4f0] sm:%s2283]
                  %2451 = vst [vmem:[%s2291 + $0x13c] sm:%s2283] %v2450
                  %v2452 = vld [vmem:[%s2290 + $0x500] sm:%s2283]
                  %2453 = vst [vmem:[%s2291 + $0x140] sm:%s2283] %v2452
                  %v2454 = vld [vmem:[%s2290 + $0x510] sm:%s2283]
                  %2455 = vst [vmem:[%s2291 + $0x144] sm:%s2283] %v2454
                  %v2456 = vld [vmem:[%s2290 + $0x520] sm:%s2283]
                  %2457 = vst [vmem:[%s2291 + $0x148] sm:%s2283] %v2456
                  %v2458 = vld [vmem:[%s2290 + $0x530] sm:%s2283]
                  %2459 = vst [vmem:[%s2291 + $0x14c] sm:%s2283] %v2458
                  %v2460 = vld [vmem:[%s2290 + $0x540] sm:%s2283]
                  %2461 = vst [vmem:[%s2291 + $0x150] sm:%s2283] %v2460
                  %v2462 = vld [vmem:[%s2290 + $0x550] sm:%s2283]
                  %2463 = vst [vmem:[%s2291 + $0x154] sm:%s2283] %v2462
                  %v2464 = vld [vmem:[%s2290 + $0x560] sm:%s2283]
                  %2465 = vst [vmem:[%s2291 + $0x158] sm:%s2283] %v2464
                  %v2466 = vld [vmem:[%s2290 + $0x570] sm:%s2283]
                  %2467 = vst [vmem:[%s2291 + $0x15c] sm:%s2283] %v2466
                  %v2468 = vld [vmem:[%s2290 + $0x580] sm:%s2283]
                  %2469 = vst [vmem:[%s2291 + $0x160] sm:%s2283] %v2468
                  %v2470 = vld [vmem:[%s2290 + $0x590] sm:%s2283]
                  %2471 = vst [vmem:[%s2291 + $0x164] sm:%s2283] %v2470
                  %v2472 = vld [vmem:[%s2290 + $0x5a0] sm:%s2283]
                  %2473 = vst [vmem:[%s2291 + $0x168] sm:%s2283] %v2472
                  %v2474 = vld [vmem:[%s2290 + $0x5b0] sm:%s2283]
                  %2475 = vst [vmem:[%s2291 + $0x16c] sm:%s2283] %v2474
                  %v2476 = vld [vmem:[%s2290 + $0x5c0] sm:%s2283]
                  %2477 = vst [vmem:[%s2291 + $0x170] sm:%s2283] %v2476
                  %v2478 = vld [vmem:[%s2290 + $0x5d0] sm:%s2283]
                  %2479 = vst [vmem:[%s2291 + $0x174] sm:%s2283] %v2478
                  %v2480 = vld [vmem:[%s2290 + $0x5e0] sm:%s2283]
                  %2481 = vst [vmem:[%s2291 + $0x178] sm:%s2283] %v2480
                  %v2482 = vld [vmem:[%s2290 + $0x5f0] sm:%s2283]
                  %2483 = vst [vmem:[%s2291 + $0x17c] sm:%s2283] %v2482
                  %v2484 = vld [vmem:[%s2290 + $0x600] sm:%s2283]
                  %2485 = vst [vmem:[%s2291 + $0x180] sm:%s2283] %v2484
                  %v2486 = vld [vmem:[%s2290 + $0x610] sm:%s2283]
                  %2487 = vst [vmem:[%s2291 + $0x184] sm:%s2283] %v2486
                  %v2488 = vld [vmem:[%s2290 + $0x620] sm:%s2283]
                  %2489 = vst [vmem:[%s2291 + $0x188] sm:%s2283] %v2488
                  %v2490 = vld [vmem:[%s2290 + $0x630] sm:%s2283]
                  %2491 = vst [vmem:[%s2291 + $0x18c] sm:%s2283] %v2490
                  %v2492 = vld [vmem:[%s2290 + $0x640] sm:%s2283]
                  %2493 = vst [vmem:[%s2291 + $0x190] sm:%s2283] %v2492
                  %v2494 = vld [vmem:[%s2290 + $0x650] sm:%s2283]
                  %2495 = vst [vmem:[%s2291 + $0x194] sm:%s2283] %v2494
                  %v2496 = vld [vmem:[%s2290 + $0x660] sm:%s2283]
                  %2497 = vst [vmem:[%s2291 + $0x198] sm:%s2283] %v2496
                  %v2498 = vld [vmem:[%s2290 + $0x670] sm:%s2283]
                  %2499 = vst [vmem:[%s2291 + $0x19c] sm:%s2283] %v2498
                  %v2500 = vld [vmem:[%s2290 + $0x680] sm:%s2283]
                  %2501 = vst [vmem:[%s2291 + $0x1a0] sm:%s2283] %v2500
                  %v2502 = vld [vmem:[%s2290 + $0x690] sm:%s2283]
                  %2503 = vst [vmem:[%s2291 + $0x1a4] sm:%s2283] %v2502
                  %v2504 = vld [vmem:[%s2290 + $0x6a0] sm:%s2283]
                  %2505 = vst [vmem:[%s2291 + $0x1a8] sm:%s2283] %v2504
                  %v2506 = vld [vmem:[%s2290 + $0x6b0] sm:%s2283]
                  %2507 = vst [vmem:[%s2291 + $0x1ac] sm:%s2283] %v2506
                  %v2508 = vld [vmem:[%s2290 + $0x6c0] sm:%s2283]
                  %2509 = vst [vmem:[%s2291 + $0x1b0] sm:%s2283] %v2508
                  %v2510 = vld [vmem:[%s2290 + $0x6d0] sm:%s2283]
                  %2511 = vst [vmem:[%s2291 + $0x1b4] sm:%s2283] %v2510
                  %v2512 = vld [vmem:[%s2290 + $0x6e0] sm:%s2283]
                  %2513 = vst [vmem:[%s2291 + $0x1b8] sm:%s2283] %v2512
                  %v2514 = vld [vmem:[%s2290 + $0x6f0] sm:%s2283]
                  %2515 = vst [vmem:[%s2291 + $0x1bc] sm:%s2283] %v2514
                  %v2516 = vld [vmem:[%s2290 + $0x700] sm:%s2283]
                  %2517 = vst [vmem:[%s2291 + $0x1c0] sm:%s2283] %v2516
                  %v2518 = vld [vmem:[%s2290 + $0x710] sm:%s2283]
                  %2519 = vst [vmem:[%s2291 + $0x1c4] sm:%s2283] %v2518
                  %v2520 = vld [vmem:[%s2290 + $0x720] sm:%s2283]
                  %2521 = vst [vmem:[%s2291 + $0x1c8] sm:%s2283] %v2520
                  %v2522 = vld [vmem:[%s2290 + $0x730] sm:%s2283]
                  %2523 = vst [vmem:[%s2291 + $0x1cc] sm:%s2283] %v2522
                  %v2524 = vld [vmem:[%s2290 + $0x740] sm:%s2283]
                  %2525 = vst [vmem:[%s2291 + $0x1d0] sm:%s2283] %v2524
                  %v2526 = vld [vmem:[%s2290 + $0x750] sm:%s2283]
                  %2527 = vst [vmem:[%s2291 + $0x1d4] sm:%s2283] %v2526
                  %v2528 = vld [vmem:[%s2290 + $0x760] sm:%s2283]
                  %2529 = vst [vmem:[%s2291 + $0x1d8] sm:%s2283] %v2528
                  %v2530 = vld [vmem:[%s2290 + $0x770] sm:%s2283]
                  %2531 = vst [vmem:[%s2291 + $0x1dc] sm:%s2283] %v2530
                  %v2532 = vld [vmem:[%s2290 + $0x780] sm:%s2283]
                  %2533 = vst [vmem:[%s2291 + $0x1e0] sm:%s2283] %v2532
                  %v2534 = vld [vmem:[%s2290 + $0x790] sm:%s2283]
                  %2535 = vst [vmem:[%s2291 + $0x1e4] sm:%s2283] %v2534
                  %v2536 = vld [vmem:[%s2290 + $0x7a0] sm:%s2283]
                  %2537 = vst [vmem:[%s2291 + $0x1e8] sm:%s2283] %v2536
                  %v2538 = vld [vmem:[%s2290 + $0x7b0] sm:%s2283]
                  %2539 = vst [vmem:[%s2291 + $0x1ec] sm:%s2283] %v2538
                  %v2540 = vld [vmem:[%s2290 + $0x7c0] sm:%s2283]
                  %2541 = vst [vmem:[%s2291 + $0x1f0] sm:%s2283] %v2540
                  %v2542 = vld [vmem:[%s2290 + $0x7d0] sm:%s2283]
                  %2543 = vst [vmem:[%s2291 + $0x1f4] sm:%s2283] %v2542
                  %v2544 = vld [vmem:[%s2290 + $0x7e0] sm:%s2283]
                  %2545 = vst [vmem:[%s2291 + $0x1f8] sm:%s2283] %v2544
                  %v2546 = vld [vmem:[%s2290 + $0x7f0] sm:%s2283]
                  %2547 = vst [vmem:[%s2291 + $0x1fc] sm:%s2283] %v2546
                  %v2548 = vld [vmem:[%s2290 + $0x800] sm:%s2283]
                  %2549 = vst [vmem:[%s2291 + $0x200] sm:%s2283] %v2548
                  %v2550 = vld [vmem:[%s2290 + $0x810] sm:%s2283]
                  %2551 = vst [vmem:[%s2291 + $0x204] sm:%s2283] %v2550
                  %v2552 = vld [vmem:[%s2290 + $0x820] sm:%s2283]
                  %2553 = vst [vmem:[%s2291 + $0x208] sm:%s2283] %v2552
                  %v2554 = vld [vmem:[%s2290 + $0x830] sm:%s2283]
                  %2555 = vst [vmem:[%s2291 + $0x20c] sm:%s2283] %v2554
                  %v2556 = vld [vmem:[%s2290 + $0x840] sm:%s2283]
                  %2557 = vst [vmem:[%s2291 + $0x210] sm:%s2283] %v2556
                  %v2558 = vld [vmem:[%s2290 + $0x850] sm:%s2283]
                  %2559 = vst [vmem:[%s2291 + $0x214] sm:%s2283] %v2558
                  %v2560 = vld [vmem:[%s2290 + $0x860] sm:%s2283]
                  %2561 = vst [vmem:[%s2291 + $0x218] sm:%s2283] %v2560
                  %v2562 = vld [vmem:[%s2290 + $0x870] sm:%s2283]
                  %2563 = vst [vmem:[%s2291 + $0x21c] sm:%s2283] %v2562
                  %v2564 = vld [vmem:[%s2290 + $0x880] sm:%s2283]
                  %2565 = vst [vmem:[%s2291 + $0x220] sm:%s2283] %v2564
                  %v2566 = vld [vmem:[%s2290 + $0x890] sm:%s2283]
                  %2567 = vst [vmem:[%s2291 + $0x224] sm:%s2283] %v2566
                  %v2568 = vld [vmem:[%s2290 + $0x8a0] sm:%s2283]
                  %2569 = vst [vmem:[%s2291 + $0x228] sm:%s2283] %v2568
                  %v2570 = vld [vmem:[%s2290 + $0x8b0] sm:%s2283]
                  %2571 = vst [vmem:[%s2291 + $0x22c] sm:%s2283] %v2570
                  %v2572 = vld [vmem:[%s2290 + $0x8c0] sm:%s2283]
                  %2573 = vst [vmem:[%s2291 + $0x230] sm:%s2283] %v2572
                  %v2574 = vld [vmem:[%s2290 + $0x8d0] sm:%s2283]
                  %2575 = vst [vmem:[%s2291 + $0x234] sm:%s2283] %v2574
                  %v2576 = vld [vmem:[%s2290 + $0x8e0] sm:%s2283]
                  %2577 = vst [vmem:[%s2291 + $0x238] sm:%s2283] %v2576
                  %v2578 = vld [vmem:[%s2290 + $0x8f0] sm:%s2283]
                  %2579 = vst [vmem:[%s2291 + $0x23c] sm:%s2283] %v2578
                  %v2580 = vld [vmem:[%s2290 + $0x900] sm:%s2283]
                  %2581 = vst [vmem:[%s2291 + $0x240] sm:%s2283] %v2580
                  %v2582 = vld [vmem:[%s2290 + $0x910] sm:%s2283]
                  %2583 = vst [vmem:[%s2291 + $0x244] sm:%s2283] %v2582
                  %v2584 = vld [vmem:[%s2290 + $0x920] sm:%s2283]
                  %2585 = vst [vmem:[%s2291 + $0x248] sm:%s2283] %v2584
                  %v2586 = vld [vmem:[%s2290 + $0x930] sm:%s2283]
                  %2587 = vst [vmem:[%s2291 + $0x24c] sm:%s2283] %v2586
                  %v2588 = vld [vmem:[%s2290 + $0x940] sm:%s2283]
                  %2589 = vst [vmem:[%s2291 + $0x250] sm:%s2283] %v2588
                  %v2590 = vld [vmem:[%s2290 + $0x950] sm:%s2283]
                  %2591 = vst [vmem:[%s2291 + $0x254] sm:%s2283] %v2590
                  %v2592 = vld [vmem:[%s2290 + $0x960] sm:%s2283]
                  %2593 = vst [vmem:[%s2291 + $0x258] sm:%s2283] %v2592
                  %v2594 = vld [vmem:[%s2290 + $0x970] sm:%s2283]
                  %2595 = vst [vmem:[%s2291 + $0x25c] sm:%s2283] %v2594
                  %v2596 = vld [vmem:[%s2290 + $0x980] sm:%s2283]
                  %2597 = vst [vmem:[%s2291 + $0x260] sm:%s2283] %v2596
                  %v2598 = vld [vmem:[%s2290 + $0x990] sm:%s2283]
                  %2599 = vst [vmem:[%s2291 + $0x264] sm:%s2283] %v2598
                  %v2600 = vld [vmem:[%s2290 + $0x9a0] sm:%s2283]
                  %2601 = vst [vmem:[%s2291 + $0x268] sm:%s2283] %v2600
                  %v2602 = vld [vmem:[%s2290 + $0x9b0] sm:%s2283]
                  %2603 = vst [vmem:[%s2291 + $0x26c] sm:%s2283] %v2602
                  %v2604 = vld [vmem:[%s2290 + $0x9c0] sm:%s2283]
                  %2605 = vst [vmem:[%s2291 + $0x270] sm:%s2283] %v2604
                  %v2606 = vld [vmem:[%s2290 + $0x9d0] sm:%s2283]
                  %2607 = vst [vmem:[%s2291 + $0x274] sm:%s2283] %v2606
                  %v2608 = vld [vmem:[%s2290 + $0x9e0] sm:%s2283]
                  %2609 = vst [vmem:[%s2291 + $0x278] sm:%s2283] %v2608
                  %v2610 = vld [vmem:[%s2290 + $0x9f0] sm:%s2283]
                  %2611 = vst [vmem:[%s2291 + $0x27c] sm:%s2283] %v2610
                  %v2612 = vld [vmem:[%s2290 + $0xa00] sm:%s2283]
                  %2613 = vst [vmem:[%s2291 + $0x280] sm:%s2283] %v2612
                  %v2614 = vld [vmem:[%s2290 + $0xa10] sm:%s2283]
                  %2615 = vst [vmem:[%s2291 + $0x284] sm:%s2283] %v2614
                  %v2616 = vld [vmem:[%s2290 + $0xa20] sm:%s2283]
                  %2617 = vst [vmem:[%s2291 + $0x288] sm:%s2283] %v2616
                  %v2618 = vld [vmem:[%s2290 + $0xa30] sm:%s2283]
                  %2619 = vst [vmem:[%s2291 + $0x28c] sm:%s2283] %v2618
                  %v2620 = vld [vmem:[%s2290 + $0xa40] sm:%s2283]
                  %2621 = vst [vmem:[%s2291 + $0x290] sm:%s2283] %v2620
                  %v2622 = vld [vmem:[%s2290 + $0xa50] sm:%s2283]
                  %2623 = vst [vmem:[%s2291 + $0x294] sm:%s2283] %v2622
                  %v2624 = vld [vmem:[%s2290 + $0xa60] sm:%s2283]
                  %2625 = vst [vmem:[%s2291 + $0x298] sm:%s2283] %v2624
                  %v2626 = vld [vmem:[%s2290 + $0xa70] sm:%s2283]
                  %2627 = vst [vmem:[%s2291 + $0x29c] sm:%s2283] %v2626
                  %v2628 = vld [vmem:[%s2290 + $0xa80] sm:%s2283]
                  %2629 = vst [vmem:[%s2291 + $0x2a0] sm:%s2283] %v2628
                  %v2630 = vld [vmem:[%s2290 + $0xa90] sm:%s2283]
                  %2631 = vst [vmem:[%s2291 + $0x2a4] sm:%s2283] %v2630
                  %v2632 = vld [vmem:[%s2290 + $0xaa0] sm:%s2283]
                  %2633 = vst [vmem:[%s2291 + $0x2a8] sm:%s2283] %v2632
                  %v2634 = vld [vmem:[%s2290 + $0xab0] sm:%s2283]
                  %2635 = vst [vmem:[%s2291 + $0x2ac] sm:%s2283] %v2634
                  %v2636 = vld [vmem:[%s2290 + $0xac0] sm:%s2283]
                  %2637 = vst [vmem:[%s2291 + $0x2b0] sm:%s2283] %v2636
                  %v2638 = vld [vmem:[%s2290 + $0xad0] sm:%s2283]
                  %2639 = vst [vmem:[%s2291 + $0x2b4] sm:%s2283] %v2638
                  %v2640 = vld [vmem:[%s2290 + $0xae0] sm:%s2283]
                  %2641 = vst [vmem:[%s2291 + $0x2b8] sm:%s2283] %v2640
                  %v2642 = vld [vmem:[%s2290 + $0xaf0] sm:%s2283]
                  %2643 = vst [vmem:[%s2291 + $0x2bc] sm:%s2283] %v2642
                  %v2644 = vld [vmem:[%s2290 + $0xb00] sm:%s2283]
                  %2645 = vst [vmem:[%s2291 + $0x2c0] sm:%s2283] %v2644
                  %v2646 = vld [vmem:[%s2290 + $0xb10] sm:%s2283]
                  %2647 = vst [vmem:[%s2291 + $0x2c4] sm:%s2283] %v2646
                  %v2648 = vld [vmem:[%s2290 + $0xb20] sm:%s2283]
                  %2649 = vst [vmem:[%s2291 + $0x2c8] sm:%s2283] %v2648
                  %v2650 = vld [vmem:[%s2290 + $0xb30] sm:%s2283]
                  %2651 = vst [vmem:[%s2291 + $0x2cc] sm:%s2283] %v2650
                  %v2652 = vld [vmem:[%s2290 + $0xb40] sm:%s2283]
                  %2653 = vst [vmem:[%s2291 + $0x2d0] sm:%s2283] %v2652
                  %v2654 = vld [vmem:[%s2290 + $0xb50] sm:%s2283]
                  %2655 = vst [vmem:[%s2291 + $0x2d4] sm:%s2283] %v2654
                  %v2656 = vld [vmem:[%s2290 + $0xb60] sm:%s2283]
                  %2657 = vst [vmem:[%s2291 + $0x2d8] sm:%s2283] %v2656
                  %v2658 = vld [vmem:[%s2290 + $0xb70] sm:%s2283]
                  %2659 = vst [vmem:[%s2291 + $0x2dc] sm:%s2283] %v2658
                  %v2660 = vld [vmem:[%s2290 + $0xb80] sm:%s2283]
                  %2661 = vst [vmem:[%s2291 + $0x2e0] sm:%s2283] %v2660
                  %v2662 = vld [vmem:[%s2290 + $0xb90] sm:%s2283]
                  %2663 = vst [vmem:[%s2291 + $0x2e4] sm:%s2283] %v2662
                  %v2664 = vld [vmem:[%s2290 + $0xba0] sm:%s2283]
                  %2665 = vst [vmem:[%s2291 + $0x2e8] sm:%s2283] %v2664
                  %v2666 = vld [vmem:[%s2290 + $0xbb0] sm:%s2283]
                  %2667 = vst [vmem:[%s2291 + $0x2ec] sm:%s2283] %v2666
                  %v2668 = vld [vmem:[%s2290 + $0xbc0] sm:%s2283]
                  %2669 = vst [vmem:[%s2291 + $0x2f0] sm:%s2283] %v2668
                  %v2670 = vld [vmem:[%s2290 + $0xbd0] sm:%s2283]
                  %2671 = vst [vmem:[%s2291 + $0x2f4] sm:%s2283] %v2670
                  %v2672 = vld [vmem:[%s2290 + $0xbe0] sm:%s2283]
                  %2673 = vst [vmem:[%s2291 + $0x2f8] sm:%s2283] %v2672
                  %v2674 = vld [vmem:[%s2290 + $0xbf0] sm:%s2283]
                  %2675 = vst [vmem:[%s2291 + $0x2fc] sm:%s2283] %v2674
                  %v2676 = vld [vmem:[%s2290 + $0xc00] sm:%s2283]
                  %2677 = vst [vmem:[%s2291 + $0x300] sm:%s2283] %v2676
                  %v2678 = vld [vmem:[%s2290 + $0xc10] sm:%s2283]
                  %2679 = vst [vmem:[%s2291 + $0x304] sm:%s2283] %v2678
                  %v2680 = vld [vmem:[%s2290 + $0xc20] sm:%s2283]
                  %2681 = vst [vmem:[%s2291 + $0x308] sm:%s2283] %v2680
                  %v2682 = vld [vmem:[%s2290 + $0xc30] sm:%s2283]
                  %2683 = vst [vmem:[%s2291 + $0x30c] sm:%s2283] %v2682
                  %v2684 = vld [vmem:[%s2290 + $0xc40] sm:%s2283]
                  %2685 = vst [vmem:[%s2291 + $0x310] sm:%s2283] %v2684
                  %v2686 = vld [vmem:[%s2290 + $0xc50] sm:%s2283]
                  %2687 = vst [vmem:[%s2291 + $0x314] sm:%s2283] %v2686
                  %v2688 = vld [vmem:[%s2290 + $0xc60] sm:%s2283]
                  %2689 = vst [vmem:[%s2291 + $0x318] sm:%s2283] %v2688
                  %v2690 = vld [vmem:[%s2290 + $0xc70] sm:%s2283]
                  %2691 = vst [vmem:[%s2291 + $0x31c] sm:%s2283] %v2690
                  %v2692 = vld [vmem:[%s2290 + $0xc80] sm:%s2283]
                  %2693 = vst [vmem:[%s2291 + $0x320] sm:%s2283] %v2692
                  %v2694 = vld [vmem:[%s2290 + $0xc90] sm:%s2283]
                  %2695 = vst [vmem:[%s2291 + $0x324] sm:%s2283] %v2694
                  %v2696 = vld [vmem:[%s2290 + $0xca0] sm:%s2283]
                  %2697 = vst [vmem:[%s2291 + $0x328] sm:%s2283] %v2696
                  %v2698 = vld [vmem:[%s2290 + $0xcb0] sm:%s2283]
                  %2699 = vst [vmem:[%s2291 + $0x32c] sm:%s2283] %v2698
                  %v2700 = vld [vmem:[%s2290 + $0xcc0] sm:%s2283]
                  %2701 = vst [vmem:[%s2291 + $0x330] sm:%s2283] %v2700
                  %v2702 = vld [vmem:[%s2290 + $0xcd0] sm:%s2283]
                  %2703 = vst [vmem:[%s2291 + $0x334] sm:%s2283] %v2702
                  %v2704 = vld [vmem:[%s2290 + $0xce0] sm:%s2283]
                  %2705 = vst [vmem:[%s2291 + $0x338] sm:%s2283] %v2704
                  %v2706 = vld [vmem:[%s2290 + $0xcf0] sm:%s2283]
                  %2707 = vst [vmem:[%s2291 + $0x33c] sm:%s2283] %v2706
                  %v2708 = vld [vmem:[%s2290 + $0xd00] sm:%s2283]
                  %2709 = vst [vmem:[%s2291 + $0x340] sm:%s2283] %v2708
                  %v2710 = vld [vmem:[%s2290 + $0xd10] sm:%s2283]
                  %2711 = vst [vmem:[%s2291 + $0x344] sm:%s2283] %v2710
                  %v2712 = vld [vmem:[%s2290 + $0xd20] sm:%s2283]
                  %2713 = vst [vmem:[%s2291 + $0x348] sm:%s2283] %v2712
                  %v2714 = vld [vmem:[%s2290 + $0xd30] sm:%s2283]
                  %2715 = vst [vmem:[%s2291 + $0x34c] sm:%s2283] %v2714
                  %v2716 = vld [vmem:[%s2290 + $0xd40] sm:%s2283]
                  %2717 = vst [vmem:[%s2291 + $0x350] sm:%s2283] %v2716
                  %v2718 = vld [vmem:[%s2290 + $0xd50] sm:%s2283]
                  %2719 = vst [vmem:[%s2291 + $0x354] sm:%s2283] %v2718
                  %v2720 = vld [vmem:[%s2290 + $0xd60] sm:%s2283]
                  %2721 = vst [vmem:[%s2291 + $0x358] sm:%s2283] %v2720
                  %v2722 = vld [vmem:[%s2290 + $0xd70] sm:%s2283]
                  %2723 = vst [vmem:[%s2291 + $0x35c] sm:%s2283] %v2722
                  %v2724 = vld [vmem:[%s2290 + $0xd80] sm:%s2283]
                  %2725 = vst [vmem:[%s2291 + $0x360] sm:%s2283] %v2724
                  %v2726 = vld [vmem:[%s2290 + $0xd90] sm:%s2283]
                  %2727 = vst [vmem:[%s2291 + $0x364] sm:%s2283] %v2726
                  %v2728 = vld [vmem:[%s2290 + $0xda0] sm:%s2283]
                  %2729 = vst [vmem:[%s2291 + $0x368] sm:%s2283] %v2728
                  %v2730 = vld [vmem:[%s2290 + $0xdb0] sm:%s2283]
                  %2731 = vst [vmem:[%s2291 + $0x36c] sm:%s2283] %v2730
                  %v2732 = vld [vmem:[%s2290 + $0xdc0] sm:%s2283]
                  %2733 = vst [vmem:[%s2291 + $0x370] sm:%s2283] %v2732
                  %v2734 = vld [vmem:[%s2290 + $0xdd0] sm:%s2283]
                  %2735 = vst [vmem:[%s2291 + $0x374] sm:%s2283] %v2734
                  %v2736 = vld [vmem:[%s2290 + $0xde0] sm:%s2283]
                  %2737 = vst [vmem:[%s2291 + $0x378] sm:%s2283] %v2736
                  %v2738 = vld [vmem:[%s2290 + $0xdf0] sm:%s2283]
                  %2739 = vst [vmem:[%s2291 + $0x37c] sm:%s2283] %v2738
                  %v2740 = vld [vmem:[%s2290 + $0xe00] sm:%s2283]
                  %2741 = vst [vmem:[%s2291 + $0x380] sm:%s2283] %v2740
                  %v2742 = vld [vmem:[%s2290 + $0xe10] sm:%s2283]
                  %2743 = vst [vmem:[%s2291 + $0x384] sm:%s2283] %v2742
                  %v2744 = vld [vmem:[%s2290 + $0xe20] sm:%s2283]
                  %2745 = vst [vmem:[%s2291 + $0x388] sm:%s2283] %v2744
                  %v2746 = vld [vmem:[%s2290 + $0xe30] sm:%s2283]
                  %2747 = vst [vmem:[%s2291 + $0x38c] sm:%s2283] %v2746
                  %v2748 = vld [vmem:[%s2290 + $0xe40] sm:%s2283]
                  %2749 = vst [vmem:[%s2291 + $0x390] sm:%s2283] %v2748
                  %v2750 = vld [vmem:[%s2290 + $0xe50] sm:%s2283]
                  %2751 = vst [vmem:[%s2291 + $0x394] sm:%s2283] %v2750
                  %v2752 = vld [vmem:[%s2290 + $0xe60] sm:%s2283]
                  %2753 = vst [vmem:[%s2291 + $0x398] sm:%s2283] %v2752
                  %v2754 = vld [vmem:[%s2290 + $0xe70] sm:%s2283]
                  %2755 = vst [vmem:[%s2291 + $0x39c] sm:%s2283] %v2754
                  %v2756 = vld [vmem:[%s2290 + $0xe80] sm:%s2283]
                  %2757 = vst [vmem:[%s2291 + $0x3a0] sm:%s2283] %v2756
                  %v2758 = vld [vmem:[%s2290 + $0xe90] sm:%s2283]
                  %2759 = vst [vmem:[%s2291 + $0x3a4] sm:%s2283] %v2758
                  %v2760 = vld [vmem:[%s2290 + $0xea0] sm:%s2283]
                  %2761 = vst [vmem:[%s2291 + $0x3a8] sm:%s2283] %v2760
                  %v2762 = vld [vmem:[%s2290 + $0xeb0] sm:%s2283]
                  %2763 = vst [vmem:[%s2291 + $0x3ac] sm:%s2283] %v2762
                  %v2764 = vld [vmem:[%s2290 + $0xec0] sm:%s2283]
                  %2765 = vst [vmem:[%s2291 + $0x3b0] sm:%s2283] %v2764
                  %v2766 = vld [vmem:[%s2290 + $0xed0] sm:%s2283]
                  %2767 = vst [vmem:[%s2291 + $0x3b4] sm:%s2283] %v2766
                  %v2768 = vld [vmem:[%s2290 + $0xee0] sm:%s2283]
                  %2769 = vst [vmem:[%s2291 + $0x3b8] sm:%s2283] %v2768
                  %v2770 = vld [vmem:[%s2290 + $0xef0] sm:%s2283]
                  %2771 = vst [vmem:[%s2291 + $0x3bc] sm:%s2283] %v2770
                  %v2772 = vld [vmem:[%s2290 + $0xf00] sm:%s2283]
                  %2773 = vst [vmem:[%s2291 + $0x3c0] sm:%s2283] %v2772
                  %v2774 = vld [vmem:[%s2290 + $0xf10] sm:%s2283]
                  %2775 = vst [vmem:[%s2291 + $0x3c4] sm:%s2283] %v2774
                  %v2776 = vld [vmem:[%s2290 + $0xf20] sm:%s2283]
                  %2777 = vst [vmem:[%s2291 + $0x3c8] sm:%s2283] %v2776
                  %v2778 = vld [vmem:[%s2290 + $0xf30] sm:%s2283]
                  %2779 = vst [vmem:[%s2291 + $0x3cc] sm:%s2283] %v2778
                  %v2780 = vld [vmem:[%s2290 + $0xf40] sm:%s2283]
                  %2781 = vst [vmem:[%s2291 + $0x3d0] sm:%s2283] %v2780
                  %v2782 = vld [vmem:[%s2290 + $0xf50] sm:%s2283]
                  %2783 = vst [vmem:[%s2291 + $0x3d4] sm:%s2283] %v2782
                  %v2784 = vld [vmem:[%s2290 + $0xf60] sm:%s2283]
                  %2785 = vst [vmem:[%s2291 + $0x3d8] sm:%s2283] %v2784
                  %v2786 = vld [vmem:[%s2290 + $0xf70] sm:%s2283]
                  %2787 = vst [vmem:[%s2291 + $0x3dc] sm:%s2283] %v2786
                  %v2788 = vld [vmem:[%s2290 + $0xf80] sm:%s2283]
                  %2789 = vst [vmem:[%s2291 + $0x3e0] sm:%s2283] %v2788
                  %v2790 = vld [vmem:[%s2290 + $0xf90] sm:%s2283]
                  %2791 = vst [vmem:[%s2291 + $0x3e4] sm:%s2283] %v2790
                  %v2792 = vld [vmem:[%s2290 + $0xfa0] sm:%s2283]
                  %2793 = vst [vmem:[%s2291 + $0x3e8] sm:%s2283] %v2792
                  %v2794 = vld [vmem:[%s2290 + $0xfb0] sm:%s2283]
                  %2795 = vst [vmem:[%s2291 + $0x3ec] sm:%s2283] %v2794
                  %v2796 = vld [vmem:[%s2290 + $0xfc0] sm:%s2283]
                  %2797 = vst [vmem:[%s2291 + $0x3f0] sm:%s2283] %v2796
                  %v2798 = vld [vmem:[%s2290 + $0xfd0] sm:%s2283]
                  %2799 = vst [vmem:[%s2291 + $0x3f4] sm:%s2283] %v2798
                  %v2800 = vld [vmem:[%s2290 + $0xfe0] sm:%s2283]
                  %2801 = vst [vmem:[%s2291 + $0x3f8] sm:%s2283] %v2800
                  %v2802 = vld [vmem:[%s2290 + $0xff0] sm:%s2283]
                  %2803 = vst [vmem:[%s2291 + $0x3fc] sm:%s2283] %v2802
                  %v2804 = vld [vmem:[%s2290 + $0x1000] sm:%s2283]
                  %2805 = vst [vmem:[%s2291 + $0x400] sm:%s2283] %v2804
                  %v2806 = vld [vmem:[%s2290 + $0x1010] sm:%s2283]
                  %2807 = vst [vmem:[%s2291 + $0x404] sm:%s2283] %v2806
                  %v2808 = vld [vmem:[%s2290 + $0x1020] sm:%s2283]
                  %2809 = vst [vmem:[%s2291 + $0x408] sm:%s2283] %v2808
                  %v2810 = vld [vmem:[%s2290 + $0x1030] sm:%s2283]
                  %2811 = vst [vmem:[%s2291 + $0x40c] sm:%s2283] %v2810
                  %v2812 = vld [vmem:[%s2290 + $0x1040] sm:%s2283]
                  %2813 = vst [vmem:[%s2291 + $0x410] sm:%s2283] %v2812
                  %v2814 = vld [vmem:[%s2290 + $0x1050] sm:%s2283]
                  %2815 = vst [vmem:[%s2291 + $0x414] sm:%s2283] %v2814
                  %v2816 = vld [vmem:[%s2290 + $0x1060] sm:%s2283]
                  %2817 = vst [vmem:[%s2291 + $0x418] sm:%s2283] %v2816
                  %v2818 = vld [vmem:[%s2290 + $0x1070] sm:%s2283]
                  %2819 = vst [vmem:[%s2291 + $0x41c] sm:%s2283] %v2818
                  %v2820 = vld [vmem:[%s2290 + $0x1080] sm:%s2283]
                  %2821 = vst [vmem:[%s2291 + $0x420] sm:%s2283] %v2820
                  %v2822 = vld [vmem:[%s2290 + $0x1090] sm:%s2283]
                  %2823 = vst [vmem:[%s2291 + $0x424] sm:%s2283] %v2822
                  %v2824 = vld [vmem:[%s2290 + $0x10a0] sm:%s2283]
                  %2825 = vst [vmem:[%s2291 + $0x428] sm:%s2283] %v2824
                  %v2826 = vld [vmem:[%s2290 + $0x10b0] sm:%s2283]
                  %2827 = vst [vmem:[%s2291 + $0x42c] sm:%s2283] %v2826
                  %v2828 = vld [vmem:[%s2290 + $0x10c0] sm:%s2283]
                  %2829 = vst [vmem:[%s2291 + $0x430] sm:%s2283] %v2828
                  %v2830 = vld [vmem:[%s2290 + $0x10d0] sm:%s2283]
                  %2831 = vst [vmem:[%s2291 + $0x434] sm:%s2283] %v2830
                  %v2832 = vld [vmem:[%s2290 + $0x10e0] sm:%s2283]
                  %2833 = vst [vmem:[%s2291 + $0x438] sm:%s2283] %v2832
                  %v2834 = vld [vmem:[%s2290 + $0x10f0] sm:%s2283]
                  %2835 = vst [vmem:[%s2291 + $0x43c] sm:%s2283] %v2834
                  %v2836 = vld [vmem:[%s2290 + $0x1100] sm:%s2283]
                  %2837 = vst [vmem:[%s2291 + $0x440] sm:%s2283] %v2836
                  %v2838 = vld [vmem:[%s2290 + $0x1110] sm:%s2283]
                  %2839 = vst [vmem:[%s2291 + $0x444] sm:%s2283] %v2838
                  %v2840 = vld [vmem:[%s2290 + $0x1120] sm:%s2283]
                  %2841 = vst [vmem:[%s2291 + $0x448] sm:%s2283] %v2840
                  %v2842 = vld [vmem:[%s2290 + $0x1130] sm:%s2283]
                  %2843 = vst [vmem:[%s2291 + $0x44c] sm:%s2283] %v2842
                  %v2844 = vld [vmem:[%s2290 + $0x1140] sm:%s2283]
                  %2845 = vst [vmem:[%s2291 + $0x450] sm:%s2283] %v2844
                  %v2846 = vld [vmem:[%s2290 + $0x1150] sm:%s2283]
                  %2847 = vst [vmem:[%s2291 + $0x454] sm:%s2283] %v2846
                  %v2848 = vld [vmem:[%s2290 + $0x1160] sm:%s2283]
                  %2849 = vst [vmem:[%s2291 + $0x458] sm:%s2283] %v2848
                  %v2850 = vld [vmem:[%s2290 + $0x1170] sm:%s2283]
                  %2851 = vst [vmem:[%s2291 + $0x45c] sm:%s2283] %v2850
                  %v2852 = vld [vmem:[%s2290 + $0x1180] sm:%s2283]
                  %2853 = vst [vmem:[%s2291 + $0x460] sm:%s2283] %v2852
                  %v2854 = vld [vmem:[%s2290 + $0x1190] sm:%s2283]
                  %2855 = vst [vmem:[%s2291 + $0x464] sm:%s2283] %v2854
                  %v2856 = vld [vmem:[%s2290 + $0x11a0] sm:%s2283]
                  %2857 = vst [vmem:[%s2291 + $0x468] sm:%s2283] %v2856
                  %v2858 = vld [vmem:[%s2290 + $0x11b0] sm:%s2283]
                  %2859 = vst [vmem:[%s2291 + $0x46c] sm:%s2283] %v2858
                  %v2860 = vld [vmem:[%s2290 + $0x11c0] sm:%s2283]
                  %2861 = vst [vmem:[%s2291 + $0x470] sm:%s2283] %v2860
                  %v2862 = vld [vmem:[%s2290 + $0x11d0] sm:%s2283]
                  %2863 = vst [vmem:[%s2291 + $0x474] sm:%s2283] %v2862
                  %v2864 = vld [vmem:[%s2290 + $0x11e0] sm:%s2283]
                  %2865 = vst [vmem:[%s2291 + $0x478] sm:%s2283] %v2864
                  %v2866 = vld [vmem:[%s2290 + $0x11f0] sm:%s2283]
                  %2867 = vst [vmem:[%s2291 + $0x47c] sm:%s2283] %v2866
                  %v2868 = vld [vmem:[%s2290 + $0x1200] sm:%s2283]
                  %2869 = vst [vmem:[%s2291 + $0x480] sm:%s2283] %v2868
                  %v2870 = vld [vmem:[%s2290 + $0x1210] sm:%s2283]
                  %2871 = vst [vmem:[%s2291 + $0x484] sm:%s2283] %v2870
                  %v2872 = vld [vmem:[%s2290 + $0x1220] sm:%s2283]
                  %2873 = vst [vmem:[%s2291 + $0x488] sm:%s2283] %v2872
                  %v2874 = vld [vmem:[%s2290 + $0x1230] sm:%s2283]
                  %2875 = vst [vmem:[%s2291 + $0x48c] sm:%s2283] %v2874
                  %v2876 = vld [vmem:[%s2290 + $0x1240] sm:%s2283]
                  %2877 = vst [vmem:[%s2291 + $0x490] sm:%s2283] %v2876
                  %v2878 = vld [vmem:[%s2290 + $0x1250] sm:%s2283]
                  %2879 = vst [vmem:[%s2291 + $0x494] sm:%s2283] %v2878
                  %v2880 = vld [vmem:[%s2290 + $0x1260] sm:%s2283]
                  %2881 = vst [vmem:[%s2291 + $0x498] sm:%s2283] %v2880
                  %v2882 = vld [vmem:[%s2290 + $0x1270] sm:%s2283]
                  %2883 = vst [vmem:[%s2291 + $0x49c] sm:%s2283] %v2882
                  %v2884 = vld [vmem:[%s2290 + $0x1280] sm:%s2283]
                  %2885 = vst [vmem:[%s2291 + $0x4a0] sm:%s2283] %v2884
                  %v2886 = vld [vmem:[%s2290 + $0x1290] sm:%s2283]
                  %2887 = vst [vmem:[%s2291 + $0x4a4] sm:%s2283] %v2886
                  %v2888 = vld [vmem:[%s2290 + $0x12a0] sm:%s2283]
                  %2889 = vst [vmem:[%s2291 + $0x4a8] sm:%s2283] %v2888
                  %v2890 = vld [vmem:[%s2290 + $0x12b0] sm:%s2283]
                  %2891 = vst [vmem:[%s2291 + $0x4ac] sm:%s2283] %v2890
                  %v2892 = vld [vmem:[%s2290 + $0x12c0] sm:%s2283]
                  %2893 = vst [vmem:[%s2291 + $0x4b0] sm:%s2283] %v2892
                  %v2894 = vld [vmem:[%s2290 + $0x12d0] sm:%s2283]
                  %2895 = vst [vmem:[%s2291 + $0x4b4] sm:%s2283] %v2894
                  %v2896 = vld [vmem:[%s2290 + $0x12e0] sm:%s2283]
                  %2897 = vst [vmem:[%s2291 + $0x4b8] sm:%s2283] %v2896
                  %v2898 = vld [vmem:[%s2290 + $0x12f0] sm:%s2283]
                  %2899 = vst [vmem:[%s2291 + $0x4bc] sm:%s2283] %v2898
                  %v2900 = vld [vmem:[%s2290 + $0x1300] sm:%s2283]
                  %2901 = vst [vmem:[%s2291 + $0x4c0] sm:%s2283] %v2900
                  %v2902 = vld [vmem:[%s2290 + $0x1310] sm:%s2283]
                  %2903 = vst [vmem:[%s2291 + $0x4c4] sm:%s2283] %v2902
                  %v2904 = vld [vmem:[%s2290 + $0x1320] sm:%s2283]
                  %2905 = vst [vmem:[%s2291 + $0x4c8] sm:%s2283] %v2904
                  %v2906 = vld [vmem:[%s2290 + $0x1330] sm:%s2283]
                  %2907 = vst [vmem:[%s2291 + $0x4cc] sm:%s2283] %v2906
                  %v2908 = vld [vmem:[%s2290 + $0x1340] sm:%s2283]
                  %2909 = vst [vmem:[%s2291 + $0x4d0] sm:%s2283] %v2908
                  %v2910 = vld [vmem:[%s2290 + $0x1350] sm:%s2283]
                  %2911 = vst [vmem:[%s2291 + $0x4d4] sm:%s2283] %v2910
                  %v2912 = vld [vmem:[%s2290 + $0x1360] sm:%s2283]
                  %2913 = vst [vmem:[%s2291 + $0x4d8] sm:%s2283] %v2912
                  %v2914 = vld [vmem:[%s2290 + $0x1370] sm:%s2283]
                  %2915 = vst [vmem:[%s2291 + $0x4dc] sm:%s2283] %v2914
                  %v2916 = vld [vmem:[%s2290 + $0x1380] sm:%s2283]
                  %2917 = vst [vmem:[%s2291 + $0x4e0] sm:%s2283] %v2916
                  %v2918 = vld [vmem:[%s2290 + $0x1390] sm:%s2283]
                  %2919 = vst [vmem:[%s2291 + $0x4e4] sm:%s2283] %v2918
                  %v2920 = vld [vmem:[%s2290 + $0x13a0] sm:%s2283]
                  %2921 = vst [vmem:[%s2291 + $0x4e8] sm:%s2283] %v2920
                  %v2922 = vld [vmem:[%s2290 + $0x13b0] sm:%s2283]
                  %2923 = vst [vmem:[%s2291 + $0x4ec] sm:%s2283] %v2922
                  %v2924 = vld [vmem:[%s2290 + $0x13c0] sm:%s2283]
                  %2925 = vst [vmem:[%s2291 + $0x4f0] sm:%s2283] %v2924
                  %v2926 = vld [vmem:[%s2290 + $0x13d0] sm:%s2283]
                  %2927 = vst [vmem:[%s2291 + $0x4f4] sm:%s2283] %v2926
                  %v2928 = vld [vmem:[%s2290 + $0x13e0] sm:%s2283]
                  %2929 = vst [vmem:[%s2291 + $0x4f8] sm:%s2283] %v2928
                  %v2930 = vld [vmem:[%s2290 + $0x13f0] sm:%s2283]
                  %2931 = vst [vmem:[%s2291 + $0x4fc] sm:%s2283] %v2930
                  %v2932 = vld [vmem:[%s2290 + $0x1400] sm:%s2283]
                  %2933 = vst [vmem:[%s2291 + $0x500] sm:%s2283] %v2932
                  %v2934 = vld [vmem:[%s2290 + $0x1410] sm:%s2283]
                  %2935 = vst [vmem:[%s2291 + $0x504] sm:%s2283] %v2934
                  %v2936 = vld [vmem:[%s2290 + $0x1420] sm:%s2283]
                  %2937 = vst [vmem:[%s2291 + $0x508] sm:%s2283] %v2936
                  %v2938 = vld [vmem:[%s2290 + $0x1430] sm:%s2283]
                  %2939 = vst [vmem:[%s2291 + $0x50c] sm:%s2283] %v2938
                $region90: #{dueling_dqn_forward.1} parent=77 // loop_footer
                  %s2289 = sadd.s32 1, %s2285
                $region91: #{dueling_dqn_forward.1} parent=77 // loop_footer_branch
                  %2284 = sbr.rel target = $region87
                $region92: #{dueling_dqn_forward.1} parent=77 // loop_exit
                  _
              $region78: #{dueling_dqn_forward.1} parent=51 // pred_fallthru
                _
            $region52: #{dueling_dqn_forward.1} parent=47 // pred_fallthru
              _
            // Predicated region
            $region53: #{dueling_dqn_forward.1} parent=47 // pred_check
              _
            $region54: #{dueling_dqn_forward.1} parent=47 // pred_check_branch
              %291 = sbr.rel (0) target = $region56
            $region55: #{dueling_dqn_forward.1} parent=47 // pred_region
              %s293 = ssub.s32 16, 1
              loop: start=0, step=1, limit=1
              $region57: #{dueling_dqn_forward.1} parent=55 // loop_pre_header
                _
              $region58: #{dueling_dqn_forward.1} parent=55 // loop_header
                %s295 = sphi 0, %s299
                %p296 = scmp.ge.s32.totalorder %s295, 1
                %s300 = sphi %s285, %s285
                %s301 = sphi %s283, %s283
              $region59: #{dueling_dqn_forward.1} parent=55 // loop_header_branch
                %298 = sbr.rel (%p296) target = $region63
              $region60: #{dueling_dqn_forward.1} parent=55 // loop_body
                %v302 = vld [vmem:[%s300] sm:%s293]
                %303 = vst [vmem:[%s301] sm:%s293] %v302
                %v304 = vld [vmem:[%s300 + $0x10] sm:%s293]
                %305 = vst [vmem:[%s301 + $0x4] sm:%s293] %v304
                %v306 = vld [vmem:[%s300 + $0x20] sm:%s293]
                %307 = vst [vmem:[%s301 + $0x8] sm:%s293] %v306
                %v308 = vld [vmem:[%s300 + $0x30] sm:%s293]
                %309 = vst [vmem:[%s301 + $0xc] sm:%s293] %v308
                %v310 = vld [vmem:[%s300 + $0x40] sm:%s293]
                %311 = vst [vmem:[%s301 + $0x10] sm:%s293] %v310
                %v312 = vld [vmem:[%s300 + $0x50] sm:%s293]
                %313 = vst [vmem:[%s301 + $0x14] sm:%s293] %v312
                %v314 = vld [vmem:[%s300 + $0x60] sm:%s293]
                %315 = vst [vmem:[%s301 + $0x18] sm:%s293] %v314
                %v316 = vld [vmem:[%s300 + $0x70] sm:%s293]
                %317 = vst [vmem:[%s301 + $0x1c] sm:%s293] %v316
                %v318 = vld [vmem:[%s300 + $0x80] sm:%s293]
                %319 = vst [vmem:[%s301 + $0x20] sm:%s293] %v318
                %v320 = vld [vmem:[%s300 + $0x90] sm:%s293]
                %321 = vst [vmem:[%s301 + $0x24] sm:%s293] %v320
                %v322 = vld [vmem:[%s300 + $0xa0] sm:%s293]
                %323 = vst [vmem:[%s301 + $0x28] sm:%s293] %v322
                %v324 = vld [vmem:[%s300 + $0xb0] sm:%s293]
                %325 = vst [vmem:[%s301 + $0x2c] sm:%s293] %v324
                %v326 = vld [vmem:[%s300 + $0xc0] sm:%s293]
                %327 = vst [vmem:[%s301 + $0x30] sm:%s293] %v326
                %v328 = vld [vmem:[%s300 + $0xd0] sm:%s293]
                %329 = vst [vmem:[%s301 + $0x34] sm:%s293] %v328
                %v330 = vld [vmem:[%s300 + $0xe0] sm:%s293]
                %331 = vst [vmem:[%s301 + $0x38] sm:%s293] %v330
                %v332 = vld [vmem:[%s300 + $0xf0] sm:%s293]
                %333 = vst [vmem:[%s301 + $0x3c] sm:%s293] %v332
                %v334 = vld [vmem:[%s300 + $0x100] sm:%s293]
                %335 = vst [vmem:[%s301 + $0x40] sm:%s293] %v334
                %v336 = vld [vmem:[%s300 + $0x110] sm:%s293]
                %337 = vst [vmem:[%s301 + $0x44] sm:%s293] %v336
                %v338 = vld [vmem:[%s300 + $0x120] sm:%s293]
                %339 = vst [vmem:[%s301 + $0x48] sm:%s293] %v338
                %v340 = vld [vmem:[%s300 + $0x130] sm:%s293]
                %341 = vst [vmem:[%s301 + $0x4c] sm:%s293] %v340
                %v342 = vld [vmem:[%s300 + $0x140] sm:%s293]
                %343 = vst [vmem:[%s301 + $0x50] sm:%s293] %v342
                %v344 = vld [vmem:[%s300 + $0x150] sm:%s293]
                %345 = vst [vmem:[%s301 + $0x54] sm:%s293] %v344
                %v346 = vld [vmem:[%s300 + $0x160] sm:%s293]
                %347 = vst [vmem:[%s301 + $0x58] sm:%s293] %v346
                %v348 = vld [vmem:[%s300 + $0x170] sm:%s293]
                %349 = vst [vmem:[%s301 + $0x5c] sm:%s293] %v348
                %v350 = vld [vmem:[%s300 + $0x180] sm:%s293]
                %351 = vst [vmem:[%s301 + $0x60] sm:%s293] %v350
                %v352 = vld [vmem:[%s300 + $0x190] sm:%s293]
                %353 = vst [vmem:[%s301 + $0x64] sm:%s293] %v352
                %v354 = vld [vmem:[%s300 + $0x1a0] sm:%s293]
                %355 = vst [vmem:[%s301 + $0x68] sm:%s293] %v354
                %v356 = vld [vmem:[%s300 + $0x1b0] sm:%s293]
                %357 = vst [vmem:[%s301 + $0x6c] sm:%s293] %v356
                %v358 = vld [vmem:[%s300 + $0x1c0] sm:%s293]
                %359 = vst [vmem:[%s301 + $0x70] sm:%s293] %v358
                %v360 = vld [vmem:[%s300 + $0x1d0] sm:%s293]
                %361 = vst [vmem:[%s301 + $0x74] sm:%s293] %v360
                %v362 = vld [vmem:[%s300 + $0x1e0] sm:%s293]
                %363 = vst [vmem:[%s301 + $0x78] sm:%s293] %v362
                %v364 = vld [vmem:[%s300 + $0x1f0] sm:%s293]
                %365 = vst [vmem:[%s301 + $0x7c] sm:%s293] %v364
                %v366 = vld [vmem:[%s300 + $0x200] sm:%s293]
                %367 = vst [vmem:[%s301 + $0x80] sm:%s293] %v366
                %v368 = vld [vmem:[%s300 + $0x210] sm:%s293]
                %369 = vst [vmem:[%s301 + $0x84] sm:%s293] %v368
                %v370 = vld [vmem:[%s300 + $0x220] sm:%s293]
                %371 = vst [vmem:[%s301 + $0x88] sm:%s293] %v370
                %v372 = vld [vmem:[%s300 + $0x230] sm:%s293]
                %373 = vst [vmem:[%s301 + $0x8c] sm:%s293] %v372
                %v374 = vld [vmem:[%s300 + $0x240] sm:%s293]
                %375 = vst [vmem:[%s301 + $0x90] sm:%s293] %v374
                %v376 = vld [vmem:[%s300 + $0x250] sm:%s293]
                %377 = vst [vmem:[%s301 + $0x94] sm:%s293] %v376
                %v378 = vld [vmem:[%s300 + $0x260] sm:%s293]
                %379 = vst [vmem:[%s301 + $0x98] sm:%s293] %v378
                %v380 = vld [vmem:[%s300 + $0x270] sm:%s293]
                %381 = vst [vmem:[%s301 + $0x9c] sm:%s293] %v380
                %v382 = vld [vmem:[%s300 + $0x280] sm:%s293]
                %383 = vst [vmem:[%s301 + $0xa0] sm:%s293] %v382
                %v384 = vld [vmem:[%s300 + $0x290] sm:%s293]
                %385 = vst [vmem:[%s301 + $0xa4] sm:%s293] %v384
                %v386 = vld [vmem:[%s300 + $0x2a0] sm:%s293]
                %387 = vst [vmem:[%s301 + $0xa8] sm:%s293] %v386
                %v388 = vld [vmem:[%s300 + $0x2b0] sm:%s293]
                %389 = vst [vmem:[%s301 + $0xac] sm:%s293] %v388
                %v390 = vld [vmem:[%s300 + $0x2c0] sm:%s293]
                %391 = vst [vmem:[%s301 + $0xb0] sm:%s293] %v390
                %v392 = vld [vmem:[%s300 + $0x2d0] sm:%s293]
                %393 = vst [vmem:[%s301 + $0xb4] sm:%s293] %v392
                %v394 = vld [vmem:[%s300 + $0x2e0] sm:%s293]
                %395 = vst [vmem:[%s301 + $0xb8] sm:%s293] %v394
                %v396 = vld [vmem:[%s300 + $0x2f0] sm:%s293]
                %397 = vst [vmem:[%s301 + $0xbc] sm:%s293] %v396
                %v398 = vld [vmem:[%s300 + $0x300] sm:%s293]
                %399 = vst [vmem:[%s301 + $0xc0] sm:%s293] %v398
                %v400 = vld [vmem:[%s300 + $0x310] sm:%s293]
                %401 = vst [vmem:[%s301 + $0xc4] sm:%s293] %v400
                %v402 = vld [vmem:[%s300 + $0x320] sm:%s293]
                %403 = vst [vmem:[%s301 + $0xc8] sm:%s293] %v402
                %v404 = vld [vmem:[%s300 + $0x330] sm:%s293]
                %405 = vst [vmem:[%s301 + $0xcc] sm:%s293] %v404
                %v406 = vld [vmem:[%s300 + $0x340] sm:%s293]
                %407 = vst [vmem:[%s301 + $0xd0] sm:%s293] %v406
                %v408 = vld [vmem:[%s300 + $0x350] sm:%s293]
                %409 = vst [vmem:[%s301 + $0xd4] sm:%s293] %v408
                %v410 = vld [vmem:[%s300 + $0x360] sm:%s293]
                %411 = vst [vmem:[%s301 + $0xd8] sm:%s293] %v410
                %v412 = vld [vmem:[%s300 + $0x370] sm:%s293]
                %413 = vst [vmem:[%s301 + $0xdc] sm:%s293] %v412
                %v414 = vld [vmem:[%s300 + $0x380] sm:%s293]
                %415 = vst [vmem:[%s301 + $0xe0] sm:%s293] %v414
                %v416 = vld [vmem:[%s300 + $0x390] sm:%s293]
                %417 = vst [vmem:[%s301 + $0xe4] sm:%s293] %v416
                %v418 = vld [vmem:[%s300 + $0x3a0] sm:%s293]
                %419 = vst [vmem:[%s301 + $0xe8] sm:%s293] %v418
                %v420 = vld [vmem:[%s300 + $0x3b0] sm:%s293]
                %421 = vst [vmem:[%s301 + $0xec] sm:%s293] %v420
                %v422 = vld [vmem:[%s300 + $0x3c0] sm:%s293]
                %423 = vst [vmem:[%s301 + $0xf0] sm:%s293] %v422
                %v424 = vld [vmem:[%s300 + $0x3d0] sm:%s293]
                %425 = vst [vmem:[%s301 + $0xf4] sm:%s293] %v424
                %v426 = vld [vmem:[%s300 + $0x3e0] sm:%s293]
                %427 = vst [vmem:[%s301 + $0xf8] sm:%s293] %v426
                %v428 = vld [vmem:[%s300 + $0x3f0] sm:%s293]
                %429 = vst [vmem:[%s301 + $0xfc] sm:%s293] %v428
                %v430 = vld [vmem:[%s300 + $0x400] sm:%s293]
                %431 = vst [vmem:[%s301 + $0x100] sm:%s293] %v430
                %v432 = vld [vmem:[%s300 + $0x410] sm:%s293]
                %433 = vst [vmem:[%s301 + $0x104] sm:%s293] %v432
                %v434 = vld [vmem:[%s300 + $0x420] sm:%s293]
                %435 = vst [vmem:[%s301 + $0x108] sm:%s293] %v434
                %v436 = vld [vmem:[%s300 + $0x430] sm:%s293]
                %437 = vst [vmem:[%s301 + $0x10c] sm:%s293] %v436
                %v438 = vld [vmem:[%s300 + $0x440] sm:%s293]
                %439 = vst [vmem:[%s301 + $0x110] sm:%s293] %v438
                %v440 = vld [vmem:[%s300 + $0x450] sm:%s293]
                %441 = vst [vmem:[%s301 + $0x114] sm:%s293] %v440
                %v442 = vld [vmem:[%s300 + $0x460] sm:%s293]
                %443 = vst [vmem:[%s301 + $0x118] sm:%s293] %v442
                %v444 = vld [vmem:[%s300 + $0x470] sm:%s293]
                %445 = vst [vmem:[%s301 + $0x11c] sm:%s293] %v444
                %v446 = vld [vmem:[%s300 + $0x480] sm:%s293]
                %447 = vst [vmem:[%s301 + $0x120] sm:%s293] %v446
                %v448 = vld [vmem:[%s300 + $0x490] sm:%s293]
                %449 = vst [vmem:[%s301 + $0x124] sm:%s293] %v448
                %v450 = vld [vmem:[%s300 + $0x4a0] sm:%s293]
                %451 = vst [vmem:[%s301 + $0x128] sm:%s293] %v450
                %v452 = vld [vmem:[%s300 + $0x4b0] sm:%s293]
                %453 = vst [vmem:[%s301 + $0x12c] sm:%s293] %v452
                %v454 = vld [vmem:[%s300 + $0x4c0] sm:%s293]
                %455 = vst [vmem:[%s301 + $0x130] sm:%s293] %v454
                %v456 = vld [vmem:[%s300 + $0x4d0] sm:%s293]
                %457 = vst [vmem:[%s301 + $0x134] sm:%s293] %v456
                %v458 = vld [vmem:[%s300 + $0x4e0] sm:%s293]
                %459 = vst [vmem:[%s301 + $0x138] sm:%s293] %v458
                %v460 = vld [vmem:[%s300 + $0x4f0] sm:%s293]
                %461 = vst [vmem:[%s301 + $0x13c] sm:%s293] %v460
                %v462 = vld [vmem:[%s300 + $0x500] sm:%s293]
                %463 = vst [vmem:[%s301 + $0x140] sm:%s293] %v462
                %v464 = vld [vmem:[%s300 + $0x510] sm:%s293]
                %465 = vst [vmem:[%s301 + $0x144] sm:%s293] %v464
                %v466 = vld [vmem:[%s300 + $0x520] sm:%s293]
                %467 = vst [vmem:[%s301 + $0x148] sm:%s293] %v466
                %v468 = vld [vmem:[%s300 + $0x530] sm:%s293]
                %469 = vst [vmem:[%s301 + $0x14c] sm:%s293] %v468
                %v470 = vld [vmem:[%s300 + $0x540] sm:%s293]
                %471 = vst [vmem:[%s301 + $0x150] sm:%s293] %v470
                %v472 = vld [vmem:[%s300 + $0x550] sm:%s293]
                %473 = vst [vmem:[%s301 + $0x154] sm:%s293] %v472
                %v474 = vld [vmem:[%s300 + $0x560] sm:%s293]
                %475 = vst [vmem:[%s301 + $0x158] sm:%s293] %v474
                %v476 = vld [vmem:[%s300 + $0x570] sm:%s293]
                %477 = vst [vmem:[%s301 + $0x15c] sm:%s293] %v476
                %v478 = vld [vmem:[%s300 + $0x580] sm:%s293]
                %479 = vst [vmem:[%s301 + $0x160] sm:%s293] %v478
                %v480 = vld [vmem:[%s300 + $0x590] sm:%s293]
                %481 = vst [vmem:[%s301 + $0x164] sm:%s293] %v480
                %v482 = vld [vmem:[%s300 + $0x5a0] sm:%s293]
                %483 = vst [vmem:[%s301 + $0x168] sm:%s293] %v482
                %v484 = vld [vmem:[%s300 + $0x5b0] sm:%s293]
                %485 = vst [vmem:[%s301 + $0x16c] sm:%s293] %v484
                %v486 = vld [vmem:[%s300 + $0x5c0] sm:%s293]
                %487 = vst [vmem:[%s301 + $0x170] sm:%s293] %v486
                %v488 = vld [vmem:[%s300 + $0x5d0] sm:%s293]
                %489 = vst [vmem:[%s301 + $0x174] sm:%s293] %v488
                %v490 = vld [vmem:[%s300 + $0x5e0] sm:%s293]
                %491 = vst [vmem:[%s301 + $0x178] sm:%s293] %v490
                %v492 = vld [vmem:[%s300 + $0x5f0] sm:%s293]
                %493 = vst [vmem:[%s301 + $0x17c] sm:%s293] %v492
                %v494 = vld [vmem:[%s300 + $0x600] sm:%s293]
                %495 = vst [vmem:[%s301 + $0x180] sm:%s293] %v494
                %v496 = vld [vmem:[%s300 + $0x610] sm:%s293]
                %497 = vst [vmem:[%s301 + $0x184] sm:%s293] %v496
                %v498 = vld [vmem:[%s300 + $0x620] sm:%s293]
                %499 = vst [vmem:[%s301 + $0x188] sm:%s293] %v498
                %v500 = vld [vmem:[%s300 + $0x630] sm:%s293]
                %501 = vst [vmem:[%s301 + $0x18c] sm:%s293] %v500
                %v502 = vld [vmem:[%s300 + $0x640] sm:%s293]
                %503 = vst [vmem:[%s301 + $0x190] sm:%s293] %v502
                %v504 = vld [vmem:[%s300 + $0x650] sm:%s293]
                %505 = vst [vmem:[%s301 + $0x194] sm:%s293] %v504
                %v506 = vld [vmem:[%s300 + $0x660] sm:%s293]
                %507 = vst [vmem:[%s301 + $0x198] sm:%s293] %v506
                %v508 = vld [vmem:[%s300 + $0x670] sm:%s293]
                %509 = vst [vmem:[%s301 + $0x19c] sm:%s293] %v508
                %v510 = vld [vmem:[%s300 + $0x680] sm:%s293]
                %511 = vst [vmem:[%s301 + $0x1a0] sm:%s293] %v510
                %v512 = vld [vmem:[%s300 + $0x690] sm:%s293]
                %513 = vst [vmem:[%s301 + $0x1a4] sm:%s293] %v512
                %v514 = vld [vmem:[%s300 + $0x6a0] sm:%s293]
                %515 = vst [vmem:[%s301 + $0x1a8] sm:%s293] %v514
                %v516 = vld [vmem:[%s300 + $0x6b0] sm:%s293]
                %517 = vst [vmem:[%s301 + $0x1ac] sm:%s293] %v516
                %v518 = vld [vmem:[%s300 + $0x6c0] sm:%s293]
                %519 = vst [vmem:[%s301 + $0x1b0] sm:%s293] %v518
                %v520 = vld [vmem:[%s300 + $0x6d0] sm:%s293]
                %521 = vst [vmem:[%s301 + $0x1b4] sm:%s293] %v520
                %v522 = vld [vmem:[%s300 + $0x6e0] sm:%s293]
                %523 = vst [vmem:[%s301 + $0x1b8] sm:%s293] %v522
                %v524 = vld [vmem:[%s300 + $0x6f0] sm:%s293]
                %525 = vst [vmem:[%s301 + $0x1bc] sm:%s293] %v524
                %v526 = vld [vmem:[%s300 + $0x700] sm:%s293]
                %527 = vst [vmem:[%s301 + $0x1c0] sm:%s293] %v526
                %v528 = vld [vmem:[%s300 + $0x710] sm:%s293]
                %529 = vst [vmem:[%s301 + $0x1c4] sm:%s293] %v528
                %v530 = vld [vmem:[%s300 + $0x720] sm:%s293]
                %531 = vst [vmem:[%s301 + $0x1c8] sm:%s293] %v530
                %v532 = vld [vmem:[%s300 + $0x730] sm:%s293]
                %533 = vst [vmem:[%s301 + $0x1cc] sm:%s293] %v532
                %v534 = vld [vmem:[%s300 + $0x740] sm:%s293]
                %535 = vst [vmem:[%s301 + $0x1d0] sm:%s293] %v534
                %v536 = vld [vmem:[%s300 + $0x750] sm:%s293]
                %537 = vst [vmem:[%s301 + $0x1d4] sm:%s293] %v536
                %v538 = vld [vmem:[%s300 + $0x760] sm:%s293]
                %539 = vst [vmem:[%s301 + $0x1d8] sm:%s293] %v538
                %v540 = vld [vmem:[%s300 + $0x770] sm:%s293]
                %541 = vst [vmem:[%s301 + $0x1dc] sm:%s293] %v540
                %v542 = vld [vmem:[%s300 + $0x780] sm:%s293]
                %543 = vst [vmem:[%s301 + $0x1e0] sm:%s293] %v542
                %v544 = vld [vmem:[%s300 + $0x790] sm:%s293]
                %545 = vst [vmem:[%s301 + $0x1e4] sm:%s293] %v544
                %v546 = vld [vmem:[%s300 + $0x7a0] sm:%s293]
                %547 = vst [vmem:[%s301 + $0x1e8] sm:%s293] %v546
                %v548 = vld [vmem:[%s300 + $0x7b0] sm:%s293]
                %549 = vst [vmem:[%s301 + $0x1ec] sm:%s293] %v548
                %v550 = vld [vmem:[%s300 + $0x7c0] sm:%s293]
                %551 = vst [vmem:[%s301 + $0x1f0] sm:%s293] %v550
                %v552 = vld [vmem:[%s300 + $0x7d0] sm:%s293]
                %553 = vst [vmem:[%s301 + $0x1f4] sm:%s293] %v552
                %v554 = vld [vmem:[%s300 + $0x7e0] sm:%s293]
                %555 = vst [vmem:[%s301 + $0x1f8] sm:%s293] %v554
                %v556 = vld [vmem:[%s300 + $0x7f0] sm:%s293]
                %557 = vst [vmem:[%s301 + $0x1fc] sm:%s293] %v556
                %v558 = vld [vmem:[%s300 + $0x800] sm:%s293]
                %559 = vst [vmem:[%s301 + $0x200] sm:%s293] %v558
                %v560 = vld [vmem:[%s300 + $0x810] sm:%s293]
                %561 = vst [vmem:[%s301 + $0x204] sm:%s293] %v560
                %v562 = vld [vmem:[%s300 + $0x820] sm:%s293]
                %563 = vst [vmem:[%s301 + $0x208] sm:%s293] %v562
                %v564 = vld [vmem:[%s300 + $0x830] sm:%s293]
                %565 = vst [vmem:[%s301 + $0x20c] sm:%s293] %v564
                %v566 = vld [vmem:[%s300 + $0x840] sm:%s293]
                %567 = vst [vmem:[%s301 + $0x210] sm:%s293] %v566
                %v568 = vld [vmem:[%s300 + $0x850] sm:%s293]
                %569 = vst [vmem:[%s301 + $0x214] sm:%s293] %v568
                %v570 = vld [vmem:[%s300 + $0x860] sm:%s293]
                %571 = vst [vmem:[%s301 + $0x218] sm:%s293] %v570
                %v572 = vld [vmem:[%s300 + $0x870] sm:%s293]
                %573 = vst [vmem:[%s301 + $0x21c] sm:%s293] %v572
                %v574 = vld [vmem:[%s300 + $0x880] sm:%s293]
                %575 = vst [vmem:[%s301 + $0x220] sm:%s293] %v574
                %v576 = vld [vmem:[%s300 + $0x890] sm:%s293]
                %577 = vst [vmem:[%s301 + $0x224] sm:%s293] %v576
                %v578 = vld [vmem:[%s300 + $0x8a0] sm:%s293]
                %579 = vst [vmem:[%s301 + $0x228] sm:%s293] %v578
                %v580 = vld [vmem:[%s300 + $0x8b0] sm:%s293]
                %581 = vst [vmem:[%s301 + $0x22c] sm:%s293] %v580
                %v582 = vld [vmem:[%s300 + $0x8c0] sm:%s293]
                %583 = vst [vmem:[%s301 + $0x230] sm:%s293] %v582
                %v584 = vld [vmem:[%s300 + $0x8d0] sm:%s293]
                %585 = vst [vmem:[%s301 + $0x234] sm:%s293] %v584
                %v586 = vld [vmem:[%s300 + $0x8e0] sm:%s293]
                %587 = vst [vmem:[%s301 + $0x238] sm:%s293] %v586
                %v588 = vld [vmem:[%s300 + $0x8f0] sm:%s293]
                %589 = vst [vmem:[%s301 + $0x23c] sm:%s293] %v588
                %v590 = vld [vmem:[%s300 + $0x900] sm:%s293]
                %591 = vst [vmem:[%s301 + $0x240] sm:%s293] %v590
                %v592 = vld [vmem:[%s300 + $0x910] sm:%s293]
                %593 = vst [vmem:[%s301 + $0x244] sm:%s293] %v592
                %v594 = vld [vmem:[%s300 + $0x920] sm:%s293]
                %595 = vst [vmem:[%s301 + $0x248] sm:%s293] %v594
                %v596 = vld [vmem:[%s300 + $0x930] sm:%s293]
                %597 = vst [vmem:[%s301 + $0x24c] sm:%s293] %v596
                %v598 = vld [vmem:[%s300 + $0x940] sm:%s293]
                %599 = vst [vmem:[%s301 + $0x250] sm:%s293] %v598
                %v600 = vld [vmem:[%s300 + $0x950] sm:%s293]
                %601 = vst [vmem:[%s301 + $0x254] sm:%s293] %v600
                %v602 = vld [vmem:[%s300 + $0x960] sm:%s293]
                %603 = vst [vmem:[%s301 + $0x258] sm:%s293] %v602
                %v604 = vld [vmem:[%s300 + $0x970] sm:%s293]
                %605 = vst [vmem:[%s301 + $0x25c] sm:%s293] %v604
                %v606 = vld [vmem:[%s300 + $0x980] sm:%s293]
                %607 = vst [vmem:[%s301 + $0x260] sm:%s293] %v606
                %v608 = vld [vmem:[%s300 + $0x990] sm:%s293]
                %609 = vst [vmem:[%s301 + $0x264] sm:%s293] %v608
                %v610 = vld [vmem:[%s300 + $0x9a0] sm:%s293]
                %611 = vst [vmem:[%s301 + $0x268] sm:%s293] %v610
                %v612 = vld [vmem:[%s300 + $0x9b0] sm:%s293]
                %613 = vst [vmem:[%s301 + $0x26c] sm:%s293] %v612
                %v614 = vld [vmem:[%s300 + $0x9c0] sm:%s293]
                %615 = vst [vmem:[%s301 + $0x270] sm:%s293] %v614
                %v616 = vld [vmem:[%s300 + $0x9d0] sm:%s293]
                %617 = vst [vmem:[%s301 + $0x274] sm:%s293] %v616
                %v618 = vld [vmem:[%s300 + $0x9e0] sm:%s293]
                %619 = vst [vmem:[%s301 + $0x278] sm:%s293] %v618
                %v620 = vld [vmem:[%s300 + $0x9f0] sm:%s293]
                %621 = vst [vmem:[%s301 + $0x27c] sm:%s293] %v620
                %v622 = vld [vmem:[%s300 + $0xa00] sm:%s293]
                %623 = vst [vmem:[%s301 + $0x280] sm:%s293] %v622
                %v624 = vld [vmem:[%s300 + $0xa10] sm:%s293]
                %625 = vst [vmem:[%s301 + $0x284] sm:%s293] %v624
                %v626 = vld [vmem:[%s300 + $0xa20] sm:%s293]
                %627 = vst [vmem:[%s301 + $0x288] sm:%s293] %v626
                %v628 = vld [vmem:[%s300 + $0xa30] sm:%s293]
                %629 = vst [vmem:[%s301 + $0x28c] sm:%s293] %v628
                %v630 = vld [vmem:[%s300 + $0xa40] sm:%s293]
                %631 = vst [vmem:[%s301 + $0x290] sm:%s293] %v630
                %v632 = vld [vmem:[%s300 + $0xa50] sm:%s293]
                %633 = vst [vmem:[%s301 + $0x294] sm:%s293] %v632
                %v634 = vld [vmem:[%s300 + $0xa60] sm:%s293]
                %635 = vst [vmem:[%s301 + $0x298] sm:%s293] %v634
                %v636 = vld [vmem:[%s300 + $0xa70] sm:%s293]
                %637 = vst [vmem:[%s301 + $0x29c] sm:%s293] %v636
                %v638 = vld [vmem:[%s300 + $0xa80] sm:%s293]
                %639 = vst [vmem:[%s301 + $0x2a0] sm:%s293] %v638
                %v640 = vld [vmem:[%s300 + $0xa90] sm:%s293]
                %641 = vst [vmem:[%s301 + $0x2a4] sm:%s293] %v640
                %v642 = vld [vmem:[%s300 + $0xaa0] sm:%s293]
                %643 = vst [vmem:[%s301 + $0x2a8] sm:%s293] %v642
                %v644 = vld [vmem:[%s300 + $0xab0] sm:%s293]
                %645 = vst [vmem:[%s301 + $0x2ac] sm:%s293] %v644
                %v646 = vld [vmem:[%s300 + $0xac0] sm:%s293]
                %647 = vst [vmem:[%s301 + $0x2b0] sm:%s293] %v646
                %v648 = vld [vmem:[%s300 + $0xad0] sm:%s293]
                %649 = vst [vmem:[%s301 + $0x2b4] sm:%s293] %v648
                %v650 = vld [vmem:[%s300 + $0xae0] sm:%s293]
                %651 = vst [vmem:[%s301 + $0x2b8] sm:%s293] %v650
                %v652 = vld [vmem:[%s300 + $0xaf0] sm:%s293]
                %653 = vst [vmem:[%s301 + $0x2bc] sm:%s293] %v652
                %v654 = vld [vmem:[%s300 + $0xb00] sm:%s293]
                %655 = vst [vmem:[%s301 + $0x2c0] sm:%s293] %v654
                %v656 = vld [vmem:[%s300 + $0xb10] sm:%s293]
                %657 = vst [vmem:[%s301 + $0x2c4] sm:%s293] %v656
                %v658 = vld [vmem:[%s300 + $0xb20] sm:%s293]
                %659 = vst [vmem:[%s301 + $0x2c8] sm:%s293] %v658
                %v660 = vld [vmem:[%s300 + $0xb30] sm:%s293]
                %661 = vst [vmem:[%s301 + $0x2cc] sm:%s293] %v660
                %v662 = vld [vmem:[%s300 + $0xb40] sm:%s293]
                %663 = vst [vmem:[%s301 + $0x2d0] sm:%s293] %v662
                %v664 = vld [vmem:[%s300 + $0xb50] sm:%s293]
                %665 = vst [vmem:[%s301 + $0x2d4] sm:%s293] %v664
                %v666 = vld [vmem:[%s300 + $0xb60] sm:%s293]
                %667 = vst [vmem:[%s301 + $0x2d8] sm:%s293] %v666
                %v668 = vld [vmem:[%s300 + $0xb70] sm:%s293]
                %669 = vst [vmem:[%s301 + $0x2dc] sm:%s293] %v668
                %v670 = vld [vmem:[%s300 + $0xb80] sm:%s293]
                %671 = vst [vmem:[%s301 + $0x2e0] sm:%s293] %v670
                %v672 = vld [vmem:[%s300 + $0xb90] sm:%s293]
                %673 = vst [vmem:[%s301 + $0x2e4] sm:%s293] %v672
                %v674 = vld [vmem:[%s300 + $0xba0] sm:%s293]
                %675 = vst [vmem:[%s301 + $0x2e8] sm:%s293] %v674
                %v676 = vld [vmem:[%s300 + $0xbb0] sm:%s293]
                %677 = vst [vmem:[%s301 + $0x2ec] sm:%s293] %v676
                %v678 = vld [vmem:[%s300 + $0xbc0] sm:%s293]
                %679 = vst [vmem:[%s301 + $0x2f0] sm:%s293] %v678
                %v680 = vld [vmem:[%s300 + $0xbd0] sm:%s293]
                %681 = vst [vmem:[%s301 + $0x2f4] sm:%s293] %v680
                %v682 = vld [vmem:[%s300 + $0xbe0] sm:%s293]
                %683 = vst [vmem:[%s301 + $0x2f8] sm:%s293] %v682
                %v684 = vld [vmem:[%s300 + $0xbf0] sm:%s293]
                %685 = vst [vmem:[%s301 + $0x2fc] sm:%s293] %v684
                %v686 = vld [vmem:[%s300 + $0xc00] sm:%s293]
                %687 = vst [vmem:[%s301 + $0x300] sm:%s293] %v686
                %v688 = vld [vmem:[%s300 + $0xc10] sm:%s293]
                %689 = vst [vmem:[%s301 + $0x304] sm:%s293] %v688
                %v690 = vld [vmem:[%s300 + $0xc20] sm:%s293]
                %691 = vst [vmem:[%s301 + $0x308] sm:%s293] %v690
                %v692 = vld [vmem:[%s300 + $0xc30] sm:%s293]
                %693 = vst [vmem:[%s301 + $0x30c] sm:%s293] %v692
                %v694 = vld [vmem:[%s300 + $0xc40] sm:%s293]
                %695 = vst [vmem:[%s301 + $0x310] sm:%s293] %v694
                %v696 = vld [vmem:[%s300 + $0xc50] sm:%s293]
                %697 = vst [vmem:[%s301 + $0x314] sm:%s293] %v696
                %v698 = vld [vmem:[%s300 + $0xc60] sm:%s293]
                %699 = vst [vmem:[%s301 + $0x318] sm:%s293] %v698
                %v700 = vld [vmem:[%s300 + $0xc70] sm:%s293]
                %701 = vst [vmem:[%s301 + $0x31c] sm:%s293] %v700
                %v702 = vld [vmem:[%s300 + $0xc80] sm:%s293]
                %703 = vst [vmem:[%s301 + $0x320] sm:%s293] %v702
                %v704 = vld [vmem:[%s300 + $0xc90] sm:%s293]
                %705 = vst [vmem:[%s301 + $0x324] sm:%s293] %v704
                %v706 = vld [vmem:[%s300 + $0xca0] sm:%s293]
                %707 = vst [vmem:[%s301 + $0x328] sm:%s293] %v706
                %v708 = vld [vmem:[%s300 + $0xcb0] sm:%s293]
                %709 = vst [vmem:[%s301 + $0x32c] sm:%s293] %v708
                %v710 = vld [vmem:[%s300 + $0xcc0] sm:%s293]
                %711 = vst [vmem:[%s301 + $0x330] sm:%s293] %v710
                %v712 = vld [vmem:[%s300 + $0xcd0] sm:%s293]
                %713 = vst [vmem:[%s301 + $0x334] sm:%s293] %v712
                %v714 = vld [vmem:[%s300 + $0xce0] sm:%s293]
                %715 = vst [vmem:[%s301 + $0x338] sm:%s293] %v714
                %v716 = vld [vmem:[%s300 + $0xcf0] sm:%s293]
                %717 = vst [vmem:[%s301 + $0x33c] sm:%s293] %v716
                %v718 = vld [vmem:[%s300 + $0xd00] sm:%s293]
                %719 = vst [vmem:[%s301 + $0x340] sm:%s293] %v718
                %v720 = vld [vmem:[%s300 + $0xd10] sm:%s293]
                %721 = vst [vmem:[%s301 + $0x344] sm:%s293] %v720
                %v722 = vld [vmem:[%s300 + $0xd20] sm:%s293]
                %723 = vst [vmem:[%s301 + $0x348] sm:%s293] %v722
                %v724 = vld [vmem:[%s300 + $0xd30] sm:%s293]
                %725 = vst [vmem:[%s301 + $0x34c] sm:%s293] %v724
                %v726 = vld [vmem:[%s300 + $0xd40] sm:%s293]
                %727 = vst [vmem:[%s301 + $0x350] sm:%s293] %v726
                %v728 = vld [vmem:[%s300 + $0xd50] sm:%s293]
                %729 = vst [vmem:[%s301 + $0x354] sm:%s293] %v728
                %v730 = vld [vmem:[%s300 + $0xd60] sm:%s293]
                %731 = vst [vmem:[%s301 + $0x358] sm:%s293] %v730
                %v732 = vld [vmem:[%s300 + $0xd70] sm:%s293]
                %733 = vst [vmem:[%s301 + $0x35c] sm:%s293] %v732
                %v734 = vld [vmem:[%s300 + $0xd80] sm:%s293]
                %735 = vst [vmem:[%s301 + $0x360] sm:%s293] %v734
                %v736 = vld [vmem:[%s300 + $0xd90] sm:%s293]
                %737 = vst [vmem:[%s301 + $0x364] sm:%s293] %v736
                %v738 = vld [vmem:[%s300 + $0xda0] sm:%s293]
                %739 = vst [vmem:[%s301 + $0x368] sm:%s293] %v738
                %v740 = vld [vmem:[%s300 + $0xdb0] sm:%s293]
                %741 = vst [vmem:[%s301 + $0x36c] sm:%s293] %v740
                %v742 = vld [vmem:[%s300 + $0xdc0] sm:%s293]
                %743 = vst [vmem:[%s301 + $0x370] sm:%s293] %v742
                %v744 = vld [vmem:[%s300 + $0xdd0] sm:%s293]
                %745 = vst [vmem:[%s301 + $0x374] sm:%s293] %v744
                %v746 = vld [vmem:[%s300 + $0xde0] sm:%s293]
                %747 = vst [vmem:[%s301 + $0x378] sm:%s293] %v746
                %v748 = vld [vmem:[%s300 + $0xdf0] sm:%s293]
                %749 = vst [vmem:[%s301 + $0x37c] sm:%s293] %v748
                %v750 = vld [vmem:[%s300 + $0xe00] sm:%s293]
                %751 = vst [vmem:[%s301 + $0x380] sm:%s293] %v750
                %v752 = vld [vmem:[%s300 + $0xe10] sm:%s293]
                %753 = vst [vmem:[%s301 + $0x384] sm:%s293] %v752
                %v754 = vld [vmem:[%s300 + $0xe20] sm:%s293]
                %755 = vst [vmem:[%s301 + $0x388] sm:%s293] %v754
                %v756 = vld [vmem:[%s300 + $0xe30] sm:%s293]
                %757 = vst [vmem:[%s301 + $0x38c] sm:%s293] %v756
                %v758 = vld [vmem:[%s300 + $0xe40] sm:%s293]
                %759 = vst [vmem:[%s301 + $0x390] sm:%s293] %v758
                %v760 = vld [vmem:[%s300 + $0xe50] sm:%s293]
                %761 = vst [vmem:[%s301 + $0x394] sm:%s293] %v760
                %v762 = vld [vmem:[%s300 + $0xe60] sm:%s293]
                %763 = vst [vmem:[%s301 + $0x398] sm:%s293] %v762
                %v764 = vld [vmem:[%s300 + $0xe70] sm:%s293]
                %765 = vst [vmem:[%s301 + $0x39c] sm:%s293] %v764
                %v766 = vld [vmem:[%s300 + $0xe80] sm:%s293]
                %767 = vst [vmem:[%s301 + $0x3a0] sm:%s293] %v766
                %v768 = vld [vmem:[%s300 + $0xe90] sm:%s293]
                %769 = vst [vmem:[%s301 + $0x3a4] sm:%s293] %v768
                %v770 = vld [vmem:[%s300 + $0xea0] sm:%s293]
                %771 = vst [vmem:[%s301 + $0x3a8] sm:%s293] %v770
                %v772 = vld [vmem:[%s300 + $0xeb0] sm:%s293]
                %773 = vst [vmem:[%s301 + $0x3ac] sm:%s293] %v772
                %v774 = vld [vmem:[%s300 + $0xec0] sm:%s293]
                %775 = vst [vmem:[%s301 + $0x3b0] sm:%s293] %v774
                %v776 = vld [vmem:[%s300 + $0xed0] sm:%s293]
                %777 = vst [vmem:[%s301 + $0x3b4] sm:%s293] %v776
                %v778 = vld [vmem:[%s300 + $0xee0] sm:%s293]
                %779 = vst [vmem:[%s301 + $0x3b8] sm:%s293] %v778
                %v780 = vld [vmem:[%s300 + $0xef0] sm:%s293]
                %781 = vst [vmem:[%s301 + $0x3bc] sm:%s293] %v780
                %v782 = vld [vmem:[%s300 + $0xf00] sm:%s293]
                %783 = vst [vmem:[%s301 + $0x3c0] sm:%s293] %v782
                %v784 = vld [vmem:[%s300 + $0xf10] sm:%s293]
                %785 = vst [vmem:[%s301 + $0x3c4] sm:%s293] %v784
                %v786 = vld [vmem:[%s300 + $0xf20] sm:%s293]
                %787 = vst [vmem:[%s301 + $0x3c8] sm:%s293] %v786
                %v788 = vld [vmem:[%s300 + $0xf30] sm:%s293]
                %789 = vst [vmem:[%s301 + $0x3cc] sm:%s293] %v788
                %v790 = vld [vmem:[%s300 + $0xf40] sm:%s293]
                %791 = vst [vmem:[%s301 + $0x3d0] sm:%s293] %v790
                %v792 = vld [vmem:[%s300 + $0xf50] sm:%s293]
                %793 = vst [vmem:[%s301 + $0x3d4] sm:%s293] %v792
                %v794 = vld [vmem:[%s300 + $0xf60] sm:%s293]
                %795 = vst [vmem:[%s301 + $0x3d8] sm:%s293] %v794
                %v796 = vld [vmem:[%s300 + $0xf70] sm:%s293]
                %797 = vst [vmem:[%s301 + $0x3dc] sm:%s293] %v796
                %v798 = vld [vmem:[%s300 + $0xf80] sm:%s293]
                %799 = vst [vmem:[%s301 + $0x3e0] sm:%s293] %v798
                %v800 = vld [vmem:[%s300 + $0xf90] sm:%s293]
                %801 = vst [vmem:[%s301 + $0x3e4] sm:%s293] %v800
                %v802 = vld [vmem:[%s300 + $0xfa0] sm:%s293]
                %803 = vst [vmem:[%s301 + $0x3e8] sm:%s293] %v802
                %v804 = vld [vmem:[%s300 + $0xfb0] sm:%s293]
                %805 = vst [vmem:[%s301 + $0x3ec] sm:%s293] %v804
                %v806 = vld [vmem:[%s300 + $0xfc0] sm:%s293]
                %807 = vst [vmem:[%s301 + $0x3f0] sm:%s293] %v806
                %v808 = vld [vmem:[%s300 + $0xfd0] sm:%s293]
                %809 = vst [vmem:[%s301 + $0x3f4] sm:%s293] %v808
                %v810 = vld [vmem:[%s300 + $0xfe0] sm:%s293]
                %811 = vst [vmem:[%s301 + $0x3f8] sm:%s293] %v810
                %v812 = vld [vmem:[%s300 + $0xff0] sm:%s293]
                %813 = vst [vmem:[%s301 + $0x3fc] sm:%s293] %v812
                %v814 = vld [vmem:[%s300 + $0x1000] sm:%s293]
                %815 = vst [vmem:[%s301 + $0x400] sm:%s293] %v814
                %v816 = vld [vmem:[%s300 + $0x1010] sm:%s293]
                %817 = vst [vmem:[%s301 + $0x404] sm:%s293] %v816
                %v818 = vld [vmem:[%s300 + $0x1020] sm:%s293]
                %819 = vst [vmem:[%s301 + $0x408] sm:%s293] %v818
                %v820 = vld [vmem:[%s300 + $0x1030] sm:%s293]
                %821 = vst [vmem:[%s301 + $0x40c] sm:%s293] %v820
                %v822 = vld [vmem:[%s300 + $0x1040] sm:%s293]
                %823 = vst [vmem:[%s301 + $0x410] sm:%s293] %v822
                %v824 = vld [vmem:[%s300 + $0x1050] sm:%s293]
                %825 = vst [vmem:[%s301 + $0x414] sm:%s293] %v824
                %v826 = vld [vmem:[%s300 + $0x1060] sm:%s293]
                %827 = vst [vmem:[%s301 + $0x418] sm:%s293] %v826
                %v828 = vld [vmem:[%s300 + $0x1070] sm:%s293]
                %829 = vst [vmem:[%s301 + $0x41c] sm:%s293] %v828
                %v830 = vld [vmem:[%s300 + $0x1080] sm:%s293]
                %831 = vst [vmem:[%s301 + $0x420] sm:%s293] %v830
                %v832 = vld [vmem:[%s300 + $0x1090] sm:%s293]
                %833 = vst [vmem:[%s301 + $0x424] sm:%s293] %v832
                %v834 = vld [vmem:[%s300 + $0x10a0] sm:%s293]
                %835 = vst [vmem:[%s301 + $0x428] sm:%s293] %v834
                %v836 = vld [vmem:[%s300 + $0x10b0] sm:%s293]
                %837 = vst [vmem:[%s301 + $0x42c] sm:%s293] %v836
                %v838 = vld [vmem:[%s300 + $0x10c0] sm:%s293]
                %839 = vst [vmem:[%s301 + $0x430] sm:%s293] %v838
                %v840 = vld [vmem:[%s300 + $0x10d0] sm:%s293]
                %841 = vst [vmem:[%s301 + $0x434] sm:%s293] %v840
                %v842 = vld [vmem:[%s300 + $0x10e0] sm:%s293]
                %843 = vst [vmem:[%s301 + $0x438] sm:%s293] %v842
                %v844 = vld [vmem:[%s300 + $0x10f0] sm:%s293]
                %845 = vst [vmem:[%s301 + $0x43c] sm:%s293] %v844
                %v846 = vld [vmem:[%s300 + $0x1100] sm:%s293]
                %847 = vst [vmem:[%s301 + $0x440] sm:%s293] %v846
                %v848 = vld [vmem:[%s300 + $0x1110] sm:%s293]
                %849 = vst [vmem:[%s301 + $0x444] sm:%s293] %v848
                %v850 = vld [vmem:[%s300 + $0x1120] sm:%s293]
                %851 = vst [vmem:[%s301 + $0x448] sm:%s293] %v850
                %v852 = vld [vmem:[%s300 + $0x1130] sm:%s293]
                %853 = vst [vmem:[%s301 + $0x44c] sm:%s293] %v852
                %v854 = vld [vmem:[%s300 + $0x1140] sm:%s293]
                %855 = vst [vmem:[%s301 + $0x450] sm:%s293] %v854
                %v856 = vld [vmem:[%s300 + $0x1150] sm:%s293]
                %857 = vst [vmem:[%s301 + $0x454] sm:%s293] %v856
                %v858 = vld [vmem:[%s300 + $0x1160] sm:%s293]
                %859 = vst [vmem:[%s301 + $0x458] sm:%s293] %v858
                %v860 = vld [vmem:[%s300 + $0x1170] sm:%s293]
                %861 = vst [vmem:[%s301 + $0x45c] sm:%s293] %v860
                %v862 = vld [vmem:[%s300 + $0x1180] sm:%s293]
                %863 = vst [vmem:[%s301 + $0x460] sm:%s293] %v862
                %v864 = vld [vmem:[%s300 + $0x1190] sm:%s293]
                %865 = vst [vmem:[%s301 + $0x464] sm:%s293] %v864
                %v866 = vld [vmem:[%s300 + $0x11a0] sm:%s293]
                %867 = vst [vmem:[%s301 + $0x468] sm:%s293] %v866
                %v868 = vld [vmem:[%s300 + $0x11b0] sm:%s293]
                %869 = vst [vmem:[%s301 + $0x46c] sm:%s293] %v868
                %v870 = vld [vmem:[%s300 + $0x11c0] sm:%s293]
                %871 = vst [vmem:[%s301 + $0x470] sm:%s293] %v870
                %v872 = vld [vmem:[%s300 + $0x11d0] sm:%s293]
                %873 = vst [vmem:[%s301 + $0x474] sm:%s293] %v872
                %v874 = vld [vmem:[%s300 + $0x11e0] sm:%s293]
                %875 = vst [vmem:[%s301 + $0x478] sm:%s293] %v874
                %v876 = vld [vmem:[%s300 + $0x11f0] sm:%s293]
                %877 = vst [vmem:[%s301 + $0x47c] sm:%s293] %v876
                %v878 = vld [vmem:[%s300 + $0x1200] sm:%s293]
                %879 = vst [vmem:[%s301 + $0x480] sm:%s293] %v878
                %v880 = vld [vmem:[%s300 + $0x1210] sm:%s293]
                %881 = vst [vmem:[%s301 + $0x484] sm:%s293] %v880
                %v882 = vld [vmem:[%s300 + $0x1220] sm:%s293]
                %883 = vst [vmem:[%s301 + $0x488] sm:%s293] %v882
                %v884 = vld [vmem:[%s300 + $0x1230] sm:%s293]
                %885 = vst [vmem:[%s301 + $0x48c] sm:%s293] %v884
                %v886 = vld [vmem:[%s300 + $0x1240] sm:%s293]
                %887 = vst [vmem:[%s301 + $0x490] sm:%s293] %v886
                %v888 = vld [vmem:[%s300 + $0x1250] sm:%s293]
                %889 = vst [vmem:[%s301 + $0x494] sm:%s293] %v888
                %v890 = vld [vmem:[%s300 + $0x1260] sm:%s293]
                %891 = vst [vmem:[%s301 + $0x498] sm:%s293] %v890
                %v892 = vld [vmem:[%s300 + $0x1270] sm:%s293]
                %893 = vst [vmem:[%s301 + $0x49c] sm:%s293] %v892
                %v894 = vld [vmem:[%s300 + $0x1280] sm:%s293]
                %895 = vst [vmem:[%s301 + $0x4a0] sm:%s293] %v894
                %v896 = vld [vmem:[%s300 + $0x1290] sm:%s293]
                %897 = vst [vmem:[%s301 + $0x4a4] sm:%s293] %v896
                %v898 = vld [vmem:[%s300 + $0x12a0] sm:%s293]
                %899 = vst [vmem:[%s301 + $0x4a8] sm:%s293] %v898
                %v900 = vld [vmem:[%s300 + $0x12b0] sm:%s293]
                %901 = vst [vmem:[%s301 + $0x4ac] sm:%s293] %v900
                %v902 = vld [vmem:[%s300 + $0x12c0] sm:%s293]
                %903 = vst [vmem:[%s301 + $0x4b0] sm:%s293] %v902
                %v904 = vld [vmem:[%s300 + $0x12d0] sm:%s293]
                %905 = vst [vmem:[%s301 + $0x4b4] sm:%s293] %v904
                %v906 = vld [vmem:[%s300 + $0x12e0] sm:%s293]
                %907 = vst [vmem:[%s301 + $0x4b8] sm:%s293] %v906
                %v908 = vld [vmem:[%s300 + $0x12f0] sm:%s293]
                %909 = vst [vmem:[%s301 + $0x4bc] sm:%s293] %v908
                %v910 = vld [vmem:[%s300 + $0x1300] sm:%s293]
                %911 = vst [vmem:[%s301 + $0x4c0] sm:%s293] %v910
                %v912 = vld [vmem:[%s300 + $0x1310] sm:%s293]
                %913 = vst [vmem:[%s301 + $0x4c4] sm:%s293] %v912
                %v914 = vld [vmem:[%s300 + $0x1320] sm:%s293]
                %915 = vst [vmem:[%s301 + $0x4c8] sm:%s293] %v914
                %v916 = vld [vmem:[%s300 + $0x1330] sm:%s293]
                %917 = vst [vmem:[%s301 + $0x4cc] sm:%s293] %v916
                %v918 = vld [vmem:[%s300 + $0x1340] sm:%s293]
                %919 = vst [vmem:[%s301 + $0x4d0] sm:%s293] %v918
                %v920 = vld [vmem:[%s300 + $0x1350] sm:%s293]
                %921 = vst [vmem:[%s301 + $0x4d4] sm:%s293] %v920
                %v922 = vld [vmem:[%s300 + $0x1360] sm:%s293]
                %923 = vst [vmem:[%s301 + $0x4d8] sm:%s293] %v922
                %v924 = vld [vmem:[%s300 + $0x1370] sm:%s293]
                %925 = vst [vmem:[%s301 + $0x4dc] sm:%s293] %v924
                %v926 = vld [vmem:[%s300 + $0x1380] sm:%s293]
                %927 = vst [vmem:[%s301 + $0x4e0] sm:%s293] %v926
                %v928 = vld [vmem:[%s300 + $0x1390] sm:%s293]
                %929 = vst [vmem:[%s301 + $0x4e4] sm:%s293] %v928
                %v930 = vld [vmem:[%s300 + $0x13a0] sm:%s293]
                %931 = vst [vmem:[%s301 + $0x4e8] sm:%s293] %v930
                %v932 = vld [vmem:[%s300 + $0x13b0] sm:%s293]
                %933 = vst [vmem:[%s301 + $0x4ec] sm:%s293] %v932
                %v934 = vld [vmem:[%s300 + $0x13c0] sm:%s293]
                %935 = vst [vmem:[%s301 + $0x4f0] sm:%s293] %v934
                %v936 = vld [vmem:[%s300 + $0x13d0] sm:%s293]
                %937 = vst [vmem:[%s301 + $0x4f4] sm:%s293] %v936
                %v938 = vld [vmem:[%s300 + $0x13e0] sm:%s293]
                %939 = vst [vmem:[%s301 + $0x4f8] sm:%s293] %v938
                %v940 = vld [vmem:[%s300 + $0x13f0] sm:%s293]
                %941 = vst [vmem:[%s301 + $0x4fc] sm:%s293] %v940
                %v942 = vld [vmem:[%s300 + $0x1400] sm:%s293]
                %943 = vst [vmem:[%s301 + $0x500] sm:%s293] %v942
                %v944 = vld [vmem:[%s300 + $0x1410] sm:%s293]
                %945 = vst [vmem:[%s301 + $0x504] sm:%s293] %v944
                %v946 = vld [vmem:[%s300 + $0x1420] sm:%s293]
                %947 = vst [vmem:[%s301 + $0x508] sm:%s293] %v946
                %v948 = vld [vmem:[%s300 + $0x1430] sm:%s293]
                %949 = vst [vmem:[%s301 + $0x50c] sm:%s293] %v948
              $region61: #{dueling_dqn_forward.1} parent=55 // loop_footer
                %s299 = sadd.s32 1, %s295
              $region62: #{dueling_dqn_forward.1} parent=55 // loop_footer_branch
                %294 = sbr.rel target = $region58
              $region63: #{dueling_dqn_forward.1} parent=55 // loop_exit
                _
            $region56: #{dueling_dqn_forward.1} parent=47 // pred_fallthru
              _
          $region48: #{dueling_dqn_forward.1} parent=43 // pred_fallthru
            _
          %2940 = vnop
        $region44: #{dueling_dqn_forward.1} parent=39 // pred_fallthru
          _
        // Predicated region
        $region93: #{dueling_dqn_forward.1} parent=39 // pred_check
          %p2941 = pneg %p166
        $region94: #{dueling_dqn_forward.1} parent=39 // pred_check_branch
          %2943 = sbr.rel (%p2941) target = $region96
        $region95: #{dueling_dqn_forward.1} parent=39 // pred_region
          %p2944 = scmp.lt.s32.totalorder %s15, 3
          %s2945 = scalar_select %p2944, %s15, 3
          %s2946 = scalar_lea.vmem %s6, %s2945
        $region96: #{dueling_dqn_forward.1} parent=39 // pred_fallthru
          _
        // Predicated region
        $region97: #{dueling_dqn_forward.1} parent=39 // pred_check
          %p2947 = pneg %p192
        $region98: #{dueling_dqn_forward.1} parent=39 // pred_check_branch
          %2949 = sbr.rel (%p2947) target = $region100
        $region99: #{dueling_dqn_forward.1} parent=39 // pred_region
          %s2950 = smul.u32 16, %s15
          %p2951 = scmp.lt.s32.totalorder %s2950, 63
          %s2952 = scalar_select %p2951, %s2950, 63
          %s2953 = smul.addr %s2952, 4
          %s2954 = scalar_lea.vmem %s7, %s2953
          %s2955 = smul.u32 16, %s15
        $region100: #{dueling_dqn_forward.1} parent=39 // pred_fallthru
          _
      $region40: #{dueling_dqn_forward.1} parent=5 // pred_fallthru
        _
      %p2956 = scmp.le.s32.totalorder 1, %s15
      %p2957 = scmp.lt.s32.totalorder %s15, 5
      %p2958 = pnand %p2956, %p2957
      %p2959 = pneg %p2958
      // Predicated region
      $region101: #{dueling_dqn_forward.1} parent=5 // pred_check
        _
      $region102: #{dueling_dqn_forward.1} parent=5 // pred_check_branch
        %2961 = sbr.rel (%p2958) target = $region104
      $region103: #{dueling_dqn_forward.1} parent=5 // pred_region
        %s2962 = ssub.s32 %s15, 1
        %s2963 = sand.u32 %s133, 1
        %s2964 = sand.u32 %s133, 1
        %s2965 = smul.addr %s2964, 1296
        %s2966 = scalar_lea.vmem [#allocation5], %s2965
        // Predicated region
        $region105: #{dueling_dqn_forward.1} parent=103 // pred_check
          %p2967 = pneg %p146
        $region106: #{dueling_dqn_forward.1} parent=103 // pred_check_branch
          %2969 = sbr.rel (%p2967) target = $region108
        $region107: #{dueling_dqn_forward.1} parent=103 // pred_region
          _
        $region108: #{dueling_dqn_forward.1} parent=103 // pred_fallthru
          _
        %p2970 = pneg %p36
        %p2971 = pneg %p33
        %p2972 = pneg %p57
        %p2973 = pneg %p54
        %p2974 = pneg %p78
        %p2975 = pneg %p75
        %p2976 = pneg %p99
        %p2977 = pneg %p96
        %p2978 = pneg %p120
        %p2979 = pneg %p117
        %s2980 = sand.u32 %s133, 1
        %s2981 = sand.u32 %s133, 1
        %s2982 = smul.addr %s2981, 1296
        %s2983 = scalar_lea.vmem [#allocation5], %s2982
        %p2984 = pneg %p146
        %p2985 = pneg %p143
        %p2986 = scmp.lt.s32.totalorder %s20, 3
        %s2987 = scalar_select %p2986, %s20, 3
        %s2988 = scalar_lea.vmem %s6, %s2987
        %p2989 = pneg %p172
        %p2990 = pneg %p169
        %s2991 = smul.u32 16, %s20
        %p2992 = scmp.lt.s32.totalorder %s2991, 63
        %s2993 = scalar_select %p2992, %s2991, 63
        %s2994 = smul.addr %s2993, 4
        %s2995 = scalar_lea.vmem %s7, %s2994
        %p2996 = pneg %p198
        %p2997 = pneg %p195
        %p2998 = pneg %p219
        %p2999 = pneg %p216
        %p3000 = pneg %p240
        %p3001 = pneg %p237
        %p3002 = scmp.lt.s32.totalorder %s20, 3
        %s3003 = scalar_select %p3002, %s20, 3
        %s3004 = scalar_lea.vmem %s6, %s3003
        %s3005 = smul.u32 16, %s20
        %p3006 = scmp.lt.s32.totalorder %s3005, 63
        %s3007 = scalar_select %p3006, %s3005, 63
        %s3008 = smul.addr %s3007, 4
        %s3009 = scalar_lea.vmem %s7, %s3008
        %s3010 = smul.u32 16, %s20
        %p3012 = scmp.eq.s32.totalorder %s20, 0
        // Predicated region
        $region109: #{dueling_dqn_forward.1} parent=103 // pred_check
          %p3013 = pneg %p3012
        $region110: #{dueling_dqn_forward.1} parent=103 // pred_check_branch
          %3015 = sbr.rel (%p3013) target = $region112
        $region111: #{dueling_dqn_forward.1} parent=103 // pred_region
          %v3016 = vld [vmem:[%s0] sm:$0xff]
          %v3017 = vld [vmem:[%s0 + $0x8] sm:$0xff]
          %v3018 = vld [vmem:[%s0 + $0x10] sm:$0xff]
          %v3019 = vld [vmem:[%s0 + $0x18] sm:$0xff]
          %v3020 = vld [vmem:[%s0 + $0x20] sm:$0xff]
          %v3021 = vld [vmem:[%s0 + $0x28] sm:$0xff]
          %v3022 = vld [vmem:[%s0 + $0x30] sm:$0xff]
          %v3023 = vld [vmem:[%s0 + $0x38] sm:$0xff]
          %v3024 = vld [vmem:[%s0 + $0x40] sm:$0xff]
          %v3025 = vld [vmem:[%s0 + $0x48] sm:$0xff]
          %v3026 = vld [vmem:[%s0 + $0x50] sm:$0xff]
          %v3027 = vld [vmem:[%s0 + $0x58] sm:$0xff]
          %v3028 = vld [vmem:[%s0 + $0x60] sm:$0xff]
          %v3029 = vld [vmem:[%s0 + $0x68] sm:$0xff]
          %v3030 = vld [vmem:[%s0 + $0x70] sm:$0xff]
          %v3031 = vld [vmem:[%s0 + $0x78] sm:$0xff]
          %v3032 = vld [vmem:[%s0 + $0x80] sm:$0xff]
          %v3033 = vld [vmem:[%s0 + $0x88] sm:$0xff]
          %v3034 = vld [vmem:[%s0 + $0x90] sm:$0xff]
          %v3035 = vld [vmem:[%s0 + $0x98] sm:$0xff]
          %v3036 = vld [vmem:[%s0 + $0xa0] sm:$0x11]
          %v3037 = vld [vmem:[%s1] sm:$0xff]
          %v3038 = vld [vmem:[%s1 + $0x8] sm:$0xff]
          %v3039 = vld [vmem:[%s1 + $0x10] sm:$0xff]
          %v3040 = vld [vmem:[%s1 + $0x18] sm:$0xff]
          %v3041 = vld [vmem:[%s1 + $0x20] sm:$0xff]
          %v3042 = vld [vmem:[%s1 + $0x28] sm:$0xff]
          %v3043 = vld [vmem:[%s1 + $0x30] sm:$0xff]
          %v3044 = vld [vmem:[%s1 + $0x38] sm:$0xff]
          %v3045 = vld [vmem:[%s1 + $0x40] sm:$0xff]
          %v3046 = vld [vmem:[%s1 + $0x48] sm:$0xff]
          %v3047 = vld [vmem:[%s1 + $0x50] sm:$0xff]
          %v3048 = vld [vmem:[%s1 + $0x58] sm:$0xff]
          %v3049 = vld [vmem:[%s1 + $0x60] sm:$0xff]
          %v3050 = vld [vmem:[%s1 + $0x68] sm:$0xff]
          %v3051 = vld [vmem:[%s1 + $0x70] sm:$0xff]
          %v3052 = vld [vmem:[%s1 + $0x78] sm:$0xff]
          %v3053 = vld [vmem:[%s1 + $0x80] sm:$0xff]
          %v3054 = vld [vmem:[%s1 + $0x88] sm:$0xff]
          %v3055 = vld [vmem:[%s1 + $0x90] sm:$0xff]
          %v3056 = vld [vmem:[%s1 + $0x98] sm:$0xff]
          %v3057 = vld [vmem:[%s1 + $0xa0] sm:$0xff]
          %v3058 = vld [vmem:[%s1 + $0xa8] sm:$0xff]
          %v3059 = vld [vmem:[%s1 + $0xb0] sm:$0xff]
          %v3060 = vld [vmem:[%s1 + $0xb8] sm:$0xff]
          %v3061 = vld [vmem:[%s1 + $0xc0] sm:$0xff]
          %v3062 = vld [vmem:[%s1 + $0xc8] sm:$0xff]
          %v3063 = vld [vmem:[%s1 + $0xd0] sm:$0xff]
          %v3064 = vld [vmem:[%s1 + $0xd8] sm:$0xff]
          %v3065 = vld [vmem:[%s1 + $0xe0] sm:$0xff]
          %v3066 = vld [vmem:[%s1 + $0xe8] sm:$0xff]
          %v3067 = vld [vmem:[%s1 + $0xf0] sm:$0xff]
          %v3068 = vld [vmem:[%s1 + $0xf8] sm:$0xff]
          %v3069 = vld [vmem:[%s2] sm:$0x3]
          %v3071 = vperm.slane %v3069, 0
          %v3072 = vperm.slane %v3069, 1
          %v3096 = vunpack.c.l.b16 %v3016
          %v3097 = vunpack.c.h.b16 %v3016
          %v3098 = vunpack.c.l.b16 %v3017
          %v3099 = vunpack.c.h.b16 %v3017
          %v3100 = vunpack.c.l.b16 %v3018
          %v3101 = vunpack.c.h.b16 %v3018
          %v3102 = vunpack.c.l.b16 %v3019
          %v3103 = vunpack.c.h.b16 %v3019
          %v3104 = vunpack.c.l.b16 %v3020
          %v3105 = vunpack.c.h.b16 %v3020
          %v3106 = vunpack.c.l.b16 %v3021
          %v3107 = vunpack.c.h.b16 %v3021
          %v3108 = vunpack.c.l.b16 %v3022
          %v3109 = vunpack.c.h.b16 %v3022
          %v3110 = vunpack.c.l.b16 %v3023
          %v3111 = vunpack.c.h.b16 %v3023
          %v3112 = vunpack.c.l.b16 %v3024
          %v3113 = vunpack.c.h.b16 %v3024
          %v3114 = vunpack.c.l.b16 %v3025
          %v3115 = vunpack.c.h.b16 %v3025
          %v3116 = vunpack.c.l.b16 %v3026
          %v3117 = vunpack.c.h.b16 %v3026
          %v3118 = vunpack.c.l.b16 %v3027
          %v3119 = vunpack.c.h.b16 %v3027
          %v3120 = vunpack.c.l.b16 %v3028
          %v3121 = vunpack.c.h.b16 %v3028
          %v3122 = vunpack.c.l.b16 %v3029
          %v3123 = vunpack.c.h.b16 %v3029
          %v3124 = vunpack.c.l.b16 %v3030
          %v3125 = vunpack.c.h.b16 %v3030
          %v3126 = vunpack.c.l.b16 %v3031
          %v3127 = vunpack.c.h.b16 %v3031
          %v3128 = vunpack.c.l.b16 %v3032
          %v3129 = vunpack.c.h.b16 %v3032
          %v3130 = vunpack.c.l.b16 %v3033
          %v3131 = vunpack.c.h.b16 %v3033
          %v3132 = vunpack.c.l.b16 %v3034
          %v3133 = vunpack.c.h.b16 %v3034
          %v3134 = vunpack.c.l.b16 %v3035
          %v3135 = vunpack.c.h.b16 %v3035
          %v3136 = vunpack.c.l.b16 %v3036
          %v3137 = vunpack.c.h.b16 %v3036
          %v3138 = vpack.c.b16 %v3098, %v3096
          %v3139 = vpack.c.b16 %v3099, %v3097
          %v3140 = vpack.c.b16 %v3102, %v3100
          %v3141 = vpack.c.b16 %v3103, %v3101
          %v3142 = vpack.c.b16 %v3106, %v3104
          %v3143 = vpack.c.b16 %v3107, %v3105
          %v3144 = vpack.c.b16 %v3110, %v3108
          %v3145 = vpack.c.b16 %v3111, %v3109
          %v3146 = vpack.c.b16 %v3114, %v3112
          %v3147 = vpack.c.b16 %v3115, %v3113
          %v3148 = vpack.c.b16 %v3118, %v3116
          %v3149 = vpack.c.b16 %v3119, %v3117
          %v3150 = vpack.c.b16 %v3122, %v3120
          %v3151 = vpack.c.b16 %v3123, %v3121
          %v3152 = vpack.c.b16 %v3126, %v3124
          %v3153 = vpack.c.b16 %v3127, %v3125
          %v3154 = vpack.c.b16 %v3130, %v3128
          %v3155 = vpack.c.b16 %v3131, %v3129
          %v3156 = vpack.c.b16 %v3134, %v3132
          %v3157 = vpack.c.b16 %v3135, %v3133
          %v3158 = vpack.c.b16 %v3136, %v3136
          %v3159 = vpack.c.b16 %v3137, %v3137
          %v3214 = vunpack.c.l.b16 %v3037
          %v3215 = vunpack.c.h.b16 %v3037
          %v3216 = vunpack.c.l.b16 %v3038
          %v3217 = vunpack.c.h.b16 %v3038
          %v3218 = vunpack.c.l.b16 %v3039
          %v3219 = vunpack.c.h.b16 %v3039
          %v3220 = vunpack.c.l.b16 %v3040
          %v3221 = vunpack.c.h.b16 %v3040
          %v3222 = vunpack.c.l.b16 %v3041
          %v3223 = vunpack.c.h.b16 %v3041
          %v3224 = vunpack.c.l.b16 %v3042
          %v3225 = vunpack.c.h.b16 %v3042
          %v3226 = vunpack.c.l.b16 %v3043
          %v3227 = vunpack.c.h.b16 %v3043
          %v3228 = vunpack.c.l.b16 %v3044
          %v3229 = vunpack.c.h.b16 %v3044
          %v3230 = vunpack.c.l.b16 %v3045
          %v3231 = vunpack.c.h.b16 %v3045
          %v3232 = vunpack.c.l.b16 %v3046
          %v3233 = vunpack.c.h.b16 %v3046
          %v3234 = vunpack.c.l.b16 %v3047
          %v3235 = vunpack.c.h.b16 %v3047
          %v3236 = vunpack.c.l.b16 %v3048
          %v3237 = vunpack.c.h.b16 %v3048
          %v3238 = vunpack.c.l.b16 %v3049
          %v3239 = vunpack.c.h.b16 %v3049
          %v3240 = vunpack.c.l.b16 %v3050
          %v3241 = vunpack.c.h.b16 %v3050
          %v3242 = vunpack.c.l.b16 %v3051
          %v3243 = vunpack.c.h.b16 %v3051
          %v3244 = vunpack.c.l.b16 %v3052
          %v3245 = vunpack.c.h.b16 %v3052
          %v3246 = vunpack.c.l.b16 %v3053
          %v3247 = vunpack.c.h.b16 %v3053
          %v3248 = vunpack.c.l.b16 %v3054
          %v3249 = vunpack.c.h.b16 %v3054
          %v3250 = vunpack.c.l.b16 %v3055
          %v3251 = vunpack.c.h.b16 %v3055
          %v3252 = vunpack.c.l.b16 %v3056
          %v3253 = vunpack.c.h.b16 %v3056
          %v3254 = vunpack.c.l.b16 %v3057
          %v3255 = vunpack.c.h.b16 %v3057
          %v3256 = vunpack.c.l.b16 %v3058
          %v3257 = vunpack.c.h.b16 %v3058
          %v3258 = vunpack.c.l.b16 %v3059
          %v3259 = vunpack.c.h.b16 %v3059
          %v3260 = vunpack.c.l.b16 %v3060
          %v3261 = vunpack.c.h.b16 %v3060
          %v3262 = vunpack.c.l.b16 %v3061
          %v3263 = vunpack.c.h.b16 %v3061
          %v3264 = vunpack.c.l.b16 %v3062
          %v3265 = vunpack.c.h.b16 %v3062
          %v3266 = vunpack.c.l.b16 %v3063
          %v3267 = vunpack.c.h.b16 %v3063
          %v3268 = vunpack.c.l.b16 %v3064
          %v3269 = vunpack.c.h.b16 %v3064
          %v3270 = vunpack.c.l.b16 %v3065
          %v3271 = vunpack.c.h.b16 %v3065
          %v3272 = vunpack.c.l.b16 %v3066
          %v3273 = vunpack.c.h.b16 %v3066
          %v3274 = vunpack.c.l.b16 %v3067
          %v3275 = vunpack.c.h.b16 %v3067
          %v3276 = vunpack.c.l.b16 %v3068
          %v3277 = vunpack.c.h.b16 %v3068
          %v3278 = vpack.c.b16 %v3216, %v3214
          %v3279 = vpack.c.b16 %v3217, %v3215
          %v3280 = vpack.c.b16 %v3220, %v3218
          %v3281 = vpack.c.b16 %v3221, %v3219
          %v3282 = vpack.c.b16 %v3224, %v3222
          %v3283 = vpack.c.b16 %v3225, %v3223
          %v3284 = vpack.c.b16 %v3228, %v3226
          %v3285 = vpack.c.b16 %v3229, %v3227
          %v3286 = vpack.c.b16 %v3232, %v3230
          %v3287 = vpack.c.b16 %v3233, %v3231
          %v3288 = vpack.c.b16 %v3236, %v3234
          %v3289 = vpack.c.b16 %v3237, %v3235
          %v3290 = vpack.c.b16 %v3240, %v3238
          %v3291 = vpack.c.b16 %v3241, %v3239
          %v3292 = vpack.c.b16 %v3244, %v3242
          %v3293 = vpack.c.b16 %v3245, %v3243
          %v3294 = vpack.c.b16 %v3248, %v3246
          %v3295 = vpack.c.b16 %v3249, %v3247
          %v3296 = vpack.c.b16 %v3252, %v3250
          %v3297 = vpack.c.b16 %v3253, %v3251
          %v3298 = vpack.c.b16 %v3256, %v3254
          %v3299 = vpack.c.b16 %v3257, %v3255
          %v3300 = vpack.c.b16 %v3260, %v3258
          %v3301 = vpack.c.b16 %v3261, %v3259
          %v3302 = vpack.c.b16 %v3264, %v3262
          %v3303 = vpack.c.b16 %v3265, %v3263
          %v3304 = vpack.c.b16 %v3268, %v3266
          %v3305 = vpack.c.b16 %v3269, %v3267
          %v3306 = vpack.c.b16 %v3272, %v3270
          %v3307 = vpack.c.b16 %v3273, %v3271
          %v3308 = vpack.c.b16 %v3276, %v3274
          %v3309 = vpack.c.b16 %v3277, %v3275
          %3342 = vmatpush.bf16.msra.mxu0 %v3292
          %3343 = vmatpush.bf16.msra.mxu0 %v3290
          %3344 = vmatpush.bf16.msra.mxu0 %v3288
          %3345 = vmatpush.bf16.msra.mxu0 %v3286
          %3346 = vmatpush.bf16.msra.mxu0 %v3284
          %3347 = vmatpush.bf16.msra.mxu0 %v3282
          %3348 = vmatpush.bf16.msra.mxu0 %v3280
          %3349 = vmatpush.bf16.msra.mxu0 %v3278
          %3350 = vmatmul.bf16.gmra.mxu0 %v3138
          %v3351 = vpop.f32.mrf.mxu0
          %v3352 = vadd.f32 %v3071, %v3351
          %v3353 = vpop.f32.mrf.mxu0
          %v3354 = vadd.f32 %v3071, %v3353
          %3355 = vmatmul.bf16.gmra.mxu0 %v3140
          %v3356 = vpop.f32.mrf.mxu0
          %v3357 = vadd.f32 %v3071, %v3356
          %v3358 = vpop.f32.mrf.mxu0
          %v3359 = vadd.f32 %v3071, %v3358
          %3360 = vmatmul.bf16.gmra.mxu0 %v3142
          %v3361 = vpop.f32.mrf.mxu0
          %v3362 = vadd.f32 %v3071, %v3361
          %v3363 = vpop.f32.mrf.mxu0
          %v3364 = vadd.f32 %v3071, %v3363
          %3365 = vmatmul.bf16.gmra.mxu0 %v3144
          %v3366 = vpop.f32.mrf.mxu0
          %v3367 = vadd.f32 %v3071, %v3366
          %v3368 = vpop.f32.mrf.mxu0
          %v3369 = vadd.f32 %v3071, %v3368
          %3370 = vmatmul.bf16.gmra.mxu0 %v3146
          %v3371 = vpop.f32.mrf.mxu0
          %v3372 = vadd.f32 %v3071, %v3371
          %v3373 = vpop.f32.mrf.mxu0
          %v3374 = vadd.f32 %v3071, %v3373
          %3375 = vmatmul.bf16.gmra.mxu0 %v3148
          %v3376 = vpop.f32.mrf.mxu0
          %v3377 = vadd.f32 %v3071, %v3376
          %v3378 = vpop.f32.mrf.mxu0
          %v3379 = vadd.f32 %v3071, %v3378
          %3380 = vmatmul.bf16.gmra.mxu0 %v3150
          %v3381 = vpop.f32.mrf.mxu0
          %v3382 = vadd.f32 %v3071, %v3381
          %v3383 = vpop.f32.mrf.mxu0
          %v3384 = vadd.f32 %v3071, %v3383
          %3385 = vmatmul.bf16.gmra.mxu0 %v3152
          %v3386 = vpop.f32.mrf.mxu0
          %v3387 = vadd.f32 %v3071, %v3386
          %v3388 = vpop.f32.mrf.mxu0
          %v3389 = vadd.f32 %v3071, %v3388
          %3390 = vmatmul.bf16.gmra.mxu0 %v3154
          %v3391 = vpop.f32.mrf.mxu0
          %v3392 = vadd.f32 %v3071, %v3391
          %v3393 = vpop.f32.mrf.mxu0
          %v3394 = vadd.f32 %v3071, %v3393
          %3395 = vmatmul.bf16.gmra.mxu0 %v3156
          %v3396 = vpop.f32.mrf.mxu0
          %v3397 = vadd.f32 %v3071, %v3396
          %v3398 = vpop.f32.mrf.mxu0
          %v3399 = vadd.f32 %v3071, %v3398
          %3400 = vmatmul.bf16.gmra.mxu0 %v3158
          %v3401 = vpop.f32.mrf.mxu0
          %v3402 = vadd.f32 %v3071, %v3401
          %v3403 = vpop.f32.mrf.mxu0
          %3404 = vdwg.mxu0
          %3405 = vmatpush.bf16.msra.mxu0 %v3308
          %3406 = vmatpush.bf16.msra.mxu0 %v3306
          %3407 = vmatpush.bf16.msra.mxu0 %v3304
          %3408 = vmatpush.bf16.msra.mxu0 %v3302
          %3409 = vmatpush.bf16.msra.mxu0 %v3300
          %3410 = vmatpush.bf16.msra.mxu0 %v3298
          %3411 = vmatpush.bf16.msra.mxu0 %v3296
          %3412 = vmatpush.bf16.msra.mxu0 %v3294
          %3413 = vmatmul.bf16.gmra.mxu0 %v3139
          %v3414 = vpop.f32.mrf.mxu0
          %v3415 = vadd.f32 %v3352, %v3414
          %v3416 = vpop.f32.mrf.mxu0
          %v3417 = vadd.f32 %v3354, %v3416
          %3418 = vmatmul.bf16.gmra.mxu0 %v3141
          %v3419 = vpop.f32.mrf.mxu0
          %v3420 = vadd.f32 %v3357, %v3419
          %v3421 = vpop.f32.mrf.mxu0
          %v3422 = vadd.f32 %v3359, %v3421
          %3423 = vmatmul.bf16.gmra.mxu0 %v3143
          %v3424 = vpop.f32.mrf.mxu0
          %v3425 = vadd.f32 %v3362, %v3424
          %v3426 = vpop.f32.mrf.mxu0
          %v3427 = vadd.f32 %v3364, %v3426
          %3428 = vmatmul.bf16.gmra.mxu0 %v3145
          %v3429 = vpop.f32.mrf.mxu0
          %v3430 = vadd.f32 %v3367, %v3429
          %v3431 = vpop.f32.mrf.mxu0
          %v3432 = vadd.f32 %v3369, %v3431
          %3433 = vmatmul.bf16.gmra.mxu0 %v3147
          %v3434 = vpop.f32.mrf.mxu0
          %v3435 = vadd.f32 %v3372, %v3434
          %v3436 = vpop.f32.mrf.mxu0
          %v3437 = vadd.f32 %v3374, %v3436
          %3438 = vmatmul.bf16.gmra.mxu0 %v3149
          %v3439 = vpop.f32.mrf.mxu0
          %v3440 = vadd.f32 %v3377, %v3439
          %v3441 = vpop.f32.mrf.mxu0
          %v3442 = vadd.f32 %v3379, %v3441
          %3443 = vmatmul.bf16.gmra.mxu0 %v3151
          %v3444 = vpop.f32.mrf.mxu0
          %v3445 = vadd.f32 %v3382, %v3444
          %v3446 = vpop.f32.mrf.mxu0
          %v3447 = vadd.f32 %v3384, %v3446
          %3448 = vmatmul.bf16.gmra.mxu0 %v3153
          %v3449 = vpop.f32.mrf.mxu0
          %v3450 = vadd.f32 %v3387, %v3449
          %v3451 = vpop.f32.mrf.mxu0
          %v3452 = vadd.f32 %v3389, %v3451
          %3453 = vmatmul.bf16.gmra.mxu0 %v3155
          %v3454 = vpop.f32.mrf.mxu0
          %v3455 = vadd.f32 %v3392, %v3454
          %v3456 = vpop.f32.mrf.mxu0
          %v3457 = vadd.f32 %v3394, %v3456
          %3458 = vmatmul.bf16.gmra.mxu0 %v3157
          %v3459 = vpop.f32.mrf.mxu0
          %v3460 = vadd.f32 %v3397, %v3459
          %v3461 = vpop.f32.mrf.mxu0
          %v3462 = vadd.f32 %v3399, %v3461
          %3463 = vmatmul.bf16.gmra.mxu0 %v3159
          %v3464 = vpop.f32.mrf.mxu0
          %v3465 = vadd.f32 %v3402, %v3464
          %v3466 = vpop.f32.mrf.mxu0
          %3467 = vdwg.mxu0
          %3468 = vmatpush.bf16.msra.mxu0 %v3293
          %3469 = vmatpush.bf16.msra.mxu0 %v3291
          %3470 = vmatpush.bf16.msra.mxu0 %v3289
          %3471 = vmatpush.bf16.msra.mxu0 %v3287
          %3472 = vmatpush.bf16.msra.mxu0 %v3285
          %3473 = vmatpush.bf16.msra.mxu0 %v3283
          %3474 = vmatpush.bf16.msra.mxu0 %v3281
          %3475 = vmatpush.bf16.msra.mxu0 %v3279
          %3476 = vmatmul.bf16.gmra.mxu0 %v3138
          %v3477 = vpop.f32.mrf.mxu0
          %v3478 = vadd.f32 %v3072, %v3477
          %v3479 = vpop.f32.mrf.mxu0
          %v3480 = vadd.f32 %v3072, %v3479
          %3481 = vmatmul.bf16.gmra.mxu0 %v3140
          %v3482 = vpop.f32.mrf.mxu0
          %v3483 = vadd.f32 %v3072, %v3482
          %v3484 = vpop.f32.mrf.mxu0
          %v3485 = vadd.f32 %v3072, %v3484
          %3486 = vmatmul.bf16.gmra.mxu0 %v3142
          %v3487 = vpop.f32.mrf.mxu0
          %v3488 = vadd.f32 %v3072, %v3487
          %v3489 = vpop.f32.mrf.mxu0
          %v3490 = vadd.f32 %v3072, %v3489
          %3491 = vmatmul.bf16.gmra.mxu0 %v3144
          %v3492 = vpop.f32.mrf.mxu0
          %v3493 = vadd.f32 %v3072, %v3492
          %v3494 = vpop.f32.mrf.mxu0
          %v3495 = vadd.f32 %v3072, %v3494
          %3496 = vmatmul.bf16.gmra.mxu0 %v3146
          %v3497 = vpop.f32.mrf.mxu0
          %v3498 = vadd.f32 %v3072, %v3497
          %v3499 = vpop.f32.mrf.mxu0
          %v3500 = vadd.f32 %v3072, %v3499
          %3501 = vmatmul.bf16.gmra.mxu0 %v3148
          %v3502 = vpop.f32.mrf.mxu0
          %v3503 = vadd.f32 %v3072, %v3502
          %v3504 = vpop.f32.mrf.mxu0
          %v3505 = vadd.f32 %v3072, %v3504
          %3506 = vmatmul.bf16.gmra.mxu0 %v3150
          %v3507 = vpop.f32.mrf.mxu0
          %v3508 = vadd.f32 %v3072, %v3507
          %v3509 = vpop.f32.mrf.mxu0
          %v3510 = vadd.f32 %v3072, %v3509
          %3511 = vmatmul.bf16.gmra.mxu0 %v3152
          %v3512 = vpop.f32.mrf.mxu0
          %v3513 = vadd.f32 %v3072, %v3512
          %v3514 = vpop.f32.mrf.mxu0
          %v3515 = vadd.f32 %v3072, %v3514
          %3516 = vmatmul.bf16.gmra.mxu0 %v3154
          %v3517 = vpop.f32.mrf.mxu0
          %v3518 = vadd.f32 %v3072, %v3517
          %v3519 = vpop.f32.mrf.mxu0
          %v3520 = vadd.f32 %v3072, %v3519
          %3521 = vmatmul.bf16.gmra.mxu0 %v3156
          %v3522 = vpop.f32.mrf.mxu0
          %v3523 = vadd.f32 %v3072, %v3522
          %v3524 = vpop.f32.mrf.mxu0
          %v3525 = vadd.f32 %v3072, %v3524
          %3526 = vmatmul.bf16.gmra.mxu0 %v3158
          %v3527 = vpop.f32.mrf.mxu0
          %v3528 = vadd.f32 %v3072, %v3527
          %v3529 = vpop.f32.mrf.mxu0
          %3530 = vdwg.mxu0
          %3531 = vmatpush.bf16.msra.mxu0 %v3309
          %3532 = vmatpush.bf16.msra.mxu0 %v3307
          %3533 = vmatpush.bf16.msra.mxu0 %v3305
          %3534 = vmatpush.bf16.msra.mxu0 %v3303
          %3535 = vmatpush.bf16.msra.mxu0 %v3301
          %3536 = vmatpush.bf16.msra.mxu0 %v3299
          %3537 = vmatpush.bf16.msra.mxu0 %v3297
          %3538 = vmatpush.bf16.msra.mxu0 %v3295
          %3539 = vmatmul.bf16.gmra.mxu0 %v3139
          %v3540 = vpop.f32.mrf.mxu0
          %v3541 = vadd.f32 %v3478, %v3540
          %v3542 = vpop.f32.mrf.mxu0
          %v3543 = vadd.f32 %v3480, %v3542
          %3544 = vmatmul.bf16.gmra.mxu0 %v3141
          %v3545 = vpop.f32.mrf.mxu0
          %v3546 = vadd.f32 %v3483, %v3545
          %v3547 = vpop.f32.mrf.mxu0
          %v3548 = vadd.f32 %v3485, %v3547
          %3549 = vmatmul.bf16.gmra.mxu0 %v3143
          %v3550 = vpop.f32.mrf.mxu0
          %v3551 = vadd.f32 %v3488, %v3550
          %v3552 = vpop.f32.mrf.mxu0
          %v3553 = vadd.f32 %v3490, %v3552
          %3554 = vmatmul.bf16.gmra.mxu0 %v3145
          %v3555 = vpop.f32.mrf.mxu0
          %v3556 = vadd.f32 %v3493, %v3555
          %v3557 = vpop.f32.mrf.mxu0
          %v3558 = vadd.f32 %v3495, %v3557
          %3559 = vmatmul.bf16.gmra.mxu0 %v3147
          %v3560 = vpop.f32.mrf.mxu0
          %v3561 = vadd.f32 %v3498, %v3560
          %v3562 = vpop.f32.mrf.mxu0
          %v3563 = vadd.f32 %v3500, %v3562
          %3564 = vmatmul.bf16.gmra.mxu0 %v3149
          %v3565 = vpop.f32.mrf.mxu0
          %v3566 = vadd.f32 %v3503, %v3565
          %v3567 = vpop.f32.mrf.mxu0
          %v3568 = vadd.f32 %v3505, %v3567
          %3569 = vmatmul.bf16.gmra.mxu0 %v3151
          %v3570 = vpop.f32.mrf.mxu0
          %v3571 = vadd.f32 %v3508, %v3570
          %v3572 = vpop.f32.mrf.mxu0
          %v3573 = vadd.f32 %v3510, %v3572
          %3574 = vmatmul.bf16.gmra.mxu0 %v3153
          %v3575 = vpop.f32.mrf.mxu0
          %v3576 = vadd.f32 %v3513, %v3575
          %v3577 = vpop.f32.mrf.mxu0
          %v3578 = vadd.f32 %v3515, %v3577
          %3579 = vmatmul.bf16.gmra.mxu0 %v3155
          %v3580 = vpop.f32.mrf.mxu0
          %v3581 = vadd.f32 %v3518, %v3580
          %v3582 = vpop.f32.mrf.mxu0
          %v3583 = vadd.f32 %v3520, %v3582
          %3584 = vmatmul.bf16.gmra.mxu0 %v3157
          %v3585 = vpop.f32.mrf.mxu0
          %v3586 = vadd.f32 %v3523, %v3585
          %v3587 = vpop.f32.mrf.mxu0
          %v3588 = vadd.f32 %v3525, %v3587
          %3589 = vmatmul.bf16.gmra.mxu0 %v3159
          %v3590 = vpop.f32.mrf.mxu0
          %v3591 = vadd.f32 %v3528, %v3590
          %v3592 = vpop.f32.mrf.mxu0
          %3593 = vdwg.mxu0
          %v3594 = vmax.f32 %v3415, 0.0
          %v3595 = vmax.f32 %v3541, 0.0
          %v3596 = vmax.f32 %v3417, 0.0
          %v3597 = vmax.f32 %v3543, 0.0
          %v3598 = vmax.f32 %v3420, 0.0
          %v3599 = vmax.f32 %v3546, 0.0
          %v3600 = vmax.f32 %v3422, 0.0
          %v3601 = vmax.f32 %v3548, 0.0
          %v3602 = vmax.f32 %v3425, 0.0
          %v3603 = vmax.f32 %v3551, 0.0
          %v3604 = vmax.f32 %v3427, 0.0
          %v3605 = vmax.f32 %v3553, 0.0
          %v3606 = vmax.f32 %v3430, 0.0
          %v3607 = vmax.f32 %v3556, 0.0
          %v3608 = vmax.f32 %v3432, 0.0
          %v3609 = vmax.f32 %v3558, 0.0
          %v3610 = vmax.f32 %v3435, 0.0
          %v3611 = vmax.f32 %v3561, 0.0
          %v3612 = vmax.f32 %v3437, 0.0
          %v3613 = vmax.f32 %v3563, 0.0
          %v3614 = vmax.f32 %v3440, 0.0
          %v3615 = vmax.f32 %v3566, 0.0
          %v3616 = vmax.f32 %v3442, 0.0
          %v3617 = vmax.f32 %v3568, 0.0
          %v3618 = vmax.f32 %v3445, 0.0
          %v3619 = vmax.f32 %v3571, 0.0
          %v3620 = vmax.f32 %v3447, 0.0
          %v3621 = vmax.f32 %v3573, 0.0
          %v3622 = vmax.f32 %v3450, 0.0
          %v3623 = vmax.f32 %v3576, 0.0
          %v3624 = vmax.f32 %v3452, 0.0
          %v3625 = vmax.f32 %v3578, 0.0
          %v3626 = vmax.f32 %v3455, 0.0
          %v3627 = vmax.f32 %v3581, 0.0
          %v3628 = vmax.f32 %v3457, 0.0
          %v3629 = vmax.f32 %v3583, 0.0
          %v3630 = vmax.f32 %v3460, 0.0
          %v3631 = vmax.f32 %v3586, 0.0
          %v3632 = vmax.f32 %v3462, 0.0
          %v3633 = vmax.f32 %v3588, 0.0
          %v3634 = vmax.f32 %v3465, 0.0
          %v3635 = vmax.f32 %v3591, 0.0
          %v3636 = vpack.c.bf16 %v3595, %v3594
          %v3637 = vpack.c.bf16 %v3597, %v3596
          %v3638 = vpack.c.bf16 %v3599, %v3598
          %v3639 = vpack.c.bf16 %v3601, %v3600
          %v3640 = vpack.c.bf16 %v3603, %v3602
          %v3641 = vpack.c.bf16 %v3605, %v3604
          %v3642 = vpack.c.bf16 %v3607, %v3606
          %v3643 = vpack.c.bf16 %v3609, %v3608
          %v3644 = vpack.c.bf16 %v3611, %v3610
          %v3645 = vpack.c.bf16 %v3613, %v3612
          %v3646 = vpack.c.bf16 %v3615, %v3614
          %v3647 = vpack.c.bf16 %v3617, %v3616
          %v3648 = vpack.c.bf16 %v3619, %v3618
          %v3649 = vpack.c.bf16 %v3621, %v3620
          %v3650 = vpack.c.bf16 %v3623, %v3622
          %v3651 = vpack.c.bf16 %v3625, %v3624
          %v3652 = vpack.c.bf16 %v3627, %v3626
          %v3653 = vpack.c.bf16 %v3629, %v3628
          %v3654 = vpack.c.bf16 %v3631, %v3630
          %v3655 = vpack.c.bf16 %v3633, %v3632
          %v3656 = vpack.c.bf16 %v3635, %v3634
          %3657 = vst [vmem:[#allocation2] sm:$0xff] %v3636
          %3658 = vst [vmem:[#allocation2 + $0x8] sm:$0xff] %v3637
          %3659 = vst [vmem:[#allocation2 + $0x10] sm:$0xff] %v3638
          %3660 = vst [vmem:[#allocation2 + $0x18] sm:$0xff] %v3639
          %3661 = vst [vmem:[#allocation2 + $0x20] sm:$0xff] %v3640
          %3662 = vst [vmem:[#allocation2 + $0x28] sm:$0xff] %v3641
          %3663 = vst [vmem:[#allocation2 + $0x30] sm:$0xff] %v3642
          %3664 = vst [vmem:[#allocation2 + $0x38] sm:$0xff] %v3643
          %3665 = vst [vmem:[#allocation2 + $0x40] sm:$0xff] %v3644
          %3666 = vst [vmem:[#allocation2 + $0x48] sm:$0xff] %v3645
          %3667 = vst [vmem:[#allocation2 + $0x50] sm:$0xff] %v3646
          %3668 = vst [vmem:[#allocation2 + $0x58] sm:$0xff] %v3647
          %3669 = vst [vmem:[#allocation2 + $0x60] sm:$0xff] %v3648
          %3670 = vst [vmem:[#allocation2 + $0x68] sm:$0xff] %v3649
          %3671 = vst [vmem:[#allocation2 + $0x70] sm:$0xff] %v3650
          %3672 = vst [vmem:[#allocation2 + $0x78] sm:$0xff] %v3651
          %3673 = vst [vmem:[#allocation2 + $0x80] sm:$0xff] %v3652
          %3674 = vst [vmem:[#allocation2 + $0x88] sm:$0xff] %v3653
          %3675 = vst [vmem:[#allocation2 + $0x90] sm:$0xff] %v3654
          %3676 = vst [vmem:[#allocation2 + $0x98] sm:$0xff] %v3655
          %3677 = vst [vmem:[#allocation2 + $0xa0] sm:$0x11] %v3656
          %v3678 = vld [vmem:[#allocation2] sm:$0xff]
          %v3679 = vld [vmem:[#allocation2 + $0x8] sm:$0xff]
          %v3680 = vld [vmem:[#allocation2 + $0x10] sm:$0xff]
          %v3681 = vld [vmem:[#allocation2 + $0x18] sm:$0xff]
          %v3682 = vld [vmem:[#allocation2 + $0x20] sm:$0xff]
          %v3683 = vld [vmem:[#allocation2 + $0x28] sm:$0xff]
          %v3684 = vld [vmem:[#allocation2 + $0x30] sm:$0xff]
          %v3685 = vld [vmem:[#allocation2 + $0x38] sm:$0xff]
          %v3686 = vld [vmem:[#allocation2 + $0x40] sm:$0xff]
          %v3687 = vld [vmem:[#allocation2 + $0x48] sm:$0xff]
          %v3688 = vld [vmem:[#allocation2 + $0x50] sm:$0xff]
          %v3689 = vld [vmem:[#allocation2 + $0x58] sm:$0xff]
          %v3690 = vld [vmem:[#allocation2 + $0x60] sm:$0xff]
          %v3691 = vld [vmem:[#allocation2 + $0x68] sm:$0xff]
          %v3692 = vld [vmem:[#allocation2 + $0x70] sm:$0xff]
          %v3693 = vld [vmem:[#allocation2 + $0x78] sm:$0xff]
          %v3694 = vld [vmem:[#allocation2 + $0x80] sm:$0xff]
          %v3695 = vld [vmem:[#allocation2 + $0x88] sm:$0xff]
          %v3696 = vld [vmem:[#allocation2 + $0x90] sm:$0xff]
          %v3697 = vld [vmem:[#allocation2 + $0x98] sm:$0xff]
          %v3698 = vld [vmem:[#allocation2 + $0xa0] sm:$0x11]
          %v3699 = vld [vmem:[%s3] sm:$0xf]
          %v3700 = vld [vmem:[%s3 + $0x4] sm:$0xf]
          %v3701 = vld [vmem:[%s3 + $0x8] sm:$0xf]
          %v3702 = vld [vmem:[%s3 + $0xc] sm:$0xf]
          %v3703 = vld [vmem:[%s3 + $0x10] sm:$0xf]
          %v3704 = vld [vmem:[%s3 + $0x14] sm:$0xf]
          %v3705 = vld [vmem:[%s3 + $0x18] sm:$0xf]
          %v3706 = vld [vmem:[%s3 + $0x1c] sm:$0xf]
          %v3707 = vld [vmem:[%s3 + $0x20] sm:$0xf]
          %v3708 = vld [vmem:[%s3 + $0x24] sm:$0xf]
          %v3709 = vld [vmem:[%s3 + $0x28] sm:$0xf]
          %v3710 = vld [vmem:[%s3 + $0x2c] sm:$0xf]
          %v3711 = vld [vmem:[%s3 + $0x30] sm:$0xf]
          %v3712 = vld [vmem:[%s3 + $0x34] sm:$0xf]
          %v3713 = vld [vmem:[%s3 + $0x38] sm:$0xf]
          %v3714 = vld [vmem:[%s3 + $0x3c] sm:$0xf]
          %v3715 = vld [vmem:[%s3 + $0x40] sm:$0xf]
          %v3716 = vld [vmem:[%s3 + $0x44] sm:$0xf]
          %v3717 = vld [vmem:[%s3 + $0x48] sm:$0xf]
          %v3718 = vld [vmem:[%s3 + $0x4c] sm:$0xf]
          %v3719 = vld [vmem:[%s3 + $0x50] sm:$0xf]
          %v3720 = vld [vmem:[%s3 + $0x54] sm:$0xf]
          %v3721 = vld [vmem:[%s3 + $0x58] sm:$0xf]
          %v3722 = vld [vmem:[%s3 + $0x5c] sm:$0xf]
          %v3723 = vld [vmem:[%s3 + $0x60] sm:$0xf]
          %v3724 = vld [vmem:[%s3 + $0x64] sm:$0xf]
          %v3725 = vld [vmem:[%s3 + $0x68] sm:$0xf]
          %v3726 = vld [vmem:[%s3 + $0x6c] sm:$0xf]
          %v3727 = vld [vmem:[%s3 + $0x70] sm:$0xf]
          %v3728 = vld [vmem:[%s3 + $0x74] sm:$0xf]
          %v3729 = vld [vmem:[%s3 + $0x78] sm:$0xf]
          %v3730 = vld [vmem:[%s3 + $0x7c] sm:$0xf]
          %v3731 = vld [vmem:[%s4] sm:$0x1]
          %v3733 = vperm.slane %v3731, 0
          %v3756 = vunpack.c.l.b16 %v3678
          %v3757 = vunpack.c.h.b16 %v3678
          %v3758 = vunpack.c.l.b16 %v3679
          %v3759 = vunpack.c.h.b16 %v3679
          %v3760 = vunpack.c.l.b16 %v3680
          %v3761 = vunpack.c.h.b16 %v3680
          %v3762 = vunpack.c.l.b16 %v3681
          %v3763 = vunpack.c.h.b16 %v3681
          %v3764 = vunpack.c.l.b16 %v3682
          %v3765 = vunpack.c.h.b16 %v3682
          %v3766 = vunpack.c.l.b16 %v3683
          %v3767 = vunpack.c.h.b16 %v3683
          %v3768 = vunpack.c.l.b16 %v3684
          %v3769 = vunpack.c.h.b16 %v3684
          %v3770 = vunpack.c.l.b16 %v3685
          %v3771 = vunpack.c.h.b16 %v3685
          %v3772 = vunpack.c.l.b16 %v3686
          %v3773 = vunpack.c.h.b16 %v3686
          %v3774 = vunpack.c.l.b16 %v3687
          %v3775 = vunpack.c.h.b16 %v3687
          %v3776 = vunpack.c.l.b16 %v3688
          %v3777 = vunpack.c.h.b16 %v3688
          %v3778 = vunpack.c.l.b16 %v3689
          %v3779 = vunpack.c.h.b16 %v3689
          %v3780 = vunpack.c.l.b16 %v3690
          %v3781 = vunpack.c.h.b16 %v3690
          %v3782 = vunpack.c.l.b16 %v3691
          %v3783 = vunpack.c.h.b16 %v3691
          %v3784 = vunpack.c.l.b16 %v3692
          %v3785 = vunpack.c.h.b16 %v3692
          %v3786 = vunpack.c.l.b16 %v3693
          %v3787 = vunpack.c.h.b16 %v3693
          %v3788 = vunpack.c.l.b16 %v3694
          %v3789 = vunpack.c.h.b16 %v3694
          %v3790 = vunpack.c.l.b16 %v3695
          %v3791 = vunpack.c.h.b16 %v3695
          %v3792 = vunpack.c.l.b16 %v3696
          %v3793 = vunpack.c.h.b16 %v3696
          %v3794 = vunpack.c.l.b16 %v3697
          %v3795 = vunpack.c.h.b16 %v3697
          %v3796 = vunpack.c.l.b16 %v3698
          %v3797 = vunpack.c.h.b16 %v3698
          %v3798 = vpack.c.b16 %v3758, %v3756
          %v3799 = vpack.c.b16 %v3759, %v3757
          %v3800 = vpack.c.b16 %v3762, %v3760
          %v3801 = vpack.c.b16 %v3763, %v3761
          %v3802 = vpack.c.b16 %v3766, %v3764
          %v3803 = vpack.c.b16 %v3767, %v3765
          %v3804 = vpack.c.b16 %v3770, %v3768
          %v3805 = vpack.c.b16 %v3771, %v3769
          %v3806 = vpack.c.b16 %v3774, %v3772
          %v3807 = vpack.c.b16 %v3775, %v3773
          %v3808 = vpack.c.b16 %v3778, %v3776
          %v3809 = vpack.c.b16 %v3779, %v3777
          %v3810 = vpack.c.b16 %v3782, %v3780
          %v3811 = vpack.c.b16 %v3783, %v3781
          %v3812 = vpack.c.b16 %v3786, %v3784
          %v3813 = vpack.c.b16 %v3787, %v3785
          %v3814 = vpack.c.b16 %v3790, %v3788
          %v3815 = vpack.c.b16 %v3791, %v3789
          %v3816 = vpack.c.b16 %v3794, %v3792
          %v3817 = vpack.c.b16 %v3795, %v3793
          %v3818 = vpack.c.b16 %v3796, %v3796
          %v3819 = vpack.c.b16 %v3797, %v3797
          %v3874 = vunpack.c.l.b16 %v3699
          %v3875 = vunpack.c.l.b16 %v3700
          %v3876 = vunpack.c.l.b16 %v3701
          %v3877 = vunpack.c.l.b16 %v3702
          %v3878 = vunpack.c.l.b16 %v3703
          %v3879 = vunpack.c.l.b16 %v3704
          %v3880 = vunpack.c.l.b16 %v3705
          %v3881 = vunpack.c.l.b16 %v3706
          %v3882 = vunpack.c.l.b16 %v3707
          %v3883 = vunpack.c.l.b16 %v3708
          %v3884 = vunpack.c.l.b16 %v3709
          %v3885 = vunpack.c.l.b16 %v3710
          %v3886 = vunpack.c.l.b16 %v3711
          %v3887 = vunpack.c.l.b16 %v3712
          %v3888 = vunpack.c.l.b16 %v3713
          %v3889 = vunpack.c.l.b16 %v3714
          %v3890 = vunpack.c.l.b16 %v3715
          %v3891 = vunpack.c.l.b16 %v3716
          %v3892 = vunpack.c.l.b16 %v3717
          %v3893 = vunpack.c.l.b16 %v3718
          %v3894 = vunpack.c.l.b16 %v3719
          %v3895 = vunpack.c.l.b16 %v3720
          %v3896 = vunpack.c.l.b16 %v3721
          %v3897 = vunpack.c.l.b16 %v3722
          %v3898 = vunpack.c.l.b16 %v3723
          %v3899 = vunpack.c.l.b16 %v3724
          %v3900 = vunpack.c.l.b16 %v3725
          %v3901 = vunpack.c.l.b16 %v3726
          %v3902 = vunpack.c.l.b16 %v3727
          %v3903 = vunpack.c.l.b16 %v3728
          %v3904 = vunpack.c.l.b16 %v3729
          %v3905 = vunpack.c.l.b16 %v3730
          %v3906 = vpack.c.b16 %v3875, %v3874
          %v3907 = vpack.c.b16 %v3877, %v3876
          %v3908 = vpack.c.b16 %v3879, %v3878
          %v3909 = vpack.c.b16 %v3881, %v3880
          %v3910 = vpack.c.b16 %v3883, %v3882
          %v3911 = vpack.c.b16 %v3885, %v3884
          %v3912 = vpack.c.b16 %v3887, %v3886
          %v3913 = vpack.c.b16 %v3889, %v3888
          %v3914 = vpack.c.b16 %v3891, %v3890
          %v3915 = vpack.c.b16 %v3893, %v3892
          %v3916 = vpack.c.b16 %v3895, %v3894
          %v3917 = vpack.c.b16 %v3897, %v3896
          %v3918 = vpack.c.b16 %v3899, %v3898
          %v3919 = vpack.c.b16 %v3901, %v3900
          %v3920 = vpack.c.b16 %v3903, %v3902
          %v3921 = vpack.c.b16 %v3905, %v3904
          %3938 = vmatpush.bf16.msra.mxu0 %v3913
          %3939 = vmatpush.bf16.msra.mxu0 %v3912
          %3940 = vmatpush.bf16.msra.mxu0 %v3911
          %3941 = vmatpush.bf16.msra.mxu0 %v3910
          %3942 = vmatpush.bf16.msra.mxu0 %v3909
          %3943 = vmatpush.bf16.msra.mxu0 %v3908
          %3944 = vmatpush.bf16.msra.mxu0 %v3907
          %3945 = vmatpush.bf16.msra.mxu0 %v3906
          %3946 = vmatmul.bf16.gmra.mxu0 %v3798
          %v3947 = vpop.f32.mrf.mxu0
          %v3948 = vadd.f32 %v3733, %v3947
          %v3949 = vpop.f32.mrf.mxu0
          %v3950 = vadd.f32 %v3733, %v3949
          %3951 = vmatmul.bf16.gmra.mxu0 %v3800
          %v3952 = vpop.f32.mrf.mxu0
          %v3953 = vadd.f32 %v3733, %v3952
          %v3954 = vpop.f32.mrf.mxu0
          %v3955 = vadd.f32 %v3733, %v3954
          %3956 = vmatmul.bf16.gmra.mxu0 %v3802
          %v3957 = vpop.f32.mrf.mxu0
          %v3958 = vadd.f32 %v3733, %v3957
          %v3959 = vpop.f32.mrf.mxu0
          %v3960 = vadd.f32 %v3733, %v3959
          %3961 = vmatmul.bf16.gmra.mxu0 %v3804
          %v3962 = vpop.f32.mrf.mxu0
          %v3963 = vadd.f32 %v3733, %v3962
          %v3964 = vpop.f32.mrf.mxu0
          %v3965 = vadd.f32 %v3733, %v3964
          %3966 = vmatmul.bf16.gmra.mxu0 %v3806
          %v3967 = vpop.f32.mrf.mxu0
          %v3968 = vadd.f32 %v3733, %v3967
          %v3969 = vpop.f32.mrf.mxu0
          %v3970 = vadd.f32 %v3733, %v3969
          %3971 = vmatmul.bf16.gmra.mxu0 %v3808
          %v3972 = vpop.f32.mrf.mxu0
          %v3973 = vadd.f32 %v3733, %v3972
          %v3974 = vpop.f32.mrf.mxu0
          %v3975 = vadd.f32 %v3733, %v3974
          %3976 = vmatmul.bf16.gmra.mxu0 %v3810
          %v3977 = vpop.f32.mrf.mxu0
          %v3978 = vadd.f32 %v3733, %v3977
          %v3979 = vpop.f32.mrf.mxu0
          %v3980 = vadd.f32 %v3733, %v3979
          %3981 = vmatmul.bf16.gmra.mxu0 %v3812
          %v3982 = vpop.f32.mrf.mxu0
          %v3983 = vadd.f32 %v3733, %v3982
          %v3984 = vpop.f32.mrf.mxu0
          %v3985 = vadd.f32 %v3733, %v3984
          %3986 = vmatmul.bf16.gmra.mxu0 %v3814
          %v3987 = vpop.f32.mrf.mxu0
          %v3988 = vadd.f32 %v3733, %v3987
          %v3989 = vpop.f32.mrf.mxu0
          %v3990 = vadd.f32 %v3733, %v3989
          %3991 = vmatmul.bf16.gmra.mxu0 %v3816
          %v3992 = vpop.f32.mrf.mxu0
          %v3993 = vadd.f32 %v3733, %v3992
          %v3994 = vpop.f32.mrf.mxu0
          %v3995 = vadd.f32 %v3733, %v3994
          %3996 = vmatmul.bf16.gmra.mxu0 %v3818
          %v3997 = vpop.f32.mrf.mxu0
          %v3998 = vadd.f32 %v3733, %v3997
          %v3999 = vpop.f32.mrf.mxu0
          %4000 = vdwg.mxu0
          %4001 = vmatpush.bf16.msra.mxu0 %v3921
          %4002 = vmatpush.bf16.msra.mxu0 %v3920
          %4003 = vmatpush.bf16.msra.mxu0 %v3919
          %4004 = vmatpush.bf16.msra.mxu0 %v3918
          %4005 = vmatpush.bf16.msra.mxu0 %v3917
          %4006 = vmatpush.bf16.msra.mxu0 %v3916
          %4007 = vmatpush.bf16.msra.mxu0 %v3915
          %4008 = vmatpush.bf16.msra.mxu0 %v3914
          %4009 = vmatmul.bf16.gmra.mxu0 %v3799
          %v4010 = vpop.f32.mrf.mxu0
          %v4011 = vadd.f32 %v3948, %v4010
          %v4012 = vpop.f32.mrf.mxu0
          %v4013 = vadd.f32 %v3950, %v4012
          %4014 = vmatmul.bf16.gmra.mxu0 %v3801
          %v4015 = vpop.f32.mrf.mxu0
          %v4016 = vadd.f32 %v3953, %v4015
          %v4017 = vpop.f32.mrf.mxu0
          %v4018 = vadd.f32 %v3955, %v4017
          %4019 = vmatmul.bf16.gmra.mxu0 %v3803
          %v4020 = vpop.f32.mrf.mxu0
          %v4021 = vadd.f32 %v3958, %v4020
          %v4022 = vpop.f32.mrf.mxu0
          %v4023 = vadd.f32 %v3960, %v4022
          %4024 = vmatmul.bf16.gmra.mxu0 %v3805
          %v4025 = vpop.f32.mrf.mxu0
          %v4026 = vadd.f32 %v3963, %v4025
          %v4027 = vpop.f32.mrf.mxu0
          %v4028 = vadd.f32 %v3965, %v4027
          %4029 = vmatmul.bf16.gmra.mxu0 %v3807
          %v4030 = vpop.f32.mrf.mxu0
          %v4031 = vadd.f32 %v3968, %v4030
          %v4032 = vpop.f32.mrf.mxu0
          %v4033 = vadd.f32 %v3970, %v4032
          %4034 = vmatmul.bf16.gmra.mxu0 %v3809
          %v4035 = vpop.f32.mrf.mxu0
          %v4036 = vadd.f32 %v3973, %v4035
          %v4037 = vpop.f32.mrf.mxu0
          %v4038 = vadd.f32 %v3975, %v4037
          %4039 = vmatmul.bf16.gmra.mxu0 %v3811
          %v4040 = vpop.f32.mrf.mxu0
          %v4041 = vadd.f32 %v3978, %v4040
          %v4042 = vpop.f32.mrf.mxu0
          %v4043 = vadd.f32 %v3980, %v4042
          %4044 = vmatmul.bf16.gmra.mxu0 %v3813
          %v4045 = vpop.f32.mrf.mxu0
          %v4046 = vadd.f32 %v3983, %v4045
          %v4047 = vpop.f32.mrf.mxu0
          %v4048 = vadd.f32 %v3985, %v4047
          %4049 = vmatmul.bf16.gmra.mxu0 %v3815
          %v4050 = vpop.f32.mrf.mxu0
          %v4051 = vadd.f32 %v3988, %v4050
          %v4052 = vpop.f32.mrf.mxu0
          %v4053 = vadd.f32 %v3990, %v4052
          %4054 = vmatmul.bf16.gmra.mxu0 %v3817
          %v4055 = vpop.f32.mrf.mxu0
          %v4056 = vadd.f32 %v3993, %v4055
          %v4057 = vpop.f32.mrf.mxu0
          %v4058 = vadd.f32 %v3995, %v4057
          %4059 = vmatmul.bf16.gmra.mxu0 %v3819
          %v4060 = vpop.f32.mrf.mxu0
          %v4061 = vadd.f32 %v3998, %v4060
          %v4062 = vpop.f32.mrf.mxu0
          %4063 = vdwg.mxu0
          %v4064 = vmax.f32 %v4011, 0.0
          %v4065 = vmax.f32 %v4013, 0.0
          %v4066 = vmax.f32 %v4016, 0.0
          %v4067 = vmax.f32 %v4018, 0.0
          %v4068 = vmax.f32 %v4021, 0.0
          %v4069 = vmax.f32 %v4023, 0.0
          %v4070 = vmax.f32 %v4026, 0.0
          %v4071 = vmax.f32 %v4028, 0.0
          %v4072 = vmax.f32 %v4031, 0.0
          %v4073 = vmax.f32 %v4033, 0.0
          %v4074 = vmax.f32 %v4036, 0.0
          %v4075 = vmax.f32 %v4038, 0.0
          %v4076 = vmax.f32 %v4041, 0.0
          %v4077 = vmax.f32 %v4043, 0.0
          %v4078 = vmax.f32 %v4046, 0.0
          %v4079 = vmax.f32 %v4048, 0.0
          %v4080 = vmax.f32 %v4051, 0.0
          %v4081 = vmax.f32 %v4053, 0.0
          %v4082 = vmax.f32 %v4056, 0.0
          %v4083 = vmax.f32 %v4058, 0.0
          %v4084 = vmax.f32 %v4061, 0.0
          %vm4085 = vcmask 261120
          %4086 = vst.msk [vmem:[#allocation3] sm:$0xff] %vm4085, %v4064
          %4087 = vst.msk [vmem:[#allocation3 + $0x8] sm:$0xff] %vm4085, %v4065
          %4088 = vst.msk [vmem:[#allocation3 + $0x10] sm:$0xff] %vm4085, %v4066
          %4089 = vst.msk [vmem:[#allocation3 + $0x18] sm:$0xff] %vm4085, %v4067
          %4090 = vst.msk [vmem:[#allocation3 + $0x20] sm:$0xff] %vm4085, %v4068
          %4091 = vst.msk [vmem:[#allocation3 + $0x28] sm:$0xff] %vm4085, %v4069
          %4092 = vst.msk [vmem:[#allocation3 + $0x30] sm:$0xff] %vm4085, %v4070
          %4093 = vst.msk [vmem:[#allocation3 + $0x38] sm:$0xff] %vm4085, %v4071
          %4094 = vst.msk [vmem:[#allocation3 + $0x40] sm:$0xff] %vm4085, %v4072
          %4095 = vst.msk [vmem:[#allocation3 + $0x48] sm:$0xff] %vm4085, %v4073
          %4096 = vst.msk [vmem:[#allocation3 + $0x50] sm:$0xff] %vm4085, %v4074
          %4097 = vst.msk [vmem:[#allocation3 + $0x58] sm:$0xff] %vm4085, %v4075
          %4098 = vst.msk [vmem:[#allocation3 + $0x60] sm:$0xff] %vm4085, %v4076
          %4099 = vst.msk [vmem:[#allocation3 + $0x68] sm:$0xff] %vm4085, %v4077
          %4100 = vst.msk [vmem:[#allocation3 + $0x70] sm:$0xff] %vm4085, %v4078
          %4101 = vst.msk [vmem:[#allocation3 + $0x78] sm:$0xff] %vm4085, %v4079
          %4102 = vst.msk [vmem:[#allocation3 + $0x80] sm:$0xff] %vm4085, %v4080
          %4103 = vst.msk [vmem:[#allocation3 + $0x88] sm:$0xff] %vm4085, %v4081
          %4104 = vst.msk [vmem:[#allocation3 + $0x90] sm:$0xff] %vm4085, %v4082
          %4105 = vst.msk [vmem:[#allocation3 + $0x98] sm:$0xff] %vm4085, %v4083
          %vm4106 = vcmask 254976
          %4107 = vst.msk [vmem:[#allocation3 + $0xa0] sm:$0x3] %vm4106, %v4084
          %v4108 = vld [vmem:[#allocation3] sm:$0x3]
          %4109 = vst.msk [vmem:[#allocation4] sm:$0x3] %vm4106, %v4108
          %v4110 = vld [vmem:[#allocation3 + $0x2] sm:$0x3]
          %4112 = vrot.lane.b32.xlu0 %v4110, 32
          %v4113 = vpop.permute.xlu0 %4112
          %vm4115 = vcmask 517376
          %4116 = vst.msk [vmem:[#allocation4] sm:$0x3] %vm4115, %v4113
          %v4117 = vld [vmem:[#allocation3 + $0x4] sm:$0x3]
          %4119 = vrot.lane.b32.xlu0 %v4117, 64
          %v4120 = vpop.permute.xlu0 %4119
          %vm4122 = vcmask 779776
          %4123 = vst.msk [vmem:[#allocation4] sm:$0x3] %vm4122, %v4120
          %v4124 = vld [vmem:[#allocation3 + $0x6] sm:$0x3]
          %4126 = vrot.lane.b32.xlu0 %v4124, 96
          %v4127 = vpop.permute.xlu0 %4126
          %vm4129 = vcmask 1042176
          %4130 = vst.msk [vmem:[#allocation4] sm:$0x3] %vm4129, %v4127
          %v4131 = vld [vmem:[#allocation3 + $0x8] sm:$0x3]
          %4132 = vst.msk [vmem:[#allocation4 + $0x2] sm:$0x3] %vm4106, %v4131
          %v4133 = vld [vmem:[#allocation3 + $0xa] sm:$0x3]
          %4135 = vrot.lane.b32.xlu0 %v4133, 32
          %v4136 = vpop.permute.xlu0 %4135
          %4138 = vst.msk [vmem:[#allocation4 + $0x2] sm:$0x3] %vm4115, %v4136
          %v4139 = vld [vmem:[#allocation3 + $0xc] sm:$0x3]
          %4141 = vrot.lane.b32.xlu0 %v4139, 64
          %v4142 = vpop.permute.xlu0 %4141
          %4144 = vst.msk [vmem:[#allocation4 + $0x2] sm:$0x3] %vm4122, %v4142
          %v4145 = vld [vmem:[#allocation3 + $0xe] sm:$0x3]
          %4147 = vrot.lane.b32.xlu0 %v4145, 96
          %v4148 = vpop.permute.xlu0 %4147
          %4150 = vst.msk [vmem:[#allocation4 + $0x2] sm:$0x3] %vm4129, %v4148
          %v4151 = vld [vmem:[#allocation3 + $0x10] sm:$0x3]
          %4152 = vst.msk [vmem:[#allocation4 + $0x4] sm:$0x3] %vm4106, %v4151
          %v4153 = vld [vmem:[#allocation3 + $0x12] sm:$0x3]
          %4155 = vrot.lane.b32.xlu0 %v4153, 32
          %v4156 = vpop.permute.xlu0 %4155
          %4158 = vst.msk [vmem:[#allocation4 + $0x4] sm:$0x3] %vm4115, %v4156
          %v4159 = vld [vmem:[#allocation3 + $0x14] sm:$0x3]
          %4161 = vrot.lane.b32.xlu0 %v4159, 64
          %v4162 = vpop.permute.xlu0 %4161
          %4164 = vst.msk [vmem:[#allocation4 + $0x4] sm:$0x3] %vm4122, %v4162
          %v4165 = vld [vmem:[#allocation3 + $0x16] sm:$0x3]
          %4167 = vrot.lane.b32.xlu0 %v4165, 96
          %v4168 = vpop.permute.xlu0 %4167
          %4170 = vst.msk [vmem:[#allocation4 + $0x4] sm:$0x3] %vm4129, %v4168
          %v4171 = vld [vmem:[#allocation3 + $0x18] sm:$0x3]
          %4172 = vst.msk [vmem:[#allocation4 + $0x6] sm:$0x3] %vm4106, %v4171
          %v4173 = vld [vmem:[#allocation3 + $0x1a] sm:$0x3]
          %4175 = vrot.lane.b32.xlu0 %v4173, 32
          %v4176 = vpop.permute.xlu0 %4175
          %4178 = vst.msk [vmem:[#allocation4 + $0x6] sm:$0x3] %vm4115, %v4176
          %v4179 = vld [vmem:[#allocation3 + $0x1c] sm:$0x3]
          %4181 = vrot.lane.b32.xlu0 %v4179, 64
          %v4182 = vpop.permute.xlu0 %4181
          %4184 = vst.msk [vmem:[#allocation4 + $0x6] sm:$0x3] %vm4122, %v4182
          %v4185 = vld [vmem:[#allocation3 + $0x1e] sm:$0x3]
          %4187 = vrot.lane.b32.xlu0 %v4185, 96
          %v4188 = vpop.permute.xlu0 %4187
          %4190 = vst.msk [vmem:[#allocation4 + $0x6] sm:$0x3] %vm4129, %v4188
          %v4191 = vld [vmem:[#allocation3 + $0x20] sm:$0x3]
          %4192 = vst.msk [vmem:[#allocation4 + $0x8] sm:$0x3] %vm4106, %v4191
          %v4193 = vld [vmem:[#allocation3 + $0x22] sm:$0x3]
          %4195 = vrot.lane.b32.xlu0 %v4193, 32
          %v4196 = vpop.permute.xlu0 %4195
          %4198 = vst.msk [vmem:[#allocation4 + $0x8] sm:$0x3] %vm4115, %v4196
          %v4199 = vld [vmem:[#allocation3 + $0x24] sm:$0x3]
          %4201 = vrot.lane.b32.xlu0 %v4199, 64
          %v4202 = vpop.permute.xlu0 %4201
          %4204 = vst.msk [vmem:[#allocation4 + $0x8] sm:$0x3] %vm4122, %v4202
          %v4205 = vld [vmem:[#allocation3 + $0x26] sm:$0x3]
          %4207 = vrot.lane.b32.xlu0 %v4205, 96
          %v4208 = vpop.permute.xlu0 %4207
          %4210 = vst.msk [vmem:[#allocation4 + $0x8] sm:$0x3] %vm4129, %v4208
          %v4211 = vld [vmem:[#allocation3 + $0x28] sm:$0x3]
          %4212 = vst.msk [vmem:[#allocation4 + $0xa] sm:$0x3] %vm4106, %v4211
          %v4213 = vld [vmem:[#allocation3 + $0x2a] sm:$0x3]
          %4215 = vrot.lane.b32.xlu0 %v4213, 32
          %v4216 = vpop.permute.xlu0 %4215
          %4218 = vst.msk [vmem:[#allocation4 + $0xa] sm:$0x3] %vm4115, %v4216
          %v4219 = vld [vmem:[#allocation3 + $0x2c] sm:$0x3]
          %4221 = vrot.lane.b32.xlu0 %v4219, 64
          %v4222 = vpop.permute.xlu0 %4221
          %4224 = vst.msk [vmem:[#allocation4 + $0xa] sm:$0x3] %vm4122, %v4222
          %v4225 = vld [vmem:[#allocation3 + $0x2e] sm:$0x3]
          %4227 = vrot.lane.b32.xlu0 %v4225, 96
          %v4228 = vpop.permute.xlu0 %4227
          %4230 = vst.msk [vmem:[#allocation4 + $0xa] sm:$0x3] %vm4129, %v4228
          %v4231 = vld [vmem:[#allocation3 + $0x30] sm:$0x3]
          %4232 = vst.msk [vmem:[#allocation4 + $0xc] sm:$0x3] %vm4106, %v4231
          %v4233 = vld [vmem:[#allocation3 + $0x32] sm:$0x3]
          %4235 = vrot.lane.b32.xlu0 %v4233, 32
          %v4236 = vpop.permute.xlu0 %4235
          %4238 = vst.msk [vmem:[#allocation4 + $0xc] sm:$0x3] %vm4115, %v4236
          %v4239 = vld [vmem:[#allocation3 + $0x34] sm:$0x3]
          %4241 = vrot.lane.b32.xlu0 %v4239, 64
          %v4242 = vpop.permute.xlu0 %4241
          %4244 = vst.msk [vmem:[#allocation4 + $0xc] sm:$0x3] %vm4122, %v4242
          %v4245 = vld [vmem:[#allocation3 + $0x36] sm:$0x3]
          %4247 = vrot.lane.b32.xlu0 %v4245, 96
          %v4248 = vpop.permute.xlu0 %4247
          %4250 = vst.msk [vmem:[#allocation4 + $0xc] sm:$0x3] %vm4129, %v4248
          %v4251 = vld [vmem:[#allocation3 + $0x38] sm:$0x3]
          %4252 = vst.msk [vmem:[#allocation4 + $0xe] sm:$0x3] %vm4106, %v4251
          %v4253 = vld [vmem:[#allocation3 + $0x3a] sm:$0x3]
          %4255 = vrot.lane.b32.xlu0 %v4253, 32
          %v4256 = vpop.permute.xlu0 %4255
          %4258 = vst.msk [vmem:[#allocation4 + $0xe] sm:$0x3] %vm4115, %v4256
          %v4259 = vld [vmem:[#allocation3 + $0x3c] sm:$0x3]
          %4261 = vrot.lane.b32.xlu0 %v4259, 64
          %v4262 = vpop.permute.xlu0 %4261
          %4264 = vst.msk [vmem:[#allocation4 + $0xe] sm:$0x3] %vm4122, %v4262
          %v4265 = vld [vmem:[#allocation3 + $0x3e] sm:$0x3]
          %4267 = vrot.lane.b32.xlu0 %v4265, 96
          %v4268 = vpop.permute.xlu0 %4267
          %4270 = vst.msk [vmem:[#allocation4 + $0xe] sm:$0x3] %vm4129, %v4268
          %v4271 = vld [vmem:[#allocation3 + $0x40] sm:$0x3]
          %4272 = vst.msk [vmem:[#allocation4 + $0x10] sm:$0x3] %vm4106, %v4271
          %v4273 = vld [vmem:[#allocation3 + $0x42] sm:$0x3]
          %4275 = vrot.lane.b32.xlu0 %v4273, 32
          %v4276 = vpop.permute.xlu0 %4275
          %4278 = vst.msk [vmem:[#allocation4 + $0x10] sm:$0x3] %vm4115, %v4276
          %v4279 = vld [vmem:[#allocation3 + $0x44] sm:$0x3]
          %4281 = vrot.lane.b32.xlu0 %v4279, 64
          %v4282 = vpop.permute.xlu0 %4281
          %4284 = vst.msk [vmem:[#allocation4 + $0x10] sm:$0x3] %vm4122, %v4282
          %v4285 = vld [vmem:[#allocation3 + $0x46] sm:$0x3]
          %4287 = vrot.lane.b32.xlu0 %v4285, 96
          %v4288 = vpop.permute.xlu0 %4287
          %4290 = vst.msk [vmem:[#allocation4 + $0x10] sm:$0x3] %vm4129, %v4288
          %v4291 = vld [vmem:[#allocation3 + $0x48] sm:$0x3]
          %4292 = vst.msk [vmem:[#allocation4 + $0x12] sm:$0x3] %vm4106, %v4291
          %v4293 = vld [vmem:[#allocation3 + $0x4a] sm:$0x3]
          %4295 = vrot.lane.b32.xlu0 %v4293, 32
          %v4296 = vpop.permute.xlu0 %4295
          %4298 = vst.msk [vmem:[#allocation4 + $0x12] sm:$0x3] %vm4115, %v4296
          %v4299 = vld [vmem:[#allocation3 + $0x4c] sm:$0x3]
          %4301 = vrot.lane.b32.xlu0 %v4299, 64
          %v4302 = vpop.permute.xlu0 %4301
          %4304 = vst.msk [vmem:[#allocation4 + $0x12] sm:$0x3] %vm4122, %v4302
          %v4305 = vld [vmem:[#allocation3 + $0x4e] sm:$0x3]
          %4307 = vrot.lane.b32.xlu0 %v4305, 96
          %v4308 = vpop.permute.xlu0 %4307
          %4310 = vst.msk [vmem:[#allocation4 + $0x12] sm:$0x3] %vm4129, %v4308
          %v4311 = vld [vmem:[#allocation3 + $0x50] sm:$0x3]
          %4312 = vst.msk [vmem:[#allocation4 + $0x14] sm:$0x3] %vm4106, %v4311
          %v4313 = vld [vmem:[#allocation3 + $0x52] sm:$0x3]
          %4315 = vrot.lane.b32.xlu0 %v4313, 32
          %v4316 = vpop.permute.xlu0 %4315
          %4318 = vst.msk [vmem:[#allocation4 + $0x14] sm:$0x3] %vm4115, %v4316
          %v4319 = vld [vmem:[#allocation3 + $0x54] sm:$0x3]
          %4321 = vrot.lane.b32.xlu0 %v4319, 64
          %v4322 = vpop.permute.xlu0 %4321
          %4324 = vst.msk [vmem:[#allocation4 + $0x14] sm:$0x3] %vm4122, %v4322
          %v4325 = vld [vmem:[#allocation3 + $0x56] sm:$0x3]
          %4327 = vrot.lane.b32.xlu0 %v4325, 96
          %v4328 = vpop.permute.xlu0 %4327
          %4330 = vst.msk [vmem:[#allocation4 + $0x14] sm:$0x3] %vm4129, %v4328
          %v4331 = vld [vmem:[#allocation3 + $0x58] sm:$0x3]
          %4332 = vst.msk [vmem:[#allocation4 + $0x16] sm:$0x3] %vm4106, %v4331
          %v4333 = vld [vmem:[#allocation3 + $0x5a] sm:$0x3]
          %4335 = vrot.lane.b32.xlu0 %v4333, 32
          %v4336 = vpop.permute.xlu0 %4335
          %4338 = vst.msk [vmem:[#allocation4 + $0x16] sm:$0x3] %vm4115, %v4336
          %v4339 = vld [vmem:[#allocation3 + $0x5c] sm:$0x3]
          %4341 = vrot.lane.b32.xlu0 %v4339, 64
          %v4342 = vpop.permute.xlu0 %4341
          %4344 = vst.msk [vmem:[#allocation4 + $0x16] sm:$0x3] %vm4122, %v4342
          %v4345 = vld [vmem:[#allocation3 + $0x5e] sm:$0x3]
          %4347 = vrot.lane.b32.xlu0 %v4345, 96
          %v4348 = vpop.permute.xlu0 %4347
          %4350 = vst.msk [vmem:[#allocation4 + $0x16] sm:$0x3] %vm4129, %v4348
          %v4351 = vld [vmem:[#allocation3 + $0x60] sm:$0x3]
          %4352 = vst.msk [vmem:[#allocation4 + $0x18] sm:$0x3] %vm4106, %v4351
          %v4353 = vld [vmem:[#allocation3 + $0x62] sm:$0x3]
          %4355 = vrot.lane.b32.xlu0 %v4353, 32
          %v4356 = vpop.permute.xlu0 %4355
          %4358 = vst.msk [vmem:[#allocation4 + $0x18] sm:$0x3] %vm4115, %v4356
          %v4359 = vld [vmem:[#allocation3 + $0x64] sm:$0x3]
          %4361 = vrot.lane.b32.xlu0 %v4359, 64
          %v4362 = vpop.permute.xlu0 %4361
          %4364 = vst.msk [vmem:[#allocation4 + $0x18] sm:$0x3] %vm4122, %v4362
          %v4365 = vld [vmem:[#allocation3 + $0x66] sm:$0x3]
          %4367 = vrot.lane.b32.xlu0 %v4365, 96
          %v4368 = vpop.permute.xlu0 %4367
          %4370 = vst.msk [vmem:[#allocation4 + $0x18] sm:$0x3] %vm4129, %v4368
          %v4371 = vld [vmem:[#allocation3 + $0x68] sm:$0x3]
          %4372 = vst.msk [vmem:[#allocation4 + $0x1a] sm:$0x3] %vm4106, %v4371
          %v4373 = vld [vmem:[#allocation3 + $0x6a] sm:$0x3]
          %4375 = vrot.lane.b32.xlu0 %v4373, 32
          %v4376 = vpop.permute.xlu0 %4375
          %4378 = vst.msk [vmem:[#allocation4 + $0x1a] sm:$0x3] %vm4115, %v4376
          %v4379 = vld [vmem:[#allocation3 + $0x6c] sm:$0x3]
          %4381 = vrot.lane.b32.xlu0 %v4379, 64
          %v4382 = vpop.permute.xlu0 %4381
          %4384 = vst.msk [vmem:[#allocation4 + $0x1a] sm:$0x3] %vm4122, %v4382
          %v4385 = vld [vmem:[#allocation3 + $0x6e] sm:$0x3]
          %4387 = vrot.lane.b32.xlu0 %v4385, 96
          %v4388 = vpop.permute.xlu0 %4387
          %4390 = vst.msk [vmem:[#allocation4 + $0x1a] sm:$0x3] %vm4129, %v4388
          %v4391 = vld [vmem:[#allocation3 + $0x70] sm:$0x3]
          %4392 = vst.msk [vmem:[#allocation4 + $0x1c] sm:$0x3] %vm4106, %v4391
          %v4393 = vld [vmem:[#allocation3 + $0x72] sm:$0x3]
          %4395 = vrot.lane.b32.xlu0 %v4393, 32
          %v4396 = vpop.permute.xlu0 %4395
          %4398 = vst.msk [vmem:[#allocation4 + $0x1c] sm:$0x3] %vm4115, %v4396
          %v4399 = vld [vmem:[#allocation3 + $0x74] sm:$0x3]
          %4401 = vrot.lane.b32.xlu0 %v4399, 64
          %v4402 = vpop.permute.xlu0 %4401
          %4404 = vst.msk [vmem:[#allocation4 + $0x1c] sm:$0x3] %vm4122, %v4402
          %v4405 = vld [vmem:[#allocation3 + $0x76] sm:$0x3]
          %4407 = vrot.lane.b32.xlu0 %v4405, 96
          %v4408 = vpop.permute.xlu0 %4407
          %4410 = vst.msk [vmem:[#allocation4 + $0x1c] sm:$0x3] %vm4129, %v4408
          %v4411 = vld [vmem:[#allocation3 + $0x78] sm:$0x3]
          %4412 = vst.msk [vmem:[#allocation4 + $0x1e] sm:$0x3] %vm4106, %v4411
          %v4413 = vld [vmem:[#allocation3 + $0x7a] sm:$0x3]
          %4415 = vrot.lane.b32.xlu0 %v4413, 32
          %v4416 = vpop.permute.xlu0 %4415
          %4418 = vst.msk [vmem:[#allocation4 + $0x1e] sm:$0x3] %vm4115, %v4416
          %v4419 = vld [vmem:[#allocation3 + $0x7c] sm:$0x3]
          %4421 = vrot.lane.b32.xlu0 %v4419, 64
          %v4422 = vpop.permute.xlu0 %4421
          %4424 = vst.msk [vmem:[#allocation4 + $0x1e] sm:$0x3] %vm4122, %v4422
          %v4425 = vld [vmem:[#allocation3 + $0x7e] sm:$0x3]
          %4427 = vrot.lane.b32.xlu0 %v4425, 96
          %v4428 = vpop.permute.xlu0 %4427
          %4430 = vst.msk [vmem:[#allocation4 + $0x1e] sm:$0x3] %vm4129, %v4428
          %v4431 = vld [vmem:[#allocation3 + $0x80] sm:$0x3]
          %4432 = vst.msk [vmem:[#allocation4 + $0x20] sm:$0x3] %vm4106, %v4431
          %v4433 = vld [vmem:[#allocation3 + $0x82] sm:$0x3]
          %4435 = vrot.lane.b32.xlu0 %v4433, 32
          %v4436 = vpop.permute.xlu0 %4435
          %4438 = vst.msk [vmem:[#allocation4 + $0x20] sm:$0x3] %vm4115, %v4436
          %v4439 = vld [vmem:[#allocation3 + $0x84] sm:$0x3]
          %4441 = vrot.lane.b32.xlu0 %v4439, 64
          %v4442 = vpop.permute.xlu0 %4441
          %4444 = vst.msk [vmem:[#allocation4 + $0x20] sm:$0x3] %vm4122, %v4442
          %v4445 = vld [vmem:[#allocation3 + $0x86] sm:$0x3]
          %4447 = vrot.lane.b32.xlu0 %v4445, 96
          %v4448 = vpop.permute.xlu0 %4447
          %4450 = vst.msk [vmem:[#allocation4 + $0x20] sm:$0x3] %vm4129, %v4448
          %v4451 = vld [vmem:[#allocation3 + $0x88] sm:$0x3]
          %4452 = vst.msk [vmem:[#allocation4 + $0x22] sm:$0x3] %vm4106, %v4451
          %v4453 = vld [vmem:[#allocation3 + $0x8a] sm:$0x3]
          %4455 = vrot.lane.b32.xlu0 %v4453, 32
          %v4456 = vpop.permute.xlu0 %4455
          %4458 = vst.msk [vmem:[#allocation4 + $0x22] sm:$0x3] %vm4115, %v4456
          %v4459 = vld [vmem:[#allocation3 + $0x8c] sm:$0x3]
          %4461 = vrot.lane.b32.xlu0 %v4459, 64
          %v4462 = vpop.permute.xlu0 %4461
          %4464 = vst.msk [vmem:[#allocation4 + $0x22] sm:$0x3] %vm4122, %v4462
          %v4465 = vld [vmem:[#allocation3 + $0x8e] sm:$0x3]
          %4467 = vrot.lane.b32.xlu0 %v4465, 96
          %v4468 = vpop.permute.xlu0 %4467
          %4470 = vst.msk [vmem:[#allocation4 + $0x22] sm:$0x3] %vm4129, %v4468
          %v4471 = vld [vmem:[#allocation3 + $0x90] sm:$0x3]
          %4472 = vst.msk [vmem:[#allocation4 + $0x24] sm:$0x3] %vm4106, %v4471
          %v4473 = vld [vmem:[#allocation3 + $0x92] sm:$0x3]
          %4475 = vrot.lane.b32.xlu0 %v4473, 32
          %v4476 = vpop.permute.xlu0 %4475
          %4478 = vst.msk [vmem:[#allocation4 + $0x24] sm:$0x3] %vm4115, %v4476
          %v4479 = vld [vmem:[#allocation3 + $0x94] sm:$0x3]
          %4481 = vrot.lane.b32.xlu0 %v4479, 64
          %v4482 = vpop.permute.xlu0 %4481
          %4484 = vst.msk [vmem:[#allocation4 + $0x24] sm:$0x3] %vm4122, %v4482
          %v4485 = vld [vmem:[#allocation3 + $0x96] sm:$0x3]
          %4487 = vrot.lane.b32.xlu0 %v4485, 96
          %v4488 = vpop.permute.xlu0 %4487
          %4490 = vst.msk [vmem:[#allocation4 + $0x24] sm:$0x3] %vm4129, %v4488
          %v4491 = vld [vmem:[#allocation3 + $0x98] sm:$0x3]
          %4492 = vst.msk [vmem:[#allocation4 + $0x26] sm:$0x3] %vm4106, %v4491
          %v4493 = vld [vmem:[#allocation3 + $0x9a] sm:$0x3]
          %4495 = vrot.lane.b32.xlu0 %v4493, 32
          %v4496 = vpop.permute.xlu0 %4495
          %4498 = vst.msk [vmem:[#allocation4 + $0x26] sm:$0x3] %vm4115, %v4496
          %v4499 = vld [vmem:[#allocation3 + $0x9c] sm:$0x3]
          %4501 = vrot.lane.b32.xlu0 %v4499, 64
          %v4502 = vpop.permute.xlu0 %4501
          %4504 = vst.msk [vmem:[#allocation4 + $0x26] sm:$0x3] %vm4122, %v4502
          %v4505 = vld [vmem:[#allocation3 + $0x9e] sm:$0x3]
          %4507 = vrot.lane.b32.xlu0 %v4505, 96
          %v4508 = vpop.permute.xlu0 %4507
          %4510 = vst.msk [vmem:[#allocation4 + $0x26] sm:$0x3] %vm4129, %v4508
          %v4511 = vld [vmem:[#allocation3 + $0xa0] sm:$0x3]
          %4512 = vst.msk [vmem:[#allocation4 + $0x28] sm:$0x3] %vm4106, %v4511
          %v4513 = vld [vmem:[%s8] sm:$0x1]
          %v4515 = vperm.slane %v4513, 0
          %4517 = vst [vmem:[%s9] sm:$0x3] %v4515
        $region112: #{dueling_dqn_forward.1} parent=103 // pred_fallthru
          _
        %v4518 = vld [vmem:[#allocation4] sm:$0xff]
        %v4519 = vld [vmem:[#allocation4 + $0x8] sm:$0xff]
        %v4520 = vld [vmem:[#allocation4 + $0x10] sm:$0xff]
        %v4521 = vld [vmem:[#allocation4 + $0x18] sm:$0xff]
        %v4522 = vld [vmem:[#allocation4 + $0x20] sm:$0xff]
        %v4523 = vld [vmem:[#allocation4 + $0x28] sm:$0x3]
        %4530 = vst [vmem:[#allocation1] ss:$4 sm:$0xff] %v4518
        %s4531 = scalar_lea.vmem [#allocation1], 32
        %4532 = vst [vmem:[%s4531] ss:$4 sm:$0xff] %v4519
        %v4533 = vld.sshfl [vmem:[#allocation1] sm:$0xff pattern:$0x73625140]
        %v4534 = vld.sshfl [vmem:[#allocation1 + $0x8] sm:$0xff pattern:$0x73625140]
        %v4535 = vld.sshfl [vmem:[#allocation1 + $0x10] sm:$0xff pattern:$0x73625140]
        %v4536 = vld.sshfl [vmem:[#allocation1 + $0x18] sm:$0xff pattern:$0x73625140]
        %v4537 = vld.sshfl [vmem:[#allocation1 + $0x20] sm:$0xff pattern:$0x73625140]
        %v4538 = vld.sshfl [vmem:[#allocation1 + $0x28] sm:$0xff pattern:$0x73625140]
        %v4539 = vld.sshfl [vmem:[#allocation1 + $0x30] sm:$0xff pattern:$0x73625140]
        %v4540 = vld.sshfl [vmem:[#allocation1 + $0x38] sm:$0xff pattern:$0x73625140]
        %4541 = vst [vmem:[#allocation1] ss:$4 sm:$0xff] %v4520
        %4542 = vst [vmem:[%s4531] ss:$4 sm:$0xff] %v4521
        %v4543 = vld.sshfl [vmem:[#allocation1] sm:$0xff pattern:$0x73625140]
        %v4544 = vld.sshfl [vmem:[#allocation1 + $0x8] sm:$0xff pattern:$0x73625140]
        %v4545 = vld.sshfl [vmem:[#allocation1 + $0x10] sm:$0xff pattern:$0x73625140]
        %v4546 = vld.sshfl [vmem:[#allocation1 + $0x18] sm:$0xff pattern:$0x73625140]
        %v4547 = vld.sshfl [vmem:[#allocation1 + $0x20] sm:$0xff pattern:$0x73625140]
        %v4548 = vld.sshfl [vmem:[#allocation1 + $0x28] sm:$0xff pattern:$0x73625140]
        %v4549 = vld.sshfl [vmem:[#allocation1 + $0x30] sm:$0xff pattern:$0x73625140]
        %v4550 = vld.sshfl [vmem:[#allocation1 + $0x38] sm:$0xff pattern:$0x73625140]
        %4551 = vst [vmem:[#allocation1] ss:$4 sm:$0xff] %v4522
        %4552 = vst [vmem:[%s4531] ss:$4 sm:$0xff] %v4523
        %v4553 = vld.sshfl [vmem:[#allocation1] sm:$0xff pattern:$0x73625140]
        %v4554 = vld.sshfl [vmem:[#allocation1 + $0x8] sm:$0xff pattern:$0x73625140]
        %v4555 = vld.sshfl [vmem:[#allocation1 + $0x10] sm:$0xff pattern:$0x73625140]
        %v4556 = vld.sshfl [vmem:[#allocation1 + $0x18] sm:$0xff pattern:$0x73625140]
        %v4557 = vld.sshfl [vmem:[#allocation1 + $0x20] sm:$0xff pattern:$0x73625140]
        %v4579 = vpack.c.bf16 %v4533, %v4533
        %v4580 = vpack.c.bf16 %v4534, %v4534
        %v4581 = vpack.c.bf16 %v4535, %v4535
        %v4582 = vpack.c.bf16 %v4536, %v4536
        %v4583 = vpack.c.bf16 %v4537, %v4537
        %v4584 = vpack.c.bf16 %v4538, %v4538
        %v4585 = vpack.c.bf16 %v4539, %v4539
        %v4586 = vpack.c.bf16 %v4540, %v4540
        %v4587 = vpack.c.bf16 %v4543, %v4543
        %v4588 = vpack.c.bf16 %v4544, %v4544
        %v4589 = vpack.c.bf16 %v4545, %v4545
        %v4590 = vpack.c.bf16 %v4546, %v4546
        %v4591 = vpack.c.bf16 %v4547, %v4547
        %v4592 = vpack.c.bf16 %v4548, %v4548
        %v4593 = vpack.c.bf16 %v4549, %v4549
        %v4594 = vpack.c.bf16 %v4550, %v4550
        %v4595 = vpack.c.bf16 %v4553, %v4553
        %v4596 = vpack.c.bf16 %v4554, %v4554
        %v4597 = vpack.c.bf16 %v4555, %v4555
        %v4598 = vpack.c.bf16 %v4556, %v4556
        %v4599 = vpack.c.bf16 %v4557, %v4557
        %v4600 = vld [vmem:[%s2966] sm:$0xf]
        %v4601 = vld [vmem:[%s2966 + $0x4] sm:$0xf]
        %v4602 = vld [vmem:[%s2966 + $0x8] sm:$0xf]
        %v4603 = vld [vmem:[%s2966 + $0xc] sm:$0xf]
        %v4604 = vld [vmem:[%s2966 + $0x10] sm:$0xf]
        %v4605 = vld [vmem:[%s2966 + $0x14] sm:$0xf]
        %v4606 = vld [vmem:[%s2966 + $0x18] sm:$0xf]
        %v4607 = vld [vmem:[%s2966 + $0x1c] sm:$0xf]
        %v4608 = vld [vmem:[%s2966 + $0x20] sm:$0xf]
        %v4609 = vld [vmem:[%s2966 + $0x24] sm:$0xf]
        %v4610 = vld [vmem:[%s2966 + $0x28] sm:$0xf]
        %v4611 = vld [vmem:[%s2966 + $0x2c] sm:$0xf]
        %v4612 = vld [vmem:[%s2966 + $0x30] sm:$0xf]
        %v4613 = vld [vmem:[%s2966 + $0x34] sm:$0xf]
        %v4614 = vld [vmem:[%s2966 + $0x38] sm:$0xf]
        %v4615 = vld [vmem:[%s2966 + $0x3c] sm:$0xf]
        %v4616 = vld [vmem:[%s2966 + $0x40] sm:$0xf]
        %v4617 = vld [vmem:[%s2966 + $0x44] sm:$0xf]
        %v4618 = vld [vmem:[%s2966 + $0x48] sm:$0xf]
        %v4619 = vld [vmem:[%s2966 + $0x4c] sm:$0xf]
        %v4620 = vld [vmem:[%s2966 + $0x50] sm:$0xf]
        %v4621 = vld [vmem:[%s2966 + $0x54] sm:$0xf]
        %v4622 = vld [vmem:[%s2966 + $0x58] sm:$0xf]
        %v4623 = vld [vmem:[%s2966 + $0x5c] sm:$0xf]
        %v4624 = vld [vmem:[%s2966 + $0x60] sm:$0xf]
        %v4625 = vld [vmem:[%s2966 + $0x64] sm:$0xf]
        %v4626 = vld [vmem:[%s2966 + $0x68] sm:$0xf]
        %v4627 = vld [vmem:[%s2966 + $0x6c] sm:$0xf]
        %v4628 = vld [vmem:[%s2966 + $0x70] sm:$0xf]
        %v4629 = vld [vmem:[%s2966 + $0x74] sm:$0xf]
        %v4630 = vld [vmem:[%s2966 + $0x78] sm:$0xf]
        %v4631 = vld [vmem:[%s2966 + $0x7c] sm:$0xf]
        %v4632 = vld [vmem:[%s2966 + $0x80] sm:$0xf]
        %v4633 = vld [vmem:[%s2966 + $0x84] sm:$0xf]
        %v4634 = vld [vmem:[%s2966 + $0x88] sm:$0xf]
        %v4635 = vld [vmem:[%s2966 + $0x8c] sm:$0xf]
        %v4636 = vld [vmem:[%s2966 + $0x90] sm:$0xf]
        %v4637 = vld [vmem:[%s2966 + $0x94] sm:$0xf]
        %v4638 = vld [vmem:[%s2966 + $0x98] sm:$0xf]
        %v4639 = vld [vmem:[%s2966 + $0x9c] sm:$0xf]
        %v4640 = vld [vmem:[%s2966 + $0xa0] sm:$0xf]
        %v4641 = vld [vmem:[%s2966 + $0xa4] sm:$0xf]
        %v4642 = vld [vmem:[%s2966 + $0xa8] sm:$0xf]
        %v4643 = vld [vmem:[%s2966 + $0xac] sm:$0xf]
        %v4644 = vld [vmem:[%s2966 + $0xb0] sm:$0xf]
        %v4645 = vld [vmem:[%s2966 + $0xb4] sm:$0xf]
        %v4646 = vld [vmem:[%s2966 + $0xb8] sm:$0xf]
        %v4647 = vld [vmem:[%s2966 + $0xbc] sm:$0xf]
        %v4648 = vld [vmem:[%s2966 + $0xc0] sm:$0xf]
        %v4649 = vld [vmem:[%s2966 + $0xc4] sm:$0xf]
        %v4650 = vld [vmem:[%s2966 + $0xc8] sm:$0xf]
        %v4651 = vld [vmem:[%s2966 + $0xcc] sm:$0xf]
        %v4652 = vld [vmem:[%s2966 + $0xd0] sm:$0xf]
        %v4653 = vld [vmem:[%s2966 + $0xd4] sm:$0xf]
        %v4654 = vld [vmem:[%s2966 + $0xd8] sm:$0xf]
        %v4655 = vld [vmem:[%s2966 + $0xdc] sm:$0xf]
        %v4656 = vld [vmem:[%s2966 + $0xe0] sm:$0xf]
        %v4657 = vld [vmem:[%s2966 + $0xe4] sm:$0xf]
        %v4658 = vld [vmem:[%s2966 + $0xe8] sm:$0xf]
        %v4659 = vld [vmem:[%s2966 + $0xec] sm:$0xf]
        %v4660 = vld [vmem:[%s2966 + $0xf0] sm:$0xf]
        %v4661 = vld [vmem:[%s2966 + $0xf4] sm:$0xf]
        %v4662 = vld [vmem:[%s2966 + $0xf8] sm:$0xf]
        %v4663 = vld [vmem:[%s2966 + $0xfc] sm:$0xf]
        %v4664 = vld [vmem:[%s2966 + $0x100] sm:$0xf]
        %v4665 = vld [vmem:[%s2966 + $0x104] sm:$0xf]
        %v4666 = vld [vmem:[%s2966 + $0x108] sm:$0xf]
        %v4667 = vld [vmem:[%s2966 + $0x10c] sm:$0xf]
        %v4668 = vld [vmem:[%s2966 + $0x110] sm:$0xf]
        %v4669 = vld [vmem:[%s2966 + $0x114] sm:$0xf]
        %v4670 = vld [vmem:[%s2966 + $0x118] sm:$0xf]
        %v4671 = vld [vmem:[%s2966 + $0x11c] sm:$0xf]
        %v4672 = vld [vmem:[%s2966 + $0x120] sm:$0xf]
        %v4673 = vld [vmem:[%s2966 + $0x124] sm:$0xf]
        %v4674 = vld [vmem:[%s2966 + $0x128] sm:$0xf]
        %v4675 = vld [vmem:[%s2966 + $0x12c] sm:$0xf]
        %v4676 = vld [vmem:[%s2966 + $0x130] sm:$0xf]
        %v4677 = vld [vmem:[%s2966 + $0x134] sm:$0xf]
        %v4678 = vld [vmem:[%s2966 + $0x138] sm:$0xf]
        %v4679 = vld [vmem:[%s2966 + $0x13c] sm:$0xf]
        %v4680 = vld [vmem:[%s2966 + $0x140] sm:$0xf]
        %v4681 = vld [vmem:[%s2966 + $0x144] sm:$0xf]
        %v4682 = vld [vmem:[%s2966 + $0x148] sm:$0xf]
        %v4683 = vld [vmem:[%s2966 + $0x14c] sm:$0xf]
        %v4684 = vld [vmem:[%s2966 + $0x150] sm:$0xf]
        %v4685 = vld [vmem:[%s2966 + $0x154] sm:$0xf]
        %v4686 = vld [vmem:[%s2966 + $0x158] sm:$0xf]
        %v4687 = vld [vmem:[%s2966 + $0x15c] sm:$0xf]
        %v4688 = vld [vmem:[%s2966 + $0x160] sm:$0xf]
        %v4689 = vld [vmem:[%s2966 + $0x164] sm:$0xf]
        %v4690 = vld [vmem:[%s2966 + $0x168] sm:$0xf]
        %v4691 = vld [vmem:[%s2966 + $0x16c] sm:$0xf]
        %v4692 = vld [vmem:[%s2966 + $0x170] sm:$0xf]
        %v4693 = vld [vmem:[%s2966 + $0x174] sm:$0xf]
        %v4694 = vld [vmem:[%s2966 + $0x178] sm:$0xf]
        %v4695 = vld [vmem:[%s2966 + $0x17c] sm:$0xf]
        %v4696 = vld [vmem:[%s2966 + $0x180] sm:$0xf]
        %v4697 = vld [vmem:[%s2966 + $0x184] sm:$0xf]
        %v4698 = vld [vmem:[%s2966 + $0x188] sm:$0xf]
        %v4699 = vld [vmem:[%s2966 + $0x18c] sm:$0xf]
        %v4700 = vld [vmem:[%s2966 + $0x190] sm:$0xf]
        %v4701 = vld [vmem:[%s2966 + $0x194] sm:$0xf]
        %v4702 = vld [vmem:[%s2966 + $0x198] sm:$0xf]
        %v4703 = vld [vmem:[%s2966 + $0x19c] sm:$0xf]
        %v4704 = vld [vmem:[%s2966 + $0x1a0] sm:$0xf]
        %v4705 = vld [vmem:[%s2966 + $0x1a4] sm:$0xf]
        %v4706 = vld [vmem:[%s2966 + $0x1a8] sm:$0xf]
        %v4707 = vld [vmem:[%s2966 + $0x1ac] sm:$0xf]
        %v4708 = vld [vmem:[%s2966 + $0x1b0] sm:$0xf]
        %v4709 = vld [vmem:[%s2966 + $0x1b4] sm:$0xf]
        %v4710 = vld [vmem:[%s2966 + $0x1b8] sm:$0xf]
        %v4711 = vld [vmem:[%s2966 + $0x1bc] sm:$0xf]
        %v4712 = vld [vmem:[%s2966 + $0x1c0] sm:$0xf]
        %v4713 = vld [vmem:[%s2966 + $0x1c4] sm:$0xf]
        %v4714 = vld [vmem:[%s2966 + $0x1c8] sm:$0xf]
        %v4715 = vld [vmem:[%s2966 + $0x1cc] sm:$0xf]
        %v4716 = vld [vmem:[%s2966 + $0x1d0] sm:$0xf]
        %v4717 = vld [vmem:[%s2966 + $0x1d4] sm:$0xf]
        %v4718 = vld [vmem:[%s2966 + $0x1d8] sm:$0xf]
        %v4719 = vld [vmem:[%s2966 + $0x1dc] sm:$0xf]
        %v4720 = vld [vmem:[%s2966 + $0x1e0] sm:$0xf]
        %v4721 = vld [vmem:[%s2966 + $0x1e4] sm:$0xf]
        %v4722 = vld [vmem:[%s2966 + $0x1e8] sm:$0xf]
        %v4723 = vld [vmem:[%s2966 + $0x1ec] sm:$0xf]
        %v4724 = vld [vmem:[%s2966 + $0x1f0] sm:$0xf]
        %v4725 = vld [vmem:[%s2966 + $0x1f4] sm:$0xf]
        %v4726 = vld [vmem:[%s2966 + $0x1f8] sm:$0xf]
        %v4727 = vld [vmem:[%s2966 + $0x1fc] sm:$0xf]
        %v4728 = vld [vmem:[%s2966 + $0x200] sm:$0xf]
        %v4729 = vld [vmem:[%s2966 + $0x204] sm:$0xf]
        %v4730 = vld [vmem:[%s2966 + $0x208] sm:$0xf]
        %v4731 = vld [vmem:[%s2966 + $0x20c] sm:$0xf]
        %v4732 = vld [vmem:[%s2966 + $0x210] sm:$0xf]
        %v4733 = vld [vmem:[%s2966 + $0x214] sm:$0xf]
        %v4734 = vld [vmem:[%s2966 + $0x218] sm:$0xf]
        %v4735 = vld [vmem:[%s2966 + $0x21c] sm:$0xf]
        %v4736 = vld [vmem:[%s2966 + $0x220] sm:$0xf]
        %v4737 = vld [vmem:[%s2966 + $0x224] sm:$0xf]
        %v4738 = vld [vmem:[%s2966 + $0x228] sm:$0xf]
        %v4739 = vld [vmem:[%s2966 + $0x22c] sm:$0xf]
        %v4740 = vld [vmem:[%s2966 + $0x230] sm:$0xf]
        %v4741 = vld [vmem:[%s2966 + $0x234] sm:$0xf]
        %v4742 = vld [vmem:[%s2966 + $0x238] sm:$0xf]
        %v4743 = vld [vmem:[%s2966 + $0x23c] sm:$0xf]
        %v4744 = vld [vmem:[%s2966 + $0x240] sm:$0xf]
        %v4745 = vld [vmem:[%s2966 + $0x244] sm:$0xf]
        %v4746 = vld [vmem:[%s2966 + $0x248] sm:$0xf]
        %v4747 = vld [vmem:[%s2966 + $0x24c] sm:$0xf]
        %v4748 = vld [vmem:[%s2966 + $0x250] sm:$0xf]
        %v4749 = vld [vmem:[%s2966 + $0x254] sm:$0xf]
        %v4750 = vld [vmem:[%s2966 + $0x258] sm:$0xf]
        %v4751 = vld [vmem:[%s2966 + $0x25c] sm:$0xf]
        %v4752 = vld [vmem:[%s2966 + $0x260] sm:$0xf]
        %v4753 = vld [vmem:[%s2966 + $0x264] sm:$0xf]
        %v4754 = vld [vmem:[%s2966 + $0x268] sm:$0xf]
        %v4755 = vld [vmem:[%s2966 + $0x26c] sm:$0xf]
        %v4756 = vld [vmem:[%s2966 + $0x270] sm:$0xf]
        %v4757 = vld [vmem:[%s2966 + $0x274] sm:$0xf]
        %v4758 = vld [vmem:[%s2966 + $0x278] sm:$0xf]
        %v4759 = vld [vmem:[%s2966 + $0x27c] sm:$0xf]
        %v4760 = vld [vmem:[%s2966 + $0x280] sm:$0xf]
        %v4761 = vld [vmem:[%s2966 + $0x284] sm:$0xf]
        %v4762 = vld [vmem:[%s2966 + $0x288] sm:$0xf]
        %v4763 = vld [vmem:[%s2966 + $0x28c] sm:$0xf]
        %v4764 = vld [vmem:[%s2966 + $0x290] sm:$0xf]
        %v4765 = vld [vmem:[%s2966 + $0x294] sm:$0xf]
        %v4766 = vld [vmem:[%s2966 + $0x298] sm:$0xf]
        %v4767 = vld [vmem:[%s2966 + $0x29c] sm:$0xf]
        %v4768 = vld [vmem:[%s2966 + $0x2a0] sm:$0xf]
        %v4769 = vld [vmem:[%s2966 + $0x2a4] sm:$0xf]
        %v4770 = vld [vmem:[%s2966 + $0x2a8] sm:$0xf]
        %v4771 = vld [vmem:[%s2966 + $0x2ac] sm:$0xf]
        %v4772 = vld [vmem:[%s2966 + $0x2b0] sm:$0xf]
        %v4773 = vld [vmem:[%s2966 + $0x2b4] sm:$0xf]
        %v4774 = vld [vmem:[%s2966 + $0x2b8] sm:$0xf]
        %v4775 = vld [vmem:[%s2966 + $0x2bc] sm:$0xf]
        %v4776 = vld [vmem:[%s2966 + $0x2c0] sm:$0xf]
        %v4777 = vld [vmem:[%s2966 + $0x2c4] sm:$0xf]
        %v4778 = vld [vmem:[%s2966 + $0x2c8] sm:$0xf]
        %v4779 = vld [vmem:[%s2966 + $0x2cc] sm:$0xf]
        %v4780 = vld [vmem:[%s2966 + $0x2d0] sm:$0xf]
        %v4781 = vld [vmem:[%s2966 + $0x2d4] sm:$0xf]
        %v4782 = vld [vmem:[%s2966 + $0x2d8] sm:$0xf]
        %v4783 = vld [vmem:[%s2966 + $0x2dc] sm:$0xf]
        %v4784 = vld [vmem:[%s2966 + $0x2e0] sm:$0xf]
        %v4785 = vld [vmem:[%s2966 + $0x2e4] sm:$0xf]
        %v4786 = vld [vmem:[%s2966 + $0x2e8] sm:$0xf]
        %v4787 = vld [vmem:[%s2966 + $0x2ec] sm:$0xf]
        %v4788 = vld [vmem:[%s2966 + $0x2f0] sm:$0xf]
        %v4789 = vld [vmem:[%s2966 + $0x2f4] sm:$0xf]
        %v4790 = vld [vmem:[%s2966 + $0x2f8] sm:$0xf]
        %v4791 = vld [vmem:[%s2966 + $0x2fc] sm:$0xf]
        %v4792 = vld [vmem:[%s2966 + $0x300] sm:$0xf]
        %v4793 = vld [vmem:[%s2966 + $0x304] sm:$0xf]
        %v4794 = vld [vmem:[%s2966 + $0x308] sm:$0xf]
        %v4795 = vld [vmem:[%s2966 + $0x30c] sm:$0xf]
        %v4796 = vld [vmem:[%s2966 + $0x310] sm:$0xf]
        %v4797 = vld [vmem:[%s2966 + $0x314] sm:$0xf]
        %v4798 = vld [vmem:[%s2966 + $0x318] sm:$0xf]
        %v4799 = vld [vmem:[%s2966 + $0x31c] sm:$0xf]
        %v4800 = vld [vmem:[%s2966 + $0x320] sm:$0xf]
        %v4801 = vld [vmem:[%s2966 + $0x324] sm:$0xf]
        %v4802 = vld [vmem:[%s2966 + $0x328] sm:$0xf]
        %v4803 = vld [vmem:[%s2966 + $0x32c] sm:$0xf]
        %v4804 = vld [vmem:[%s2966 + $0x330] sm:$0xf]
        %v4805 = vld [vmem:[%s2966 + $0x334] sm:$0xf]
        %v4806 = vld [vmem:[%s2966 + $0x338] sm:$0xf]
        %v4807 = vld [vmem:[%s2966 + $0x33c] sm:$0xf]
        %v4808 = vld [vmem:[%s2966 + $0x340] sm:$0xf]
        %v4809 = vld [vmem:[%s2966 + $0x344] sm:$0xf]
        %v4810 = vld [vmem:[%s2966 + $0x348] sm:$0xf]
        %v4811 = vld [vmem:[%s2966 + $0x34c] sm:$0xf]
        %v4812 = vld [vmem:[%s2966 + $0x350] sm:$0xf]
        %v4813 = vld [vmem:[%s2966 + $0x354] sm:$0xf]
        %v4814 = vld [vmem:[%s2966 + $0x358] sm:$0xf]
        %v4815 = vld [vmem:[%s2966 + $0x35c] sm:$0xf]
        %v4816 = vld [vmem:[%s2966 + $0x360] sm:$0xf]
        %v4817 = vld [vmem:[%s2966 + $0x364] sm:$0xf]
        %v4818 = vld [vmem:[%s2966 + $0x368] sm:$0xf]
        %v4819 = vld [vmem:[%s2966 + $0x36c] sm:$0xf]
        %v4820 = vld [vmem:[%s2966 + $0x370] sm:$0xf]
        %v4821 = vld [vmem:[%s2966 + $0x374] sm:$0xf]
        %v4822 = vld [vmem:[%s2966 + $0x378] sm:$0xf]
        %v4823 = vld [vmem:[%s2966 + $0x37c] sm:$0xf]
        %v4824 = vld [vmem:[%s2966 + $0x380] sm:$0xf]
        %v4825 = vld [vmem:[%s2966 + $0x384] sm:$0xf]
        %v4826 = vld [vmem:[%s2966 + $0x388] sm:$0xf]
        %v4827 = vld [vmem:[%s2966 + $0x38c] sm:$0xf]
        %v4828 = vld [vmem:[%s2966 + $0x390] sm:$0xf]
        %v4829 = vld [vmem:[%s2966 + $0x394] sm:$0xf]
        %v4830 = vld [vmem:[%s2966 + $0x398] sm:$0xf]
        %v4831 = vld [vmem:[%s2966 + $0x39c] sm:$0xf]
        %v4832 = vld [vmem:[%s2966 + $0x3a0] sm:$0xf]
        %v4833 = vld [vmem:[%s2966 + $0x3a4] sm:$0xf]
        %v4834 = vld [vmem:[%s2966 + $0x3a8] sm:$0xf]
        %v4835 = vld [vmem:[%s2966 + $0x3ac] sm:$0xf]
        %v4836 = vld [vmem:[%s2966 + $0x3b0] sm:$0xf]
        %v4837 = vld [vmem:[%s2966 + $0x3b4] sm:$0xf]
        %v4838 = vld [vmem:[%s2966 + $0x3b8] sm:$0xf]
        %v4839 = vld [vmem:[%s2966 + $0x3bc] sm:$0xf]
        %v4840 = vld [vmem:[%s2966 + $0x3c0] sm:$0xf]
        %v4841 = vld [vmem:[%s2966 + $0x3c4] sm:$0xf]
        %v4842 = vld [vmem:[%s2966 + $0x3c8] sm:$0xf]
        %v4843 = vld [vmem:[%s2966 + $0x3cc] sm:$0xf]
        %v4844 = vld [vmem:[%s2966 + $0x3d0] sm:$0xf]
        %v4845 = vld [vmem:[%s2966 + $0x3d4] sm:$0xf]
        %v4846 = vld [vmem:[%s2966 + $0x3d8] sm:$0xf]
        %v4847 = vld [vmem:[%s2966 + $0x3dc] sm:$0xf]
        %v4848 = vld [vmem:[%s2966 + $0x3e0] sm:$0xf]
        %v4849 = vld [vmem:[%s2966 + $0x3e4] sm:$0xf]
        %v4850 = vld [vmem:[%s2966 + $0x3e8] sm:$0xf]
        %v4851 = vld [vmem:[%s2966 + $0x3ec] sm:$0xf]
        %v4852 = vld [vmem:[%s2966 + $0x3f0] sm:$0xf]
        %v4853 = vld [vmem:[%s2966 + $0x3f4] sm:$0xf]
        %v4854 = vld [vmem:[%s2966 + $0x3f8] sm:$0xf]
        %v4855 = vld [vmem:[%s2966 + $0x3fc] sm:$0xf]
        %v4856 = vld [vmem:[%s2966 + $0x400] sm:$0xf]
        %v4857 = vld [vmem:[%s2966 + $0x404] sm:$0xf]
        %v4858 = vld [vmem:[%s2966 + $0x408] sm:$0xf]
        %v4859 = vld [vmem:[%s2966 + $0x40c] sm:$0xf]
        %v4860 = vld [vmem:[%s2966 + $0x410] sm:$0xf]
        %v4861 = vld [vmem:[%s2966 + $0x414] sm:$0xf]
        %v4862 = vld [vmem:[%s2966 + $0x418] sm:$0xf]
        %v4863 = vld [vmem:[%s2966 + $0x41c] sm:$0xf]
        %v4864 = vld [vmem:[%s2966 + $0x420] sm:$0xf]
        %v4865 = vld [vmem:[%s2966 + $0x424] sm:$0xf]
        %v4866 = vld [vmem:[%s2966 + $0x428] sm:$0xf]
        %v4867 = vld [vmem:[%s2966 + $0x42c] sm:$0xf]
        %v4868 = vld [vmem:[%s2966 + $0x430] sm:$0xf]
        %v4869 = vld [vmem:[%s2966 + $0x434] sm:$0xf]
        %v4870 = vld [vmem:[%s2966 + $0x438] sm:$0xf]
        %v4871 = vld [vmem:[%s2966 + $0x43c] sm:$0xf]
        %v4872 = vld [vmem:[%s2966 + $0x440] sm:$0xf]
        %v4873 = vld [vmem:[%s2966 + $0x444] sm:$0xf]
        %v4874 = vld [vmem:[%s2966 + $0x448] sm:$0xf]
        %v4875 = vld [vmem:[%s2966 + $0x44c] sm:$0xf]
        %v4876 = vld [vmem:[%s2966 + $0x450] sm:$0xf]
        %v4877 = vld [vmem:[%s2966 + $0x454] sm:$0xf]
        %v4878 = vld [vmem:[%s2966 + $0x458] sm:$0xf]
        %v4879 = vld [vmem:[%s2966 + $0x45c] sm:$0xf]
        %v4880 = vld [vmem:[%s2966 + $0x460] sm:$0xf]
        %v4881 = vld [vmem:[%s2966 + $0x464] sm:$0xf]
        %v4882 = vld [vmem:[%s2966 + $0x468] sm:$0xf]
        %v4883 = vld [vmem:[%s2966 + $0x46c] sm:$0xf]
        %v4884 = vld [vmem:[%s2966 + $0x470] sm:$0xf]
        %v4885 = vld [vmem:[%s2966 + $0x474] sm:$0xf]
        %v4886 = vld [vmem:[%s2966 + $0x478] sm:$0xf]
        %v4887 = vld [vmem:[%s2966 + $0x47c] sm:$0xf]
        %v4888 = vld [vmem:[%s2966 + $0x480] sm:$0xf]
        %v4889 = vld [vmem:[%s2966 + $0x484] sm:$0xf]
        %v4890 = vld [vmem:[%s2966 + $0x488] sm:$0xf]
        %v4891 = vld [vmem:[%s2966 + $0x48c] sm:$0xf]
        %v4892 = vld [vmem:[%s2966 + $0x490] sm:$0xf]
        %v4893 = vld [vmem:[%s2966 + $0x494] sm:$0xf]
        %v4894 = vld [vmem:[%s2966 + $0x498] sm:$0xf]
        %v4895 = vld [vmem:[%s2966 + $0x49c] sm:$0xf]
        %v4896 = vld [vmem:[%s2966 + $0x4a0] sm:$0xf]
        %v4897 = vld [vmem:[%s2966 + $0x4a4] sm:$0xf]
        %v4898 = vld [vmem:[%s2966 + $0x4a8] sm:$0xf]
        %v4899 = vld [vmem:[%s2966 + $0x4ac] sm:$0xf]
        %v4900 = vld [vmem:[%s2966 + $0x4b0] sm:$0xf]
        %v4901 = vld [vmem:[%s2966 + $0x4b4] sm:$0xf]
        %v4902 = vld [vmem:[%s2966 + $0x4b8] sm:$0xf]
        %v4903 = vld [vmem:[%s2966 + $0x4bc] sm:$0xf]
        %v4904 = vld [vmem:[%s2966 + $0x4c0] sm:$0xf]
        %v4905 = vld [vmem:[%s2966 + $0x4c4] sm:$0xf]
        %v4906 = vld [vmem:[%s2966 + $0x4c8] sm:$0xf]
        %v4907 = vld [vmem:[%s2966 + $0x4cc] sm:$0xf]
        %v4908 = vld [vmem:[%s2966 + $0x4d0] sm:$0xf]
        %v4909 = vld [vmem:[%s2966 + $0x4d4] sm:$0xf]
        %v4910 = vld [vmem:[%s2966 + $0x4d8] sm:$0xf]
        %v4911 = vld [vmem:[%s2966 + $0x4dc] sm:$0xf]
        %v4912 = vld [vmem:[%s2966 + $0x4e0] sm:$0xf]
        %v4913 = vld [vmem:[%s2966 + $0x4e4] sm:$0xf]
        %v4914 = vld [vmem:[%s2966 + $0x4e8] sm:$0xf]
        %v4915 = vld [vmem:[%s2966 + $0x4ec] sm:$0xf]
        %v4916 = vld [vmem:[%s2966 + $0x4f0] sm:$0xf]
        %v4917 = vld [vmem:[%s2966 + $0x4f4] sm:$0xf]
        %v4918 = vld [vmem:[%s2966 + $0x4f8] sm:$0xf]
        %v4919 = vld [vmem:[%s2966 + $0x4fc] sm:$0xf]
        %v4920 = vld [vmem:[%s2966 + $0x500] sm:$0xf]
        %v4921 = vld [vmem:[%s2966 + $0x504] sm:$0xf]
        %v4922 = vld [vmem:[%s2966 + $0x508] sm:$0xf]
        %v4923 = vld [vmem:[%s2966 + $0x50c] sm:$0xf]
        %v4924 = vld [vmem:[%s3004] sm:$0x1]
        %v4926 = vperm.slane %v4924, 0
        %v5252 = vunpack.c.l.b16 %v4600
        %v5253 = vunpack.c.l.b16 %v4601
        %v5254 = vunpack.c.l.b16 %v4602
        %v5255 = vunpack.c.l.b16 %v4603
        %v5256 = vunpack.c.l.b16 %v4604
        %v5257 = vunpack.c.l.b16 %v4605
        %v5258 = vunpack.c.l.b16 %v4606
        %v5259 = vunpack.c.l.b16 %v4607
        %v5260 = vunpack.c.l.b16 %v4608
        %v5261 = vunpack.c.l.b16 %v4609
        %v5262 = vunpack.c.l.b16 %v4610
        %v5263 = vunpack.c.l.b16 %v4611
        %v5264 = vunpack.c.l.b16 %v4612
        %v5265 = vunpack.c.l.b16 %v4613
        %v5266 = vunpack.c.l.b16 %v4614
        %v5267 = vunpack.c.l.b16 %v4615
        %v5268 = vunpack.c.l.b16 %v4616
        %v5269 = vunpack.c.l.b16 %v4617
        %v5270 = vunpack.c.l.b16 %v4618
        %v5271 = vunpack.c.l.b16 %v4619
        %v5272 = vunpack.c.l.b16 %v4620
        %v5273 = vunpack.c.l.b16 %v4621
        %v5274 = vunpack.c.l.b16 %v4622
        %v5275 = vunpack.c.l.b16 %v4623
        %v5276 = vunpack.c.l.b16 %v4624
        %v5277 = vunpack.c.l.b16 %v4625
        %v5278 = vunpack.c.l.b16 %v4626
        %v5279 = vunpack.c.l.b16 %v4627
        %v5280 = vunpack.c.l.b16 %v4628
        %v5281 = vunpack.c.l.b16 %v4629
        %v5282 = vunpack.c.l.b16 %v4630
        %v5283 = vunpack.c.l.b16 %v4631
        %v5284 = vunpack.c.l.b16 %v4632
        %v5285 = vunpack.c.l.b16 %v4633
        %v5286 = vunpack.c.l.b16 %v4634
        %v5287 = vunpack.c.l.b16 %v4635
        %v5288 = vunpack.c.l.b16 %v4636
        %v5289 = vunpack.c.l.b16 %v4637
        %v5290 = vunpack.c.l.b16 %v4638
        %v5291 = vunpack.c.l.b16 %v4639
        %v5292 = vunpack.c.l.b16 %v4640
        %v5293 = vunpack.c.l.b16 %v4641
        %v5294 = vunpack.c.l.b16 %v4642
        %v5295 = vunpack.c.l.b16 %v4643
        %v5296 = vunpack.c.l.b16 %v4644
        %v5297 = vunpack.c.l.b16 %v4645
        %v5298 = vunpack.c.l.b16 %v4646
        %v5299 = vunpack.c.l.b16 %v4647
        %v5300 = vunpack.c.l.b16 %v4648
        %v5301 = vunpack.c.l.b16 %v4649
        %v5302 = vunpack.c.l.b16 %v4650
        %v5303 = vunpack.c.l.b16 %v4651
        %v5304 = vunpack.c.l.b16 %v4652
        %v5305 = vunpack.c.l.b16 %v4653
        %v5306 = vunpack.c.l.b16 %v4654
        %v5307 = vunpack.c.l.b16 %v4655
        %v5308 = vunpack.c.l.b16 %v4656
        %v5309 = vunpack.c.l.b16 %v4657
        %v5310 = vunpack.c.l.b16 %v4658
        %v5311 = vunpack.c.l.b16 %v4659
        %v5312 = vunpack.c.l.b16 %v4660
        %v5313 = vunpack.c.l.b16 %v4661
        %v5314 = vunpack.c.l.b16 %v4662
        %v5315 = vunpack.c.l.b16 %v4663
        %v5316 = vunpack.c.l.b16 %v4664
        %v5317 = vunpack.c.l.b16 %v4665
        %v5318 = vunpack.c.l.b16 %v4666
        %v5319 = vunpack.c.l.b16 %v4667
        %v5320 = vunpack.c.l.b16 %v4668
        %v5321 = vunpack.c.l.b16 %v4669
        %v5322 = vunpack.c.l.b16 %v4670
        %v5323 = vunpack.c.l.b16 %v4671
        %v5324 = vunpack.c.l.b16 %v4672
        %v5325 = vunpack.c.l.b16 %v4673
        %v5326 = vunpack.c.l.b16 %v4674
        %v5327 = vunpack.c.l.b16 %v4675
        %v5328 = vunpack.c.l.b16 %v4676
        %v5329 = vunpack.c.l.b16 %v4677
        %v5330 = vunpack.c.l.b16 %v4678
        %v5331 = vunpack.c.l.b16 %v4679
        %v5332 = vunpack.c.l.b16 %v4680
        %v5333 = vunpack.c.l.b16 %v4681
        %v5334 = vunpack.c.l.b16 %v4682
        %v5335 = vunpack.c.l.b16 %v4683
        %v5336 = vunpack.c.l.b16 %v4684
        %v5337 = vunpack.c.l.b16 %v4685
        %v5338 = vunpack.c.l.b16 %v4686
        %v5339 = vunpack.c.l.b16 %v4687
        %v5340 = vunpack.c.l.b16 %v4688
        %v5341 = vunpack.c.l.b16 %v4689
        %v5342 = vunpack.c.l.b16 %v4690
        %v5343 = vunpack.c.l.b16 %v4691
        %v5344 = vunpack.c.l.b16 %v4692
        %v5345 = vunpack.c.l.b16 %v4693
        %v5346 = vunpack.c.l.b16 %v4694
        %v5347 = vunpack.c.l.b16 %v4695
        %v5348 = vunpack.c.l.b16 %v4696
        %v5349 = vunpack.c.l.b16 %v4697
        %v5350 = vunpack.c.l.b16 %v4698
        %v5351 = vunpack.c.l.b16 %v4699
        %v5352 = vunpack.c.l.b16 %v4700
        %v5353 = vunpack.c.l.b16 %v4701
        %v5354 = vunpack.c.l.b16 %v4702
        %v5355 = vunpack.c.l.b16 %v4703
        %v5356 = vunpack.c.l.b16 %v4704
        %v5357 = vunpack.c.l.b16 %v4705
        %v5358 = vunpack.c.l.b16 %v4706
        %v5359 = vunpack.c.l.b16 %v4707
        %v5360 = vunpack.c.l.b16 %v4708
        %v5361 = vunpack.c.l.b16 %v4709
        %v5362 = vunpack.c.l.b16 %v4710
        %v5363 = vunpack.c.l.b16 %v4711
        %v5364 = vunpack.c.l.b16 %v4712
        %v5365 = vunpack.c.l.b16 %v4713
        %v5366 = vunpack.c.l.b16 %v4714
        %v5367 = vunpack.c.l.b16 %v4715
        %v5368 = vunpack.c.l.b16 %v4716
        %v5369 = vunpack.c.l.b16 %v4717
        %v5370 = vunpack.c.l.b16 %v4718
        %v5371 = vunpack.c.l.b16 %v4719
        %v5372 = vunpack.c.l.b16 %v4720
        %v5373 = vunpack.c.l.b16 %v4721
        %v5374 = vunpack.c.l.b16 %v4722
        %v5375 = vunpack.c.l.b16 %v4723
        %v5376 = vunpack.c.l.b16 %v4724
        %v5377 = vunpack.c.l.b16 %v4725
        %v5378 = vunpack.c.l.b16 %v4726
        %v5379 = vunpack.c.l.b16 %v4727
        %v5380 = vunpack.c.l.b16 %v4728
        %v5381 = vunpack.c.l.b16 %v4729
        %v5382 = vunpack.c.l.b16 %v4730
        %v5383 = vunpack.c.l.b16 %v4731
        %v5384 = vunpack.c.l.b16 %v4732
        %v5385 = vunpack.c.l.b16 %v4733
        %v5386 = vunpack.c.l.b16 %v4734
        %v5387 = vunpack.c.l.b16 %v4735
        %v5388 = vunpack.c.l.b16 %v4736
        %v5389 = vunpack.c.l.b16 %v4737
        %v5390 = vunpack.c.l.b16 %v4738
        %v5391 = vunpack.c.l.b16 %v4739
        %v5392 = vunpack.c.l.b16 %v4740
        %v5393 = vunpack.c.l.b16 %v4741
        %v5394 = vunpack.c.l.b16 %v4742
        %v5395 = vunpack.c.l.b16 %v4743
        %v5396 = vunpack.c.l.b16 %v4744
        %v5397 = vunpack.c.l.b16 %v4745
        %v5398 = vunpack.c.l.b16 %v4746
        %v5399 = vunpack.c.l.b16 %v4747
        %v5400 = vunpack.c.l.b16 %v4748
        %v5401 = vunpack.c.l.b16 %v4749
        %v5402 = vunpack.c.l.b16 %v4750
        %v5403 = vunpack.c.l.b16 %v4751
        %v5404 = vunpack.c.l.b16 %v4752
        %v5405 = vunpack.c.l.b16 %v4753
        %v5406 = vunpack.c.l.b16 %v4754
        %v5407 = vunpack.c.l.b16 %v4755
        %v5408 = vunpack.c.l.b16 %v4756
        %v5409 = vunpack.c.l.b16 %v4757
        %v5410 = vunpack.c.l.b16 %v4758
        %v5411 = vunpack.c.l.b16 %v4759
        %v5412 = vunpack.c.l.b16 %v4760
        %v5413 = vunpack.c.l.b16 %v4761
        %v5414 = vunpack.c.l.b16 %v4762
        %v5415 = vunpack.c.l.b16 %v4763
        %v5416 = vunpack.c.l.b16 %v4764
        %v5417 = vunpack.c.l.b16 %v4765
        %v5418 = vunpack.c.l.b16 %v4766
        %v5419 = vunpack.c.l.b16 %v4767
        %v5420 = vunpack.c.l.b16 %v4768
        %v5421 = vunpack.c.l.b16 %v4769
        %v5422 = vunpack.c.l.b16 %v4770
        %v5423 = vunpack.c.l.b16 %v4771
        %v5424 = vunpack.c.l.b16 %v4772
        %v5425 = vunpack.c.l.b16 %v4773
        %v5426 = vunpack.c.l.b16 %v4774
        %v5427 = vunpack.c.l.b16 %v4775
        %v5428 = vunpack.c.l.b16 %v4776
        %v5429 = vunpack.c.l.b16 %v4777
        %v5430 = vunpack.c.l.b16 %v4778
        %v5431 = vunpack.c.l.b16 %v4779
        %v5432 = vunpack.c.l.b16 %v4780
        %v5433 = vunpack.c.l.b16 %v4781
        %v5434 = vunpack.c.l.b16 %v4782
        %v5435 = vunpack.c.l.b16 %v4783
        %v5436 = vunpack.c.l.b16 %v4784
        %v5437 = vunpack.c.l.b16 %v4785
        %v5438 = vunpack.c.l.b16 %v4786
        %v5439 = vunpack.c.l.b16 %v4787
        %v5440 = vunpack.c.l.b16 %v4788
        %v5441 = vunpack.c.l.b16 %v4789
        %v5442 = vunpack.c.l.b16 %v4790
        %v5443 = vunpack.c.l.b16 %v4791
        %v5444 = vunpack.c.l.b16 %v4792
        %v5445 = vunpack.c.l.b16 %v4793
        %v5446 = vunpack.c.l.b16 %v4794
        %v5447 = vunpack.c.l.b16 %v4795
        %v5448 = vunpack.c.l.b16 %v4796
        %v5449 = vunpack.c.l.b16 %v4797
        %v5450 = vunpack.c.l.b16 %v4798
        %v5451 = vunpack.c.l.b16 %v4799
        %v5452 = vunpack.c.l.b16 %v4800
        %v5453 = vunpack.c.l.b16 %v4801
        %v5454 = vunpack.c.l.b16 %v4802
        %v5455 = vunpack.c.l.b16 %v4803
        %v5456 = vunpack.c.l.b16 %v4804
        %v5457 = vunpack.c.l.b16 %v4805
        %v5458 = vunpack.c.l.b16 %v4806
        %v5459 = vunpack.c.l.b16 %v4807
        %v5460 = vunpack.c.l.b16 %v4808
        %v5461 = vunpack.c.l.b16 %v4809
        %v5462 = vunpack.c.l.b16 %v4810
        %v5463 = vunpack.c.l.b16 %v4811
        %v5464 = vunpack.c.l.b16 %v4812
        %v5465 = vunpack.c.l.b16 %v4813
        %v5466 = vunpack.c.l.b16 %v4814
        %v5467 = vunpack.c.l.b16 %v4815
        %v5468 = vunpack.c.l.b16 %v4816
        %v5469 = vunpack.c.l.b16 %v4817
        %v5470 = vunpack.c.l.b16 %v4818
        %v5471 = vunpack.c.l.b16 %v4819
        %v5472 = vunpack.c.l.b16 %v4820
        %v5473 = vunpack.c.l.b16 %v4821
        %v5474 = vunpack.c.l.b16 %v4822
        %v5475 = vunpack.c.l.b16 %v4823
        %v5476 = vunpack.c.l.b16 %v4824
        %v5477 = vunpack.c.l.b16 %v4825
        %v5478 = vunpack.c.l.b16 %v4826
        %v5479 = vunpack.c.l.b16 %v4827
        %v5480 = vunpack.c.l.b16 %v4828
        %v5481 = vunpack.c.l.b16 %v4829
        %v5482 = vunpack.c.l.b16 %v4830
        %v5483 = vunpack.c.l.b16 %v4831
        %v5484 = vunpack.c.l.b16 %v4832
        %v5485 = vunpack.c.l.b16 %v4833
        %v5486 = vunpack.c.l.b16 %v4834
        %v5487 = vunpack.c.l.b16 %v4835
        %v5488 = vunpack.c.l.b16 %v4836
        %v5489 = vunpack.c.l.b16 %v4837
        %v5490 = vunpack.c.l.b16 %v4838
        %v5491 = vunpack.c.l.b16 %v4839
        %v5492 = vunpack.c.l.b16 %v4840
        %v5493 = vunpack.c.l.b16 %v4841
        %v5494 = vunpack.c.l.b16 %v4842
        %v5495 = vunpack.c.l.b16 %v4843
        %v5496 = vunpack.c.l.b16 %v4844
        %v5497 = vunpack.c.l.b16 %v4845
        %v5498 = vunpack.c.l.b16 %v4846
        %v5499 = vunpack.c.l.b16 %v4847
        %v5500 = vunpack.c.l.b16 %v4848
        %v5501 = vunpack.c.l.b16 %v4849
        %v5502 = vunpack.c.l.b16 %v4850
        %v5503 = vunpack.c.l.b16 %v4851
        %v5504 = vunpack.c.l.b16 %v4852
        %v5505 = vunpack.c.l.b16 %v4853
        %v5506 = vunpack.c.l.b16 %v4854
        %v5507 = vunpack.c.l.b16 %v4855
        %v5508 = vunpack.c.l.b16 %v4856
        %v5509 = vunpack.c.l.b16 %v4857
        %v5510 = vunpack.c.l.b16 %v4858
        %v5511 = vunpack.c.l.b16 %v4859
        %v5512 = vunpack.c.l.b16 %v4860
        %v5513 = vunpack.c.l.b16 %v4861
        %v5514 = vunpack.c.l.b16 %v4862
        %v5515 = vunpack.c.l.b16 %v4863
        %v5516 = vunpack.c.l.b16 %v4864
        %v5517 = vunpack.c.l.b16 %v4865
        %v5518 = vunpack.c.l.b16 %v4866
        %v5519 = vunpack.c.l.b16 %v4867
        %v5520 = vunpack.c.l.b16 %v4868
        %v5521 = vunpack.c.l.b16 %v4869
        %v5522 = vunpack.c.l.b16 %v4870
        %v5523 = vunpack.c.l.b16 %v4871
        %v5524 = vunpack.c.l.b16 %v4872
        %v5525 = vunpack.c.l.b16 %v4873
        %v5526 = vunpack.c.l.b16 %v4874
        %v5527 = vunpack.c.l.b16 %v4875
        %v5528 = vunpack.c.l.b16 %v4876
        %v5529 = vunpack.c.l.b16 %v4877
        %v5530 = vunpack.c.l.b16 %v4878
        %v5531 = vunpack.c.l.b16 %v4879
        %v5532 = vunpack.c.l.b16 %v4880
        %v5533 = vunpack.c.l.b16 %v4881
        %v5534 = vunpack.c.l.b16 %v4882
        %v5535 = vunpack.c.l.b16 %v4883
        %v5536 = vunpack.c.l.b16 %v4884
        %v5537 = vunpack.c.l.b16 %v4885
        %v5538 = vunpack.c.l.b16 %v4886
        %v5539 = vunpack.c.l.b16 %v4887
        %v5540 = vunpack.c.l.b16 %v4888
        %v5541 = vunpack.c.l.b16 %v4889
        %v5542 = vunpack.c.l.b16 %v4890
        %v5543 = vunpack.c.l.b16 %v4891
        %v5544 = vunpack.c.l.b16 %v4892
        %v5545 = vunpack.c.l.b16 %v4893
        %v5546 = vunpack.c.l.b16 %v4894
        %v5547 = vunpack.c.l.b16 %v4895
        %v5548 = vunpack.c.l.b16 %v4896
        %v5549 = vunpack.c.l.b16 %v4897
        %v5550 = vunpack.c.l.b16 %v4898
        %v5551 = vunpack.c.l.b16 %v4899
        %v5552 = vunpack.c.l.b16 %v4900
        %v5553 = vunpack.c.l.b16 %v4901
        %v5554 = vunpack.c.l.b16 %v4902
        %v5555 = vunpack.c.l.b16 %v4903
        %v5556 = vunpack.c.l.b16 %v4904
        %v5557 = vunpack.c.l.b16 %v4905
        %v5558 = vunpack.c.l.b16 %v4906
        %v5559 = vunpack.c.l.b16 %v4907
        %v5560 = vunpack.c.l.b16 %v4908
        %v5561 = vunpack.c.l.b16 %v4909
        %v5562 = vunpack.c.l.b16 %v4910
        %v5563 = vunpack.c.l.b16 %v4911
        %v5564 = vunpack.c.l.b16 %v4912
        %v5565 = vunpack.c.l.b16 %v4913
        %v5566 = vunpack.c.l.b16 %v4914
        %v5567 = vunpack.c.l.b16 %v4915
        %v5568 = vunpack.c.l.b16 %v4916
        %v5569 = vunpack.c.l.b16 %v4917
        %v5570 = vunpack.c.l.b16 %v4918
        %v5571 = vunpack.c.l.b16 %v4919
        %v5572 = vunpack.c.l.b16 %v4920
        %v5573 = vunpack.c.l.b16 %v4921
        %v5574 = vunpack.c.l.b16 %v4922
        %v5575 = vunpack.c.l.b16 %v4923
        %v5576 = vpack.c.b16 %v5253, %v5252
        %v5577 = vpack.c.b16 %v5255, %v5254
        %v5578 = vpack.c.b16 %v5257, %v5256
        %v5579 = vpack.c.b16 %v5259, %v5258
        %v5580 = vpack.c.b16 %v5261, %v5260
        %v5581 = vpack.c.b16 %v5263, %v5262
        %v5582 = vpack.c.b16 %v5265, %v5264
        %v5583 = vpack.c.b16 %v5267, %v5266
        %v5584 = vpack.c.b16 %v5269, %v5268
        %v5585 = vpack.c.b16 %v5271, %v5270
        %v5586 = vpack.c.b16 %v5273, %v5272
        %v5587 = vpack.c.b16 %v5275, %v5274
        %v5588 = vpack.c.b16 %v5277, %v5276
        %v5589 = vpack.c.b16 %v5279, %v5278
        %v5590 = vpack.c.b16 %v5281, %v5280
        %v5591 = vpack.c.b16 %v5283, %v5282
        %v5592 = vpack.c.b16 %v5285, %v5284
        %v5593 = vpack.c.b16 %v5287, %v5286
        %v5594 = vpack.c.b16 %v5289, %v5288
        %v5595 = vpack.c.b16 %v5291, %v5290
        %v5596 = vpack.c.b16 %v5293, %v5292
        %v5597 = vpack.c.b16 %v5295, %v5294
        %v5598 = vpack.c.b16 %v5297, %v5296
        %v5599 = vpack.c.b16 %v5299, %v5298
        %v5600 = vpack.c.b16 %v5301, %v5300
        %v5601 = vpack.c.b16 %v5303, %v5302
        %v5602 = vpack.c.b16 %v5305, %v5304
        %v5603 = vpack.c.b16 %v5307, %v5306
        %v5604 = vpack.c.b16 %v5309, %v5308
        %v5605 = vpack.c.b16 %v5311, %v5310
        %v5606 = vpack.c.b16 %v5313, %v5312
        %v5607 = vpack.c.b16 %v5315, %v5314
        %v5608 = vpack.c.b16 %v5317, %v5316
        %v5609 = vpack.c.b16 %v5319, %v5318
        %v5610 = vpack.c.b16 %v5321, %v5320
        %v5611 = vpack.c.b16 %v5323, %v5322
        %v5612 = vpack.c.b16 %v5325, %v5324
        %v5613 = vpack.c.b16 %v5327, %v5326
        %v5614 = vpack.c.b16 %v5329, %v5328
        %v5615 = vpack.c.b16 %v5331, %v5330
        %v5616 = vpack.c.b16 %v5333, %v5332
        %v5617 = vpack.c.b16 %v5335, %v5334
        %v5618 = vpack.c.b16 %v5337, %v5336
        %v5619 = vpack.c.b16 %v5339, %v5338
        %v5620 = vpack.c.b16 %v5341, %v5340
        %v5621 = vpack.c.b16 %v5343, %v5342
        %v5622 = vpack.c.b16 %v5345, %v5344
        %v5623 = vpack.c.b16 %v5347, %v5346
        %v5624 = vpack.c.b16 %v5349, %v5348
        %v5625 = vpack.c.b16 %v5351, %v5350
        %v5626 = vpack.c.b16 %v5353, %v5352
        %v5627 = vpack.c.b16 %v5355, %v5354
        %v5628 = vpack.c.b16 %v5357, %v5356
        %v5629 = vpack.c.b16 %v5359, %v5358
        %v5630 = vpack.c.b16 %v5361, %v5360
        %v5631 = vpack.c.b16 %v5363, %v5362
        %v5632 = vpack.c.b16 %v5365, %v5364
        %v5633 = vpack.c.b16 %v5367, %v5366
        %v5634 = vpack.c.b16 %v5369, %v5368
        %v5635 = vpack.c.b16 %v5371, %v5370
        %v5636 = vpack.c.b16 %v5373, %v5372
        %v5637 = vpack.c.b16 %v5375, %v5374
        %v5638 = vpack.c.b16 %v5377, %v5376
        %v5639 = vpack.c.b16 %v5379, %v5378
        %v5640 = vpack.c.b16 %v5381, %v5380
        %v5641 = vpack.c.b16 %v5383, %v5382
        %v5642 = vpack.c.b16 %v5385, %v5384
        %v5643 = vpack.c.b16 %v5387, %v5386
        %v5644 = vpack.c.b16 %v5389, %v5388
        %v5645 = vpack.c.b16 %v5391, %v5390
        %v5646 = vpack.c.b16 %v5393, %v5392
        %v5647 = vpack.c.b16 %v5395, %v5394
        %v5648 = vpack.c.b16 %v5397, %v5396
        %v5649 = vpack.c.b16 %v5399, %v5398
        %v5650 = vpack.c.b16 %v5401, %v5400
        %v5651 = vpack.c.b16 %v5403, %v5402
        %v5652 = vpack.c.b16 %v5405, %v5404
        %v5653 = vpack.c.b16 %v5407, %v5406
        %v5654 = vpack.c.b16 %v5409, %v5408
        %v5655 = vpack.c.b16 %v5411, %v5410
        %v5656 = vpack.c.b16 %v5413, %v5412
        %v5657 = vpack.c.b16 %v5415, %v5414
        %v5658 = vpack.c.b16 %v5417, %v5416
        %v5659 = vpack.c.b16 %v5419, %v5418
        %v5660 = vpack.c.b16 %v5421, %v5420
        %v5661 = vpack.c.b16 %v5423, %v5422
        %v5662 = vpack.c.b16 %v5425, %v5424
        %v5663 = vpack.c.b16 %v5427, %v5426
        %v5664 = vpack.c.b16 %v5429, %v5428
        %v5665 = vpack.c.b16 %v5431, %v5430
        %v5666 = vpack.c.b16 %v5433, %v5432
        %v5667 = vpack.c.b16 %v5435, %v5434
        %v5668 = vpack.c.b16 %v5437, %v5436
        %v5669 = vpack.c.b16 %v5439, %v5438
        %v5670 = vpack.c.b16 %v5441, %v5440
        %v5671 = vpack.c.b16 %v5443, %v5442
        %v5672 = vpack.c.b16 %v5445, %v5444
        %v5673 = vpack.c.b16 %v5447, %v5446
        %v5674 = vpack.c.b16 %v5449, %v5448
        %v5675 = vpack.c.b16 %v5451, %v5450
        %v5676 = vpack.c.b16 %v5453, %v5452
        %v5677 = vpack.c.b16 %v5455, %v5454
        %v5678 = vpack.c.b16 %v5457, %v5456
        %v5679 = vpack.c.b16 %v5459, %v5458
        %v5680 = vpack.c.b16 %v5461, %v5460
        %v5681 = vpack.c.b16 %v5463, %v5462
        %v5682 = vpack.c.b16 %v5465, %v5464
        %v5683 = vpack.c.b16 %v5467, %v5466
        %v5684 = vpack.c.b16 %v5469, %v5468
        %v5685 = vpack.c.b16 %v5471, %v5470
        %v5686 = vpack.c.b16 %v5473, %v5472
        %v5687 = vpack.c.b16 %v5475, %v5474
        %v5688 = vpack.c.b16 %v5477, %v5476
        %v5689 = vpack.c.b16 %v5479, %v5478
        %v5690 = vpack.c.b16 %v5481, %v5480
        %v5691 = vpack.c.b16 %v5483, %v5482
        %v5692 = vpack.c.b16 %v5485, %v5484
        %v5693 = vpack.c.b16 %v5487, %v5486
        %v5694 = vpack.c.b16 %v5489, %v5488
        %v5695 = vpack.c.b16 %v5491, %v5490
        %v5696 = vpack.c.b16 %v5493, %v5492
        %v5697 = vpack.c.b16 %v5495, %v5494
        %v5698 = vpack.c.b16 %v5497, %v5496
        %v5699 = vpack.c.b16 %v5499, %v5498
        %v5700 = vpack.c.b16 %v5501, %v5500
        %v5701 = vpack.c.b16 %v5503, %v5502
        %v5702 = vpack.c.b16 %v5505, %v5504
        %v5703 = vpack.c.b16 %v5507, %v5506
        %v5704 = vpack.c.b16 %v5509, %v5508
        %v5705 = vpack.c.b16 %v5511, %v5510
        %v5706 = vpack.c.b16 %v5513, %v5512
        %v5707 = vpack.c.b16 %v5515, %v5514
        %v5708 = vpack.c.b16 %v5517, %v5516
        %v5709 = vpack.c.b16 %v5519, %v5518
        %v5710 = vpack.c.b16 %v5521, %v5520
        %v5711 = vpack.c.b16 %v5523, %v5522
        %v5712 = vpack.c.b16 %v5525, %v5524
        %v5713 = vpack.c.b16 %v5527, %v5526
        %v5714 = vpack.c.b16 %v5529, %v5528
        %v5715 = vpack.c.b16 %v5531, %v5530
        %v5716 = vpack.c.b16 %v5533, %v5532
        %v5717 = vpack.c.b16 %v5535, %v5534
        %v5718 = vpack.c.b16 %v5537, %v5536
        %v5719 = vpack.c.b16 %v5539, %v5538
        %v5720 = vpack.c.b16 %v5541, %v5540
        %v5721 = vpack.c.b16 %v5543, %v5542
        %v5722 = vpack.c.b16 %v5545, %v5544
        %v5723 = vpack.c.b16 %v5547, %v5546
        %v5724 = vpack.c.b16 %v5549, %v5548
        %v5725 = vpack.c.b16 %v5551, %v5550
        %v5726 = vpack.c.b16 %v5553, %v5552
        %v5727 = vpack.c.b16 %v5555, %v5554
        %v5728 = vpack.c.b16 %v5557, %v5556
        %v5729 = vpack.c.b16 %v5559, %v5558
        %v5730 = vpack.c.b16 %v5561, %v5560
        %v5731 = vpack.c.b16 %v5563, %v5562
        %v5732 = vpack.c.b16 %v5565, %v5564
        %v5733 = vpack.c.b16 %v5567, %v5566
        %v5734 = vpack.c.b16 %v5569, %v5568
        %v5735 = vpack.c.b16 %v5571, %v5570
        %v5736 = vpack.c.b16 %v5573, %v5572
        %v5737 = vpack.c.b16 %v5575, %v5574
        %vm5900 = vcmask 261120
        %v5902 = vsel %vm5900, %v4599, 0
        %5904 = vmatpush.bf16.msra.mxu0 %v5583
        %5905 = vmatpush.bf16.msra.mxu0 %v5582
        %5906 = vmatpush.bf16.msra.mxu0 %v5581
        %5907 = vmatpush.bf16.msra.mxu0 %v5580
        %5908 = vmatpush.bf16.msra.mxu0 %v5579
        %5909 = vmatpush.bf16.msra.mxu0 %v5578
        %5910 = vmatpush.bf16.msra.mxu0 %v5577
        %5911 = vmatpush.bf16.msra.mxu0 %v5576
        %5912 = vmatmul.bf16.gmra.mxu0 %v4579
        %v5913 = vpop.f32.mrf.mxu0
        %v5914 = vadd.f32 %v4926, %v5913
        %v5915 = vpop.f32.mrf.mxu0
        %5916 = vdwg.mxu0
        %5917 = vmatpush.bf16.msra.mxu0 %v5591
        %5918 = vmatpush.bf16.msra.mxu0 %v5590
        %5919 = vmatpush.bf16.msra.mxu0 %v5589
        %5920 = vmatpush.bf16.msra.mxu0 %v5588
        %5921 = vmatpush.bf16.msra.mxu0 %v5587
        %5922 = vmatpush.bf16.msra.mxu0 %v5586
        %5923 = vmatpush.bf16.msra.mxu0 %v5585
        %5924 = vmatpush.bf16.msra.mxu0 %v5584
        %5925 = vmatmul.bf16.gmra.mxu0 %v4580
        %v5926 = vpop.f32.mrf.mxu0
        %v5927 = vadd.f32 %v5914, %v5926
        %v5928 = vpop.f32.mrf.mxu0
        %5929 = vdwg.mxu0
        %5930 = vmatpush.bf16.msra.mxu0 %v5599
        %5931 = vmatpush.bf16.msra.mxu0 %v5598
        %5932 = vmatpush.bf16.msra.mxu0 %v5597
        %5933 = vmatpush.bf16.msra.mxu0 %v5596
        %5934 = vmatpush.bf16.msra.mxu0 %v5595
        %5935 = vmatpush.bf16.msra.mxu0 %v5594
        %5936 = vmatpush.bf16.msra.mxu0 %v5593
        %5937 = vmatpush.bf16.msra.mxu0 %v5592
        %5938 = vmatmul.bf16.gmra.mxu0 %v4581
        %v5939 = vpop.f32.mrf.mxu0
        %v5940 = vadd.f32 %v5927, %v5939
        %v5941 = vpop.f32.mrf.mxu0
        %5942 = vdwg.mxu0
        %5943 = vmatpush.bf16.msra.mxu0 %v5607
        %5944 = vmatpush.bf16.msra.mxu0 %v5606
        %5945 = vmatpush.bf16.msra.mxu0 %v5605
        %5946 = vmatpush.bf16.msra.mxu0 %v5604
        %5947 = vmatpush.bf16.msra.mxu0 %v5603
        %5948 = vmatpush.bf16.msra.mxu0 %v5602
        %5949 = vmatpush.bf16.msra.mxu0 %v5601
        %5950 = vmatpush.bf16.msra.mxu0 %v5600
        %5951 = vmatmul.bf16.gmra.mxu0 %v4582
        %v5952 = vpop.f32.mrf.mxu0
        %v5953 = vadd.f32 %v5940, %v5952
        %v5954 = vpop.f32.mrf.mxu0
        %5955 = vdwg.mxu0
        %5956 = vmatpush.bf16.msra.mxu0 %v5615
        %5957 = vmatpush.bf16.msra.mxu0 %v5614
        %5958 = vmatpush.bf16.msra.mxu0 %v5613
        %5959 = vmatpush.bf16.msra.mxu0 %v5612
        %5960 = vmatpush.bf16.msra.mxu0 %v5611
        %5961 = vmatpush.bf16.msra.mxu0 %v5610
        %5962 = vmatpush.bf16.msra.mxu0 %v5609
        %5963 = vmatpush.bf16.msra.mxu0 %v5608
        %5964 = vmatmul.bf16.gmra.mxu0 %v4583
        %v5965 = vpop.f32.mrf.mxu0
        %v5966 = vadd.f32 %v5953, %v5965
        %v5967 = vpop.f32.mrf.mxu0
        %5968 = vdwg.mxu0
        %5969 = vmatpush.bf16.msra.mxu0 %v5623
        %5970 = vmatpush.bf16.msra.mxu0 %v5622
        %5971 = vmatpush.bf16.msra.mxu0 %v5621
        %5972 = vmatpush.bf16.msra.mxu0 %v5620
        %5973 = vmatpush.bf16.msra.mxu0 %v5619
        %5974 = vmatpush.bf16.msra.mxu0 %v5618
        %5975 = vmatpush.bf16.msra.mxu0 %v5617
        %5976 = vmatpush.bf16.msra.mxu0 %v5616
        %5977 = vmatmul.bf16.gmra.mxu0 %v4584
        %v5978 = vpop.f32.mrf.mxu0
        %v5979 = vadd.f32 %v5966, %v5978
        %v5980 = vpop.f32.mrf.mxu0
        %5981 = vdwg.mxu0
        %5982 = vmatpush.bf16.msra.mxu0 %v5631
        %5983 = vmatpush.bf16.msra.mxu0 %v5630
        %5984 = vmatpush.bf16.msra.mxu0 %v5629
        %5985 = vmatpush.bf16.msra.mxu0 %v5628
        %5986 = vmatpush.bf16.msra.mxu0 %v5627
        %5987 = vmatpush.bf16.msra.mxu0 %v5626
        %5988 = vmatpush.bf16.msra.mxu0 %v5625
        %5989 = vmatpush.bf16.msra.mxu0 %v5624
        %5990 = vmatmul.bf16.gmra.mxu0 %v4585
        %v5991 = vpop.f32.mrf.mxu0
        %v5992 = vadd.f32 %v5979, %v5991
        %v5993 = vpop.f32.mrf.mxu0
        %5994 = vdwg.mxu0
        %5995 = vmatpush.bf16.msra.mxu0 %v5639
        %5996 = vmatpush.bf16.msra.mxu0 %v5638
        %5997 = vmatpush.bf16.msra.mxu0 %v5637
        %5998 = vmatpush.bf16.msra.mxu0 %v5636
        %5999 = vmatpush.bf16.msra.mxu0 %v5635
        %6000 = vmatpush.bf16.msra.mxu0 %v5634
        %6001 = vmatpush.bf16.msra.mxu0 %v5633
        %6002 = vmatpush.bf16.msra.mxu0 %v5632
        %6003 = vmatmul.bf16.gmra.mxu0 %v4586
        %v6004 = vpop.f32.mrf.mxu0
        %v6005 = vadd.f32 %v5992, %v6004
        %v6006 = vpop.f32.mrf.mxu0
        %6007 = vdwg.mxu0
        %6008 = vmatpush.bf16.msra.mxu0 %v5647
        %6009 = vmatpush.bf16.msra.mxu0 %v5646
        %6010 = vmatpush.bf16.msra.mxu0 %v5645
        %6011 = vmatpush.bf16.msra.mxu0 %v5644
        %6012 = vmatpush.bf16.msra.mxu0 %v5643
        %6013 = vmatpush.bf16.msra.mxu0 %v5642
        %6014 = vmatpush.bf16.msra.mxu0 %v5641
        %6015 = vmatpush.bf16.msra.mxu0 %v5640
        %6016 = vmatmul.bf16.gmra.mxu0 %v4587
        %v6017 = vpop.f32.mrf.mxu0
        %v6018 = vadd.f32 %v6005, %v6017
        %v6019 = vpop.f32.mrf.mxu0
        %6020 = vdwg.mxu0
        %6021 = vmatpush.bf16.msra.mxu0 %v5655
        %6022 = vmatpush.bf16.msra.mxu0 %v5654
        %6023 = vmatpush.bf16.msra.mxu0 %v5653
        %6024 = vmatpush.bf16.msra.mxu0 %v5652
        %6025 = vmatpush.bf16.msra.mxu0 %v5651
        %6026 = vmatpush.bf16.msra.mxu0 %v5650
        %6027 = vmatpush.bf16.msra.mxu0 %v5649
        %6028 = vmatpush.bf16.msra.mxu0 %v5648
        %6029 = vmatmul.bf16.gmra.mxu0 %v4588
        %v6030 = vpop.f32.mrf.mxu0
        %v6031 = vadd.f32 %v6018, %v6030
        %v6032 = vpop.f32.mrf.mxu0
        %6033 = vdwg.mxu0
        %6034 = vmatpush.bf16.msra.mxu0 %v5663
        %6035 = vmatpush.bf16.msra.mxu0 %v5662
        %6036 = vmatpush.bf16.msra.mxu0 %v5661
        %6037 = vmatpush.bf16.msra.mxu0 %v5660
        %6038 = vmatpush.bf16.msra.mxu0 %v5659
        %6039 = vmatpush.bf16.msra.mxu0 %v5658
        %6040 = vmatpush.bf16.msra.mxu0 %v5657
        %6041 = vmatpush.bf16.msra.mxu0 %v5656
        %6042 = vmatmul.bf16.gmra.mxu0 %v4589
        %v6043 = vpop.f32.mrf.mxu0
        %v6044 = vadd.f32 %v6031, %v6043
        %v6045 = vpop.f32.mrf.mxu0
        %6046 = vdwg.mxu0
        %6047 = vmatpush.bf16.msra.mxu0 %v5671
        %6048 = vmatpush.bf16.msra.mxu0 %v5670
        %6049 = vmatpush.bf16.msra.mxu0 %v5669
        %6050 = vmatpush.bf16.msra.mxu0 %v5668
        %6051 = vmatpush.bf16.msra.mxu0 %v5667
        %6052 = vmatpush.bf16.msra.mxu0 %v5666
        %6053 = vmatpush.bf16.msra.mxu0 %v5665
        %6054 = vmatpush.bf16.msra.mxu0 %v5664
        %6055 = vmatmul.bf16.gmra.mxu0 %v4590
        %v6056 = vpop.f32.mrf.mxu0
        %v6057 = vadd.f32 %v6044, %v6056
        %v6058 = vpop.f32.mrf.mxu0
        %6059 = vdwg.mxu0
        %6060 = vmatpush.bf16.msra.mxu0 %v5679
        %6061 = vmatpush.bf16.msra.mxu0 %v5678
        %6062 = vmatpush.bf16.msra.mxu0 %v5677
        %6063 = vmatpush.bf16.msra.mxu0 %v5676
        %6064 = vmatpush.bf16.msra.mxu0 %v5675
        %6065 = vmatpush.bf16.msra.mxu0 %v5674
        %6066 = vmatpush.bf16.msra.mxu0 %v5673
        %6067 = vmatpush.bf16.msra.mxu0 %v5672
        %6068 = vmatmul.bf16.gmra.mxu0 %v4591
        %v6069 = vpop.f32.mrf.mxu0
        %v6070 = vadd.f32 %v6057, %v6069
        %v6071 = vpop.f32.mrf.mxu0
        %6072 = vdwg.mxu0
        %6073 = vmatpush.bf16.msra.mxu0 %v5687
        %6074 = vmatpush.bf16.msra.mxu0 %v5686
        %6075 = vmatpush.bf16.msra.mxu0 %v5685
        %6076 = vmatpush.bf16.msra.mxu0 %v5684
        %6077 = vmatpush.bf16.msra.mxu0 %v5683
        %6078 = vmatpush.bf16.msra.mxu0 %v5682
        %6079 = vmatpush.bf16.msra.mxu0 %v5681
        %6080 = vmatpush.bf16.msra.mxu0 %v5680
        %6081 = vmatmul.bf16.gmra.mxu0 %v4592
        %v6082 = vpop.f32.mrf.mxu0
        %v6083 = vadd.f32 %v6070, %v6082
        %v6084 = vpop.f32.mrf.mxu0
        %6085 = vdwg.mxu0
        %6086 = vmatpush.bf16.msra.mxu0 %v5695
        %6087 = vmatpush.bf16.msra.mxu0 %v5694
        %6088 = vmatpush.bf16.msra.mxu0 %v5693
        %6089 = vmatpush.bf16.msra.mxu0 %v5692
        %6090 = vmatpush.bf16.msra.mxu0 %v5691
        %6091 = vmatpush.bf16.msra.mxu0 %v5690
        %6092 = vmatpush.bf16.msra.mxu0 %v5689
        %6093 = vmatpush.bf16.msra.mxu0 %v5688
        %6094 = vmatmul.bf16.gmra.mxu0 %v4593
        %v6095 = vpop.f32.mrf.mxu0
        %v6096 = vadd.f32 %v6083, %v6095
        %v6097 = vpop.f32.mrf.mxu0
        %6098 = vdwg.mxu0
        %6099 = vmatpush.bf16.msra.mxu0 %v5703
        %6100 = vmatpush.bf16.msra.mxu0 %v5702
        %6101 = vmatpush.bf16.msra.mxu0 %v5701
        %6102 = vmatpush.bf16.msra.mxu0 %v5700
        %6103 = vmatpush.bf16.msra.mxu0 %v5699
        %6104 = vmatpush.bf16.msra.mxu0 %v5698
        %6105 = vmatpush.bf16.msra.mxu0 %v5697
        %6106 = vmatpush.bf16.msra.mxu0 %v5696
        %6107 = vmatmul.bf16.gmra.mxu0 %v4594
        %v6108 = vpop.f32.mrf.mxu0
        %v6109 = vadd.f32 %v6096, %v6108
        %v6110 = vpop.f32.mrf.mxu0
        %6111 = vdwg.mxu0
        %6112 = vmatpush.bf16.msra.mxu0 %v5711
        %6113 = vmatpush.bf16.msra.mxu0 %v5710
        %6114 = vmatpush.bf16.msra.mxu0 %v5709
        %6115 = vmatpush.bf16.msra.mxu0 %v5708
        %6116 = vmatpush.bf16.msra.mxu0 %v5707
        %6117 = vmatpush.bf16.msra.mxu0 %v5706
        %6118 = vmatpush.bf16.msra.mxu0 %v5705
        %6119 = vmatpush.bf16.msra.mxu0 %v5704
        %6120 = vmatmul.bf16.gmra.mxu0 %v4595
        %v6121 = vpop.f32.mrf.mxu0
        %v6122 = vadd.f32 %v6109, %v6121
        %v6123 = vpop.f32.mrf.mxu0
        %6124 = vdwg.mxu0
        %6125 = vmatpush.bf16.msra.mxu0 %v5719
        %6126 = vmatpush.bf16.msra.mxu0 %v5718
        %6127 = vmatpush.bf16.msra.mxu0 %v5717
        %6128 = vmatpush.bf16.msra.mxu0 %v5716
        %6129 = vmatpush.bf16.msra.mxu0 %v5715
        %6130 = vmatpush.bf16.msra.mxu0 %v5714
        %6131 = vmatpush.bf16.msra.mxu0 %v5713
        %6132 = vmatpush.bf16.msra.mxu0 %v5712
        %6133 = vmatmul.bf16.gmra.mxu0 %v4596
        %v6134 = vpop.f32.mrf.mxu0
        %v6135 = vadd.f32 %v6122, %v6134
        %v6136 = vpop.f32.mrf.mxu0
        %6137 = vdwg.mxu0
        %6138 = vmatpush.bf16.msra.mxu0 %v5727
        %6139 = vmatpush.bf16.msra.mxu0 %v5726
        %6140 = vmatpush.bf16.msra.mxu0 %v5725
        %6141 = vmatpush.bf16.msra.mxu0 %v5724
        %6142 = vmatpush.bf16.msra.mxu0 %v5723
        %6143 = vmatpush.bf16.msra.mxu0 %v5722
        %6144 = vmatpush.bf16.msra.mxu0 %v5721
        %6145 = vmatpush.bf16.msra.mxu0 %v5720
        %6146 = vmatmul.bf16.gmra.mxu0 %v4597
        %v6147 = vpop.f32.mrf.mxu0
        %v6148 = vadd.f32 %v6135, %v6147
        %v6149 = vpop.f32.mrf.mxu0
        %6150 = vdwg.mxu0
        %6151 = vmatpush.bf16.msra.mxu0 %v5735
        %6152 = vmatpush.bf16.msra.mxu0 %v5734
        %6153 = vmatpush.bf16.msra.mxu0 %v5733
        %6154 = vmatpush.bf16.msra.mxu0 %v5732
        %6155 = vmatpush.bf16.msra.mxu0 %v5731
        %6156 = vmatpush.bf16.msra.mxu0 %v5730
        %6157 = vmatpush.bf16.msra.mxu0 %v5729
        %6158 = vmatpush.bf16.msra.mxu0 %v5728
        %6159 = vmatmul.bf16.gmra.mxu0 %v4598
        %v6160 = vpop.f32.mrf.mxu0
        %v6161 = vadd.f32 %v6148, %v6160
        %v6162 = vpop.f32.mrf.mxu0
        %6163 = vdwg.mxu0
        %6164 = vmatpush.bf16.msra.mxu0 0
        %6165 = vmatpush.bf16.msra.mxu0 0
        %6166 = vmatpush.bf16.msra.mxu0 0
        %6167 = vmatpush.bf16.msra.mxu0 0
        %6168 = vmatpush.bf16.msra.mxu0 0
        %6169 = vmatpush.bf16.msra.mxu0 0
        %6170 = vmatpush.bf16.msra.mxu0 %v5737
        %6171 = vmatpush.bf16.msra.mxu0 %v5736
        %6172 = vmatmul.bf16.gmra.mxu0 %v5902
        %v6173 = vpop.f32.mrf.mxu0
        %v6174 = vadd.f32 %v6161, %v6173
        %v6175 = vpop.f32.mrf.mxu0
        %6176 = vdwg.mxu0
        %v6177 = vmax.f32 %v6174, 0.0
        %v6178 = vld [vmem:[%s9] sm:$0x3]
        %v6179 = vpack.c.bf16 %v6177, %v6177
        %v6180 = vld [vmem:[%s3009] sm:$0xf]
        %v6181 = vld [vmem:[%s3009 + $0x4] sm:$0xf]
        %v6182 = vld [vmem:[%s3009 + $0x8] sm:$0xf]
        %v6183 = vld [vmem:[%s3009 + $0xc] sm:$0xf]
        %v6184 = vld [vmem:[%s3009 + $0x10] sm:$0xf]
        %v6185 = vld [vmem:[%s3009 + $0x14] sm:$0xf]
        %v6186 = vld [vmem:[%s3009 + $0x18] sm:$0xf]
        %v6187 = vld [vmem:[%s3009 + $0x1c] sm:$0xf]
        %v6188 = vld [vmem:[%s3009 + $0x20] sm:$0xf]
        %v6189 = vld [vmem:[%s3009 + $0x24] sm:$0xf]
        %v6190 = vld [vmem:[%s3009 + $0x28] sm:$0xf]
        %v6191 = vld [vmem:[%s3009 + $0x2c] sm:$0xf]
        %v6192 = vld [vmem:[%s3009 + $0x30] sm:$0xf]
        %v6193 = vld [vmem:[%s3009 + $0x34] sm:$0xf]
        %v6194 = vld [vmem:[%s3009 + $0x38] sm:$0xf]
        %v6195 = vld [vmem:[%s3009 + $0x3c] sm:$0xf]
        %v6212 = vunpack.c.l.b16 %v6180
        %v6213 = vunpack.c.l.b16 %v6181
        %v6214 = vunpack.c.l.b16 %v6182
        %v6215 = vunpack.c.l.b16 %v6183
        %v6216 = vunpack.c.l.b16 %v6184
        %v6217 = vunpack.c.l.b16 %v6185
        %v6218 = vunpack.c.l.b16 %v6186
        %v6219 = vunpack.c.l.b16 %v6187
        %v6220 = vunpack.c.l.b16 %v6188
        %v6221 = vunpack.c.l.b16 %v6189
        %v6222 = vunpack.c.l.b16 %v6190
        %v6223 = vunpack.c.l.b16 %v6191
        %v6224 = vunpack.c.l.b16 %v6192
        %v6225 = vunpack.c.l.b16 %v6193
        %v6226 = vunpack.c.l.b16 %v6194
        %v6227 = vunpack.c.l.b16 %v6195
        %v6228 = vpack.c.b16 %v6213, %v6212
        %v6229 = vpack.c.b16 %v6215, %v6214
        %v6230 = vpack.c.b16 %v6217, %v6216
        %v6231 = vpack.c.b16 %v6219, %v6218
        %v6232 = vpack.c.b16 %v6221, %v6220
        %v6233 = vpack.c.b16 %v6223, %v6222
        %v6234 = vpack.c.b16 %v6225, %v6224
        %v6235 = vpack.c.b16 %v6227, %v6226
        %6244 = vmatpush.bf16.msra.mxu0 %v6235
        %6245 = vmatpush.bf16.msra.mxu0 %v6234
        %6246 = vmatpush.bf16.msra.mxu0 %v6233
        %6247 = vmatpush.bf16.msra.mxu0 %v6232
        %6248 = vmatpush.bf16.msra.mxu0 %v6231
        %6249 = vmatpush.bf16.msra.mxu0 %v6230
        %6250 = vmatpush.bf16.msra.mxu0 %v6229
        %6251 = vmatpush.bf16.msra.mxu0 %v6228
        %6252 = vmatmul.bf16.gmra.mxu0 %v6179
        %v6253 = vpop.f32.mrf.mxu0
        %v6254 = vadd.f32 0.0, %v6253
        %v6255 = vpop.f32.mrf.mxu0
        %6256 = vdwg.mxu0
        %v6257 = vadd.f32 %v6178, %v6254
        %6258 = vst [vmem:[%s9] sm:$0x3] %v6257
        // Predicated region
        $region113: #{dueling_dqn_forward.1} parent=103 // pred_check
          %p6259 = pneg %p237
        $region114: #{dueling_dqn_forward.1} parent=103 // pred_check_branch
          %6261 = sbr.rel (%p6259) target = $region116
        $region115: #{dueling_dqn_forward.1} parent=103 // pred_region
          _
        $region116: #{dueling_dqn_forward.1} parent=103 // pred_fallthru
          _
        // Predicated region
        $region117: #{dueling_dqn_forward.1} parent=103 // pred_check
          %p6262 = pneg %p237
        $region118: #{dueling_dqn_forward.1} parent=103 // pred_check_branch
          %6264 = sbr.rel (%p6262) target = $region120
        $region119: #{dueling_dqn_forward.1} parent=103 // pred_region
          _
        $region120: #{dueling_dqn_forward.1} parent=103 // pred_fallthru
          _
      $region104: #{dueling_dqn_forward.1} parent=5 // pred_fallthru
        _
      %p6265 = scmp.le.s32.totalorder 2, %s15
      // Predicated region
      $region121: #{dueling_dqn_forward.1} parent=5 // pred_check
        %p6266 = pneg %p6265
      $region122: #{dueling_dqn_forward.1} parent=5 // pred_check_branch
        %6268 = sbr.rel (%p6266) target = $region124
      $region123: #{dueling_dqn_forward.1} parent=5 // pred_region
        %s6269 = ssub.s32 %s15, 2
      $region124: #{dueling_dqn_forward.1} parent=5 // pred_fallthru
        _
    $region6: #{dueling_dqn_forward.1} parent=1 // loop_footer
      %s19 = sadd.s32 1, %s15
    $region7: #{dueling_dqn_forward.1} parent=1 // loop_footer_branch
      %14 = sbr.rel target = $region3
    $region8: #{dueling_dqn_forward.1} parent=1 // loop_exit
      _

</llo_original>
